<compile_context>
chip_gen: v7x
topology: tpu7x:2x2x1
jax: 0.10.0
libtpu: 0.0.40
codegen_flags: <defaults>
</compile_context>

<pallas_src>
import functools

import jax
import jax.numpy as jnp
from jax.experimental import pallas as pl
from jax.experimental.pallas import tpu as pltpu


# ----------------------------------------------------------------------------
# Helpers
# ----------------------------------------------------------------------------
def _round_up(x, m):
    return ((x + m - 1) // m) * m


def _vmem_budgets():
    """Generation-aware VMEM sizing: (in-kernel adjacency budget, vmem limit)."""
    cap = 128 * 1024 * 1024                     # v5e / v6e VMEM per TensorCore
    try:
        if hasattr(pltpu, "get_tpu_info"):
            cap = int(getattr(pltpu.get_tpu_info(), "vmem_capacity_bytes", cap))
    except Exception:
        pass
    adj_budget = max(512 * 1024, cap // 32)              # 2 MiB (v7x) / 4 MiB (v5e/v6e)
    vmem_limit = min((cap * 3) // 4, 112 * 1024 * 1024)  # 48 MiB (v7x) / 96 MiB (v5e/v6e)
    return int(adj_budget), int(vmem_limit)


def _pick_lb(rows, Vp, Cp, Co, itemsize, adj_budget, vmem_limit):
    """Rows of the merged (N*L) axis per grid step."""
    adj_per_row = Vp * Vp * 4                          # in-kernel f32 adjacency tile
    io_per_row = (3 * Cp + 2 * Co) * Vp * itemsize     # x, x1, x2 in + 2 concat outs
    lb = min(adj_budget // adj_per_row, (vmem_limit // 6) // max(1, io_per_row))
    lb = max(1, min(lb, rows))
    # Keep >= 2 grid steps so both v7x TensorCores get work (harmless on 1-TC chips).
    if rows >= 2 and (rows + lb - 1) // lb < 2:
        lb = (rows + 1) // 2
    return int(lb)


def _pad_square_linear(w, b, Cp):
    o, i = w.shape
    return jnp.pad(w, ((0, Cp - o), (0, Cp - i))), jnp.pad(b, (0, Cp - o))


def _pad_mlp_weight(w, C, Cp, gdep):
    # (c_out, (gdep+1)*C) -> (c_out, (gdep+1)*Cp), zero weights on padded channels.
    c_out = w.shape[0]
    w = w.reshape(c_out, gdep + 1, C)
    w = jnp.pad(w, ((0, 0), (0, 0), (0, Cp - C)))
    return w.reshape(c_out, (gdep + 1) * Cp)


def _conv1x1(w, b, t):
    # 1x1 Conv2d over channels in the (N, L, C, V) layout (plain-XLA glue).
    y = jnp.einsum("oi,nliv->nlov", w, t, preferred_element_type=jnp.float32)
    return y + b.astype(jnp.float32)[None, None, :, None]


# ----------------------------------------------------------------------------
# Fused Pallas kernel: adjacency + masked double softmax + gdep hops + concat
# ----------------------------------------------------------------------------
def _make_fused_kernel(Cp, Vp, V, gdep, alpha):
    need_mask = Vp != V
    alpha = float(alpha)

    def kernel(x_ref, x1_ref, x2_ref, o0_ref, o1_ref):
        # x_ref/x1_ref/x2_ref: (Lb, Cp, Vp); o*_ref: (Lb, (gdep+1)*Cp, Vp)
        x_f32 = x_ref[...].astype(jnp.float32)

        if need_mask:
            col = jax.lax.broadcasted_iota(jnp.int32, (Vp, Vp), 1)
            row = jax.lax.broadcasted_iota(jnp.int32, (Vp, Vp), 0)
            col_ok = (col < V)[None]          # (1, Vp, Vp), softmax-axis validity
            row_ok = (row < V)[None]          # padded source-node rows of A

        def masked_row_softmax(logits):       # (Lb, Vp, Vp) f32, softmax over last axis
            if need_mask:
                logits = jnp.where(col_ok, logits, -jnp.inf)
            m = jnp.max(logits, axis=-1, keepdims=True)
            e = jnp.exp(logits - m)
            p = e / jnp.sum(e, axis=-1, keepdims=True)
            if need_mask:
                p = jnp.where(row_ok, p, 0.0)  # padded rows exactly zero
            return p

        def adjacency(lhs_ref, rhs_ref):
            # A[l, i, j] = softmax_j( sum_c lhs[l, c, i] * rhs[l, c, j] )
            # Transpose lhs in f32 (32-bit XLU transpose), then a standard batched
            # MXU matmul with f32 accumulation.
            lhs_t = jnp.swapaxes(lhs_ref[...].astype(jnp.float32), 1, 2)
            lhs_t = lhs_t.astype(rhs_ref.dtype)
            logits = jnp.einsum("lic,lcj->lij", lhs_t, rhs_ref[...],
                                preferred_element_type=jnp.float32)
            return masked_row_softmax(logits)

        def propagate(a, o_ref):
            # Hop 0 is x itself (absorbs the torch.cat); h is carried in f32 and
            # only the per-hop store is cast to the streaming dtype.
            o_ref[:, 0:Cp, :] = x_ref[...].astype(o_ref.dtype)
            h = x_f32
            for d in range(gdep):
                hA = jnp.einsum("lcv,lvw->lcw", h.astype(a.dtype), a,
                                preferred_element_type=jnp.float32)
                h = alpha * x_f32 + (1.0 - alpha) * hA        # blend scalars in f32
                o_ref[:, (d + 1) * Cp:(d + 2) * Cp, :] = h.astype(o_ref.dtype)

        # Branch 1: A0[l,i,j] = softmax_j adj[l,i,j]
        a0 = adjacency(x1_ref, x2_ref).astype(x_ref.dtype)
        propagate(a0, o0_ref)
        # Branch 2: A1[l,j,i] = softmax_i adj[l,i,j]  (row softmax of adj^T)
        a1 = adjacency(x2_ref, x1_ref).astype(x_ref.dtype)
        propagate(a1, o1_ref)

    return kernel


def _fused_propagation(x_c, x1, x2, *, gdep, alpha, V):
    """x_c/x1/x2: (R, Cp, Vp) -> two (R, (gdep+1)*Cp, Vp) concat-of-hops tensors."""
    R, Cp, Vp = x_c.shape
    Co = (gdep + 1) * Cp
    itemsize = jnp.dtype(x_c.dtype).itemsize

    adj_budget, vmem_limit = _vmem_budgets()
    lb = _pick_lb(R, Vp, Cp, Co, itemsize, adj_budget, vmem_limit)
    Rp = _round_up(R, lb)
    if Rp != R:
        pad = ((0, Rp - R), (0, 0), (0, 0))
        x_c = jnp.pad(x_c, pad)
        x1 = jnp.pad(x1, pad)
        x2 = jnp.pad(x2, pad)

    cost = pl.CostEstimate(
        flops=int(4 * Rp * (gdep + 1) * Cp * Vp * Vp),
        transcendentals=int(2 * Rp * Vp * Vp),
        bytes_accessed=int((3 * Rp * Cp * Vp + 2 * Rp * Co * Vp) * itemsize),
    )

    in_spec = pl.BlockSpec((lb, Cp, Vp), lambda r: (r, 0, 0))
    out_spec = pl.BlockSpec((lb, Co, Vp), lambda r: (r, 0, 0))

    ho0, ho1 = pl.pallas_call(
        _make_fused_kernel(Cp, Vp, V, gdep, alpha),
        out_shape=(jax.ShapeDtypeStruct((Rp, Co, Vp), x_c.dtype),
                   jax.ShapeDtypeStruct((Rp, Co, Vp), x_c.dtype)),
        grid=(Rp // lb,),
        in_specs=[in_spec, in_spec, in_spec],
        out_specs=(out_spec, out_spec),
        compiler_params=pltpu.CompilerParams(
            dimension_semantics=("parallel",),
            vmem_limit_bytes=int(vmem_limit),
        ),
        cost_estimate=cost,
    )(x_c, x1, x2)

    if Rp != R:
        ho0, ho1 = ho0[:R], ho1[:R]
    return ho0, ho1


# ----------------------------------------------------------------------------
# dy_mixprop forward (Pallas-backed propagation core, XLA 1x1-conv glue)
# ----------------------------------------------------------------------------
def init_dy_mixprop_params(key, c_in, c_out, gdep, dtype=jnp.float32):
    ks = jax.random.split(key, 8)

    def lin_init(kw, kb, o, i):
        s = float(i) ** -0.5
        w = jax.random.uniform(kw, (o, i), dtype, -s, s)
        b = jax.random.uniform(kb, (o,), dtype, -s, s)
        return w, b

    lin1_w, lin1_b = lin_init(ks[0], ks[1], c_in, c_in)
    lin2_w, lin2_b = lin_init(ks[2], ks[3], c_in, c_in)
    mlp1_w, mlp1_b = lin_init(ks[4], ks[5], c_out, (gdep + 1) * c_in)
    mlp2_w, mlp2_b = lin_init(ks[6], ks[7], c_out, (gdep + 1) * c_in)
    return dict(lin1_w=lin1_w, lin1_b=lin1_b, lin2_w=lin2_w, lin2_b=lin2_b,
                mlp1_w=mlp1_w, mlp1_b=mlp1_b, mlp2_w=mlp2_w, mlp2_b=mlp2_b)


def dy_mixprop_forward(params, x, *, gdep, alpha, compute_dtype=jnp.bfloat16):
    """dy_mixprop forward.  x: (N, c_in, V, L) -> (N, c_out, V, L)."""
    N, C, V, L = x.shape
    cd = jnp.dtype(compute_dtype)

    Vp = _round_up(V, 128)                       # always lane-dense node dim
    c_mult = 8 if cd.itemsize >= 4 else 16       # sublane multiple for the dtype
    Cp = _round_up(C, c_mult)

    # One-time layout change + zero-pad + cast at the module boundary.
    x_t = jnp.transpose(x, (0, 3, 1, 2))                       # (N, L, C, V)
    x_t = jnp.pad(x_t, ((0, 0), (0, 0), (0, Cp - C), (0, Vp - V)))
    x_c = x_t.astype(cd)

    # lin1 / lin2 (1x1 convs) + tanh, with zero-padded weights/biases so padded
    # channels stay exactly zero.  TODO(synk): remains plain-XLA glue.
    w1, b1 = _pad_square_linear(params["lin1_w"], params["lin1_b"], Cp)
    w2, b2 = _pad_square_linear(params["lin2_w"], params["lin2_b"], Cp)
    x1 = jnp.tanh(_conv1x1(w1.astype(cd), b1, x_c)).astype(cd)
    x2 = jnp.tanh(_conv1x1(w2.astype(cd), b2, x_c)).astype(cd)

    # Fused Pallas core: adjacency + masked double softmax + gdep hops + concat.
    R = N * L
    sh = (R, Cp, Vp)
    ho0, ho1 = _fused_propagation(x_c.reshape(sh), x1.reshape(sh), x2.reshape(sh),
                                  gdep=gdep, alpha=alpha, V=V)
    Co = (gdep + 1) * Cp
    ho0 = ho0.reshape(N, L, Co, Vp)
    ho1 = ho1.reshape(N, L, Co, Vp)

    # Output MLPs over the concatenated hops (weights padded to the Cp layout).
    mw1 = _pad_mlp_weight(params["mlp1_w"], C, Cp, gdep).astype(cd)
    mw2 = _pad_mlp_weight(params["mlp2_w"], C, Cp, gdep).astype(cd)
    out_t = (_conv1x1(mw1, params["mlp1_b"], ho0)
             + _conv1x1(mw2, params["mlp2_b"], ho1))           # (N, L, c_out, Vp) f32

    # Back to the PyTorch 'n c w l' layout, dropping node padding.
    return jnp.transpose(out_t[..., :V], (0, 2, 3, 1)).astype(jnp.float32)


# ----------------------------------------------------------------------------
# Plain-JAX (f32) replica of the PyTorch module, used as the reference.
# ----------------------------------------------------------------------------
def dy_mixprop_reference(params, x, *, gdep, alpha):
    def nconv(xx, aa):
        return jnp.einsum("ncvl,nvwl->ncwl", xx, aa)

    def lin(w, b, xx):
        return jnp.einsum("oi,nivl->novl", w, xx) + b[None, :, None, None]

    x1 = jnp.tanh(lin(params["lin1_w"], params["lin1_b"], x))
    x2 = jnp.tanh(lin(params["lin2_w"], params["lin2_b"], x))
    adj = nconv(jnp.transpose(x1, (0, 2, 1, 3)), x2)             # (N, V, V, L)
    adj0 = jax.nn.softmax(adj, axis=2)
    adj1 = jax.nn.softmax(jnp.transpose(adj, (0, 2, 1, 3)), axis=2)

    def prop(a):
        h = x
        outs = [h]
        for _ in range(gdep):
            h = alpha * x + (1.0 - alpha) * nconv(h, a)
            outs.append(h)
        return jnp.concatenate(outs, axis=1)

    ho1 = lin(params["mlp1_w"], params["mlp1_b"], prop(adj0))
    ho2 = lin(params["mlp2_w"], params["mlp2_b"], prop(adj1))
    return ho1 + ho2


if __name__ == "__main__":
    key = jax.random.PRNGKey(0)
    kp, kx, kp2, kx2 = jax.random.split(key, 4)

    # Small shapes consistent with dy_mixprop:
    # batch=2, c_in=4, c_out=6, nodes=16, seq=8, gdep=2, alpha=0.05.
    N, c_in, c_out, V, L, gdep, alpha = 2, 4, 6, 16, 8, 2, 0.05
    params = init_dy_mixprop_params(kp, c_in, c_out, gdep)
    x = jax.random.normal(kx, (N, c_in, V, L), dtype=jnp.float32)

    ref = dy_mixprop_reference(params, x, gdep=gdep, alpha=alpha)

    # f32 compute path: tight check against the reference.
    fwd_f32 = jax.jit(functools.partial(
        dy_mixprop_forward, gdep=gdep, alpha=alpha, compute_dtype=jnp.float32))
    out_f32 = jax.block_until_ready(fwd_f32(params, x))
    assert out_f32.shape == (N, c_out, V, L)
    assert jnp.allclose(out_f32, ref, atol=5e-3, rtol=5e-3)

    # bf16 streaming path (halves HBM traffic): loose relative-error check.
    fwd_bf16 = jax.jit(functools.partial(
        dy_mixprop_forward, gdep=gdep, alpha=alpha, compute_dtype=jnp.bfloat16))
    out_bf16 = jax.block_until_ready(fwd_bf16(params, x)).astype(jnp.float32)
    rel = jnp.linalg.norm(out_bf16 - ref) / jnp.linalg.norm(ref)
    assert rel < 5e-2

    # Exercise the lane/row padding paths (V > 128, not a multiple of 128; the
    # merged N*L axis not a multiple of the chosen block).
    N2, c2_in, c2_out, V2, L2, gdep2, alpha2 = 1, 4, 4, 136, 8, 1, 0.1
    params2 = init_dy_mixprop_params(kp2, c2_in, c2_out, gdep2)
    x2 = jax.random.normal(kx2, (N2, c2_in, V2, L2), dtype=jnp.float32)
    ref2 = dy_mixprop_reference(params2, x2, gdep=gdep2, alpha=alpha2)
    fwd2 = jax.jit(functools.partial(
        dy_mixprop_forward, gdep=gdep2, alpha=alpha2, compute_dtype=jnp.float32))
    out2 = jax.block_until_ready(fwd2(params2, x2))
    assert out2.shape == (N2, c2_out, V2, L2)
    assert jnp.allclose(out2, ref2, atol=5e-3, rtol=5e-3)

    print("KERNEL_OK")
</pallas_src>

<mosaic_0001>
module attributes {stable_mosaic.version = 11 : i64} {
  func.func @kernel(%arg0: i32, %arg1: memref<8x8x128xf32, #tpu.memory_space<vmem>>, %arg2: memref<8x8x128xf32, #tpu.memory_space<vmem>>, %arg3: memref<8x8x128xf32, #tpu.memory_space<vmem>>, %arg4: memref<8x24x128xf32, #tpu.memory_space<vmem>>, %arg5: memref<8x24x128xf32, #tpu.memory_space<vmem>>) attributes {dimension_semantics = [#tpu.dimension_semantics<parallel>], iteration_bounds = array<i64: 2>, scalar_prefetch = 0 : i64, scratch_operands = 0 : i64, tpu.core_type = #tpu.core_type<tc>, window_params = [{transform_indices = @transform_0, window_bounds = array<i64: 8, 8, 128>}, {transform_indices = @transform_1, window_bounds = array<i64: 8, 8, 128>}, {transform_indices = @transform_2, window_bounds = array<i64: 8, 8, 128>}, {transform_indices = @transform_3, window_bounds = array<i64: 8, 24, 128>}, {transform_indices = @transform_4, window_bounds = array<i64: 8, 24, 128>}]} {
    %c0 = arith.constant 0 : index
    %c0_0 = arith.constant 0 : index
    %c0_1 = arith.constant 0 : index
    %0 = vector.load %arg1[%c0, %c0_0, %c0_1] : memref<8x8x128xf32, #tpu.memory_space<vmem>>, vector<8x8x128xf32>
    %1 = tpu.iota {dimensions = array<i32: 1>} : vector<128x128xi32>
    %2 = tpu.iota {dimensions = array<i32: 0>} : vector<128x128xi32>
    %c16_i32 = arith.constant 16 : i32
    %3 = vector.broadcast %c16_i32 : i32 to vector<128x128xi32>
    %4 = arith.cmpi slt, %1, %3 : vector<128x128xi32>
    %5 = vector.shape_cast %4 : vector<128x128xi1> to vector<1x128x128xi1>
    %c16_i32_2 = arith.constant 16 : i32
    %6 = vector.broadcast %c16_i32_2 : i32 to vector<128x128xi32>
    %7 = arith.cmpi slt, %2, %6 : vector<128x128xi32>
    %8 = vector.shape_cast %7 : vector<128x128xi1> to vector<1x128x128xi1>
    %c0_3 = arith.constant 0 : index
    %c0_4 = arith.constant 0 : index
    %c0_5 = arith.constant 0 : index
    %9 = vector.load %arg2[%c0_3, %c0_4, %c0_5] : memref<8x8x128xf32, #tpu.memory_space<vmem>>, vector<8x8x128xf32>
    %10 = tpu.transpose %9, [0, 2, 1] : vector<8x8x128xf32> -> vector<8x128x8xf32>
    %c0_6 = arith.constant 0 : index
    %c0_7 = arith.constant 0 : index
    %c0_8 = arith.constant 0 : index
    %11 = vector.load %arg3[%c0_6, %c0_7, %c0_8] : memref<8x8x128xf32, #tpu.memory_space<vmem>>, vector<8x8x128xf32>
    "tpu.trace_start"() <{level = 10 : i32, message = "lic,lcj->lij"}> : () -> ()
    %cst = arith.constant dense<0.000000e+00> : vector<8x128x128xf32>
    %12 = tpu.matmul %10, %11, %cst {dimension_numbers = #tpu.dot_dimension_numbers<[2], [1], [1], [2], [0, 0, 0, 1, 1, 2], [0], [0]>} : vector<8x128x8xf32>, vector<8x8x128xf32>, vector<8x128x128xf32> -> vector<8x128x128xf32>
    %cst_9 = arith.constant 0xFF800000 : f32
    "tpu.trace_stop"() : () -> ()
    %13 = vector.shape_cast %5 : vector<1x128x128xi1> to vector<1x128x128xi1>
    %14 = vector.broadcast %13 : vector<1x128x128xi1> to vector<8x128x128xi1>
    %15 = vector.broadcast %cst_9 : f32 to vector<8x128x128xf32>
    %16 = arith.select %14, %12, %15 : vector<8x128x128xi1>, vector<8x128x128xf32>
    %cst_10 = arith.constant dense<0xFF800000> : vector<8x128xf32>
    %17 = vector.multi_reduction <maximumf>, %16, %cst_10 [2] : vector<8x128x128xf32> to vector<8x128xf32>
    %18 = vector.shape_cast %17 : vector<8x128xf32> to vector<8x128x1xf32>
    %19 = vector.broadcast %18 : vector<8x128x1xf32> to vector<8x128x128xf32>
    %20 = arith.subf %16, %19 : vector<8x128x128xf32>
    %21 = math.exp %20 : vector<8x128x128xf32>
    %cst_11 = arith.constant dense<0.000000e+00> : vector<8x128xf32>
    %22 = vector.multi_reduction <add>, %21, %cst_11 [2] : vector<8x128x128xf32> to vector<8x128xf32>
    %23 = vector.shape_cast %22 : vector<8x128xf32> to vector<8x128x1xf32>
    %24 = vector.broadcast %23 : vector<8x128x1xf32> to vector<8x128x128xf32>
    %25 = arith.divf %21, %24 : vector<8x128x128xf32>
    %cst_12 = arith.constant 0.000000e+00 : f32
    %26 = vector.shape_cast %8 : vector<1x128x128xi1> to vector<1x128x128xi1>
    %27 = vector.broadcast %26 : vector<1x128x128xi1> to vector<8x128x128xi1>
    %28 = vector.broadcast %cst_12 : f32 to vector<8x128x128xf32>
    %29 = arith.select %27, %25, %28 : vector<8x128x128xi1>, vector<8x128x128xf32>
    %c0_13 = arith.constant 0 : index
    %c0_14 = arith.constant 0 : index
    %c0_15 = arith.constant 0 : index
    %30 = vector.load %arg1[%c0_13, %c0_14, %c0_15] : memref<8x8x128xf32, #tpu.memory_space<vmem>>, vector<8x8x128xf32>
    %c0_16 = arith.constant 0 : index
    %c0_17 = arith.constant 0 : index
    %c0_18 = arith.constant 0 : index
    %31 = vector.load %arg4[%c0_16, %c0_17, %c0_18] : memref<8x24x128xf32, #tpu.memory_space<vmem>>, vector<8x8x128xf32>
    tpu.vector_store %arg4[%c0_16, %c0_17, %c0_18], %30 {strides = array<i32>} : memref<8x24x128xf32, #tpu.memory_space<vmem>>, vector<8x8x128xf32>,
    "tpu.trace_start"() <{level = 10 : i32, message = "lcv,lvw->lcw"}> : () -> ()
    %cst_19 = arith.constant dense<0.000000e+00> : vector<8x8x128xf32>
    %32 = tpu.matmul %0, %29, %cst_19 {dimension_numbers = #tpu.dot_dimension_numbers<[2], [1], [1], [2], [0, 0, 0, 1, 1, 2], [0], [0]>} : vector<8x8x128xf32>, vector<8x128x128xf32>, vector<8x8x128xf32> -> vector<8x8x128xf32>
    "tpu.trace_stop"() : () -> ()
    %cst_20 = arith.constant 5.000000e-02 : f32
    %33 = vector.broadcast %cst_20 : f32 to vector<8x8x128xf32>
    %34 = arith.mulf %33, %0 : vector<8x8x128xf32>
    %cst_21 = arith.constant 0.949999988 : f32
    %35 = vector.broadcast %cst_21 : f32 to vector<8x8x128xf32>
    %36 = arith.mulf %35, %32 : vector<8x8x128xf32>
    %37 = arith.addf %34, %36 : vector<8x8x128xf32>
    %c0_22 = arith.constant 0 : index
    %c8 = arith.constant 8 : index
    %c0_23 = arith.constant 0 : index
    %38 = vector.load %arg4[%c0_22, %c8, %c0_23] : memref<8x24x128xf32, #tpu.memory_space<vmem>>, vector<8x8x128xf32>
    tpu.vector_store %arg4[%c0_22, %c8, %c0_23], %37 {strides = array<i32>} : memref<8x24x128xf32, #tpu.memory_space<vmem>>, vector<8x8x128xf32>,
    "tpu.trace_start"() <{level = 10 : i32, message = "lcv,lvw->lcw"}> : () -> ()
    %cst_24 = arith.constant dense<0.000000e+00> : vector<8x8x128xf32>
    %39 = tpu.matmul %37, %29, %cst_24 {dimension_numbers = #tpu.dot_dimension_numbers<[2], [1], [1], [2], [0, 0, 0, 1, 1, 2], [0], [0]>} : vector<8x8x128xf32>, vector<8x128x128xf32>, vector<8x8x128xf32> -> vector<8x8x128xf32>
    "tpu.trace_stop"() : () -> ()
    %cst_25 = arith.constant 5.000000e-02 : f32
    %40 = vector.broadcast %cst_25 : f32 to vector<8x8x128xf32>
    %41 = arith.mulf %40, %0 : vector<8x8x128xf32>
    %cst_26 = arith.constant 0.949999988 : f32
    %42 = vector.broadcast %cst_26 : f32 to vector<8x8x128xf32>
    %43 = arith.mulf %42, %39 : vector<8x8x128xf32>
    %44 = arith.addf %41, %43 : vector<8x8x128xf32>
    %c0_27 = arith.constant 0 : index
    %c16 = arith.constant 16 : index
    %c0_28 = arith.constant 0 : index
    %45 = vector.load %arg4[%c0_27, %c16, %c0_28] : memref<8x24x128xf32, #tpu.memory_space<vmem>>, vector<8x8x128xf32>
    tpu.vector_store %arg4[%c0_27, %c16, %c0_28], %44 {strides = array<i32>} : memref<8x24x128xf32, #tpu.memory_space<vmem>>, vector<8x8x128xf32>,
    %c0_29 = arith.constant 0 : index
    %c0_30 = arith.constant 0 : index
    %c0_31 = arith.constant 0 : index
    %46 = vector.load %arg3[%c0_29, %c0_30, %c0_31] : memref<8x8x128xf32, #tpu.memory_space<vmem>>, vector<8x8x128xf32>
    %47 = tpu.transpose %46, [0, 2, 1] : vector<8x8x128xf32> -> vector<8x128x8xf32>
    %c0_32 = arith.constant 0 : index
    %c0_33 = arith.constant 0 : index
    %c0_34 = arith.constant 0 : index
    %48 = vector.load %arg2[%c0_32, %c0_33, %c0_34] : memref<8x8x128xf32, #tpu.memory_space<vmem>>, vector<8x8x128xf32>
    "tpu.trace_start"() <{level = 10 : i32, message = "lic,lcj->lij"}> : () -> ()
    %cst_35 = arith.constant dense<0.000000e+00> : vector<8x128x128xf32>
    %49 = tpu.matmul %47, %48, %cst_35 {dimension_numbers = #tpu.dot_dimension_numbers<[2], [1], [1], [2], [0, 0, 0, 1, 1, 2], [0], [0]>} : vector<8x128x8xf32>, vector<8x8x128xf32>, vector<8x128x128xf32> -> vector<8x128x128xf32>
    %cst_36 = arith.constant 0xFF800000 : f32
    "tpu.trace_stop"() : () -> ()
    %50 = vector.shape_cast %5 : vector<1x128x128xi1> to vector<1x128x128xi1>
    %51 = vector.broadcast %50 : vector<1x128x128xi1> to vector<8x128x128xi1>
    %52 = vector.broadcast %cst_36 : f32 to vector<8x128x128xf32>
    %53 = arith.select %51, %49, %52 : vector<8x128x128xi1>, vector<8x128x128xf32>
    %cst_37 = arith.constant dense<0xFF800000> : vector<8x128xf32>
    %54 = vector.multi_reduction <maximumf>, %53, %cst_37 [2] : vector<8x128x128xf32> to vector<8x128xf32>
    %55 = vector.shape_cast %54 : vector<8x128xf32> to vector<8x128x1xf32>
    %56 = vector.broadcast %55 : vector<8x128x1xf32> to vector<8x128x128xf32>
    %57 = arith.subf %53, %56 : vector<8x128x128xf32>
    %58 = math.exp %57 : vector<8x128x128xf32>
    %cst_38 = arith.constant dense<0.000000e+00> : vector<8x128xf32>
    %59 = vector.multi_reduction <add>, %58, %cst_38 [2] : vector<8x128x128xf32> to vector<8x128xf32>
    %60 = vector.shape_cast %59 : vector<8x128xf32> to vector<8x128x1xf32>
    %61 = vector.broadcast %60 : vector<8x128x1xf32> to vector<8x128x128xf32>
    %62 = arith.divf %58, %61 : vector<8x128x128xf32>
    %cst_39 = arith.constant 0.000000e+00 : f32
    %63 = vector.shape_cast %8 : vector<1x128x128xi1> to vector<1x128x128xi1>
    %64 = vector.broadcast %63 : vector<1x128x128xi1> to vector<8x128x128xi1>
    %65 = vector.broadcast %cst_39 : f32 to vector<8x128x128xf32>
    %66 = arith.select %64, %62, %65 : vector<8x128x128xi1>, vector<8x128x128xf32>
    %c0_40 = arith.constant 0 : index
    %c0_41 = arith.constant 0 : index
    %c0_42 = arith.constant 0 : index
    %67 = vector.load %arg1[%c0_40, %c0_41, %c0_42] : memref<8x8x128xf32, #tpu.memory_space<vmem>>, vector<8x8x128xf32>
    %c0_43 = arith.constant 0 : index
    %c0_44 = arith.constant 0 : index
    %c0_45 = arith.constant 0 : index
    %68 = vector.load %arg5[%c0_43, %c0_44, %c0_45] : memref<8x24x128xf32, #tpu.memory_space<vmem>>, vector<8x8x128xf32>
    tpu.vector_store %arg5[%c0_43, %c0_44, %c0_45], %67 {strides = array<i32>} : memref<8x24x128xf32, #tpu.memory_space<vmem>>, vector<8x8x128xf32>,
    "tpu.trace_start"() <{level = 10 : i32, message = "lcv,lvw->lcw"}> : () -> ()
    %cst_46 = arith.constant dense<0.000000e+00> : vector<8x8x128xf32>
    %69 = tpu.matmul %0, %66, %cst_46 {dimension_numbers = #tpu.dot_dimension_numbers<[2], [1], [1], [2], [0, 0, 0, 1, 1, 2], [0], [0]>} : vector<8x8x128xf32>, vector<8x128x128xf32>, vector<8x8x128xf32> -> vector<8x8x128xf32>
    "tpu.trace_stop"() : () -> ()
    %cst_47 = arith.constant 5.000000e-02 : f32
    %70 = vector.broadcast %cst_47 : f32 to vector<8x8x128xf32>
    %71 = arith.mulf %70, %0 : vector<8x8x128xf32>
    %cst_48 = arith.constant 0.949999988 : f32
    %72 = vector.broadcast %cst_48 : f32 to vector<8x8x128xf32>
    %73 = arith.mulf %72, %69 : vector<8x8x128xf32>
    %74 = arith.addf %71, %73 : vector<8x8x128xf32>
    %c0_49 = arith.constant 0 : index
    %c8_50 = arith.constant 8 : index
    %c0_51 = arith.constant 0 : index
    %75 = vector.load %arg5[%c0_49, %c8_50, %c0_51] : memref<8x24x128xf32, #tpu.memory_space<vmem>>, vector<8x8x128xf32>
    tpu.vector_store %arg5[%c0_49, %c8_50, %c0_51], %74 {strides = array<i32>} : memref<8x24x128xf32, #tpu.memory_space<vmem>>, vector<8x8x128xf32>,
    "tpu.trace_start"() <{level = 10 : i32, message = "lcv,lvw->lcw"}> : () -> ()
    %cst_52 = arith.constant dense<0.000000e+00> : vector<8x8x128xf32>
    %76 = tpu.matmul %74, %66, %cst_52 {dimension_numbers = #tpu.dot_dimension_numbers<[2], [1], [1], [2], [0, 0, 0, 1, 1, 2], [0], [0]>} : vector<8x8x128xf32>, vector<8x128x128xf32>, vector<8x8x128xf32> -> vector<8x8x128xf32>
    "tpu.trace_stop"() : () -> ()
    %cst_53 = arith.constant 5.000000e-02 : f32
    %77 = vector.broadcast %cst_53 : f32 to vector<8x8x128xf32>
    %78 = arith.mulf %77, %0 : vector<8x8x128xf32>
    %cst_54 = arith.constant 0.949999988 : f32
    %79 = vector.broadcast %cst_54 : f32 to vector<8x8x128xf32>
    %80 = arith.mulf %79, %76 : vector<8x8x128xf32>
    %81 = arith.addf %78, %80 : vector<8x8x128xf32>
    %c0_55 = arith.constant 0 : index
    %c16_56 = arith.constant 16 : index
    %c0_57 = arith.constant 0 : index
    %82 = vector.load %arg5[%c0_55, %c16_56, %c0_57] : memref<8x24x128xf32, #tpu.memory_space<vmem>>, vector<8x8x128xf32>
    tpu.vector_store %arg5[%c0_55, %c16_56, %c0_57], %81 {strides = array<i32>} : memref<8x24x128xf32, #tpu.memory_space<vmem>>, vector<8x8x128xf32>,
    return
  }
  func.func @transform_0(%arg0: i32) -> (i32, i32, i32) {
    %c0_i32 = arith.constant 0 : i32
    %c0_i32_0 = arith.constant 0 : i32
    %c0_i32_1 = arith.constant 0 : i32
    return %arg0, %c0_i32, %c0_i32_0 : i32, i32, i32
  }
  func.func @transform_1(%arg0: i32) -> (i32, i32, i32) {
    %c0_i32 = arith.constant 0 : i32
    %c0_i32_0 = arith.constant 0 : i32
    %c0_i32_1 = arith.constant 0 : i32
    return %arg0, %c0_i32, %c0_i32_0 : i32, i32, i32
  }
  func.func @transform_2(%arg0: i32) -> (i32, i32, i32) {
    %c0_i32 = arith.constant 0 : i32
    %c0_i32_0 = arith.constant 0 : i32
    %c0_i32_1 = arith.constant 0 : i32
    return %arg0, %c0_i32, %c0_i32_0 : i32, i32, i32
  }
  func.func @transform_3(%arg0: i32) -> (i32, i32, i32) {
    %c0_i32 = arith.constant 0 : i32
    %c0_i32_0 = arith.constant 0 : i32
    %c0_i32_1 = arith.constant 0 : i32
    return %arg0, %c0_i32, %c0_i32_0 : i32, i32, i32
  }
  func.func @transform_4(%arg0: i32) -> (i32, i32, i32) {
    %c0_i32 = arith.constant 0 : i32
    %c0_i32_0 = arith.constant 0 : i32
    %c0_i32_1 = arith.constant 0 : i32
    return %arg0, %c0_i32, %c0_i32_0 : i32, i32, i32
  }
}

</mosaic_0001>

<llo_original>
// kernel: dy_mixprop_forward.1
$region0: #{dy_mixprop_forward.1}
  #allocation0 [shape = 'u32[]', space=smem, size = 0x4, offset = 0x4, fixed_abs, tag = 'smem constant byte address 0x4 - core index']
  #allocation1 [shape = 'u32[144,128]{1,0:T(1,128)}', space=vmem, size = 0x12000, scoped, tag = 'internal scratch']
  %s0 = inlined_call_operand.hbm [shape: f32[16,8,128], index: 0, kind: input, shape index: {}]
  %s1 = inlined_call_operand.hbm [shape: f32[16,8,128], index: 1, kind: input, shape index: {}]
  %s2 = inlined_call_operand.hbm [shape: f32[16,8,128], index: 2, kind: input, shape index: {}]
  %s3 = inlined_call_operand.hbm [shape: f32[16,24,128], index: 3, kind: output, shape index: {0}]
  %s4 = inlined_call_operand.hbm [shape: f32[16,24,128], index: 4, kind: output, shape index: {1}]
  %5 = xla_tuple %s3, %s4
  %s6 = sld [smem:[#allocation0]]
  $region65: #{dy_mixprop_forward.1} parent=0
    _
  %s8 = ssub.s32 1, %s6
  %s9 = scalar_select 0, %s8, %s6
  $region1: #{dy_mixprop_forward.1} parent=0
    #allocation2 [shape = 'u8[65536]{0}', space=vmem, size = 0x10000, scoped, tag = 'input window, operand 0']
    #allocation3 [shape = 's32[2]{0}', space=sflag, size = 0x8, scoped, tag = 'scoped memory for dy_mixprop_forward.1']
    #allocation4 [shape = 's32[2]{0}', space=sflag, size = 0x8, scoped, tag = 'scoped memory for dy_mixprop_forward.1']
    #allocation5 [shape = 'u8[65536]{0}', space=vmem, size = 0x10000, scoped, tag = 'input window, operand 1']
    #allocation6 [shape = 's32[2]{0}', space=sflag, size = 0x8, scoped, tag = 'scoped memory for dy_mixprop_forward.1']
    #allocation7 [shape = 'u8[65536]{0}', space=vmem, size = 0x10000, scoped, tag = 'input window, operand 2']
    #allocation8 [shape = 'u8[196608]{0}', space=vmem, size = 0x30000, scoped, tag = 'output window, operand 0']
    #allocation9 [shape = 'u8[196608]{0}', space=vmem, size = 0x30000, scoped, tag = 'output window, operand 1']
    #allocation10 [shape = 's32[2]{0}', space=sflag, size = 0x8, scoped, tag = 'scoped memory for dy_mixprop_forward.1']
    %10 = vsyncpa [#allocation3], 0
    %s11 = scalar_lea.sflag [#allocation3], 1
    %12 = vsyncpa %s11, 0
    %13 = vsyncpa [#allocation6], 0
    %s14 = scalar_lea.sflag [#allocation6], 1
    %15 = vsyncpa %s14, 0
    %16 = vsyncpa [#allocation4], 0
    %s17 = scalar_lea.sflag [#allocation4], 1
    %18 = vsyncpa %s17, 0
    %19 = vsyncpa [#allocation10], 0
    %s20 = scalar_lea.sflag [#allocation10], 1
    %21 = vsyncpa %s20, 0
    loop: start=0, step=1, limit=4
    $region2: #{dy_mixprop_forward.1} parent=1 // loop_pre_header
      _
    $region3: #{dy_mixprop_forward.1} parent=1 // loop_header
      %s23 = sphi 0, %s27
      %p24 = scmp.ge.s32.totalorder %s23, 4
      %s33 = sphi 0, %s35
      %s36 = sphi 0, %s33
      %s37 = sphi 0, %s36
      %s53 = sphi 0, %s37
      %s59 = sphi 0, %s61
      %s62 = sphi 0, %s59
      %s63 = sphi 0, %s62
      %s79 = sphi 0, %s63
      %s85 = sphi 0, %s87
      %s88 = sphi 0, %s85
      %s89 = sphi 0, %s88
      %s105 = sphi 0, %s89
      %s111 = sphi 0, %s113
      %s114 = sphi 0, %s111
      %s115 = sphi 0, %s114
      %s131 = sphi 0, %s115
      %s137 = sphi 0, %s139
      %s140 = sphi 0, %s137
      %s141 = sphi 0, %s140
      %s157 = sphi 0, %s141
    $region4: #{dy_mixprop_forward.1} parent=1 // loop_header_branch
      %26 = sbr.rel (%p24) target = $region8
    $region5: #{dy_mixprop_forward.1} parent=1 // loop_body
      %s28 = ssub.s32 %s23, 1
      %s29 = ssub.s32 %s23, 2
      %s30 = sadd.s32 %s23, 1
      %s31 = ssub.s32 %s23, %s30
      %p32 = scmp.eq.s32.totalorder %s31, 0
      %s34 = sadd.s32 %s33, 1
      %s35 = scalar_select %p32, %s33, %s34
      %p38 = pneg %p32
      %p39 = scmp.eq.s32.totalorder %s23, 1
      %p40 = por %p38, %p39
      %p41 = scmp.ne.s32.totalorder %s33, %s36
      %p42 = scmp.eq.s32.totalorder %s23, 0
      %p43 = por %p41, %p42
      %p44 = scmp.ne.s32.totalorder %s33, %s36
      %p45 = scmp.eq.s32.totalorder %s28, 1
      %p46 = por %p44, %p45
      %p47 = scmp.ne.s32.totalorder %s36, %s37
      %p48 = scmp.eq.s32.totalorder %s28, 0
      %p49 = por %p47, %p48
      %p50 = scmp.ne.s32.totalorder %s36, %s37
      %p51 = scmp.eq.s32.totalorder %s29, 1
      %p52 = por %p50, %p51
      %p54 = scmp.ne.s32.totalorder %s37, %s53
      %p55 = scmp.eq.s32.totalorder %s29, 0
      %p56 = por %p54, %p55
      %s57 = ssub.s32 %s23, %s30
      %p58 = scmp.eq.s32.totalorder %s57, 0
      %s60 = sadd.s32 %s59, 1
      %s61 = scalar_select %p58, %s59, %s60
      %p64 = pneg %p58
      %p65 = scmp.eq.s32.totalorder %s23, 1
      %p66 = por %p64, %p65
      %p67 = scmp.ne.s32.totalorder %s59, %s62
      %p68 = scmp.eq.s32.totalorder %s23, 0
      %p69 = por %p67, %p68
      %p70 = scmp.ne.s32.totalorder %s59, %s62
      %p71 = scmp.eq.s32.totalorder %s28, 1
      %p72 = por %p70, %p71
      %p73 = scmp.ne.s32.totalorder %s62, %s63
      %p74 = scmp.eq.s32.totalorder %s28, 0
      %p75 = por %p73, %p74
      %p76 = scmp.ne.s32.totalorder %s62, %s63
      %p77 = scmp.eq.s32.totalorder %s29, 1
      %p78 = por %p76, %p77
      %p80 = scmp.ne.s32.totalorder %s63, %s79
      %p81 = scmp.eq.s32.totalorder %s29, 0
      %p82 = por %p80, %p81
      %s83 = ssub.s32 %s23, %s30
      %p84 = scmp.eq.s32.totalorder %s83, 0
      %s86 = sadd.s32 %s85, 1
      %s87 = scalar_select %p84, %s85, %s86
      %p90 = pneg %p84
      %p91 = scmp.eq.s32.totalorder %s23, 1
      %p92 = por %p90, %p91
      %p93 = scmp.ne.s32.totalorder %s85, %s88
      %p94 = scmp.eq.s32.totalorder %s23, 0
      %p95 = por %p93, %p94
      %p96 = scmp.ne.s32.totalorder %s85, %s88
      %p97 = scmp.eq.s32.totalorder %s28, 1
      %p98 = por %p96, %p97
      %p99 = scmp.ne.s32.totalorder %s88, %s89
      %p100 = scmp.eq.s32.totalorder %s28, 0
      %p101 = por %p99, %p100
      %p102 = scmp.ne.s32.totalorder %s88, %s89
      %p103 = scmp.eq.s32.totalorder %s29, 1
      %p104 = por %p102, %p103
      %p106 = scmp.ne.s32.totalorder %s89, %s105
      %p107 = scmp.eq.s32.totalorder %s29, 0
      %p108 = por %p106, %p107
      %s109 = ssub.s32 %s23, %s30
      %p110 = scmp.eq.s32.totalorder %s109, 0
      %s112 = sadd.s32 %s111, 1
      %s113 = scalar_select %p110, %s111, %s112
      %p116 = pneg %p110
      %p117 = scmp.eq.s32.totalorder %s23, 1
      %p118 = por %p116, %p117
      %p119 = scmp.ne.s32.totalorder %s111, %s114
      %p120 = scmp.eq.s32.totalorder %s23, 0
      %p121 = por %p119, %p120
      %p122 = scmp.ne.s32.totalorder %s111, %s114
      %p123 = scmp.eq.s32.totalorder %s28, 1
      %p124 = por %p122, %p123
      %p125 = scmp.ne.s32.totalorder %s114, %s115
      %p126 = scmp.eq.s32.totalorder %s28, 0
      %p127 = por %p125, %p126
      %p128 = scmp.ne.s32.totalorder %s114, %s115
      %p129 = scmp.eq.s32.totalorder %s29, 1
      %p130 = por %p128, %p129
      %p132 = scmp.ne.s32.totalorder %s115, %s131
      %p133 = scmp.eq.s32.totalorder %s29, 0
      %p134 = por %p132, %p133
      %s135 = ssub.s32 %s23, %s30
      %p136 = scmp.eq.s32.totalorder %s135, 0
      %s138 = sadd.s32 %s137, 1
      %s139 = scalar_select %p136, %s137, %s138
      %p142 = pneg %p136
      %p143 = scmp.eq.s32.totalorder %s23, 1
      %p144 = por %p142, %p143
      %p145 = scmp.ne.s32.totalorder %s137, %s140
      %p146 = scmp.eq.s32.totalorder %s23, 0
      %p147 = por %p145, %p146
      %p148 = scmp.ne.s32.totalorder %s137, %s140
      %p149 = scmp.eq.s32.totalorder %s28, 1
      %p150 = por %p148, %p149
      %p151 = scmp.ne.s32.totalorder %s140, %s141
      %p152 = scmp.eq.s32.totalorder %s28, 0
      %p153 = por %p151, %p152
      %p154 = scmp.ne.s32.totalorder %s140, %s141
      %p155 = scmp.eq.s32.totalorder %s29, 1
      %p156 = por %p154, %p155
      %p158 = scmp.ne.s32.totalorder %s141, %s157
      %p159 = scmp.eq.s32.totalorder %s29, 0
      %p160 = por %p158, %p159
      %p161 = scmp.le.s32.totalorder 1, %s23
      %p162 = scmp.lt.s32.totalorder %s23, 3
      %p163 = pnand %p161, %p162
      %p164 = pneg %p163
      // Predicated region
      $region9: #{dy_mixprop_forward.1} parent=5 // pred_check
        _
      $region10: #{dy_mixprop_forward.1} parent=5 // pred_check_branch
        %166 = sbr.rel (%p163) target = $region12
      $region11: #{dy_mixprop_forward.1} parent=5 // pred_region
        %s167 = ssub.s32 %s23, 1
      $region12: #{dy_mixprop_forward.1} parent=5 // pred_fallthru
        _
      %p168 = scmp.lt.s32.totalorder %s23, 2
      // Predicated region
      $region13: #{dy_mixprop_forward.1} parent=5 // pred_check
        %p169 = pneg %p168
      $region14: #{dy_mixprop_forward.1} parent=5 // pred_check_branch
        %171 = sbr.rel (%p169) target = $region16
      $region15: #{dy_mixprop_forward.1} parent=5 // pred_region
        // Predicated region
        $region17: #{dy_mixprop_forward.1} parent=15 // pred_check
          %p172 = pneg %p43
        $region18: #{dy_mixprop_forward.1} parent=15 // pred_check_branch
          %174 = sbr.rel (%p172) target = $region20
        $region19: #{dy_mixprop_forward.1} parent=15 // pred_region
          %s175 = sand.u32 %s33, 1
          %s176 = scalar_lea.sflag [#allocation3], %s175
          %s177 = sand.u32 %s33, 1
          %s178 = smul.addr %s177, 64
          %s179 = scalar_lea.vmem [#allocation2], %s178
          %s180 = smul.u32 8, %s23
          %s182 = ssub.s32 1024, 1024
          %183 = vsyncadd %s176, %s182
          %s184 = smul.addr %s180, 128
          %s185 = scalar_lea.hbm %s0, %s184
          %s186 = sshll.u32 %s179, 4
          %s187 = int_to_ptr.vmem [resolvable:$true] %s186
          %192 = dma.hbm_to_vmem [thread:$0]  %s185, 1024, %s187, %s176, 128, 128, 8
        $region20: #{dy_mixprop_forward.1} parent=15 // pred_fallthru
          _
        // Predicated region
        $region21: #{dy_mixprop_forward.1} parent=15 // pred_check
          %p193 = pneg %p69
        $region22: #{dy_mixprop_forward.1} parent=15 // pred_check_branch
          %195 = sbr.rel (%p193) target = $region24
        $region23: #{dy_mixprop_forward.1} parent=15 // pred_region
          %s196 = sand.u32 %s23, 1
          %s197 = scalar_lea.sflag [#allocation6], %s196
          %s198 = sand.u32 %s59, 1
          %s199 = smul.addr %s198, 64
          %s200 = scalar_lea.vmem [#allocation5], %s199
          %s201 = smul.u32 8, %s23
          %s203 = ssub.s32 1024, 1024
          %204 = vsyncadd %s197, %s203
          %s205 = smul.addr %s201, 128
          %s206 = scalar_lea.hbm %s1, %s205
          %s207 = sshll.u32 %s200, 4
          %s208 = int_to_ptr.vmem [resolvable:$true] %s207
          %213 = dma.hbm_to_vmem [thread:$0]  %s206, 1024, %s208, %s197, 128, 128, 8
        $region24: #{dy_mixprop_forward.1} parent=15 // pred_fallthru
          _
        // Predicated region
        $region25: #{dy_mixprop_forward.1} parent=15 // pred_check
          %p214 = pneg %p95
        $region26: #{dy_mixprop_forward.1} parent=15 // pred_check_branch
          %216 = sbr.rel (%p214) target = $region28
        $region27: #{dy_mixprop_forward.1} parent=15 // pred_region
          %s217 = sand.u32 %s23, 1
          %s218 = scalar_lea.sflag [#allocation6], %s217
          %s219 = sand.u32 %s85, 1
          %s220 = smul.addr %s219, 64
          %s221 = scalar_lea.vmem [#allocation7], %s220
          %s222 = smul.u32 8, %s23
          %s224 = ssub.s32 1024, 1024
          %225 = vsyncadd %s218, %s224
          %s226 = smul.addr %s222, 128
          %s227 = scalar_lea.hbm %s2, %s226
          %s228 = sshll.u32 %s221, 4
          %s229 = int_to_ptr.vmem [resolvable:$true] %s228
          %234 = dma.hbm_to_vmem [thread:$0]  %s227, 1024, %s229, %s218, 128, 128, 8
        $region28: #{dy_mixprop_forward.1} parent=15 // pred_fallthru
          _
      $region16: #{dy_mixprop_forward.1} parent=5 // pred_fallthru
        _
      %p235 = scmp.le.s32.totalorder 1, %s23
      %p236 = scmp.lt.s32.totalorder %s23, 3
      %p237 = pnand %p235, %p236
      %p238 = pneg %p237
      // Predicated region
      $region29: #{dy_mixprop_forward.1} parent=5 // pred_check
        _
      $region30: #{dy_mixprop_forward.1} parent=5 // pred_check_branch
        %240 = sbr.rel (%p237) target = $region32
      $region31: #{dy_mixprop_forward.1} parent=5 // pred_region
        %s241 = ssub.s32 %s23, 1
        %s242 = sand.u32 %s36, 1
        %s243 = scalar_lea.sflag [#allocation3], %s242
        %s244 = sand.u32 %s36, 1
        %s245 = smul.addr %s244, 64
        %s246 = scalar_lea.vmem [#allocation2], %s245
        // Predicated region
        $region33: #{dy_mixprop_forward.1} parent=31 // pred_check
          %p247 = pneg %p49
        $region34: #{dy_mixprop_forward.1} parent=31 // pred_check_branch
          %249 = sbr.rel (%p247) target = $region36
        $region35: #{dy_mixprop_forward.1} parent=31 // pred_region
          %250 = dma.done %s243, 1024
        $region36: #{dy_mixprop_forward.1} parent=31 // pred_fallthru
          _
        %s251 = sand.u32 %s28, 1
        %s252 = scalar_lea.sflag [#allocation6], %s251
        %s253 = sand.u32 %s62, 1
        %s254 = smul.addr %s253, 64
        %s255 = scalar_lea.vmem [#allocation5], %s254
        // Predicated region
        $region37: #{dy_mixprop_forward.1} parent=31 // pred_check
          %p256 = pneg %p75
        $region38: #{dy_mixprop_forward.1} parent=31 // pred_check_branch
          %258 = sbr.rel (%p256) target = $region40
        $region39: #{dy_mixprop_forward.1} parent=31 // pred_region
          %259 = dma.done %s252, 1024
        $region40: #{dy_mixprop_forward.1} parent=31 // pred_fallthru
          _
        %s260 = sand.u32 %s28, 1
        %s261 = scalar_lea.sflag [#allocation6], %s260
        %s262 = sand.u32 %s88, 1
        %s263 = smul.addr %s262, 64
        %s264 = scalar_lea.vmem [#allocation7], %s263
        // Predicated region
        $region41: #{dy_mixprop_forward.1} parent=31 // pred_check
          %p265 = pneg %p101
        $region42: #{dy_mixprop_forward.1} parent=31 // pred_check_branch
          %267 = sbr.rel (%p265) target = $region44
        $region43: #{dy_mixprop_forward.1} parent=31 // pred_region
          %268 = dma.done %s261, 1024
        $region44: #{dy_mixprop_forward.1} parent=31 // pred_fallthru
          _
        %s269 = sand.u32 %s36, 1
        %s270 = scalar_lea.sflag [#allocation3], %s269
        %s271 = sand.u32 %s36, 1
        %s272 = smul.addr %s271, 64
        %s273 = scalar_lea.vmem [#allocation2], %s272
        %p274 = pneg %p49
        %p275 = pneg %p46
        %s276 = sand.u32 %s28, 1
        %s277 = scalar_lea.sflag [#allocation6], %s276
        %s278 = sand.u32 %s62, 1
        %s279 = smul.addr %s278, 64
        %s280 = scalar_lea.vmem [#allocation5], %s279
        %p281 = pneg %p75
        %p282 = pneg %p72
        %s283 = sand.u32 %s28, 1
        %s284 = scalar_lea.sflag [#allocation6], %s283
        %s285 = sand.u32 %s88, 1
        %s286 = smul.addr %s285, 64
        %s287 = scalar_lea.vmem [#allocation7], %s286
        %p288 = pneg %p101
        %p289 = pneg %p98
        %p290 = pneg %p127
        %p291 = pneg %p124
        %s292 = sand.u32 %s114, 1
        %s293 = scalar_lea.sflag [#allocation4], %s292
        %s294 = sand.u32 %s114, 1
        %s295 = smul.addr %s294, 192
        %s296 = scalar_lea.vmem [#allocation8], %s295
        %p297 = pneg %p153
        %p298 = pneg %p150
        %s299 = sand.u32 %s140, 1
        %s300 = scalar_lea.sflag [#allocation10], %s299
        %s301 = sand.u32 %s140, 1
        %s302 = smul.addr %s301, 192
        %s303 = scalar_lea.vmem [#allocation9], %s302
        %s304 = smul.u32 8, %s28
        %s305 = smul.u32 8, %s28
        %s306 = smul.u32 8, %s28
        %s307 = smul.u32 8, %s28
        %s308 = smul.u32 8, %s28
        %v309 = vld [vmem:[%s246] sm:$0xff]
        %v310 = vld [vmem:[%s246 + $0x8] sm:$0xff]
        %v311 = vld [vmem:[%s246 + $0x10] sm:$0xff]
        %v312 = vld [vmem:[%s246 + $0x18] sm:$0xff]
        %v313 = vld [vmem:[%s246 + $0x20] sm:$0xff]
        %v314 = vld [vmem:[%s246 + $0x28] sm:$0xff]
        %v315 = vld [vmem:[%s246 + $0x30] sm:$0xff]
        %v316 = vld [vmem:[%s246 + $0x38] sm:$0xff]
        %v317 = vlaneseq
        %v318 = vand.u32 %v317, 127
        %v319 = vlaneseq
        %v320 = vshrl.u32 %v319, 7
        %v321 = vadd.s32 %v320, 8
        %v322 = vadd.s32 %v320, 16
        %v323 = vadd.s32 %v320, 24
        %v324 = vadd.s32 %v320, 32
        %v325 = vadd.s32 %v320, 40
        %v326 = vadd.s32 %v320, 48
        %v327 = vadd.s32 %v320, 56
        %v328 = vadd.s32 %v320, 64
        %v329 = vadd.s32 %v320, 72
        %v330 = vadd.s32 %v320, 80
        %v331 = vadd.s32 %v320, 88
        %v332 = vadd.s32 %v320, 96
        %v333 = vadd.s32 %v320, 104
        %v334 = vadd.s32 %v320, 112
        %v335 = vadd.s32 %v320, 120
        %vm336 = vcmp.lt.s32.totalorder %v318, 16
        %vm337 = vcmp.lt.s32.totalorder %v320, 16
        %vm338 = vcmp.lt.s32.totalorder %v321, 16
        %vm339 = vcmp.lt.s32.totalorder %v322, 16
        %vm340 = vcmp.lt.s32.totalorder %v323, 16
        %vm341 = vcmp.lt.s32.totalorder %v324, 16
        %vm342 = vcmp.lt.s32.totalorder %v325, 16
        %vm343 = vcmp.lt.s32.totalorder %v326, 16
        %vm344 = vcmp.lt.s32.totalorder %v327, 16
        %vm345 = vcmp.lt.s32.totalorder %v328, 16
        %vm346 = vcmp.lt.s32.totalorder %v329, 16
        %vm347 = vcmp.lt.s32.totalorder %v330, 16
        %vm348 = vcmp.lt.s32.totalorder %v331, 16
        %vm349 = vcmp.lt.s32.totalorder %v332, 16
        %vm350 = vcmp.lt.s32.totalorder %v333, 16
        %vm351 = vcmp.lt.s32.totalorder %v334, 16
        %vm352 = vcmp.lt.s32.totalorder %v335, 16
        %v353 = vld [vmem:[%s255] sm:$0xff]
        %v354 = vld [vmem:[%s255 + $0x8] sm:$0xff]
        %v355 = vld [vmem:[%s255 + $0x10] sm:$0xff]
        %v356 = vld [vmem:[%s255 + $0x18] sm:$0xff]
        %v357 = vld [vmem:[%s255 + $0x20] sm:$0xff]
        %v358 = vld [vmem:[%s255 + $0x28] sm:$0xff]
        %v359 = vld [vmem:[%s255 + $0x30] sm:$0xff]
        %v360 = vld [vmem:[%s255 + $0x38] sm:$0xff]
        %361 = vxpose.xlu0.b32.start [1/16] %v353, 128
        %362 = vxpose.xlu0.b32.cont [2/16] 0.0, 128
        %363 = vxpose.xlu0.b32.cont [3/16] 0.0, 128
        %364 = vxpose.xlu0.b32.cont [4/16] 0.0, 128
        %365 = vxpose.xlu0.b32.cont [5/16] 0.0, 128
        %366 = vxpose.xlu0.b32.cont [6/16] 0.0, 128
        %367 = vxpose.xlu0.b32.cont [7/16] 0.0, 128
        %368 = vxpose.xlu0.b32.cont [8/16] 0.0, 128
        %369 = vxpose.xlu0.b32.cont [9/16] 0.0, 128
        %370 = vxpose.xlu0.b32.cont [10/16] 0.0, 128
        %371 = vxpose.xlu0.b32.cont [11/16] 0.0, 128
        %372 = vxpose.xlu0.b32.cont [12/16] 0.0, 128
        %373 = vxpose.xlu0.b32.cont [13/16] 0.0, 128
        %374 = vxpose.xlu0.b32.cont [14/16] 0.0, 128
        %375 = vxpose.xlu0.b32.cont [15/16] 0.0, 128
        %376 = vxpose.xlu0.b32.end [16/16] 0.0, 128
        %v377 = vpop.trf.xlu0
        %v378 = vpop.trf.xlu0
        %v379 = vpop.trf.xlu0
        %v380 = vpop.trf.xlu0
        %v381 = vpop.trf.xlu0
        %v382 = vpop.trf.xlu0
        %v383 = vpop.trf.xlu0
        %v384 = vpop.trf.xlu0
        %v385 = vpop.trf.xlu0
        %v386 = vpop.trf.xlu0
        %v387 = vpop.trf.xlu0
        %v388 = vpop.trf.xlu0
        %v389 = vpop.trf.xlu0
        %v390 = vpop.trf.xlu0
        %v391 = vpop.trf.xlu0
        %v392 = vpop.trf.xlu0
        %393 = vxpose.xlu0.b32.start [1/16] %v354, 128
        %394 = vxpose.xlu0.b32.cont [2/16] 0.0, 128
        %395 = vxpose.xlu0.b32.cont [3/16] 0.0, 128
        %396 = vxpose.xlu0.b32.cont [4/16] 0.0, 128
        %397 = vxpose.xlu0.b32.cont [5/16] 0.0, 128
        %398 = vxpose.xlu0.b32.cont [6/16] 0.0, 128
        %399 = vxpose.xlu0.b32.cont [7/16] 0.0, 128
        %400 = vxpose.xlu0.b32.cont [8/16] 0.0, 128
        %401 = vxpose.xlu0.b32.cont [9/16] 0.0, 128
        %402 = vxpose.xlu0.b32.cont [10/16] 0.0, 128
        %403 = vxpose.xlu0.b32.cont [11/16] 0.0, 128
        %404 = vxpose.xlu0.b32.cont [12/16] 0.0, 128
        %405 = vxpose.xlu0.b32.cont [13/16] 0.0, 128
        %406 = vxpose.xlu0.b32.cont [14/16] 0.0, 128
        %407 = vxpose.xlu0.b32.cont [15/16] 0.0, 128
        %408 = vxpose.xlu0.b32.end [16/16] 0.0, 128
        %v409 = vpop.trf.xlu0
        %v410 = vpop.trf.xlu0
        %v411 = vpop.trf.xlu0
        %v412 = vpop.trf.xlu0
        %v413 = vpop.trf.xlu0
        %v414 = vpop.trf.xlu0
        %v415 = vpop.trf.xlu0
        %v416 = vpop.trf.xlu0
        %v417 = vpop.trf.xlu0
        %v418 = vpop.trf.xlu0
        %v419 = vpop.trf.xlu0
        %v420 = vpop.trf.xlu0
        %v421 = vpop.trf.xlu0
        %v422 = vpop.trf.xlu0
        %v423 = vpop.trf.xlu0
        %v424 = vpop.trf.xlu0
        %425 = vxpose.xlu0.b32.start [1/16] %v355, 128
        %426 = vxpose.xlu0.b32.cont [2/16] 0.0, 128
        %427 = vxpose.xlu0.b32.cont [3/16] 0.0, 128
        %428 = vxpose.xlu0.b32.cont [4/16] 0.0, 128
        %429 = vxpose.xlu0.b32.cont [5/16] 0.0, 128
        %430 = vxpose.xlu0.b32.cont [6/16] 0.0, 128
        %431 = vxpose.xlu0.b32.cont [7/16] 0.0, 128
        %432 = vxpose.xlu0.b32.cont [8/16] 0.0, 128
        %433 = vxpose.xlu0.b32.cont [9/16] 0.0, 128
        %434 = vxpose.xlu0.b32.cont [10/16] 0.0, 128
        %435 = vxpose.xlu0.b32.cont [11/16] 0.0, 128
        %436 = vxpose.xlu0.b32.cont [12/16] 0.0, 128
        %437 = vxpose.xlu0.b32.cont [13/16] 0.0, 128
        %438 = vxpose.xlu0.b32.cont [14/16] 0.0, 128
        %439 = vxpose.xlu0.b32.cont [15/16] 0.0, 128
        %440 = vxpose.xlu0.b32.end [16/16] 0.0, 128
        %v441 = vpop.trf.xlu0
        %v442 = vpop.trf.xlu0
        %v443 = vpop.trf.xlu0
        %v444 = vpop.trf.xlu0
        %v445 = vpop.trf.xlu0
        %v446 = vpop.trf.xlu0
        %v447 = vpop.trf.xlu0
        %v448 = vpop.trf.xlu0
        %v449 = vpop.trf.xlu0
        %v450 = vpop.trf.xlu0
        %v451 = vpop.trf.xlu0
        %v452 = vpop.trf.xlu0
        %v453 = vpop.trf.xlu0
        %v454 = vpop.trf.xlu0
        %v455 = vpop.trf.xlu0
        %v456 = vpop.trf.xlu0
        %457 = vxpose.xlu0.b32.start [1/16] %v356, 128
        %458 = vxpose.xlu0.b32.cont [2/16] 0.0, 128
        %459 = vxpose.xlu0.b32.cont [3/16] 0.0, 128
        %460 = vxpose.xlu0.b32.cont [4/16] 0.0, 128
        %461 = vxpose.xlu0.b32.cont [5/16] 0.0, 128
        %462 = vxpose.xlu0.b32.cont [6/16] 0.0, 128
        %463 = vxpose.xlu0.b32.cont [7/16] 0.0, 128
        %464 = vxpose.xlu0.b32.cont [8/16] 0.0, 128
        %465 = vxpose.xlu0.b32.cont [9/16] 0.0, 128
        %466 = vxpose.xlu0.b32.cont [10/16] 0.0, 128
        %467 = vxpose.xlu0.b32.cont [11/16] 0.0, 128
        %468 = vxpose.xlu0.b32.cont [12/16] 0.0, 128
        %469 = vxpose.xlu0.b32.cont [13/16] 0.0, 128
        %470 = vxpose.xlu0.b32.cont [14/16] 0.0, 128
        %471 = vxpose.xlu0.b32.cont [15/16] 0.0, 128
        %472 = vxpose.xlu0.b32.end [16/16] 0.0, 128
        %v473 = vpop.trf.xlu0
        %v474 = vpop.trf.xlu0
        %v475 = vpop.trf.xlu0
        %v476 = vpop.trf.xlu0
        %v477 = vpop.trf.xlu0
        %v478 = vpop.trf.xlu0
        %v479 = vpop.trf.xlu0
        %v480 = vpop.trf.xlu0
        %v481 = vpop.trf.xlu0
        %v482 = vpop.trf.xlu0
        %v483 = vpop.trf.xlu0
        %v484 = vpop.trf.xlu0
        %v485 = vpop.trf.xlu0
        %v486 = vpop.trf.xlu0
        %v487 = vpop.trf.xlu0
        %v488 = vpop.trf.xlu0
        %489 = vxpose.xlu0.b32.start [1/16] %v357, 128
        %490 = vxpose.xlu0.b32.cont [2/16] 0.0, 128
        %491 = vxpose.xlu0.b32.cont [3/16] 0.0, 128
        %492 = vxpose.xlu0.b32.cont [4/16] 0.0, 128
        %493 = vxpose.xlu0.b32.cont [5/16] 0.0, 128
        %494 = vxpose.xlu0.b32.cont [6/16] 0.0, 128
        %495 = vxpose.xlu0.b32.cont [7/16] 0.0, 128
        %496 = vxpose.xlu0.b32.cont [8/16] 0.0, 128
        %497 = vxpose.xlu0.b32.cont [9/16] 0.0, 128
        %498 = vxpose.xlu0.b32.cont [10/16] 0.0, 128
        %499 = vxpose.xlu0.b32.cont [11/16] 0.0, 128
        %500 = vxpose.xlu0.b32.cont [12/16] 0.0, 128
        %501 = vxpose.xlu0.b32.cont [13/16] 0.0, 128
        %502 = vxpose.xlu0.b32.cont [14/16] 0.0, 128
        %503 = vxpose.xlu0.b32.cont [15/16] 0.0, 128
        %504 = vxpose.xlu0.b32.end [16/16] 0.0, 128
        %v505 = vpop.trf.xlu0
        %v506 = vpop.trf.xlu0
        %v507 = vpop.trf.xlu0
        %v508 = vpop.trf.xlu0
        %v509 = vpop.trf.xlu0
        %v510 = vpop.trf.xlu0
        %v511 = vpop.trf.xlu0
        %v512 = vpop.trf.xlu0
        %v513 = vpop.trf.xlu0
        %v514 = vpop.trf.xlu0
        %v515 = vpop.trf.xlu0
        %v516 = vpop.trf.xlu0
        %v517 = vpop.trf.xlu0
        %v518 = vpop.trf.xlu0
        %v519 = vpop.trf.xlu0
        %v520 = vpop.trf.xlu0
        %521 = vxpose.xlu0.b32.start [1/16] %v358, 128
        %522 = vxpose.xlu0.b32.cont [2/16] 0.0, 128
        %523 = vxpose.xlu0.b32.cont [3/16] 0.0, 128
        %524 = vxpose.xlu0.b32.cont [4/16] 0.0, 128
        %525 = vxpose.xlu0.b32.cont [5/16] 0.0, 128
        %526 = vxpose.xlu0.b32.cont [6/16] 0.0, 128
        %527 = vxpose.xlu0.b32.cont [7/16] 0.0, 128
        %528 = vxpose.xlu0.b32.cont [8/16] 0.0, 128
        %529 = vxpose.xlu0.b32.cont [9/16] 0.0, 128
        %530 = vxpose.xlu0.b32.cont [10/16] 0.0, 128
        %531 = vxpose.xlu0.b32.cont [11/16] 0.0, 128
        %532 = vxpose.xlu0.b32.cont [12/16] 0.0, 128
        %533 = vxpose.xlu0.b32.cont [13/16] 0.0, 128
        %534 = vxpose.xlu0.b32.cont [14/16] 0.0, 128
        %535 = vxpose.xlu0.b32.cont [15/16] 0.0, 128
        %536 = vxpose.xlu0.b32.end [16/16] 0.0, 128
        %v537 = vpop.trf.xlu0
        %v538 = vpop.trf.xlu0
        %v539 = vpop.trf.xlu0
        %v540 = vpop.trf.xlu0
        %v541 = vpop.trf.xlu0
        %v542 = vpop.trf.xlu0
        %v543 = vpop.trf.xlu0
        %v544 = vpop.trf.xlu0
        %v545 = vpop.trf.xlu0
        %v546 = vpop.trf.xlu0
        %v547 = vpop.trf.xlu0
        %v548 = vpop.trf.xlu0
        %v549 = vpop.trf.xlu0
        %v550 = vpop.trf.xlu0
        %v551 = vpop.trf.xlu0
        %v552 = vpop.trf.xlu0
        %553 = vxpose.xlu0.b32.start [1/16] %v359, 128
        %554 = vxpose.xlu0.b32.cont [2/16] 0.0, 128
        %555 = vxpose.xlu0.b32.cont [3/16] 0.0, 128
        %556 = vxpose.xlu0.b32.cont [4/16] 0.0, 128
        %557 = vxpose.xlu0.b32.cont [5/16] 0.0, 128
        %558 = vxpose.xlu0.b32.cont [6/16] 0.0, 128
        %559 = vxpose.xlu0.b32.cont [7/16] 0.0, 128
        %560 = vxpose.xlu0.b32.cont [8/16] 0.0, 128
        %561 = vxpose.xlu0.b32.cont [9/16] 0.0, 128
        %562 = vxpose.xlu0.b32.cont [10/16] 0.0, 128
        %563 = vxpose.xlu0.b32.cont [11/16] 0.0, 128
        %564 = vxpose.xlu0.b32.cont [12/16] 0.0, 128
        %565 = vxpose.xlu0.b32.cont [13/16] 0.0, 128
        %566 = vxpose.xlu0.b32.cont [14/16] 0.0, 128
        %567 = vxpose.xlu0.b32.cont [15/16] 0.0, 128
        %568 = vxpose.xlu0.b32.end [16/16] 0.0, 128
        %v569 = vpop.trf.xlu0
        %v570 = vpop.trf.xlu0
        %v571 = vpop.trf.xlu0
        %v572 = vpop.trf.xlu0
        %v573 = vpop.trf.xlu0
        %v574 = vpop.trf.xlu0
        %v575 = vpop.trf.xlu0
        %v576 = vpop.trf.xlu0
        %v577 = vpop.trf.xlu0
        %v578 = vpop.trf.xlu0
        %v579 = vpop.trf.xlu0
        %v580 = vpop.trf.xlu0
        %v581 = vpop.trf.xlu0
        %v582 = vpop.trf.xlu0
        %v583 = vpop.trf.xlu0
        %v584 = vpop.trf.xlu0
        %585 = vxpose.xlu0.b32.start [1/16] %v360, 128
        %586 = vxpose.xlu0.b32.cont [2/16] 0.0, 128
        %587 = vxpose.xlu0.b32.cont [3/16] 0.0, 128
        %588 = vxpose.xlu0.b32.cont [4/16] 0.0, 128
        %589 = vxpose.xlu0.b32.cont [5/16] 0.0, 128
        %590 = vxpose.xlu0.b32.cont [6/16] 0.0, 128
        %591 = vxpose.xlu0.b32.cont [7/16] 0.0, 128
        %592 = vxpose.xlu0.b32.cont [8/16] 0.0, 128
        %593 = vxpose.xlu0.b32.cont [9/16] 0.0, 128
        %594 = vxpose.xlu0.b32.cont [10/16] 0.0, 128
        %595 = vxpose.xlu0.b32.cont [11/16] 0.0, 128
        %596 = vxpose.xlu0.b32.cont [12/16] 0.0, 128
        %597 = vxpose.xlu0.b32.cont [13/16] 0.0, 128
        %598 = vxpose.xlu0.b32.cont [14/16] 0.0, 128
        %599 = vxpose.xlu0.b32.cont [15/16] 0.0, 128
        %600 = vxpose.xlu0.b32.end [16/16] 0.0, 128
        %v601 = vpop.trf.xlu0
        %v602 = vpop.trf.xlu0
        %v603 = vpop.trf.xlu0
        %v604 = vpop.trf.xlu0
        %v605 = vpop.trf.xlu0
        %v606 = vpop.trf.xlu0
        %v607 = vpop.trf.xlu0
        %v608 = vpop.trf.xlu0
        %v609 = vpop.trf.xlu0
        %v610 = vpop.trf.xlu0
        %v611 = vpop.trf.xlu0
        %v612 = vpop.trf.xlu0
        %v613 = vpop.trf.xlu0
        %v614 = vpop.trf.xlu0
        %v615 = vpop.trf.xlu0
        %v616 = vpop.trf.xlu0
        %v617 = vld [vmem:[%s264] sm:$0xff]
        %v618 = vld [vmem:[%s264 + $0x8] sm:$0xff]
        %v619 = vld [vmem:[%s264 + $0x10] sm:$0xff]
        %v620 = vld [vmem:[%s264 + $0x18] sm:$0xff]
        %v621 = vld [vmem:[%s264 + $0x20] sm:$0xff]
        %v622 = vld [vmem:[%s264 + $0x28] sm:$0xff]
        %v623 = vld [vmem:[%s264 + $0x30] sm:$0xff]
        %v624 = vld [vmem:[%s264 + $0x38] sm:$0xff]
        %vm625 = vcmask 64512
        %v627 = vsel %vm625, %v377, 0
        %v630 = vsel %vm625, %v378, 0
        %v633 = vsel %vm625, %v379, 0
        %v636 = vsel %vm625, %v380, 0
        %v639 = vsel %vm625, %v381, 0
        %v642 = vsel %vm625, %v382, 0
        %v645 = vsel %vm625, %v383, 0
        %v648 = vsel %vm625, %v384, 0
        %v651 = vsel %vm625, %v385, 0
        %v654 = vsel %vm625, %v386, 0
        %v657 = vsel %vm625, %v387, 0
        %v660 = vsel %vm625, %v388, 0
        %v663 = vsel %vm625, %v389, 0
        %v666 = vsel %vm625, %v390, 0
        %v669 = vsel %vm625, %v391, 0
        %v672 = vsel %vm625, %v392, 0
        %674 = vmatprep.subr.mxu0 0.0
        %675 = vmatpush1.msra.mxu0 %v617
        %676 = vmatprep.subr.mxu0 0.0
        %677 = vmatpush1.msra.mxu0 0.0
        %678 = vmatprep.subr.mxu0 0.0
        %679 = vmatpush1.msra.mxu0 0.0
        %680 = vmatprep.subr.mxu0 0.0
        %681 = vmatpush1.msra.mxu0 0.0
        %682 = vmatprep.subr.mxu0 0.0
        %683 = vmatpush1.msra.mxu0 0.0
        %684 = vmatprep.subr.mxu0 0.0
        %685 = vmatpush1.msra.mxu0 0.0
        %686 = vmatprep.subr.mxu0 0.0
        %687 = vmatpush1.msra.mxu0 0.0
        %688 = vmatprep.subr.mxu0 0.0
        %689 = vmatpush1.msra.mxu0 0.0
        %690 = vmatprep.subr.mxu0 0.0
        %691 = vmatpush1.msra.mxu0 0.0
        %692 = vmatprep.subr.mxu0 0.0
        %693 = vmatpush1.msra.mxu0 0.0
        %694 = vmatprep.subr.mxu0 0.0
        %695 = vmatpush1.msra.mxu0 0.0
        %696 = vmatprep.subr.mxu0 0.0
        %697 = vmatpush1.msra.mxu0 0.0
        %698 = vmatprep.subr.mxu0 0.0
        %699 = vmatpush1.msra.mxu0 0.0
        %700 = vmatprep.subr.mxu0 0.0
        %701 = vmatpush1.msra.mxu0 0.0
        %702 = vmatprep.subr.mxu0 0.0
        %703 = vmatpush1.msra.mxu0 0.0
        %704 = vmatprep.subr.mxu0 0.0
        %705 = vmatpush1.msra.mxu0 0.0
        %706 = vmatprep.subr.mxu0 0.0
        %707 = vmatpush1.msra.mxu0 0.0
        %708 = vmatprep.subr.mxu0 0.0
        %709 = vmatpush1.msra.mxu0 0.0
        %710 = vmatprep.subr.mxu0 0.0
        %711 = vmatpush1.msra.mxu0 0.0
        %712 = vmatprep.subr.mxu0 0.0
        %713 = vmatpush1.msra.mxu0 0.0
        %714 = vmatprep.subr.mxu0 0.0
        %715 = vmatpush1.msra.mxu0 0.0
        %716 = vmatprep.subr.mxu0 0.0
        %717 = vmatpush1.msra.mxu0 0.0
        %718 = vmatprep.subr.mxu0 0.0
        %719 = vmatpush1.msra.mxu0 0.0
        %720 = vmatprep.subr.mxu0 0.0
        %721 = vmatpush1.msra.mxu0 0.0
        %722 = vmatprep.subr.mxu0 0.0
        %723 = vmatpush1.msra.mxu0 0.0
        %724 = vmatprep.subr.mxu0 0.0
        %725 = vmatpush1.msra.mxu0 0.0
        %726 = vmatprep.subr.mxu0 0.0
        %727 = vmatpush1.msra.mxu0 0.0
        %728 = vmatprep.subr.mxu0 0.0
        %729 = vmatpush1.msra.mxu0 0.0
        %730 = vmatprep.subr.mxu0 0.0
        %731 = vmatpush1.msra.mxu0 0.0
        %732 = vmatprep.subr.mxu0 0.0
        %733 = vmatpush1.msra.mxu0 0.0
        %734 = vmatprep.subr.mxu0 0.0
        %735 = vmatpush1.msra.mxu0 0.0
        %736 = vmatprep.subr.mxu0 0.0
        %737 = vmatpush1.msra.mxu0 0.0
        %738 = vmatprep.mubr.f32.mxu0 0.0
        %739 = vmatmul.mubr.f32.gmra.mrb[0].mxu0 %v627
        %v740 = vpop.f32.mrb[0].mxu0
        %v741 = vadd.f32 0.0, %v740
        %v742 = vpop.f32.mrb[0].mxu0
        %743 = vmatprep.mubr.f32.mxu0 0.0
        %744 = vmatmul.mubr.f32.gmra.mrb[0].mxu0 %v630
        %v745 = vpop.f32.mrb[0].mxu0
        %v746 = vadd.f32 0.0, %v745
        %v747 = vpop.f32.mrb[0].mxu0
        %748 = vmatprep.mubr.f32.mxu0 0.0
        %749 = vmatmul.mubr.f32.gmra.mrb[0].mxu0 %v633
        %v750 = vpop.f32.mrb[0].mxu0
        %v751 = vadd.f32 0.0, %v750
        %v752 = vpop.f32.mrb[0].mxu0
        %753 = vmatprep.mubr.f32.mxu0 0.0
        %754 = vmatmul.mubr.f32.gmra.mrb[0].mxu0 %v636
        %v755 = vpop.f32.mrb[0].mxu0
        %v756 = vadd.f32 0.0, %v755
        %v757 = vpop.f32.mrb[0].mxu0
        %758 = vmatprep.mubr.f32.mxu0 0.0
        %759 = vmatmul.mubr.f32.gmra.mrb[0].mxu0 %v639
        %v760 = vpop.f32.mrb[0].mxu0
        %v761 = vadd.f32 0.0, %v760
        %v762 = vpop.f32.mrb[0].mxu0
        %763 = vmatprep.mubr.f32.mxu0 0.0
        %764 = vmatmul.mubr.f32.gmra.mrb[0].mxu0 %v642
        %v765 = vpop.f32.mrb[0].mxu0
        %v766 = vadd.f32 0.0, %v765
        %v767 = vpop.f32.mrb[0].mxu0
        %768 = vmatprep.mubr.f32.mxu0 0.0
        %769 = vmatmul.mubr.f32.gmra.mrb[0].mxu0 %v645
        %v770 = vpop.f32.mrb[0].mxu0
        %v771 = vadd.f32 0.0, %v770
        %v772 = vpop.f32.mrb[0].mxu0
        %773 = vmatprep.mubr.f32.mxu0 0.0
        %774 = vmatmul.mubr.f32.gmra.mrb[0].mxu0 %v648
        %v775 = vpop.f32.mrb[0].mxu0
        %v776 = vadd.f32 0.0, %v775
        %v777 = vpop.f32.mrb[0].mxu0
        %778 = vmatprep.mubr.f32.mxu0 0.0
        %779 = vmatmul.mubr.f32.gmra.mrb[0].mxu0 %v651
        %v780 = vpop.f32.mrb[0].mxu0
        %v781 = vadd.f32 0.0, %v780
        %v782 = vpop.f32.mrb[0].mxu0
        %783 = vmatprep.mubr.f32.mxu0 0.0
        %784 = vmatmul.mubr.f32.gmra.mrb[0].mxu0 %v654
        %v785 = vpop.f32.mrb[0].mxu0
        %v786 = vadd.f32 0.0, %v785
        %v787 = vpop.f32.mrb[0].mxu0
        %788 = vmatprep.mubr.f32.mxu0 0.0
        %789 = vmatmul.mubr.f32.gmra.mrb[0].mxu0 %v657
        %v790 = vpop.f32.mrb[0].mxu0
        %v791 = vadd.f32 0.0, %v790
        %v792 = vpop.f32.mrb[0].mxu0
        %793 = vmatprep.mubr.f32.mxu0 0.0
        %794 = vmatmul.mubr.f32.gmra.mrb[0].mxu0 %v660
        %v795 = vpop.f32.mrb[0].mxu0
        %v796 = vadd.f32 0.0, %v795
        %v797 = vpop.f32.mrb[0].mxu0
        %798 = vmatprep.mubr.f32.mxu0 0.0
        %799 = vmatmul.mubr.f32.gmra.mrb[0].mxu0 %v663
        %v800 = vpop.f32.mrb[0].mxu0
        %v801 = vadd.f32 0.0, %v800
        %v802 = vpop.f32.mrb[0].mxu0
        %803 = vmatprep.mubr.f32.mxu0 0.0
        %804 = vmatmul.mubr.f32.gmra.mrb[0].mxu0 %v666
        %v805 = vpop.f32.mrb[0].mxu0
        %v806 = vadd.f32 0.0, %v805
        %v807 = vpop.f32.mrb[0].mxu0
        %808 = vmatprep.mubr.f32.mxu0 0.0
        %809 = vmatmul.mubr.f32.gmra.mrb[0].mxu0 %v669
        %v810 = vpop.f32.mrb[0].mxu0
        %v811 = vadd.f32 0.0, %v810
        %v812 = vpop.f32.mrb[0].mxu0
        %813 = vmatprep.mubr.f32.mxu0 0.0
        %814 = vmatmul.mubr.f32.gmra.mrb[0].mxu0 %v672
        %v815 = vpop.f32.mrb[0].mxu0
        %v816 = vadd.f32 0.0, %v815
        %v817 = vpop.f32.mrb[0].mxu0
        %818 = vdwg.mxu0
        %v820 = vsel %vm625, %v409, 0
        %v823 = vsel %vm625, %v410, 0
        %v826 = vsel %vm625, %v411, 0
        %v829 = vsel %vm625, %v412, 0
        %v832 = vsel %vm625, %v413, 0
        %v835 = vsel %vm625, %v414, 0
        %v838 = vsel %vm625, %v415, 0
        %v841 = vsel %vm625, %v416, 0
        %v844 = vsel %vm625, %v417, 0
        %v847 = vsel %vm625, %v418, 0
        %v850 = vsel %vm625, %v419, 0
        %v853 = vsel %vm625, %v420, 0
        %v856 = vsel %vm625, %v421, 0
        %v859 = vsel %vm625, %v422, 0
        %v862 = vsel %vm625, %v423, 0
        %v865 = vsel %vm625, %v424, 0
        %867 = vmatprep.subr.mxu0 0.0
        %868 = vmatpush1.msra.mxu0 %v618
        %869 = vmatprep.subr.mxu0 0.0
        %870 = vmatpush1.msra.mxu0 0.0
        %871 = vmatprep.subr.mxu0 0.0
        %872 = vmatpush1.msra.mxu0 0.0
        %873 = vmatprep.subr.mxu0 0.0
        %874 = vmatpush1.msra.mxu0 0.0
        %875 = vmatprep.subr.mxu0 0.0
        %876 = vmatpush1.msra.mxu0 0.0
        %877 = vmatprep.subr.mxu0 0.0
        %878 = vmatpush1.msra.mxu0 0.0
        %879 = vmatprep.subr.mxu0 0.0
        %880 = vmatpush1.msra.mxu0 0.0
        %881 = vmatprep.subr.mxu0 0.0
        %882 = vmatpush1.msra.mxu0 0.0
        %883 = vmatprep.subr.mxu0 0.0
        %884 = vmatpush1.msra.mxu0 0.0
        %885 = vmatprep.subr.mxu0 0.0
        %886 = vmatpush1.msra.mxu0 0.0
        %887 = vmatprep.subr.mxu0 0.0
        %888 = vmatpush1.msra.mxu0 0.0
        %889 = vmatprep.subr.mxu0 0.0
        %890 = vmatpush1.msra.mxu0 0.0
        %891 = vmatprep.subr.mxu0 0.0
        %892 = vmatpush1.msra.mxu0 0.0
        %893 = vmatprep.subr.mxu0 0.0
        %894 = vmatpush1.msra.mxu0 0.0
        %895 = vmatprep.subr.mxu0 0.0
        %896 = vmatpush1.msra.mxu0 0.0
        %897 = vmatprep.subr.mxu0 0.0
        %898 = vmatpush1.msra.mxu0 0.0
        %899 = vmatprep.subr.mxu0 0.0
        %900 = vmatpush1.msra.mxu0 0.0
        %901 = vmatprep.subr.mxu0 0.0
        %902 = vmatpush1.msra.mxu0 0.0
        %903 = vmatprep.subr.mxu0 0.0
        %904 = vmatpush1.msra.mxu0 0.0
        %905 = vmatprep.subr.mxu0 0.0
        %906 = vmatpush1.msra.mxu0 0.0
        %907 = vmatprep.subr.mxu0 0.0
        %908 = vmatpush1.msra.mxu0 0.0
        %909 = vmatprep.subr.mxu0 0.0
        %910 = vmatpush1.msra.mxu0 0.0
        %911 = vmatprep.subr.mxu0 0.0
        %912 = vmatpush1.msra.mxu0 0.0
        %913 = vmatprep.subr.mxu0 0.0
        %914 = vmatpush1.msra.mxu0 0.0
        %915 = vmatprep.subr.mxu0 0.0
        %916 = vmatpush1.msra.mxu0 0.0
        %917 = vmatprep.subr.mxu0 0.0
        %918 = vmatpush1.msra.mxu0 0.0
        %919 = vmatprep.subr.mxu0 0.0
        %920 = vmatpush1.msra.mxu0 0.0
        %921 = vmatprep.subr.mxu0 0.0
        %922 = vmatpush1.msra.mxu0 0.0
        %923 = vmatprep.subr.mxu0 0.0
        %924 = vmatpush1.msra.mxu0 0.0
        %925 = vmatprep.subr.mxu0 0.0
        %926 = vmatpush1.msra.mxu0 0.0
        %927 = vmatprep.subr.mxu0 0.0
        %928 = vmatpush1.msra.mxu0 0.0
        %929 = vmatprep.subr.mxu0 0.0
        %930 = vmatpush1.msra.mxu0 0.0
        %931 = vmatprep.mubr.f32.mxu0 0.0
        %932 = vmatmul.mubr.f32.gmra.mrb[0].mxu0 %v820
        %v933 = vpop.f32.mrb[0].mxu0
        %v934 = vadd.f32 0.0, %v933
        %v935 = vpop.f32.mrb[0].mxu0
        %936 = vmatprep.mubr.f32.mxu0 0.0
        %937 = vmatmul.mubr.f32.gmra.mrb[0].mxu0 %v823
        %v938 = vpop.f32.mrb[0].mxu0
        %v939 = vadd.f32 0.0, %v938
        %v940 = vpop.f32.mrb[0].mxu0
        %941 = vmatprep.mubr.f32.mxu0 0.0
        %942 = vmatmul.mubr.f32.gmra.mrb[0].mxu0 %v826
        %v943 = vpop.f32.mrb[0].mxu0
        %v944 = vadd.f32 0.0, %v943
        %v945 = vpop.f32.mrb[0].mxu0
        %946 = vmatprep.mubr.f32.mxu0 0.0
        %947 = vmatmul.mubr.f32.gmra.mrb[0].mxu0 %v829
        %v948 = vpop.f32.mrb[0].mxu0
        %v949 = vadd.f32 0.0, %v948
        %v950 = vpop.f32.mrb[0].mxu0
        %951 = vmatprep.mubr.f32.mxu0 0.0
        %952 = vmatmul.mubr.f32.gmra.mrb[0].mxu0 %v832
        %v953 = vpop.f32.mrb[0].mxu0
        %v954 = vadd.f32 0.0, %v953
        %v955 = vpop.f32.mrb[0].mxu0
        %956 = vmatprep.mubr.f32.mxu0 0.0
        %957 = vmatmul.mubr.f32.gmra.mrb[0].mxu0 %v835
        %v958 = vpop.f32.mrb[0].mxu0
        %v959 = vadd.f32 0.0, %v958
        %v960 = vpop.f32.mrb[0].mxu0
        %961 = vmatprep.mubr.f32.mxu0 0.0
        %962 = vmatmul.mubr.f32.gmra.mrb[0].mxu0 %v838
        %v963 = vpop.f32.mrb[0].mxu0
        %v964 = vadd.f32 0.0, %v963
        %v965 = vpop.f32.mrb[0].mxu0
        %966 = vmatprep.mubr.f32.mxu0 0.0
        %967 = vmatmul.mubr.f32.gmra.mrb[0].mxu0 %v841
        %v968 = vpop.f32.mrb[0].mxu0
        %v969 = vadd.f32 0.0, %v968
        %v970 = vpop.f32.mrb[0].mxu0
        %971 = vmatprep.mubr.f32.mxu0 0.0
        %972 = vmatmul.mubr.f32.gmra.mrb[0].mxu0 %v844
        %v973 = vpop.f32.mrb[0].mxu0
        %v974 = vadd.f32 0.0, %v973
        %v975 = vpop.f32.mrb[0].mxu0
        %976 = vmatprep.mubr.f32.mxu0 0.0
        %977 = vmatmul.mubr.f32.gmra.mrb[0].mxu0 %v847
        %v978 = vpop.f32.mrb[0].mxu0
        %v979 = vadd.f32 0.0, %v978
        %v980 = vpop.f32.mrb[0].mxu0
        %981 = vmatprep.mubr.f32.mxu0 0.0
        %982 = vmatmul.mubr.f32.gmra.mrb[0].mxu0 %v850
        %v983 = vpop.f32.mrb[0].mxu0
        %v984 = vadd.f32 0.0, %v983
        %v985 = vpop.f32.mrb[0].mxu0
        %986 = vmatprep.mubr.f32.mxu0 0.0
        %987 = vmatmul.mubr.f32.gmra.mrb[0].mxu0 %v853
        %v988 = vpop.f32.mrb[0].mxu0
        %v989 = vadd.f32 0.0, %v988
        %v990 = vpop.f32.mrb[0].mxu0
        %991 = vmatprep.mubr.f32.mxu0 0.0
        %992 = vmatmul.mubr.f32.gmra.mrb[0].mxu0 %v856
        %v993 = vpop.f32.mrb[0].mxu0
        %v994 = vadd.f32 0.0, %v993
        %v995 = vpop.f32.mrb[0].mxu0
        %996 = vmatprep.mubr.f32.mxu0 0.0
        %997 = vmatmul.mubr.f32.gmra.mrb[0].mxu0 %v859
        %v998 = vpop.f32.mrb[0].mxu0
        %v999 = vadd.f32 0.0, %v998
        %v1000 = vpop.f32.mrb[0].mxu0
        %1001 = vmatprep.mubr.f32.mxu0 0.0
        %1002 = vmatmul.mubr.f32.gmra.mrb[0].mxu0 %v862
        %v1003 = vpop.f32.mrb[0].mxu0
        %v1004 = vadd.f32 0.0, %v1003
        %v1005 = vpop.f32.mrb[0].mxu0
        %1006 = vmatprep.mubr.f32.mxu0 0.0
        %1007 = vmatmul.mubr.f32.gmra.mrb[0].mxu0 %v865
        %v1008 = vpop.f32.mrb[0].mxu0
        %v1009 = vadd.f32 0.0, %v1008
        %v1010 = vpop.f32.mrb[0].mxu0
        %1011 = vdwg.mxu0
        %v1013 = vsel %vm625, %v441, 0
        %v1016 = vsel %vm625, %v442, 0
        %v1019 = vsel %vm625, %v443, 0
        %v1022 = vsel %vm625, %v444, 0
        %v1025 = vsel %vm625, %v445, 0
        %v1028 = vsel %vm625, %v446, 0
        %v1031 = vsel %vm625, %v447, 0
        %v1034 = vsel %vm625, %v448, 0
        %v1037 = vsel %vm625, %v449, 0
        %v1040 = vsel %vm625, %v450, 0
        %v1043 = vsel %vm625, %v451, 0
        %v1046 = vsel %vm625, %v452, 0
        %v1049 = vsel %vm625, %v453, 0
        %v1052 = vsel %vm625, %v454, 0
        %v1055 = vsel %vm625, %v455, 0
        %v1058 = vsel %vm625, %v456, 0
        %1060 = vmatprep.subr.mxu0 0.0
        %1061 = vmatpush1.msra.mxu0 %v619
        %1062 = vmatprep.subr.mxu0 0.0
        %1063 = vmatpush1.msra.mxu0 0.0
        %1064 = vmatprep.subr.mxu0 0.0
        %1065 = vmatpush1.msra.mxu0 0.0
        %1066 = vmatprep.subr.mxu0 0.0
        %1067 = vmatpush1.msra.mxu0 0.0
        %1068 = vmatprep.subr.mxu0 0.0
        %1069 = vmatpush1.msra.mxu0 0.0
        %1070 = vmatprep.subr.mxu0 0.0
        %1071 = vmatpush1.msra.mxu0 0.0
        %1072 = vmatprep.subr.mxu0 0.0
        %1073 = vmatpush1.msra.mxu0 0.0
        %1074 = vmatprep.subr.mxu0 0.0
        %1075 = vmatpush1.msra.mxu0 0.0
        %1076 = vmatprep.subr.mxu0 0.0
        %1077 = vmatpush1.msra.mxu0 0.0
        %1078 = vmatprep.subr.mxu0 0.0
        %1079 = vmatpush1.msra.mxu0 0.0
        %1080 = vmatprep.subr.mxu0 0.0
        %1081 = vmatpush1.msra.mxu0 0.0
        %1082 = vmatprep.subr.mxu0 0.0
        %1083 = vmatpush1.msra.mxu0 0.0
        %1084 = vmatprep.subr.mxu0 0.0
        %1085 = vmatpush1.msra.mxu0 0.0
        %1086 = vmatprep.subr.mxu0 0.0
        %1087 = vmatpush1.msra.mxu0 0.0
        %1088 = vmatprep.subr.mxu0 0.0
        %1089 = vmatpush1.msra.mxu0 0.0
        %1090 = vmatprep.subr.mxu0 0.0
        %1091 = vmatpush1.msra.mxu0 0.0
        %1092 = vmatprep.subr.mxu0 0.0
        %1093 = vmatpush1.msra.mxu0 0.0
        %1094 = vmatprep.subr.mxu0 0.0
        %1095 = vmatpush1.msra.mxu0 0.0
        %1096 = vmatprep.subr.mxu0 0.0
        %1097 = vmatpush1.msra.mxu0 0.0
        %1098 = vmatprep.subr.mxu0 0.0
        %1099 = vmatpush1.msra.mxu0 0.0
        %1100 = vmatprep.subr.mxu0 0.0
        %1101 = vmatpush1.msra.mxu0 0.0
        %1102 = vmatprep.subr.mxu0 0.0
        %1103 = vmatpush1.msra.mxu0 0.0
        %1104 = vmatprep.subr.mxu0 0.0
        %1105 = vmatpush1.msra.mxu0 0.0
        %1106 = vmatprep.subr.mxu0 0.0
        %1107 = vmatpush1.msra.mxu0 0.0
        %1108 = vmatprep.subr.mxu0 0.0
        %1109 = vmatpush1.msra.mxu0 0.0
        %1110 = vmatprep.subr.mxu0 0.0
        %1111 = vmatpush1.msra.mxu0 0.0
        %1112 = vmatprep.subr.mxu0 0.0
        %1113 = vmatpush1.msra.mxu0 0.0
        %1114 = vmatprep.subr.mxu0 0.0
        %1115 = vmatpush1.msra.mxu0 0.0
        %1116 = vmatprep.subr.mxu0 0.0
        %1117 = vmatpush1.msra.mxu0 0.0
        %1118 = vmatprep.subr.mxu0 0.0
        %1119 = vmatpush1.msra.mxu0 0.0
        %1120 = vmatprep.subr.mxu0 0.0
        %1121 = vmatpush1.msra.mxu0 0.0
        %1122 = vmatprep.subr.mxu0 0.0
        %1123 = vmatpush1.msra.mxu0 0.0
        %1124 = vmatprep.mubr.f32.mxu0 0.0
        %1125 = vmatmul.mubr.f32.gmra.mrb[0].mxu0 %v1013
        %v1126 = vpop.f32.mrb[0].mxu0
        %v1127 = vadd.f32 0.0, %v1126
        %v1128 = vpop.f32.mrb[0].mxu0
        %1129 = vmatprep.mubr.f32.mxu0 0.0
        %1130 = vmatmul.mubr.f32.gmra.mrb[0].mxu0 %v1016
        %v1131 = vpop.f32.mrb[0].mxu0
        %v1132 = vadd.f32 0.0, %v1131
        %v1133 = vpop.f32.mrb[0].mxu0
        %1134 = vmatprep.mubr.f32.mxu0 0.0
        %1135 = vmatmul.mubr.f32.gmra.mrb[0].mxu0 %v1019
        %v1136 = vpop.f32.mrb[0].mxu0
        %v1137 = vadd.f32 0.0, %v1136
        %v1138 = vpop.f32.mrb[0].mxu0
        %1139 = vmatprep.mubr.f32.mxu0 0.0
        %1140 = vmatmul.mubr.f32.gmra.mrb[0].mxu0 %v1022
        %v1141 = vpop.f32.mrb[0].mxu0
        %v1142 = vadd.f32 0.0, %v1141
        %v1143 = vpop.f32.mrb[0].mxu0
        %1144 = vmatprep.mubr.f32.mxu0 0.0
        %1145 = vmatmul.mubr.f32.gmra.mrb[0].mxu0 %v1025
        %v1146 = vpop.f32.mrb[0].mxu0
        %v1147 = vadd.f32 0.0, %v1146
        %v1148 = vpop.f32.mrb[0].mxu0
        %1149 = vmatprep.mubr.f32.mxu0 0.0
        %1150 = vmatmul.mubr.f32.gmra.mrb[0].mxu0 %v1028
        %v1151 = vpop.f32.mrb[0].mxu0
        %v1152 = vadd.f32 0.0, %v1151
        %v1153 = vpop.f32.mrb[0].mxu0
        %1154 = vmatprep.mubr.f32.mxu0 0.0
        %1155 = vmatmul.mubr.f32.gmra.mrb[0].mxu0 %v1031
        %v1156 = vpop.f32.mrb[0].mxu0
        %v1157 = vadd.f32 0.0, %v1156
        %v1158 = vpop.f32.mrb[0].mxu0
        %1159 = vmatprep.mubr.f32.mxu0 0.0
        %1160 = vmatmul.mubr.f32.gmra.mrb[0].mxu0 %v1034
        %v1161 = vpop.f32.mrb[0].mxu0
        %v1162 = vadd.f32 0.0, %v1161
        %v1163 = vpop.f32.mrb[0].mxu0
        %1164 = vmatprep.mubr.f32.mxu0 0.0
        %1165 = vmatmul.mubr.f32.gmra.mrb[0].mxu0 %v1037
        %v1166 = vpop.f32.mrb[0].mxu0
        %v1167 = vadd.f32 0.0, %v1166
        %v1168 = vpop.f32.mrb[0].mxu0
        %1169 = vmatprep.mubr.f32.mxu0 0.0
        %1170 = vmatmul.mubr.f32.gmra.mrb[0].mxu0 %v1040
        %v1171 = vpop.f32.mrb[0].mxu0
        %v1172 = vadd.f32 0.0, %v1171
        %v1173 = vpop.f32.mrb[0].mxu0
        %1174 = vmatprep.mubr.f32.mxu0 0.0
        %1175 = vmatmul.mubr.f32.gmra.mrb[0].mxu0 %v1043
        %v1176 = vpop.f32.mrb[0].mxu0
        %v1177 = vadd.f32 0.0, %v1176
        %v1178 = vpop.f32.mrb[0].mxu0
        %1179 = vmatprep.mubr.f32.mxu0 0.0
        %1180 = vmatmul.mubr.f32.gmra.mrb[0].mxu0 %v1046
        %v1181 = vpop.f32.mrb[0].mxu0
        %v1182 = vadd.f32 0.0, %v1181
        %v1183 = vpop.f32.mrb[0].mxu0
        %1184 = vmatprep.mubr.f32.mxu0 0.0
        %1185 = vmatmul.mubr.f32.gmra.mrb[0].mxu0 %v1049
        %v1186 = vpop.f32.mrb[0].mxu0
        %v1187 = vadd.f32 0.0, %v1186
        %v1188 = vpop.f32.mrb[0].mxu0
        %1189 = vmatprep.mubr.f32.mxu0 0.0
        %1190 = vmatmul.mubr.f32.gmra.mrb[0].mxu0 %v1052
        %v1191 = vpop.f32.mrb[0].mxu0
        %v1192 = vadd.f32 0.0, %v1191
        %v1193 = vpop.f32.mrb[0].mxu0
        %1194 = vmatprep.mubr.f32.mxu0 0.0
        %1195 = vmatmul.mubr.f32.gmra.mrb[0].mxu0 %v1055
        %v1196 = vpop.f32.mrb[0].mxu0
        %v1197 = vadd.f32 0.0, %v1196
        %v1198 = vpop.f32.mrb[0].mxu0
        %1199 = vmatprep.mubr.f32.mxu0 0.0
        %1200 = vmatmul.mubr.f32.gmra.mrb[0].mxu0 %v1058
        %v1201 = vpop.f32.mrb[0].mxu0
        %v1202 = vadd.f32 0.0, %v1201
        %v1203 = vpop.f32.mrb[0].mxu0
        %1204 = vdwg.mxu0
        %v1206 = vsel %vm625, %v473, 0
        %v1209 = vsel %vm625, %v474, 0
        %v1212 = vsel %vm625, %v475, 0
        %v1215 = vsel %vm625, %v476, 0
        %v1218 = vsel %vm625, %v477, 0
        %v1221 = vsel %vm625, %v478, 0
        %v1224 = vsel %vm625, %v479, 0
        %v1227 = vsel %vm625, %v480, 0
        %v1230 = vsel %vm625, %v481, 0
        %v1233 = vsel %vm625, %v482, 0
        %v1236 = vsel %vm625, %v483, 0
        %v1239 = vsel %vm625, %v484, 0
        %v1242 = vsel %vm625, %v485, 0
        %v1245 = vsel %vm625, %v486, 0
        %v1248 = vsel %vm625, %v487, 0
        %v1251 = vsel %vm625, %v488, 0
        %1253 = vmatprep.subr.mxu0 0.0
        %1254 = vmatpush1.msra.mxu0 %v620
        %1255 = vmatprep.subr.mxu0 0.0
        %1256 = vmatpush1.msra.mxu0 0.0
        %1257 = vmatprep.subr.mxu0 0.0
        %1258 = vmatpush1.msra.mxu0 0.0
        %1259 = vmatprep.subr.mxu0 0.0
        %1260 = vmatpush1.msra.mxu0 0.0
        %1261 = vmatprep.subr.mxu0 0.0
        %1262 = vmatpush1.msra.mxu0 0.0
        %1263 = vmatprep.subr.mxu0 0.0
        %1264 = vmatpush1.msra.mxu0 0.0
        %1265 = vmatprep.subr.mxu0 0.0
        %1266 = vmatpush1.msra.mxu0 0.0
        %1267 = vmatprep.subr.mxu0 0.0
        %1268 = vmatpush1.msra.mxu0 0.0
        %1269 = vmatprep.subr.mxu0 0.0
        %1270 = vmatpush1.msra.mxu0 0.0
        %1271 = vmatprep.subr.mxu0 0.0
        %1272 = vmatpush1.msra.mxu0 0.0
        %1273 = vmatprep.subr.mxu0 0.0
        %1274 = vmatpush1.msra.mxu0 0.0
        %1275 = vmatprep.subr.mxu0 0.0
        %1276 = vmatpush1.msra.mxu0 0.0
        %1277 = vmatprep.subr.mxu0 0.0
        %1278 = vmatpush1.msra.mxu0 0.0
        %1279 = vmatprep.subr.mxu0 0.0
        %1280 = vmatpush1.msra.mxu0 0.0
        %1281 = vmatprep.subr.mxu0 0.0
        %1282 = vmatpush1.msra.mxu0 0.0
        %1283 = vmatprep.subr.mxu0 0.0
        %1284 = vmatpush1.msra.mxu0 0.0
        %1285 = vmatprep.subr.mxu0 0.0
        %1286 = vmatpush1.msra.mxu0 0.0
        %1287 = vmatprep.subr.mxu0 0.0
        %1288 = vmatpush1.msra.mxu0 0.0
        %1289 = vmatprep.subr.mxu0 0.0
        %1290 = vmatpush1.msra.mxu0 0.0
        %1291 = vmatprep.subr.mxu0 0.0
        %1292 = vmatpush1.msra.mxu0 0.0
        %1293 = vmatprep.subr.mxu0 0.0
        %1294 = vmatpush1.msra.mxu0 0.0
        %1295 = vmatprep.subr.mxu0 0.0
        %1296 = vmatpush1.msra.mxu0 0.0
        %1297 = vmatprep.subr.mxu0 0.0
        %1298 = vmatpush1.msra.mxu0 0.0
        %1299 = vmatprep.subr.mxu0 0.0
        %1300 = vmatpush1.msra.mxu0 0.0
        %1301 = vmatprep.subr.mxu0 0.0
        %1302 = vmatpush1.msra.mxu0 0.0
        %1303 = vmatprep.subr.mxu0 0.0
        %1304 = vmatpush1.msra.mxu0 0.0
        %1305 = vmatprep.subr.mxu0 0.0
        %1306 = vmatpush1.msra.mxu0 0.0
        %1307 = vmatprep.subr.mxu0 0.0
        %1308 = vmatpush1.msra.mxu0 0.0
        %1309 = vmatprep.subr.mxu0 0.0
        %1310 = vmatpush1.msra.mxu0 0.0
        %1311 = vmatprep.subr.mxu0 0.0
        %1312 = vmatpush1.msra.mxu0 0.0
        %1313 = vmatprep.subr.mxu0 0.0
        %1314 = vmatpush1.msra.mxu0 0.0
        %1315 = vmatprep.subr.mxu0 0.0
        %1316 = vmatpush1.msra.mxu0 0.0
        %1317 = vmatprep.mubr.f32.mxu0 0.0
        %1318 = vmatmul.mubr.f32.gmra.mrb[0].mxu0 %v1206
        %v1319 = vpop.f32.mrb[0].mxu0
        %v1320 = vadd.f32 0.0, %v1319
        %v1321 = vpop.f32.mrb[0].mxu0
        %1322 = vmatprep.mubr.f32.mxu0 0.0
        %1323 = vmatmul.mubr.f32.gmra.mrb[0].mxu0 %v1209
        %v1324 = vpop.f32.mrb[0].mxu0
        %v1325 = vadd.f32 0.0, %v1324
        %v1326 = vpop.f32.mrb[0].mxu0
        %1327 = vmatprep.mubr.f32.mxu0 0.0
        %1328 = vmatmul.mubr.f32.gmra.mrb[0].mxu0 %v1212
        %v1329 = vpop.f32.mrb[0].mxu0
        %v1330 = vadd.f32 0.0, %v1329
        %v1331 = vpop.f32.mrb[0].mxu0
        %1332 = vmatprep.mubr.f32.mxu0 0.0
        %1333 = vmatmul.mubr.f32.gmra.mrb[0].mxu0 %v1215
        %v1334 = vpop.f32.mrb[0].mxu0
        %v1335 = vadd.f32 0.0, %v1334
        %v1336 = vpop.f32.mrb[0].mxu0
        %1337 = vmatprep.mubr.f32.mxu0 0.0
        %1338 = vmatmul.mubr.f32.gmra.mrb[0].mxu0 %v1218
        %v1339 = vpop.f32.mrb[0].mxu0
        %v1340 = vadd.f32 0.0, %v1339
        %v1341 = vpop.f32.mrb[0].mxu0
        %1342 = vmatprep.mubr.f32.mxu0 0.0
        %1343 = vmatmul.mubr.f32.gmra.mrb[0].mxu0 %v1221
        %v1344 = vpop.f32.mrb[0].mxu0
        %v1345 = vadd.f32 0.0, %v1344
        %v1346 = vpop.f32.mrb[0].mxu0
        %1347 = vmatprep.mubr.f32.mxu0 0.0
        %1348 = vmatmul.mubr.f32.gmra.mrb[0].mxu0 %v1224
        %v1349 = vpop.f32.mrb[0].mxu0
        %v1350 = vadd.f32 0.0, %v1349
        %v1351 = vpop.f32.mrb[0].mxu0
        %1352 = vmatprep.mubr.f32.mxu0 0.0
        %1353 = vmatmul.mubr.f32.gmra.mrb[0].mxu0 %v1227
        %v1354 = vpop.f32.mrb[0].mxu0
        %v1355 = vadd.f32 0.0, %v1354
        %v1356 = vpop.f32.mrb[0].mxu0
        %1357 = vmatprep.mubr.f32.mxu0 0.0
        %1358 = vmatmul.mubr.f32.gmra.mrb[0].mxu0 %v1230
        %v1359 = vpop.f32.mrb[0].mxu0
        %v1360 = vadd.f32 0.0, %v1359
        %v1361 = vpop.f32.mrb[0].mxu0
        %1362 = vmatprep.mubr.f32.mxu0 0.0
        %1363 = vmatmul.mubr.f32.gmra.mrb[0].mxu0 %v1233
        %v1364 = vpop.f32.mrb[0].mxu0
        %v1365 = vadd.f32 0.0, %v1364
        %v1366 = vpop.f32.mrb[0].mxu0
        %1367 = vmatprep.mubr.f32.mxu0 0.0
        %1368 = vmatmul.mubr.f32.gmra.mrb[0].mxu0 %v1236
        %v1369 = vpop.f32.mrb[0].mxu0
        %v1370 = vadd.f32 0.0, %v1369
        %v1371 = vpop.f32.mrb[0].mxu0
        %1372 = vmatprep.mubr.f32.mxu0 0.0
        %1373 = vmatmul.mubr.f32.gmra.mrb[0].mxu0 %v1239
        %v1374 = vpop.f32.mrb[0].mxu0
        %v1375 = vadd.f32 0.0, %v1374
        %v1376 = vpop.f32.mrb[0].mxu0
        %1377 = vmatprep.mubr.f32.mxu0 0.0
        %1378 = vmatmul.mubr.f32.gmra.mrb[0].mxu0 %v1242
        %v1379 = vpop.f32.mrb[0].mxu0
        %v1380 = vadd.f32 0.0, %v1379
        %v1381 = vpop.f32.mrb[0].mxu0
        %1382 = vmatprep.mubr.f32.mxu0 0.0
        %1383 = vmatmul.mubr.f32.gmra.mrb[0].mxu0 %v1245
        %v1384 = vpop.f32.mrb[0].mxu0
        %v1385 = vadd.f32 0.0, %v1384
        %v1386 = vpop.f32.mrb[0].mxu0
        %1387 = vmatprep.mubr.f32.mxu0 0.0
        %1388 = vmatmul.mubr.f32.gmra.mrb[0].mxu0 %v1248
        %v1389 = vpop.f32.mrb[0].mxu0
        %v1390 = vadd.f32 0.0, %v1389
        %v1391 = vpop.f32.mrb[0].mxu0
        %1392 = vmatprep.mubr.f32.mxu0 0.0
        %1393 = vmatmul.mubr.f32.gmra.mrb[0].mxu0 %v1251
        %v1394 = vpop.f32.mrb[0].mxu0
        %v1395 = vadd.f32 0.0, %v1394
        %v1396 = vpop.f32.mrb[0].mxu0
        %1397 = vdwg.mxu0
        %v1399 = vsel %vm625, %v505, 0
        %v1402 = vsel %vm625, %v506, 0
        %v1405 = vsel %vm625, %v507, 0
        %v1408 = vsel %vm625, %v508, 0
        %v1411 = vsel %vm625, %v509, 0
        %v1414 = vsel %vm625, %v510, 0
        %v1417 = vsel %vm625, %v511, 0
        %v1420 = vsel %vm625, %v512, 0
        %v1423 = vsel %vm625, %v513, 0
        %v1426 = vsel %vm625, %v514, 0
        %v1429 = vsel %vm625, %v515, 0
        %v1432 = vsel %vm625, %v516, 0
        %v1435 = vsel %vm625, %v517, 0
        %v1438 = vsel %vm625, %v518, 0
        %v1441 = vsel %vm625, %v519, 0
        %v1444 = vsel %vm625, %v520, 0
        %1446 = vmatprep.subr.mxu0 0.0
        %1447 = vmatpush1.msra.mxu0 %v621
        %1448 = vmatprep.subr.mxu0 0.0
        %1449 = vmatpush1.msra.mxu0 0.0
        %1450 = vmatprep.subr.mxu0 0.0
        %1451 = vmatpush1.msra.mxu0 0.0
        %1452 = vmatprep.subr.mxu0 0.0
        %1453 = vmatpush1.msra.mxu0 0.0
        %1454 = vmatprep.subr.mxu0 0.0
        %1455 = vmatpush1.msra.mxu0 0.0
        %1456 = vmatprep.subr.mxu0 0.0
        %1457 = vmatpush1.msra.mxu0 0.0
        %1458 = vmatprep.subr.mxu0 0.0
        %1459 = vmatpush1.msra.mxu0 0.0
        %1460 = vmatprep.subr.mxu0 0.0
        %1461 = vmatpush1.msra.mxu0 0.0
        %1462 = vmatprep.subr.mxu0 0.0
        %1463 = vmatpush1.msra.mxu0 0.0
        %1464 = vmatprep.subr.mxu0 0.0
        %1465 = vmatpush1.msra.mxu0 0.0
        %1466 = vmatprep.subr.mxu0 0.0
        %1467 = vmatpush1.msra.mxu0 0.0
        %1468 = vmatprep.subr.mxu0 0.0
        %1469 = vmatpush1.msra.mxu0 0.0
        %1470 = vmatprep.subr.mxu0 0.0
        %1471 = vmatpush1.msra.mxu0 0.0
        %1472 = vmatprep.subr.mxu0 0.0
        %1473 = vmatpush1.msra.mxu0 0.0
        %1474 = vmatprep.subr.mxu0 0.0
        %1475 = vmatpush1.msra.mxu0 0.0
        %1476 = vmatprep.subr.mxu0 0.0
        %1477 = vmatpush1.msra.mxu0 0.0
        %1478 = vmatprep.subr.mxu0 0.0
        %1479 = vmatpush1.msra.mxu0 0.0
        %1480 = vmatprep.subr.mxu0 0.0
        %1481 = vmatpush1.msra.mxu0 0.0
        %1482 = vmatprep.subr.mxu0 0.0
        %1483 = vmatpush1.msra.mxu0 0.0
        %1484 = vmatprep.subr.mxu0 0.0
        %1485 = vmatpush1.msra.mxu0 0.0
        %1486 = vmatprep.subr.mxu0 0.0
        %1487 = vmatpush1.msra.mxu0 0.0
        %1488 = vmatprep.subr.mxu0 0.0
        %1489 = vmatpush1.msra.mxu0 0.0
        %1490 = vmatprep.subr.mxu0 0.0
        %1491 = vmatpush1.msra.mxu0 0.0
        %1492 = vmatprep.subr.mxu0 0.0
        %1493 = vmatpush1.msra.mxu0 0.0
        %1494 = vmatprep.subr.mxu0 0.0
        %1495 = vmatpush1.msra.mxu0 0.0
        %1496 = vmatprep.subr.mxu0 0.0
        %1497 = vmatpush1.msra.mxu0 0.0
        %1498 = vmatprep.subr.mxu0 0.0
        %1499 = vmatpush1.msra.mxu0 0.0
        %1500 = vmatprep.subr.mxu0 0.0
        %1501 = vmatpush1.msra.mxu0 0.0
        %1502 = vmatprep.subr.mxu0 0.0
        %1503 = vmatpush1.msra.mxu0 0.0
        %1504 = vmatprep.subr.mxu0 0.0
        %1505 = vmatpush1.msra.mxu0 0.0
        %1506 = vmatprep.subr.mxu0 0.0
        %1507 = vmatpush1.msra.mxu0 0.0
        %1508 = vmatprep.subr.mxu0 0.0
        %1509 = vmatpush1.msra.mxu0 0.0
        %1510 = vmatprep.mubr.f32.mxu0 0.0
        %1511 = vmatmul.mubr.f32.gmra.mrb[0].mxu0 %v1399
        %v1512 = vpop.f32.mrb[0].mxu0
        %v1513 = vadd.f32 0.0, %v1512
        %v1514 = vpop.f32.mrb[0].mxu0
        %1515 = vmatprep.mubr.f32.mxu0 0.0
        %1516 = vmatmul.mubr.f32.gmra.mrb[0].mxu0 %v1402
        %v1517 = vpop.f32.mrb[0].mxu0
        %v1518 = vadd.f32 0.0, %v1517
        %v1519 = vpop.f32.mrb[0].mxu0
        %1520 = vmatprep.mubr.f32.mxu0 0.0
        %1521 = vmatmul.mubr.f32.gmra.mrb[0].mxu0 %v1405
        %v1522 = vpop.f32.mrb[0].mxu0
        %v1523 = vadd.f32 0.0, %v1522
        %v1524 = vpop.f32.mrb[0].mxu0
        %1525 = vmatprep.mubr.f32.mxu0 0.0
        %1526 = vmatmul.mubr.f32.gmra.mrb[0].mxu0 %v1408
        %v1527 = vpop.f32.mrb[0].mxu0
        %v1528 = vadd.f32 0.0, %v1527
        %v1529 = vpop.f32.mrb[0].mxu0
        %1530 = vmatprep.mubr.f32.mxu0 0.0
        %1531 = vmatmul.mubr.f32.gmra.mrb[0].mxu0 %v1411
        %v1532 = vpop.f32.mrb[0].mxu0
        %v1533 = vadd.f32 0.0, %v1532
        %v1534 = vpop.f32.mrb[0].mxu0
        %1535 = vmatprep.mubr.f32.mxu0 0.0
        %1536 = vmatmul.mubr.f32.gmra.mrb[0].mxu0 %v1414
        %v1537 = vpop.f32.mrb[0].mxu0
        %v1538 = vadd.f32 0.0, %v1537
        %v1539 = vpop.f32.mrb[0].mxu0
        %1540 = vmatprep.mubr.f32.mxu0 0.0
        %1541 = vmatmul.mubr.f32.gmra.mrb[0].mxu0 %v1417
        %v1542 = vpop.f32.mrb[0].mxu0
        %v1543 = vadd.f32 0.0, %v1542
        %v1544 = vpop.f32.mrb[0].mxu0
        %1545 = vmatprep.mubr.f32.mxu0 0.0
        %1546 = vmatmul.mubr.f32.gmra.mrb[0].mxu0 %v1420
        %v1547 = vpop.f32.mrb[0].mxu0
        %v1548 = vadd.f32 0.0, %v1547
        %v1549 = vpop.f32.mrb[0].mxu0
        %1550 = vmatprep.mubr.f32.mxu0 0.0
        %1551 = vmatmul.mubr.f32.gmra.mrb[0].mxu0 %v1423
        %v1552 = vpop.f32.mrb[0].mxu0
        %v1553 = vadd.f32 0.0, %v1552
        %v1554 = vpop.f32.mrb[0].mxu0
        %1555 = vmatprep.mubr.f32.mxu0 0.0
        %1556 = vmatmul.mubr.f32.gmra.mrb[0].mxu0 %v1426
        %v1557 = vpop.f32.mrb[0].mxu0
        %v1558 = vadd.f32 0.0, %v1557
        %v1559 = vpop.f32.mrb[0].mxu0
        %1560 = vmatprep.mubr.f32.mxu0 0.0
        %1561 = vmatmul.mubr.f32.gmra.mrb[0].mxu0 %v1429
        %v1562 = vpop.f32.mrb[0].mxu0
        %v1563 = vadd.f32 0.0, %v1562
        %v1564 = vpop.f32.mrb[0].mxu0
        %1565 = vmatprep.mubr.f32.mxu0 0.0
        %1566 = vmatmul.mubr.f32.gmra.mrb[0].mxu0 %v1432
        %v1567 = vpop.f32.mrb[0].mxu0
        %v1568 = vadd.f32 0.0, %v1567
        %v1569 = vpop.f32.mrb[0].mxu0
        %1570 = vmatprep.mubr.f32.mxu0 0.0
        %1571 = vmatmul.mubr.f32.gmra.mrb[0].mxu0 %v1435
        %v1572 = vpop.f32.mrb[0].mxu0
        %v1573 = vadd.f32 0.0, %v1572
        %v1574 = vpop.f32.mrb[0].mxu0
        %1575 = vmatprep.mubr.f32.mxu0 0.0
        %1576 = vmatmul.mubr.f32.gmra.mrb[0].mxu0 %v1438
        %v1577 = vpop.f32.mrb[0].mxu0
        %v1578 = vadd.f32 0.0, %v1577
        %v1579 = vpop.f32.mrb[0].mxu0
        %1580 = vmatprep.mubr.f32.mxu0 0.0
        %1581 = vmatmul.mubr.f32.gmra.mrb[0].mxu0 %v1441
        %v1582 = vpop.f32.mrb[0].mxu0
        %v1583 = vadd.f32 0.0, %v1582
        %v1584 = vpop.f32.mrb[0].mxu0
        %1585 = vmatprep.mubr.f32.mxu0 0.0
        %1586 = vmatmul.mubr.f32.gmra.mrb[0].mxu0 %v1444
        %v1587 = vpop.f32.mrb[0].mxu0
        %v1588 = vadd.f32 0.0, %v1587
        %v1589 = vpop.f32.mrb[0].mxu0
        %1590 = vdwg.mxu0
        %v1592 = vsel %vm625, %v537, 0
        %v1595 = vsel %vm625, %v538, 0
        %v1598 = vsel %vm625, %v539, 0
        %v1601 = vsel %vm625, %v540, 0
        %v1604 = vsel %vm625, %v541, 0
        %v1607 = vsel %vm625, %v542, 0
        %v1610 = vsel %vm625, %v543, 0
        %v1613 = vsel %vm625, %v544, 0
        %v1616 = vsel %vm625, %v545, 0
        %v1619 = vsel %vm625, %v546, 0
        %v1622 = vsel %vm625, %v547, 0
        %v1625 = vsel %vm625, %v548, 0
        %v1628 = vsel %vm625, %v549, 0
        %v1631 = vsel %vm625, %v550, 0
        %v1634 = vsel %vm625, %v551, 0
        %v1637 = vsel %vm625, %v552, 0
        %1639 = vmatprep.subr.mxu0 0.0
        %1640 = vmatpush1.msra.mxu0 %v622
        %1641 = vmatprep.subr.mxu0 0.0
        %1642 = vmatpush1.msra.mxu0 0.0
        %1643 = vmatprep.subr.mxu0 0.0
        %1644 = vmatpush1.msra.mxu0 0.0
        %1645 = vmatprep.subr.mxu0 0.0
        %1646 = vmatpush1.msra.mxu0 0.0
        %1647 = vmatprep.subr.mxu0 0.0
        %1648 = vmatpush1.msra.mxu0 0.0
        %1649 = vmatprep.subr.mxu0 0.0
        %1650 = vmatpush1.msra.mxu0 0.0
        %1651 = vmatprep.subr.mxu0 0.0
        %1652 = vmatpush1.msra.mxu0 0.0
        %1653 = vmatprep.subr.mxu0 0.0
        %1654 = vmatpush1.msra.mxu0 0.0
        %1655 = vmatprep.subr.mxu0 0.0
        %1656 = vmatpush1.msra.mxu0 0.0
        %1657 = vmatprep.subr.mxu0 0.0
        %1658 = vmatpush1.msra.mxu0 0.0
        %1659 = vmatprep.subr.mxu0 0.0
        %1660 = vmatpush1.msra.mxu0 0.0
        %1661 = vmatprep.subr.mxu0 0.0
        %1662 = vmatpush1.msra.mxu0 0.0
        %1663 = vmatprep.subr.mxu0 0.0
        %1664 = vmatpush1.msra.mxu0 0.0
        %1665 = vmatprep.subr.mxu0 0.0
        %1666 = vmatpush1.msra.mxu0 0.0
        %1667 = vmatprep.subr.mxu0 0.0
        %1668 = vmatpush1.msra.mxu0 0.0
        %1669 = vmatprep.subr.mxu0 0.0
        %1670 = vmatpush1.msra.mxu0 0.0
        %1671 = vmatprep.subr.mxu0 0.0
        %1672 = vmatpush1.msra.mxu0 0.0
        %1673 = vmatprep.subr.mxu0 0.0
        %1674 = vmatpush1.msra.mxu0 0.0
        %1675 = vmatprep.subr.mxu0 0.0
        %1676 = vmatpush1.msra.mxu0 0.0
        %1677 = vmatprep.subr.mxu0 0.0
        %1678 = vmatpush1.msra.mxu0 0.0
        %1679 = vmatprep.subr.mxu0 0.0
        %1680 = vmatpush1.msra.mxu0 0.0
        %1681 = vmatprep.subr.mxu0 0.0
        %1682 = vmatpush1.msra.mxu0 0.0
        %1683 = vmatprep.subr.mxu0 0.0
        %1684 = vmatpush1.msra.mxu0 0.0
        %1685 = vmatprep.subr.mxu0 0.0
        %1686 = vmatpush1.msra.mxu0 0.0
        %1687 = vmatprep.subr.mxu0 0.0
        %1688 = vmatpush1.msra.mxu0 0.0
        %1689 = vmatprep.subr.mxu0 0.0
        %1690 = vmatpush1.msra.mxu0 0.0
        %1691 = vmatprep.subr.mxu0 0.0
        %1692 = vmatpush1.msra.mxu0 0.0
        %1693 = vmatprep.subr.mxu0 0.0
        %1694 = vmatpush1.msra.mxu0 0.0
        %1695 = vmatprep.subr.mxu0 0.0
        %1696 = vmatpush1.msra.mxu0 0.0
        %1697 = vmatprep.subr.mxu0 0.0
        %1698 = vmatpush1.msra.mxu0 0.0
        %1699 = vmatprep.subr.mxu0 0.0
        %1700 = vmatpush1.msra.mxu0 0.0
        %1701 = vmatprep.subr.mxu0 0.0
        %1702 = vmatpush1.msra.mxu0 0.0
        %1703 = vmatprep.mubr.f32.mxu0 0.0
        %1704 = vmatmul.mubr.f32.gmra.mrb[0].mxu0 %v1592
        %v1705 = vpop.f32.mrb[0].mxu0
        %v1706 = vadd.f32 0.0, %v1705
        %v1707 = vpop.f32.mrb[0].mxu0
        %1708 = vmatprep.mubr.f32.mxu0 0.0
        %1709 = vmatmul.mubr.f32.gmra.mrb[0].mxu0 %v1595
        %v1710 = vpop.f32.mrb[0].mxu0
        %v1711 = vadd.f32 0.0, %v1710
        %v1712 = vpop.f32.mrb[0].mxu0
        %1713 = vmatprep.mubr.f32.mxu0 0.0
        %1714 = vmatmul.mubr.f32.gmra.mrb[0].mxu0 %v1598
        %v1715 = vpop.f32.mrb[0].mxu0
        %v1716 = vadd.f32 0.0, %v1715
        %v1717 = vpop.f32.mrb[0].mxu0
        %1718 = vmatprep.mubr.f32.mxu0 0.0
        %1719 = vmatmul.mubr.f32.gmra.mrb[0].mxu0 %v1601
        %v1720 = vpop.f32.mrb[0].mxu0
        %v1721 = vadd.f32 0.0, %v1720
        %v1722 = vpop.f32.mrb[0].mxu0
        %1723 = vmatprep.mubr.f32.mxu0 0.0
        %1724 = vmatmul.mubr.f32.gmra.mrb[0].mxu0 %v1604
        %v1725 = vpop.f32.mrb[0].mxu0
        %v1726 = vadd.f32 0.0, %v1725
        %v1727 = vpop.f32.mrb[0].mxu0
        %1728 = vmatprep.mubr.f32.mxu0 0.0
        %1729 = vmatmul.mubr.f32.gmra.mrb[0].mxu0 %v1607
        %v1730 = vpop.f32.mrb[0].mxu0
        %v1731 = vadd.f32 0.0, %v1730
        %v1732 = vpop.f32.mrb[0].mxu0
        %1733 = vmatprep.mubr.f32.mxu0 0.0
        %1734 = vmatmul.mubr.f32.gmra.mrb[0].mxu0 %v1610
        %v1735 = vpop.f32.mrb[0].mxu0
        %v1736 = vadd.f32 0.0, %v1735
        %v1737 = vpop.f32.mrb[0].mxu0
        %1738 = vmatprep.mubr.f32.mxu0 0.0
        %1739 = vmatmul.mubr.f32.gmra.mrb[0].mxu0 %v1613
        %v1740 = vpop.f32.mrb[0].mxu0
        %v1741 = vadd.f32 0.0, %v1740
        %v1742 = vpop.f32.mrb[0].mxu0
        %1743 = vmatprep.mubr.f32.mxu0 0.0
        %1744 = vmatmul.mubr.f32.gmra.mrb[0].mxu0 %v1616
        %v1745 = vpop.f32.mrb[0].mxu0
        %v1746 = vadd.f32 0.0, %v1745
        %v1747 = vpop.f32.mrb[0].mxu0
        %1748 = vmatprep.mubr.f32.mxu0 0.0
        %1749 = vmatmul.mubr.f32.gmra.mrb[0].mxu0 %v1619
        %v1750 = vpop.f32.mrb[0].mxu0
        %v1751 = vadd.f32 0.0, %v1750
        %v1752 = vpop.f32.mrb[0].mxu0
        %1753 = vmatprep.mubr.f32.mxu0 0.0
        %1754 = vmatmul.mubr.f32.gmra.mrb[0].mxu0 %v1622
        %v1755 = vpop.f32.mrb[0].mxu0
        %v1756 = vadd.f32 0.0, %v1755
        %v1757 = vpop.f32.mrb[0].mxu0
        %1758 = vmatprep.mubr.f32.mxu0 0.0
        %1759 = vmatmul.mubr.f32.gmra.mrb[0].mxu0 %v1625
        %v1760 = vpop.f32.mrb[0].mxu0
        %v1761 = vadd.f32 0.0, %v1760
        %v1762 = vpop.f32.mrb[0].mxu0
        %1763 = vmatprep.mubr.f32.mxu0 0.0
        %1764 = vmatmul.mubr.f32.gmra.mrb[0].mxu0 %v1628
        %v1765 = vpop.f32.mrb[0].mxu0
        %v1766 = vadd.f32 0.0, %v1765
        %v1767 = vpop.f32.mrb[0].mxu0
        %1768 = vmatprep.mubr.f32.mxu0 0.0
        %1769 = vmatmul.mubr.f32.gmra.mrb[0].mxu0 %v1631
        %v1770 = vpop.f32.mrb[0].mxu0
        %v1771 = vadd.f32 0.0, %v1770
        %v1772 = vpop.f32.mrb[0].mxu0
        %1773 = vmatprep.mubr.f32.mxu0 0.0
        %1774 = vmatmul.mubr.f32.gmra.mrb[0].mxu0 %v1634
        %v1775 = vpop.f32.mrb[0].mxu0
        %v1776 = vadd.f32 0.0, %v1775
        %v1777 = vpop.f32.mrb[0].mxu0
        %1778 = vmatprep.mubr.f32.mxu0 0.0
        %1779 = vmatmul.mubr.f32.gmra.mrb[0].mxu0 %v1637
        %v1780 = vpop.f32.mrb[0].mxu0
        %v1781 = vadd.f32 0.0, %v1780
        %v1782 = vpop.f32.mrb[0].mxu0
        %1783 = vdwg.mxu0
        %v1785 = vsel %vm625, %v569, 0
        %v1788 = vsel %vm625, %v570, 0
        %v1791 = vsel %vm625, %v571, 0
        %v1794 = vsel %vm625, %v572, 0
        %v1797 = vsel %vm625, %v573, 0
        %v1800 = vsel %vm625, %v574, 0
        %v1803 = vsel %vm625, %v575, 0
        %v1806 = vsel %vm625, %v576, 0
        %v1809 = vsel %vm625, %v577, 0
        %v1812 = vsel %vm625, %v578, 0
        %v1815 = vsel %vm625, %v579, 0
        %v1818 = vsel %vm625, %v580, 0
        %v1821 = vsel %vm625, %v581, 0
        %v1824 = vsel %vm625, %v582, 0
        %v1827 = vsel %vm625, %v583, 0
        %v1830 = vsel %vm625, %v584, 0
        %1832 = vmatprep.subr.mxu0 0.0
        %1833 = vmatpush1.msra.mxu0 %v623
        %1834 = vmatprep.subr.mxu0 0.0
        %1835 = vmatpush1.msra.mxu0 0.0
        %1836 = vmatprep.subr.mxu0 0.0
        %1837 = vmatpush1.msra.mxu0 0.0
        %1838 = vmatprep.subr.mxu0 0.0
        %1839 = vmatpush1.msra.mxu0 0.0
        %1840 = vmatprep.subr.mxu0 0.0
        %1841 = vmatpush1.msra.mxu0 0.0
        %1842 = vmatprep.subr.mxu0 0.0
        %1843 = vmatpush1.msra.mxu0 0.0
        %1844 = vmatprep.subr.mxu0 0.0
        %1845 = vmatpush1.msra.mxu0 0.0
        %1846 = vmatprep.subr.mxu0 0.0
        %1847 = vmatpush1.msra.mxu0 0.0
        %1848 = vmatprep.subr.mxu0 0.0
        %1849 = vmatpush1.msra.mxu0 0.0
        %1850 = vmatprep.subr.mxu0 0.0
        %1851 = vmatpush1.msra.mxu0 0.0
        %1852 = vmatprep.subr.mxu0 0.0
        %1853 = vmatpush1.msra.mxu0 0.0
        %1854 = vmatprep.subr.mxu0 0.0
        %1855 = vmatpush1.msra.mxu0 0.0
        %1856 = vmatprep.subr.mxu0 0.0
        %1857 = vmatpush1.msra.mxu0 0.0
        %1858 = vmatprep.subr.mxu0 0.0
        %1859 = vmatpush1.msra.mxu0 0.0
        %1860 = vmatprep.subr.mxu0 0.0
        %1861 = vmatpush1.msra.mxu0 0.0
        %1862 = vmatprep.subr.mxu0 0.0
        %1863 = vmatpush1.msra.mxu0 0.0
        %1864 = vmatprep.subr.mxu0 0.0
        %1865 = vmatpush1.msra.mxu0 0.0
        %1866 = vmatprep.subr.mxu0 0.0
        %1867 = vmatpush1.msra.mxu0 0.0
        %1868 = vmatprep.subr.mxu0 0.0
        %1869 = vmatpush1.msra.mxu0 0.0
        %1870 = vmatprep.subr.mxu0 0.0
        %1871 = vmatpush1.msra.mxu0 0.0
        %1872 = vmatprep.subr.mxu0 0.0
        %1873 = vmatpush1.msra.mxu0 0.0
        %1874 = vmatprep.subr.mxu0 0.0
        %1875 = vmatpush1.msra.mxu0 0.0
        %1876 = vmatprep.subr.mxu0 0.0
        %1877 = vmatpush1.msra.mxu0 0.0
        %1878 = vmatprep.subr.mxu0 0.0
        %1879 = vmatpush1.msra.mxu0 0.0
        %1880 = vmatprep.subr.mxu0 0.0
        %1881 = vmatpush1.msra.mxu0 0.0
        %1882 = vmatprep.subr.mxu0 0.0
        %1883 = vmatpush1.msra.mxu0 0.0
        %1884 = vmatprep.subr.mxu0 0.0
        %1885 = vmatpush1.msra.mxu0 0.0
        %1886 = vmatprep.subr.mxu0 0.0
        %1887 = vmatpush1.msra.mxu0 0.0
        %1888 = vmatprep.subr.mxu0 0.0
        %1889 = vmatpush1.msra.mxu0 0.0
        %1890 = vmatprep.subr.mxu0 0.0
        %1891 = vmatpush1.msra.mxu0 0.0
        %1892 = vmatprep.subr.mxu0 0.0
        %1893 = vmatpush1.msra.mxu0 0.0
        %1894 = vmatprep.subr.mxu0 0.0
        %1895 = vmatpush1.msra.mxu0 0.0
        %1896 = vmatprep.mubr.f32.mxu0 0.0
        %1897 = vmatmul.mubr.f32.gmra.mrb[0].mxu0 %v1785
        %v1898 = vpop.f32.mrb[0].mxu0
        %v1899 = vadd.f32 0.0, %v1898
        %v1900 = vpop.f32.mrb[0].mxu0
        %1901 = vmatprep.mubr.f32.mxu0 0.0
        %1902 = vmatmul.mubr.f32.gmra.mrb[0].mxu0 %v1788
        %v1903 = vpop.f32.mrb[0].mxu0
        %v1904 = vadd.f32 0.0, %v1903
        %v1905 = vpop.f32.mrb[0].mxu0
        %1906 = vmatprep.mubr.f32.mxu0 0.0
        %1907 = vmatmul.mubr.f32.gmra.mrb[0].mxu0 %v1791
        %v1908 = vpop.f32.mrb[0].mxu0
        %v1909 = vadd.f32 0.0, %v1908
        %v1910 = vpop.f32.mrb[0].mxu0
        %1911 = vmatprep.mubr.f32.mxu0 0.0
        %1912 = vmatmul.mubr.f32.gmra.mrb[0].mxu0 %v1794
        %v1913 = vpop.f32.mrb[0].mxu0
        %v1914 = vadd.f32 0.0, %v1913
        %v1915 = vpop.f32.mrb[0].mxu0
        %1916 = vmatprep.mubr.f32.mxu0 0.0
        %1917 = vmatmul.mubr.f32.gmra.mrb[0].mxu0 %v1797
        %v1918 = vpop.f32.mrb[0].mxu0
        %v1919 = vadd.f32 0.0, %v1918
        %v1920 = vpop.f32.mrb[0].mxu0
        %1921 = vmatprep.mubr.f32.mxu0 0.0
        %1922 = vmatmul.mubr.f32.gmra.mrb[0].mxu0 %v1800
        %v1923 = vpop.f32.mrb[0].mxu0
        %v1924 = vadd.f32 0.0, %v1923
        %v1925 = vpop.f32.mrb[0].mxu0
        %1926 = vmatprep.mubr.f32.mxu0 0.0
        %1927 = vmatmul.mubr.f32.gmra.mrb[0].mxu0 %v1803
        %v1928 = vpop.f32.mrb[0].mxu0
        %v1929 = vadd.f32 0.0, %v1928
        %v1930 = vpop.f32.mrb[0].mxu0
        %1931 = vmatprep.mubr.f32.mxu0 0.0
        %1932 = vmatmul.mubr.f32.gmra.mrb[0].mxu0 %v1806
        %v1933 = vpop.f32.mrb[0].mxu0
        %v1934 = vadd.f32 0.0, %v1933
        %v1935 = vpop.f32.mrb[0].mxu0
        %1936 = vmatprep.mubr.f32.mxu0 0.0
        %1937 = vmatmul.mubr.f32.gmra.mrb[0].mxu0 %v1809
        %v1938 = vpop.f32.mrb[0].mxu0
        %v1939 = vadd.f32 0.0, %v1938
        %v1940 = vpop.f32.mrb[0].mxu0
        %1941 = vmatprep.mubr.f32.mxu0 0.0
        %1942 = vmatmul.mubr.f32.gmra.mrb[0].mxu0 %v1812
        %v1943 = vpop.f32.mrb[0].mxu0
        %v1944 = vadd.f32 0.0, %v1943
        %v1945 = vpop.f32.mrb[0].mxu0
        %1946 = vmatprep.mubr.f32.mxu0 0.0
        %1947 = vmatmul.mubr.f32.gmra.mrb[0].mxu0 %v1815
        %v1948 = vpop.f32.mrb[0].mxu0
        %v1949 = vadd.f32 0.0, %v1948
        %v1950 = vpop.f32.mrb[0].mxu0
        %1951 = vmatprep.mubr.f32.mxu0 0.0
        %1952 = vmatmul.mubr.f32.gmra.mrb[0].mxu0 %v1818
        %v1953 = vpop.f32.mrb[0].mxu0
        %v1954 = vadd.f32 0.0, %v1953
        %v1955 = vpop.f32.mrb[0].mxu0
        %1956 = vmatprep.mubr.f32.mxu0 0.0
        %1957 = vmatmul.mubr.f32.gmra.mrb[0].mxu0 %v1821
        %v1958 = vpop.f32.mrb[0].mxu0
        %v1959 = vadd.f32 0.0, %v1958
        %v1960 = vpop.f32.mrb[0].mxu0
        %1961 = vmatprep.mubr.f32.mxu0 0.0
        %1962 = vmatmul.mubr.f32.gmra.mrb[0].mxu0 %v1824
        %v1963 = vpop.f32.mrb[0].mxu0
        %v1964 = vadd.f32 0.0, %v1963
        %v1965 = vpop.f32.mrb[0].mxu0
        %1966 = vmatprep.mubr.f32.mxu0 0.0
        %1967 = vmatmul.mubr.f32.gmra.mrb[0].mxu0 %v1827
        %v1968 = vpop.f32.mrb[0].mxu0
        %v1969 = vadd.f32 0.0, %v1968
        %v1970 = vpop.f32.mrb[0].mxu0
        %1971 = vmatprep.mubr.f32.mxu0 0.0
        %1972 = vmatmul.mubr.f32.gmra.mrb[0].mxu0 %v1830
        %v1973 = vpop.f32.mrb[0].mxu0
        %v1974 = vadd.f32 0.0, %v1973
        %v1975 = vpop.f32.mrb[0].mxu0
        %1976 = vdwg.mxu0
        %v1978 = vsel %vm625, %v601, 0
        %v1981 = vsel %vm625, %v602, 0
        %v1984 = vsel %vm625, %v603, 0
        %v1987 = vsel %vm625, %v604, 0
        %v1990 = vsel %vm625, %v605, 0
        %v1993 = vsel %vm625, %v606, 0
        %v1996 = vsel %vm625, %v607, 0
        %v1999 = vsel %vm625, %v608, 0
        %v2002 = vsel %vm625, %v609, 0
        %v2005 = vsel %vm625, %v610, 0
        %v2008 = vsel %vm625, %v611, 0
        %v2011 = vsel %vm625, %v612, 0
        %v2014 = vsel %vm625, %v613, 0
        %v2017 = vsel %vm625, %v614, 0
        %v2020 = vsel %vm625, %v615, 0
        %v2023 = vsel %vm625, %v616, 0
        %2025 = vmatprep.subr.mxu0 0.0
        %2026 = vmatpush1.msra.mxu0 %v624
        %2027 = vmatprep.subr.mxu0 0.0
        %2028 = vmatpush1.msra.mxu0 0.0
        %2029 = vmatprep.subr.mxu0 0.0
        %2030 = vmatpush1.msra.mxu0 0.0
        %2031 = vmatprep.subr.mxu0 0.0
        %2032 = vmatpush1.msra.mxu0 0.0
        %2033 = vmatprep.subr.mxu0 0.0
        %2034 = vmatpush1.msra.mxu0 0.0
        %2035 = vmatprep.subr.mxu0 0.0
        %2036 = vmatpush1.msra.mxu0 0.0
        %2037 = vmatprep.subr.mxu0 0.0
        %2038 = vmatpush1.msra.mxu0 0.0
        %2039 = vmatprep.subr.mxu0 0.0
        %2040 = vmatpush1.msra.mxu0 0.0
        %2041 = vmatprep.subr.mxu0 0.0
        %2042 = vmatpush1.msra.mxu0 0.0
        %2043 = vmatprep.subr.mxu0 0.0
        %2044 = vmatpush1.msra.mxu0 0.0
        %2045 = vmatprep.subr.mxu0 0.0
        %2046 = vmatpush1.msra.mxu0 0.0
        %2047 = vmatprep.subr.mxu0 0.0
        %2048 = vmatpush1.msra.mxu0 0.0
        %2049 = vmatprep.subr.mxu0 0.0
        %2050 = vmatpush1.msra.mxu0 0.0
        %2051 = vmatprep.subr.mxu0 0.0
        %2052 = vmatpush1.msra.mxu0 0.0
        %2053 = vmatprep.subr.mxu0 0.0
        %2054 = vmatpush1.msra.mxu0 0.0
        %2055 = vmatprep.subr.mxu0 0.0
        %2056 = vmatpush1.msra.mxu0 0.0
        %2057 = vmatprep.subr.mxu0 0.0
        %2058 = vmatpush1.msra.mxu0 0.0
        %2059 = vmatprep.subr.mxu0 0.0
        %2060 = vmatpush1.msra.mxu0 0.0
        %2061 = vmatprep.subr.mxu0 0.0
        %2062 = vmatpush1.msra.mxu0 0.0
        %2063 = vmatprep.subr.mxu0 0.0
        %2064 = vmatpush1.msra.mxu0 0.0
        %2065 = vmatprep.subr.mxu0 0.0
        %2066 = vmatpush1.msra.mxu0 0.0
        %2067 = vmatprep.subr.mxu0 0.0
        %2068 = vmatpush1.msra.mxu0 0.0
        %2069 = vmatprep.subr.mxu0 0.0
        %2070 = vmatpush1.msra.mxu0 0.0
        %2071 = vmatprep.subr.mxu0 0.0
        %2072 = vmatpush1.msra.mxu0 0.0
        %2073 = vmatprep.subr.mxu0 0.0
        %2074 = vmatpush1.msra.mxu0 0.0
        %2075 = vmatprep.subr.mxu0 0.0
        %2076 = vmatpush1.msra.mxu0 0.0
        %2077 = vmatprep.subr.mxu0 0.0
        %2078 = vmatpush1.msra.mxu0 0.0
        %2079 = vmatprep.subr.mxu0 0.0
        %2080 = vmatpush1.msra.mxu0 0.0
        %2081 = vmatprep.subr.mxu0 0.0
        %2082 = vmatpush1.msra.mxu0 0.0
        %2083 = vmatprep.subr.mxu0 0.0
        %2084 = vmatpush1.msra.mxu0 0.0
        %2085 = vmatprep.subr.mxu0 0.0
        %2086 = vmatpush1.msra.mxu0 0.0
        %2087 = vmatprep.subr.mxu0 0.0
        %2088 = vmatpush1.msra.mxu0 0.0
        %2089 = vmatprep.mubr.f32.mxu0 0.0
        %2090 = vmatmul.mubr.f32.gmra.mrb[0].mxu0 %v1978
        %v2091 = vpop.f32.mrb[0].mxu0
        %v2092 = vadd.f32 0.0, %v2091
        %v2093 = vpop.f32.mrb[0].mxu0
        %2094 = vmatprep.mubr.f32.mxu0 0.0
        %2095 = vmatmul.mubr.f32.gmra.mrb[0].mxu0 %v1981
        %v2096 = vpop.f32.mrb[0].mxu0
        %v2097 = vadd.f32 0.0, %v2096
        %v2098 = vpop.f32.mrb[0].mxu0
        %2099 = vmatprep.mubr.f32.mxu0 0.0
        %2100 = vmatmul.mubr.f32.gmra.mrb[0].mxu0 %v1984
        %v2101 = vpop.f32.mrb[0].mxu0
        %v2102 = vadd.f32 0.0, %v2101
        %v2103 = vpop.f32.mrb[0].mxu0
        %2104 = vmatprep.mubr.f32.mxu0 0.0
        %2105 = vmatmul.mubr.f32.gmra.mrb[0].mxu0 %v1987
        %v2106 = vpop.f32.mrb[0].mxu0
        %v2107 = vadd.f32 0.0, %v2106
        %v2108 = vpop.f32.mrb[0].mxu0
        %2109 = vmatprep.mubr.f32.mxu0 0.0
        %2110 = vmatmul.mubr.f32.gmra.mrb[0].mxu0 %v1990
        %v2111 = vpop.f32.mrb[0].mxu0
        %v2112 = vadd.f32 0.0, %v2111
        %v2113 = vpop.f32.mrb[0].mxu0
        %2114 = vmatprep.mubr.f32.mxu0 0.0
        %2115 = vmatmul.mubr.f32.gmra.mrb[0].mxu0 %v1993
        %v2116 = vpop.f32.mrb[0].mxu0
        %v2117 = vadd.f32 0.0, %v2116
        %v2118 = vpop.f32.mrb[0].mxu0
        %2119 = vmatprep.mubr.f32.mxu0 0.0
        %2120 = vmatmul.mubr.f32.gmra.mrb[0].mxu0 %v1996
        %v2121 = vpop.f32.mrb[0].mxu0
        %v2122 = vadd.f32 0.0, %v2121
        %v2123 = vpop.f32.mrb[0].mxu0
        %2124 = vmatprep.mubr.f32.mxu0 0.0
        %2125 = vmatmul.mubr.f32.gmra.mrb[0].mxu0 %v1999
        %v2126 = vpop.f32.mrb[0].mxu0
        %v2127 = vadd.f32 0.0, %v2126
        %v2128 = vpop.f32.mrb[0].mxu0
        %2129 = vmatprep.mubr.f32.mxu0 0.0
        %2130 = vmatmul.mubr.f32.gmra.mrb[0].mxu0 %v2002
        %v2131 = vpop.f32.mrb[0].mxu0
        %v2132 = vadd.f32 0.0, %v2131
        %v2133 = vpop.f32.mrb[0].mxu0
        %2134 = vmatprep.mubr.f32.mxu0 0.0
        %2135 = vmatmul.mubr.f32.gmra.mrb[0].mxu0 %v2005
        %v2136 = vpop.f32.mrb[0].mxu0
        %v2137 = vadd.f32 0.0, %v2136
        %v2138 = vpop.f32.mrb[0].mxu0
        %2139 = vmatprep.mubr.f32.mxu0 0.0
        %2140 = vmatmul.mubr.f32.gmra.mrb[0].mxu0 %v2008
        %v2141 = vpop.f32.mrb[0].mxu0
        %v2142 = vadd.f32 0.0, %v2141
        %v2143 = vpop.f32.mrb[0].mxu0
        %2144 = vmatprep.mubr.f32.mxu0 0.0
        %2145 = vmatmul.mubr.f32.gmra.mrb[0].mxu0 %v2011
        %v2146 = vpop.f32.mrb[0].mxu0
        %v2147 = vadd.f32 0.0, %v2146
        %v2148 = vpop.f32.mrb[0].mxu0
        %2149 = vmatprep.mubr.f32.mxu0 0.0
        %2150 = vmatmul.mubr.f32.gmra.mrb[0].mxu0 %v2014
        %v2151 = vpop.f32.mrb[0].mxu0
        %v2152 = vadd.f32 0.0, %v2151
        %v2153 = vpop.f32.mrb[0].mxu0
        %2154 = vmatprep.mubr.f32.mxu0 0.0
        %2155 = vmatmul.mubr.f32.gmra.mrb[0].mxu0 %v2017
        %v2156 = vpop.f32.mrb[0].mxu0
        %v2157 = vadd.f32 0.0, %v2156
        %v2158 = vpop.f32.mrb[0].mxu0
        %2159 = vmatprep.mubr.f32.mxu0 0.0
        %2160 = vmatmul.mubr.f32.gmra.mrb[0].mxu0 %v2020
        %v2161 = vpop.f32.mrb[0].mxu0
        %v2162 = vadd.f32 0.0, %v2161
        %v2163 = vpop.f32.mrb[0].mxu0
        %2164 = vmatprep.mubr.f32.mxu0 0.0
        %2165 = vmatmul.mubr.f32.gmra.mrb[0].mxu0 %v2023
        %v2166 = vpop.f32.mrb[0].mxu0
        %v2167 = vadd.f32 0.0, %v2166
        %v2168 = vpop.f32.mrb[0].mxu0
        %2169 = vdwg.mxu0
        %v2170 = vsel %vm336, 1, 0
        %vm2171 = vcmp.eq.s32.totalorder %v2170, 1
        %v2172 = vsel %vm2171, %v741, -inf
        %v2173 = vsel %vm2171, %v746, -inf
        %v2174 = vsel %vm2171, %v751, -inf
        %v2175 = vsel %vm2171, %v756, -inf
        %v2176 = vsel %vm2171, %v761, -inf
        %v2177 = vsel %vm2171, %v766, -inf
        %v2178 = vsel %vm2171, %v771, -inf
        %v2179 = vsel %vm2171, %v776, -inf
        %v2180 = vsel %vm2171, %v781, -inf
        %v2181 = vsel %vm2171, %v786, -inf
        %v2182 = vsel %vm2171, %v791, -inf
        %v2183 = vsel %vm2171, %v796, -inf
        %v2184 = vsel %vm2171, %v801, -inf
        %v2185 = vsel %vm2171, %v806, -inf
        %v2186 = vsel %vm2171, %v811, -inf
        %v2187 = vsel %vm2171, %v816, -inf
        %v2188 = vsel %vm2171, %v934, -inf
        %v2189 = vsel %vm2171, %v939, -inf
        %v2190 = vsel %vm2171, %v944, -inf
        %v2191 = vsel %vm2171, %v949, -inf
        %v2192 = vsel %vm2171, %v954, -inf
        %v2193 = vsel %vm2171, %v959, -inf
        %v2194 = vsel %vm2171, %v964, -inf
        %v2195 = vsel %vm2171, %v969, -inf
        %v2196 = vsel %vm2171, %v974, -inf
        %v2197 = vsel %vm2171, %v979, -inf
        %v2198 = vsel %vm2171, %v984, -inf
        %v2199 = vsel %vm2171, %v989, -inf
        %v2200 = vsel %vm2171, %v994, -inf
        %v2201 = vsel %vm2171, %v999, -inf
        %v2202 = vsel %vm2171, %v1004, -inf
        %v2203 = vsel %vm2171, %v1009, -inf
        %v2204 = vsel %vm2171, %v1127, -inf
        %v2205 = vsel %vm2171, %v1132, -inf
        %v2206 = vsel %vm2171, %v1137, -inf
        %v2207 = vsel %vm2171, %v1142, -inf
        %v2208 = vsel %vm2171, %v1147, -inf
        %v2209 = vsel %vm2171, %v1152, -inf
        %v2210 = vsel %vm2171, %v1157, -inf
        %v2211 = vsel %vm2171, %v1162, -inf
        %v2212 = vsel %vm2171, %v1167, -inf
        %v2213 = vsel %vm2171, %v1172, -inf
        %v2214 = vsel %vm2171, %v1177, -inf
        %v2215 = vsel %vm2171, %v1182, -inf
        %v2216 = vsel %vm2171, %v1187, -inf
        %v2217 = vsel %vm2171, %v1192, -inf
        %v2218 = vsel %vm2171, %v1197, -inf
        %v2219 = vsel %vm2171, %v1202, -inf
        %v2220 = vsel %vm2171, %v1320, -inf
        %v2221 = vsel %vm2171, %v1325, -inf
        %v2222 = vsel %vm2171, %v1330, -inf
        %v2223 = vsel %vm2171, %v1335, -inf
        %v2224 = vsel %vm2171, %v1340, -inf
        %v2225 = vsel %vm2171, %v1345, -inf
        %v2226 = vsel %vm2171, %v1350, -inf
        %v2227 = vsel %vm2171, %v1355, -inf
        %v2228 = vsel %vm2171, %v1360, -inf
        %v2229 = vsel %vm2171, %v1365, -inf
        %v2230 = vsel %vm2171, %v1370, -inf
        %v2231 = vsel %vm2171, %v1375, -inf
        %v2232 = vsel %vm2171, %v1380, -inf
        %v2233 = vsel %vm2171, %v1385, -inf
        %v2234 = vsel %vm2171, %v1390, -inf
        %v2235 = vsel %vm2171, %v1395, -inf
        %v2236 = vsel %vm2171, %v1513, -inf
        %v2237 = vsel %vm2171, %v1518, -inf
        %v2238 = vsel %vm2171, %v1523, -inf
        %v2239 = vsel %vm2171, %v1528, -inf
        %v2240 = vsel %vm2171, %v1533, -inf
        %v2241 = vsel %vm2171, %v1538, -inf
        %v2242 = vsel %vm2171, %v1543, -inf
        %v2243 = vsel %vm2171, %v1548, -inf
        %v2244 = vsel %vm2171, %v1553, -inf
        %v2245 = vsel %vm2171, %v1558, -inf
        %v2246 = vsel %vm2171, %v1563, -inf
        %v2247 = vsel %vm2171, %v1568, -inf
        %v2248 = vsel %vm2171, %v1573, -inf
        %v2249 = vsel %vm2171, %v1578, -inf
        %v2250 = vsel %vm2171, %v1583, -inf
        %v2251 = vsel %vm2171, %v1588, -inf
        %v2252 = vsel %vm2171, %v1706, -inf
        %v2253 = vsel %vm2171, %v1711, -inf
        %v2254 = vsel %vm2171, %v1716, -inf
        %v2255 = vsel %vm2171, %v1721, -inf
        %v2256 = vsel %vm2171, %v1726, -inf
        %v2257 = vsel %vm2171, %v1731, -inf
        %v2258 = vsel %vm2171, %v1736, -inf
        %v2259 = vsel %vm2171, %v1741, -inf
        %v2260 = vsel %vm2171, %v1746, -inf
        %v2261 = vsel %vm2171, %v1751, -inf
        %v2262 = vsel %vm2171, %v1756, -inf
        %v2263 = vsel %vm2171, %v1761, -inf
        %v2264 = vsel %vm2171, %v1766, -inf
        %v2265 = vsel %vm2171, %v1771, -inf
        %v2266 = vsel %vm2171, %v1776, -inf
        %v2267 = vsel %vm2171, %v1781, -inf
        %v2268 = vsel %vm2171, %v1899, -inf
        %v2269 = vsel %vm2171, %v1904, -inf
        %v2270 = vsel %vm2171, %v1909, -inf
        %v2271 = vsel %vm2171, %v1914, -inf
        %v2272 = vsel %vm2171, %v1919, -inf
        %v2273 = vsel %vm2171, %v1924, -inf
        %v2274 = vsel %vm2171, %v1929, -inf
        %v2275 = vsel %vm2171, %v1934, -inf
        %v2276 = vsel %vm2171, %v1939, -inf
        %v2277 = vsel %vm2171, %v1944, -inf
        %v2278 = vsel %vm2171, %v1949, -inf
        %v2279 = vsel %vm2171, %v1954, -inf
        %v2280 = vsel %vm2171, %v1959, -inf
        %v2281 = vsel %vm2171, %v1964, -inf
        %v2282 = vsel %vm2171, %v1969, -inf
        %v2283 = vsel %vm2171, %v1974, -inf
        %v2284 = vsel %vm2171, %v2092, -inf
        %v2285 = vsel %vm2171, %v2097, -inf
        %v2286 = vsel %vm2171, %v2102, -inf
        %v2287 = vsel %vm2171, %v2107, -inf
        %v2288 = vsel %vm2171, %v2112, -inf
        %v2289 = vsel %vm2171, %v2117, -inf
        %v2290 = vsel %vm2171, %v2122, -inf
        %v2291 = vsel %vm2171, %v2127, -inf
        %v2292 = vsel %vm2171, %v2132, -inf
        %v2293 = vsel %vm2171, %v2137, -inf
        %v2294 = vsel %vm2171, %v2142, -inf
        %v2295 = vsel %vm2171, %v2147, -inf
        %v2296 = vsel %vm2171, %v2152, -inf
        %v2297 = vsel %vm2171, %v2157, -inf
        %v2298 = vsel %vm2171, %v2162, -inf
        %v2299 = vsel %vm2171, %v2167, -inf
        %2300 = vmax.xlane.f32.xlu0 %v2172
        %v2301 = vpop.xlane.xlu0 %2300
        %2302 = vmax.xlane.f32.xlu0 %v2173
        %v2303 = vpop.xlane.xlu0 %2302
        %2304 = vmax.xlane.f32.xlu0 %v2174
        %v2305 = vpop.xlane.xlu0 %2304
        %2306 = vmax.xlane.f32.xlu0 %v2175
        %v2307 = vpop.xlane.xlu0 %2306
        %2308 = vmax.xlane.f32.xlu0 %v2176
        %v2309 = vpop.xlane.xlu0 %2308
        %2310 = vmax.xlane.f32.xlu0 %v2177
        %v2311 = vpop.xlane.xlu0 %2310
        %2312 = vmax.xlane.f32.xlu0 %v2178
        %v2313 = vpop.xlane.xlu0 %2312
        %2314 = vmax.xlane.f32.xlu0 %v2179
        %v2315 = vpop.xlane.xlu0 %2314
        %2316 = vmax.xlane.f32.xlu0 %v2180
        %v2317 = vpop.xlane.xlu0 %2316
        %2318 = vmax.xlane.f32.xlu0 %v2181
        %v2319 = vpop.xlane.xlu0 %2318
        %2320 = vmax.xlane.f32.xlu0 %v2182
        %v2321 = vpop.xlane.xlu0 %2320
        %2322 = vmax.xlane.f32.xlu0 %v2183
        %v2323 = vpop.xlane.xlu0 %2322
        %2324 = vmax.xlane.f32.xlu0 %v2184
        %v2325 = vpop.xlane.xlu0 %2324
        %2326 = vmax.xlane.f32.xlu0 %v2185
        %v2327 = vpop.xlane.xlu0 %2326
        %2328 = vmax.xlane.f32.xlu0 %v2186
        %v2329 = vpop.xlane.xlu0 %2328
        %2330 = vmax.xlane.f32.xlu0 %v2187
        %v2331 = vpop.xlane.xlu0 %2330
        %2332 = vmax.xlane.f32.xlu0 %v2188
        %v2333 = vpop.xlane.xlu0 %2332
        %2334 = vmax.xlane.f32.xlu0 %v2189
        %v2335 = vpop.xlane.xlu0 %2334
        %2336 = vmax.xlane.f32.xlu0 %v2190
        %v2337 = vpop.xlane.xlu0 %2336
        %2338 = vmax.xlane.f32.xlu0 %v2191
        %v2339 = vpop.xlane.xlu0 %2338
        %2340 = vmax.xlane.f32.xlu0 %v2192
        %v2341 = vpop.xlane.xlu0 %2340
        %2342 = vmax.xlane.f32.xlu0 %v2193
        %v2343 = vpop.xlane.xlu0 %2342
        %2344 = vmax.xlane.f32.xlu0 %v2194
        %v2345 = vpop.xlane.xlu0 %2344
        %2346 = vmax.xlane.f32.xlu0 %v2195
        %v2347 = vpop.xlane.xlu0 %2346
        %2348 = vmax.xlane.f32.xlu0 %v2196
        %v2349 = vpop.xlane.xlu0 %2348
        %2350 = vmax.xlane.f32.xlu0 %v2197
        %v2351 = vpop.xlane.xlu0 %2350
        %2352 = vmax.xlane.f32.xlu0 %v2198
        %v2353 = vpop.xlane.xlu0 %2352
        %2354 = vmax.xlane.f32.xlu0 %v2199
        %v2355 = vpop.xlane.xlu0 %2354
        %2356 = vmax.xlane.f32.xlu0 %v2200
        %v2357 = vpop.xlane.xlu0 %2356
        %2358 = vmax.xlane.f32.xlu0 %v2201
        %v2359 = vpop.xlane.xlu0 %2358
        %2360 = vmax.xlane.f32.xlu0 %v2202
        %v2361 = vpop.xlane.xlu0 %2360
        %2362 = vmax.xlane.f32.xlu0 %v2203
        %v2363 = vpop.xlane.xlu0 %2362
        %2364 = vmax.xlane.f32.xlu0 %v2204
        %v2365 = vpop.xlane.xlu0 %2364
        %2366 = vmax.xlane.f32.xlu0 %v2205
        %v2367 = vpop.xlane.xlu0 %2366
        %2368 = vmax.xlane.f32.xlu0 %v2206
        %v2369 = vpop.xlane.xlu0 %2368
        %2370 = vmax.xlane.f32.xlu0 %v2207
        %v2371 = vpop.xlane.xlu0 %2370
        %2372 = vmax.xlane.f32.xlu0 %v2208
        %v2373 = vpop.xlane.xlu0 %2372
        %2374 = vmax.xlane.f32.xlu0 %v2209
        %v2375 = vpop.xlane.xlu0 %2374
        %2376 = vmax.xlane.f32.xlu0 %v2210
        %v2377 = vpop.xlane.xlu0 %2376
        %2378 = vmax.xlane.f32.xlu0 %v2211
        %v2379 = vpop.xlane.xlu0 %2378
        %2380 = vmax.xlane.f32.xlu0 %v2212
        %v2381 = vpop.xlane.xlu0 %2380
        %2382 = vmax.xlane.f32.xlu0 %v2213
        %v2383 = vpop.xlane.xlu0 %2382
        %2384 = vmax.xlane.f32.xlu0 %v2214
        %v2385 = vpop.xlane.xlu0 %2384
        %2386 = vmax.xlane.f32.xlu0 %v2215
        %v2387 = vpop.xlane.xlu0 %2386
        %2388 = vmax.xlane.f32.xlu0 %v2216
        %v2389 = vpop.xlane.xlu0 %2388
        %2390 = vmax.xlane.f32.xlu0 %v2217
        %v2391 = vpop.xlane.xlu0 %2390
        %2392 = vmax.xlane.f32.xlu0 %v2218
        %v2393 = vpop.xlane.xlu0 %2392
        %2394 = vmax.xlane.f32.xlu0 %v2219
        %v2395 = vpop.xlane.xlu0 %2394
        %2396 = vmax.xlane.f32.xlu0 %v2220
        %v2397 = vpop.xlane.xlu0 %2396
        %2398 = vmax.xlane.f32.xlu0 %v2221
        %v2399 = vpop.xlane.xlu0 %2398
        %2400 = vmax.xlane.f32.xlu0 %v2222
        %v2401 = vpop.xlane.xlu0 %2400
        %2402 = vmax.xlane.f32.xlu0 %v2223
        %v2403 = vpop.xlane.xlu0 %2402
        %2404 = vmax.xlane.f32.xlu0 %v2224
        %v2405 = vpop.xlane.xlu0 %2404
        %2406 = vmax.xlane.f32.xlu0 %v2225
        %v2407 = vpop.xlane.xlu0 %2406
        %2408 = vmax.xlane.f32.xlu0 %v2226
        %v2409 = vpop.xlane.xlu0 %2408
        %2410 = vmax.xlane.f32.xlu0 %v2227
        %v2411 = vpop.xlane.xlu0 %2410
        %2412 = vmax.xlane.f32.xlu0 %v2228
        %v2413 = vpop.xlane.xlu0 %2412
        %2414 = vmax.xlane.f32.xlu0 %v2229
        %v2415 = vpop.xlane.xlu0 %2414
        %2416 = vmax.xlane.f32.xlu0 %v2230
        %v2417 = vpop.xlane.xlu0 %2416
        %2418 = vmax.xlane.f32.xlu0 %v2231
        %v2419 = vpop.xlane.xlu0 %2418
        %2420 = vmax.xlane.f32.xlu0 %v2232
        %v2421 = vpop.xlane.xlu0 %2420
        %2422 = vmax.xlane.f32.xlu0 %v2233
        %v2423 = vpop.xlane.xlu0 %2422
        %2424 = vmax.xlane.f32.xlu0 %v2234
        %v2425 = vpop.xlane.xlu0 %2424
        %2426 = vmax.xlane.f32.xlu0 %v2235
        %v2427 = vpop.xlane.xlu0 %2426
        %2428 = vmax.xlane.f32.xlu0 %v2236
        %v2429 = vpop.xlane.xlu0 %2428
        %2430 = vmax.xlane.f32.xlu0 %v2237
        %v2431 = vpop.xlane.xlu0 %2430
        %2432 = vmax.xlane.f32.xlu0 %v2238
        %v2433 = vpop.xlane.xlu0 %2432
        %2434 = vmax.xlane.f32.xlu0 %v2239
        %v2435 = vpop.xlane.xlu0 %2434
        %2436 = vmax.xlane.f32.xlu0 %v2240
        %v2437 = vpop.xlane.xlu0 %2436
        %2438 = vmax.xlane.f32.xlu0 %v2241
        %v2439 = vpop.xlane.xlu0 %2438
        %2440 = vmax.xlane.f32.xlu0 %v2242
        %v2441 = vpop.xlane.xlu0 %2440
        %2442 = vmax.xlane.f32.xlu0 %v2243
        %v2443 = vpop.xlane.xlu0 %2442
        %2444 = vmax.xlane.f32.xlu0 %v2244
        %v2445 = vpop.xlane.xlu0 %2444
        %2446 = vmax.xlane.f32.xlu0 %v2245
        %v2447 = vpop.xlane.xlu0 %2446
        %2448 = vmax.xlane.f32.xlu0 %v2246
        %v2449 = vpop.xlane.xlu0 %2448
        %2450 = vmax.xlane.f32.xlu0 %v2247
        %v2451 = vpop.xlane.xlu0 %2450
        %2452 = vmax.xlane.f32.xlu0 %v2248
        %v2453 = vpop.xlane.xlu0 %2452
        %2454 = vmax.xlane.f32.xlu0 %v2249
        %v2455 = vpop.xlane.xlu0 %2454
        %2456 = vmax.xlane.f32.xlu0 %v2250
        %v2457 = vpop.xlane.xlu0 %2456
        %2458 = vmax.xlane.f32.xlu0 %v2251
        %v2459 = vpop.xlane.xlu0 %2458
        %2460 = vmax.xlane.f32.xlu0 %v2252
        %v2461 = vpop.xlane.xlu0 %2460
        %2462 = vmax.xlane.f32.xlu0 %v2253
        %v2463 = vpop.xlane.xlu0 %2462
        %2464 = vmax.xlane.f32.xlu0 %v2254
        %v2465 = vpop.xlane.xlu0 %2464
        %2466 = vmax.xlane.f32.xlu0 %v2255
        %v2467 = vpop.xlane.xlu0 %2466
        %2468 = vmax.xlane.f32.xlu0 %v2256
        %v2469 = vpop.xlane.xlu0 %2468
        %2470 = vmax.xlane.f32.xlu0 %v2257
        %v2471 = vpop.xlane.xlu0 %2470
        %2472 = vmax.xlane.f32.xlu0 %v2258
        %v2473 = vpop.xlane.xlu0 %2472
        %2474 = vmax.xlane.f32.xlu0 %v2259
        %v2475 = vpop.xlane.xlu0 %2474
        %2476 = vmax.xlane.f32.xlu0 %v2260
        %v2477 = vpop.xlane.xlu0 %2476
        %2478 = vmax.xlane.f32.xlu0 %v2261
        %v2479 = vpop.xlane.xlu0 %2478
        %2480 = vmax.xlane.f32.xlu0 %v2262
        %v2481 = vpop.xlane.xlu0 %2480
        %2482 = vmax.xlane.f32.xlu0 %v2263
        %v2483 = vpop.xlane.xlu0 %2482
        %2484 = vmax.xlane.f32.xlu0 %v2264
        %v2485 = vpop.xlane.xlu0 %2484
        %2486 = vmax.xlane.f32.xlu0 %v2265
        %v2487 = vpop.xlane.xlu0 %2486
        %2488 = vmax.xlane.f32.xlu0 %v2266
        %v2489 = vpop.xlane.xlu0 %2488
        %2490 = vmax.xlane.f32.xlu0 %v2267
        %v2491 = vpop.xlane.xlu0 %2490
        %2492 = vmax.xlane.f32.xlu0 %v2268
        %v2493 = vpop.xlane.xlu0 %2492
        %2494 = vmax.xlane.f32.xlu0 %v2269
        %v2495 = vpop.xlane.xlu0 %2494
        %2496 = vmax.xlane.f32.xlu0 %v2270
        %v2497 = vpop.xlane.xlu0 %2496
        %2498 = vmax.xlane.f32.xlu0 %v2271
        %v2499 = vpop.xlane.xlu0 %2498
        %2500 = vmax.xlane.f32.xlu0 %v2272
        %v2501 = vpop.xlane.xlu0 %2500
        %2502 = vmax.xlane.f32.xlu0 %v2273
        %v2503 = vpop.xlane.xlu0 %2502
        %2504 = vmax.xlane.f32.xlu0 %v2274
        %v2505 = vpop.xlane.xlu0 %2504
        %2506 = vmax.xlane.f32.xlu0 %v2275
        %v2507 = vpop.xlane.xlu0 %2506
        %2508 = vmax.xlane.f32.xlu0 %v2276
        %v2509 = vpop.xlane.xlu0 %2508
        %2510 = vmax.xlane.f32.xlu0 %v2277
        %v2511 = vpop.xlane.xlu0 %2510
        %2512 = vmax.xlane.f32.xlu0 %v2278
        %v2513 = vpop.xlane.xlu0 %2512
        %2514 = vmax.xlane.f32.xlu0 %v2279
        %v2515 = vpop.xlane.xlu0 %2514
        %2516 = vmax.xlane.f32.xlu0 %v2280
        %v2517 = vpop.xlane.xlu0 %2516
        %2518 = vmax.xlane.f32.xlu0 %v2281
        %v2519 = vpop.xlane.xlu0 %2518
        %2520 = vmax.xlane.f32.xlu0 %v2282
        %v2521 = vpop.xlane.xlu0 %2520
        %2522 = vmax.xlane.f32.xlu0 %v2283
        %v2523 = vpop.xlane.xlu0 %2522
        %2524 = vmax.xlane.f32.xlu0 %v2284
        %v2525 = vpop.xlane.xlu0 %2524
        %2526 = vmax.xlane.f32.xlu0 %v2285
        %v2527 = vpop.xlane.xlu0 %2526
        %2528 = vmax.xlane.f32.xlu0 %v2286
        %v2529 = vpop.xlane.xlu0 %2528
        %2530 = vmax.xlane.f32.xlu0 %v2287
        %v2531 = vpop.xlane.xlu0 %2530
        %2532 = vmax.xlane.f32.xlu0 %v2288
        %v2533 = vpop.xlane.xlu0 %2532
        %2534 = vmax.xlane.f32.xlu0 %v2289
        %v2535 = vpop.xlane.xlu0 %2534
        %2536 = vmax.xlane.f32.xlu0 %v2290
        %v2537 = vpop.xlane.xlu0 %2536
        %2538 = vmax.xlane.f32.xlu0 %v2291
        %v2539 = vpop.xlane.xlu0 %2538
        %2540 = vmax.xlane.f32.xlu0 %v2292
        %v2541 = vpop.xlane.xlu0 %2540
        %2542 = vmax.xlane.f32.xlu0 %v2293
        %v2543 = vpop.xlane.xlu0 %2542
        %2544 = vmax.xlane.f32.xlu0 %v2294
        %v2545 = vpop.xlane.xlu0 %2544
        %2546 = vmax.xlane.f32.xlu0 %v2295
        %v2547 = vpop.xlane.xlu0 %2546
        %2548 = vmax.xlane.f32.xlu0 %v2296
        %v2549 = vpop.xlane.xlu0 %2548
        %2550 = vmax.xlane.f32.xlu0 %v2297
        %v2551 = vpop.xlane.xlu0 %2550
        %2552 = vmax.xlane.f32.xlu0 %v2298
        %v2553 = vpop.xlane.xlu0 %2552
        %2554 = vmax.xlane.f32.xlu0 %v2299
        %v2555 = vpop.xlane.xlu0 %2554
        %v2556 = vsub.f32 %v2172, %v2301
        %v2557 = vsub.f32 %v2173, %v2303
        %v2558 = vsub.f32 %v2174, %v2305
        %v2559 = vsub.f32 %v2175, %v2307
        %v2560 = vsub.f32 %v2176, %v2309
        %v2561 = vsub.f32 %v2177, %v2311
        %v2562 = vsub.f32 %v2178, %v2313
        %v2563 = vsub.f32 %v2179, %v2315
        %v2564 = vsub.f32 %v2180, %v2317
        %v2565 = vsub.f32 %v2181, %v2319
        %v2566 = vsub.f32 %v2182, %v2321
        %v2567 = vsub.f32 %v2183, %v2323
        %v2568 = vsub.f32 %v2184, %v2325
        %v2569 = vsub.f32 %v2185, %v2327
        %v2570 = vsub.f32 %v2186, %v2329
        %v2571 = vsub.f32 %v2187, %v2331
        %v2572 = vsub.f32 %v2188, %v2333
        %v2573 = vsub.f32 %v2189, %v2335
        %v2574 = vsub.f32 %v2190, %v2337
        %v2575 = vsub.f32 %v2191, %v2339
        %v2576 = vsub.f32 %v2192, %v2341
        %v2577 = vsub.f32 %v2193, %v2343
        %v2578 = vsub.f32 %v2194, %v2345
        %v2579 = vsub.f32 %v2195, %v2347
        %v2580 = vsub.f32 %v2196, %v2349
        %v2581 = vsub.f32 %v2197, %v2351
        %v2582 = vsub.f32 %v2198, %v2353
        %v2583 = vsub.f32 %v2199, %v2355
        %v2584 = vsub.f32 %v2200, %v2357
        %v2585 = vsub.f32 %v2201, %v2359
        %v2586 = vsub.f32 %v2202, %v2361
        %v2587 = vsub.f32 %v2203, %v2363
        %v2588 = vsub.f32 %v2204, %v2365
        %v2589 = vsub.f32 %v2205, %v2367
        %v2590 = vsub.f32 %v2206, %v2369
        %v2591 = vsub.f32 %v2207, %v2371
        %v2592 = vsub.f32 %v2208, %v2373
        %v2593 = vsub.f32 %v2209, %v2375
        %v2594 = vsub.f32 %v2210, %v2377
        %v2595 = vsub.f32 %v2211, %v2379
        %v2596 = vsub.f32 %v2212, %v2381
        %v2597 = vsub.f32 %v2213, %v2383
        %v2598 = vsub.f32 %v2214, %v2385
        %v2599 = vsub.f32 %v2215, %v2387
        %v2600 = vsub.f32 %v2216, %v2389
        %v2601 = vsub.f32 %v2217, %v2391
        %v2602 = vsub.f32 %v2218, %v2393
        %v2603 = vsub.f32 %v2219, %v2395
        %v2604 = vsub.f32 %v2220, %v2397
        %v2605 = vsub.f32 %v2221, %v2399
        %v2606 = vsub.f32 %v2222, %v2401
        %v2607 = vsub.f32 %v2223, %v2403
        %v2608 = vsub.f32 %v2224, %v2405
        %v2609 = vsub.f32 %v2225, %v2407
        %v2610 = vsub.f32 %v2226, %v2409
        %v2611 = vsub.f32 %v2227, %v2411
        %v2612 = vsub.f32 %v2228, %v2413
        %v2613 = vsub.f32 %v2229, %v2415
        %v2614 = vsub.f32 %v2230, %v2417
        %v2615 = vsub.f32 %v2231, %v2419
        %v2616 = vsub.f32 %v2232, %v2421
        %v2617 = vsub.f32 %v2233, %v2423
        %v2618 = vsub.f32 %v2234, %v2425
        %v2619 = vsub.f32 %v2235, %v2427
        %v2620 = vsub.f32 %v2236, %v2429
        %v2621 = vsub.f32 %v2237, %v2431
        %v2622 = vsub.f32 %v2238, %v2433
        %v2623 = vsub.f32 %v2239, %v2435
        %v2624 = vsub.f32 %v2240, %v2437
        %v2625 = vsub.f32 %v2241, %v2439
        %v2626 = vsub.f32 %v2242, %v2441
        %v2627 = vsub.f32 %v2243, %v2443
        %v2628 = vsub.f32 %v2244, %v2445
        %v2629 = vsub.f32 %v2245, %v2447
        %v2630 = vsub.f32 %v2246, %v2449
        %v2631 = vsub.f32 %v2247, %v2451
        %v2632 = vsub.f32 %v2248, %v2453
        %v2633 = vsub.f32 %v2249, %v2455
        %v2634 = vsub.f32 %v2250, %v2457
        %v2635 = vsub.f32 %v2251, %v2459
        %v2636 = vsub.f32 %v2252, %v2461
        %v2637 = vsub.f32 %v2253, %v2463
        %v2638 = vsub.f32 %v2254, %v2465
        %v2639 = vsub.f32 %v2255, %v2467
        %v2640 = vsub.f32 %v2256, %v2469
        %v2641 = vsub.f32 %v2257, %v2471
        %v2642 = vsub.f32 %v2258, %v2473
        %v2643 = vsub.f32 %v2259, %v2475
        %v2644 = vsub.f32 %v2260, %v2477
        %v2645 = vsub.f32 %v2261, %v2479
        %v2646 = vsub.f32 %v2262, %v2481
        %v2647 = vsub.f32 %v2263, %v2483
        %v2648 = vsub.f32 %v2264, %v2485
        %v2649 = vsub.f32 %v2265, %v2487
        %v2650 = vsub.f32 %v2266, %v2489
        %v2651 = vsub.f32 %v2267, %v2491
        %v2652 = vsub.f32 %v2268, %v2493
        %v2653 = vsub.f32 %v2269, %v2495
        %v2654 = vsub.f32 %v2270, %v2497
        %v2655 = vsub.f32 %v2271, %v2499
        %v2656 = vsub.f32 %v2272, %v2501
        %v2657 = vsub.f32 %v2273, %v2503
        %v2658 = vsub.f32 %v2274, %v2505
        %v2659 = vsub.f32 %v2275, %v2507
        %v2660 = vsub.f32 %v2276, %v2509
        %v2661 = vsub.f32 %v2277, %v2511
        %v2662 = vsub.f32 %v2278, %v2513
        %v2663 = vsub.f32 %v2279, %v2515
        %v2664 = vsub.f32 %v2280, %v2517
        %v2665 = vsub.f32 %v2281, %v2519
        %v2666 = vsub.f32 %v2282, %v2521
        %v2667 = vsub.f32 %v2283, %v2523
        %v2668 = vsub.f32 %v2284, %v2525
        %v2669 = vsub.f32 %v2285, %v2527
        %v2670 = vsub.f32 %v2286, %v2529
        %v2671 = vsub.f32 %v2287, %v2531
        %v2672 = vsub.f32 %v2288, %v2533
        %v2673 = vsub.f32 %v2289, %v2535
        %v2674 = vsub.f32 %v2290, %v2537
        %v2675 = vsub.f32 %v2291, %v2539
        %v2676 = vsub.f32 %v2292, %v2541
        %v2677 = vsub.f32 %v2293, %v2543
        %v2678 = vsub.f32 %v2294, %v2545
        %v2679 = vsub.f32 %v2295, %v2547
        %v2680 = vsub.f32 %v2296, %v2549
        %v2681 = vsub.f32 %v2297, %v2551
        %v2682 = vsub.f32 %v2298, %v2553
        %v2683 = vsub.f32 %v2299, %v2555
        %v2684 = vmul.f32 %v2556, 1.442695
        %v2685 = vpow.pop %v2684
        %v2686 = vmul.f32 %v2557, 1.442695
        %v2687 = vpow.pop %v2686
        %v2688 = vmul.f32 %v2558, 1.442695
        %v2689 = vpow.pop %v2688
        %v2690 = vmul.f32 %v2559, 1.442695
        %v2691 = vpow.pop %v2690
        %v2692 = vmul.f32 %v2560, 1.442695
        %v2693 = vpow.pop %v2692
        %v2694 = vmul.f32 %v2561, 1.442695
        %v2695 = vpow.pop %v2694
        %v2696 = vmul.f32 %v2562, 1.442695
        %v2697 = vpow.pop %v2696
        %v2698 = vmul.f32 %v2563, 1.442695
        %v2699 = vpow.pop %v2698
        %v2700 = vmul.f32 %v2564, 1.442695
        %v2701 = vpow.pop %v2700
        %v2702 = vmul.f32 %v2565, 1.442695
        %v2703 = vpow.pop %v2702
        %v2704 = vmul.f32 %v2566, 1.442695
        %v2705 = vpow.pop %v2704
        %v2706 = vmul.f32 %v2567, 1.442695
        %v2707 = vpow.pop %v2706
        %v2708 = vmul.f32 %v2568, 1.442695
        %v2709 = vpow.pop %v2708
        %v2710 = vmul.f32 %v2569, 1.442695
        %v2711 = vpow.pop %v2710
        %v2712 = vmul.f32 %v2570, 1.442695
        %v2713 = vpow.pop %v2712
        %v2714 = vmul.f32 %v2571, 1.442695
        %v2715 = vpow.pop %v2714
        %v2716 = vmul.f32 %v2572, 1.442695
        %v2717 = vpow.pop %v2716
        %v2718 = vmul.f32 %v2573, 1.442695
        %v2719 = vpow.pop %v2718
        %v2720 = vmul.f32 %v2574, 1.442695
        %v2721 = vpow.pop %v2720
        %v2722 = vmul.f32 %v2575, 1.442695
        %v2723 = vpow.pop %v2722
        %v2724 = vmul.f32 %v2576, 1.442695
        %v2725 = vpow.pop %v2724
        %v2726 = vmul.f32 %v2577, 1.442695
        %v2727 = vpow.pop %v2726
        %v2728 = vmul.f32 %v2578, 1.442695
        %v2729 = vpow.pop %v2728
        %v2730 = vmul.f32 %v2579, 1.442695
        %v2731 = vpow.pop %v2730
        %v2732 = vmul.f32 %v2580, 1.442695
        %v2733 = vpow.pop %v2732
        %v2734 = vmul.f32 %v2581, 1.442695
        %v2735 = vpow.pop %v2734
        %v2736 = vmul.f32 %v2582, 1.442695
        %v2737 = vpow.pop %v2736
        %v2738 = vmul.f32 %v2583, 1.442695
        %v2739 = vpow.pop %v2738
        %v2740 = vmul.f32 %v2584, 1.442695
        %v2741 = vpow.pop %v2740
        %v2742 = vmul.f32 %v2585, 1.442695
        %v2743 = vpow.pop %v2742
        %v2744 = vmul.f32 %v2586, 1.442695
        %v2745 = vpow.pop %v2744
        %v2746 = vmul.f32 %v2587, 1.442695
        %v2747 = vpow.pop %v2746
        %v2748 = vmul.f32 %v2588, 1.442695
        %v2749 = vpow.pop %v2748
        %v2750 = vmul.f32 %v2589, 1.442695
        %v2751 = vpow.pop %v2750
        %v2752 = vmul.f32 %v2590, 1.442695
        %v2753 = vpow.pop %v2752
        %v2754 = vmul.f32 %v2591, 1.442695
        %v2755 = vpow.pop %v2754
        %v2756 = vmul.f32 %v2592, 1.442695
        %v2757 = vpow.pop %v2756
        %v2758 = vmul.f32 %v2593, 1.442695
        %v2759 = vpow.pop %v2758
        %v2760 = vmul.f32 %v2594, 1.442695
        %v2761 = vpow.pop %v2760
        %v2762 = vmul.f32 %v2595, 1.442695
        %v2763 = vpow.pop %v2762
        %v2764 = vmul.f32 %v2596, 1.442695
        %v2765 = vpow.pop %v2764
        %v2766 = vmul.f32 %v2597, 1.442695
        %v2767 = vpow.pop %v2766
        %v2768 = vmul.f32 %v2598, 1.442695
        %v2769 = vpow.pop %v2768
        %v2770 = vmul.f32 %v2599, 1.442695
        %v2771 = vpow.pop %v2770
        %v2772 = vmul.f32 %v2600, 1.442695
        %v2773 = vpow.pop %v2772
        %v2774 = vmul.f32 %v2601, 1.442695
        %v2775 = vpow.pop %v2774
        %v2776 = vmul.f32 %v2602, 1.442695
        %v2777 = vpow.pop %v2776
        %v2778 = vmul.f32 %v2603, 1.442695
        %v2779 = vpow.pop %v2778
        %v2780 = vmul.f32 %v2604, 1.442695
        %v2781 = vpow.pop %v2780
        %v2782 = vmul.f32 %v2605, 1.442695
        %v2783 = vpow.pop %v2782
        %v2784 = vmul.f32 %v2606, 1.442695
        %v2785 = vpow.pop %v2784
        %v2786 = vmul.f32 %v2607, 1.442695
        %v2787 = vpow.pop %v2786
        %v2788 = vmul.f32 %v2608, 1.442695
        %v2789 = vpow.pop %v2788
        %v2790 = vmul.f32 %v2609, 1.442695
        %v2791 = vpow.pop %v2790
        %v2792 = vmul.f32 %v2610, 1.442695
        %v2793 = vpow.pop %v2792
        %v2794 = vmul.f32 %v2611, 1.442695
        %v2795 = vpow.pop %v2794
        %v2796 = vmul.f32 %v2612, 1.442695
        %v2797 = vpow.pop %v2796
        %v2798 = vmul.f32 %v2613, 1.442695
        %v2799 = vpow.pop %v2798
        %v2800 = vmul.f32 %v2614, 1.442695
        %v2801 = vpow.pop %v2800
        %v2802 = vmul.f32 %v2615, 1.442695
        %v2803 = vpow.pop %v2802
        %v2804 = vmul.f32 %v2616, 1.442695
        %v2805 = vpow.pop %v2804
        %v2806 = vmul.f32 %v2617, 1.442695
        %v2807 = vpow.pop %v2806
        %v2808 = vmul.f32 %v2618, 1.442695
        %v2809 = vpow.pop %v2808
        %v2810 = vmul.f32 %v2619, 1.442695
        %v2811 = vpow.pop %v2810
        %v2812 = vmul.f32 %v2620, 1.442695
        %v2813 = vpow.pop %v2812
        %v2814 = vmul.f32 %v2621, 1.442695
        %v2815 = vpow.pop %v2814
        %v2816 = vmul.f32 %v2622, 1.442695
        %v2817 = vpow.pop %v2816
        %v2818 = vmul.f32 %v2623, 1.442695
        %v2819 = vpow.pop %v2818
        %v2820 = vmul.f32 %v2624, 1.442695
        %v2821 = vpow.pop %v2820
        %v2822 = vmul.f32 %v2625, 1.442695
        %v2823 = vpow.pop %v2822
        %v2824 = vmul.f32 %v2626, 1.442695
        %v2825 = vpow.pop %v2824
        %v2826 = vmul.f32 %v2627, 1.442695
        %v2827 = vpow.pop %v2826
        %v2828 = vmul.f32 %v2628, 1.442695
        %v2829 = vpow.pop %v2828
        %v2830 = vmul.f32 %v2629, 1.442695
        %v2831 = vpow.pop %v2830
        %v2832 = vmul.f32 %v2630, 1.442695
        %v2833 = vpow.pop %v2832
        %v2834 = vmul.f32 %v2631, 1.442695
        %v2835 = vpow.pop %v2834
        %v2836 = vmul.f32 %v2632, 1.442695
        %v2837 = vpow.pop %v2836
        %v2838 = vmul.f32 %v2633, 1.442695
        %v2839 = vpow.pop %v2838
        %v2840 = vmul.f32 %v2634, 1.442695
        %v2841 = vpow.pop %v2840
        %v2842 = vmul.f32 %v2635, 1.442695
        %v2843 = vpow.pop %v2842
        %v2844 = vmul.f32 %v2636, 1.442695
        %v2845 = vpow.pop %v2844
        %v2846 = vmul.f32 %v2637, 1.442695
        %v2847 = vpow.pop %v2846
        %v2848 = vmul.f32 %v2638, 1.442695
        %v2849 = vpow.pop %v2848
        %v2850 = vmul.f32 %v2639, 1.442695
        %v2851 = vpow.pop %v2850
        %v2852 = vmul.f32 %v2640, 1.442695
        %v2853 = vpow.pop %v2852
        %v2854 = vmul.f32 %v2641, 1.442695
        %v2855 = vpow.pop %v2854
        %v2856 = vmul.f32 %v2642, 1.442695
        %v2857 = vpow.pop %v2856
        %v2858 = vmul.f32 %v2643, 1.442695
        %v2859 = vpow.pop %v2858
        %v2860 = vmul.f32 %v2644, 1.442695
        %v2861 = vpow.pop %v2860
        %v2862 = vmul.f32 %v2645, 1.442695
        %v2863 = vpow.pop %v2862
        %v2864 = vmul.f32 %v2646, 1.442695
        %v2865 = vpow.pop %v2864
        %v2866 = vmul.f32 %v2647, 1.442695
        %v2867 = vpow.pop %v2866
        %v2868 = vmul.f32 %v2648, 1.442695
        %v2869 = vpow.pop %v2868
        %v2870 = vmul.f32 %v2649, 1.442695
        %v2871 = vpow.pop %v2870
        %v2872 = vmul.f32 %v2650, 1.442695
        %v2873 = vpow.pop %v2872
        %v2874 = vmul.f32 %v2651, 1.442695
        %v2875 = vpow.pop %v2874
        %v2876 = vmul.f32 %v2652, 1.442695
        %v2877 = vpow.pop %v2876
        %v2878 = vmul.f32 %v2653, 1.442695
        %v2879 = vpow.pop %v2878
        %v2880 = vmul.f32 %v2654, 1.442695
        %v2881 = vpow.pop %v2880
        %v2882 = vmul.f32 %v2655, 1.442695
        %v2883 = vpow.pop %v2882
        %v2884 = vmul.f32 %v2656, 1.442695
        %v2885 = vpow.pop %v2884
        %v2886 = vmul.f32 %v2657, 1.442695
        %v2887 = vpow.pop %v2886
        %v2888 = vmul.f32 %v2658, 1.442695
        %v2889 = vpow.pop %v2888
        %v2890 = vmul.f32 %v2659, 1.442695
        %v2891 = vpow.pop %v2890
        %v2892 = vmul.f32 %v2660, 1.442695
        %v2893 = vpow.pop %v2892
        %v2894 = vmul.f32 %v2661, 1.442695
        %v2895 = vpow.pop %v2894
        %v2896 = vmul.f32 %v2662, 1.442695
        %v2897 = vpow.pop %v2896
        %v2898 = vmul.f32 %v2663, 1.442695
        %v2899 = vpow.pop %v2898
        %v2900 = vmul.f32 %v2664, 1.442695
        %v2901 = vpow.pop %v2900
        %v2902 = vmul.f32 %v2665, 1.442695
        %v2903 = vpow.pop %v2902
        %v2904 = vmul.f32 %v2666, 1.442695
        %v2905 = vpow.pop %v2904
        %v2906 = vmul.f32 %v2667, 1.442695
        %v2907 = vpow.pop %v2906
        %v2908 = vmul.f32 %v2668, 1.442695
        %v2909 = vpow.pop %v2908
        %v2910 = vmul.f32 %v2669, 1.442695
        %v2911 = vpow.pop %v2910
        %v2912 = vmul.f32 %v2670, 1.442695
        %v2913 = vpow.pop %v2912
        %v2914 = vmul.f32 %v2671, 1.442695
        %v2915 = vpow.pop %v2914
        %v2916 = vmul.f32 %v2672, 1.442695
        %v2917 = vpow.pop %v2916
        %v2918 = vmul.f32 %v2673, 1.442695
        %v2919 = vpow.pop %v2918
        %v2920 = vmul.f32 %v2674, 1.442695
        %v2921 = vpow.pop %v2920
        %v2922 = vmul.f32 %v2675, 1.442695
        %v2923 = vpow.pop %v2922
        %v2924 = vmul.f32 %v2676, 1.442695
        %v2925 = vpow.pop %v2924
        %v2926 = vmul.f32 %v2677, 1.442695
        %v2927 = vpow.pop %v2926
        %v2928 = vmul.f32 %v2678, 1.442695
        %v2929 = vpow.pop %v2928
        %v2930 = vmul.f32 %v2679, 1.442695
        %v2931 = vpow.pop %v2930
        %v2932 = vmul.f32 %v2680, 1.442695
        %v2933 = vpow.pop %v2932
        %v2934 = vmul.f32 %v2681, 1.442695
        %v2935 = vpow.pop %v2934
        %v2936 = vmul.f32 %v2682, 1.442695
        %v2937 = vpow.pop %v2936
        %v2938 = vmul.f32 %v2683, 1.442695
        %v2939 = vpow.pop %v2938
        %2940 = vadd.xlane.f32.xlu0 %v2685
        %v2941 = vpop.xlane.xlu0 %2940
        %2942 = vadd.xlane.f32.xlu0 %v2687
        %v2943 = vpop.xlane.xlu0 %2942
        %2944 = vadd.xlane.f32.xlu0 %v2689
        %v2945 = vpop.xlane.xlu0 %2944
        %2946 = vadd.xlane.f32.xlu0 %v2691
        %v2947 = vpop.xlane.xlu0 %2946
        %2948 = vadd.xlane.f32.xlu0 %v2693
        %v2949 = vpop.xlane.xlu0 %2948
        %2950 = vadd.xlane.f32.xlu0 %v2695
        %v2951 = vpop.xlane.xlu0 %2950
        %2952 = vadd.xlane.f32.xlu0 %v2697
        %v2953 = vpop.xlane.xlu0 %2952
        %2954 = vadd.xlane.f32.xlu0 %v2699
        %v2955 = vpop.xlane.xlu0 %2954
        %2956 = vadd.xlane.f32.xlu0 %v2701
        %v2957 = vpop.xlane.xlu0 %2956
        %2958 = vadd.xlane.f32.xlu0 %v2703
        %v2959 = vpop.xlane.xlu0 %2958
        %2960 = vadd.xlane.f32.xlu0 %v2705
        %v2961 = vpop.xlane.xlu0 %2960
        %2962 = vadd.xlane.f32.xlu0 %v2707
        %v2963 = vpop.xlane.xlu0 %2962
        %2964 = vadd.xlane.f32.xlu0 %v2709
        %v2965 = vpop.xlane.xlu0 %2964
        %2966 = vadd.xlane.f32.xlu0 %v2711
        %v2967 = vpop.xlane.xlu0 %2966
        %2968 = vadd.xlane.f32.xlu0 %v2713
        %v2969 = vpop.xlane.xlu0 %2968
        %2970 = vadd.xlane.f32.xlu0 %v2715
        %v2971 = vpop.xlane.xlu0 %2970
        %2972 = vadd.xlane.f32.xlu0 %v2717
        %v2973 = vpop.xlane.xlu0 %2972
        %2974 = vadd.xlane.f32.xlu0 %v2719
        %v2975 = vpop.xlane.xlu0 %2974
        %2976 = vadd.xlane.f32.xlu0 %v2721
        %v2977 = vpop.xlane.xlu0 %2976
        %2978 = vadd.xlane.f32.xlu0 %v2723
        %v2979 = vpop.xlane.xlu0 %2978
        %2980 = vadd.xlane.f32.xlu0 %v2725
        %v2981 = vpop.xlane.xlu0 %2980
        %2982 = vadd.xlane.f32.xlu0 %v2727
        %v2983 = vpop.xlane.xlu0 %2982
        %2984 = vadd.xlane.f32.xlu0 %v2729
        %v2985 = vpop.xlane.xlu0 %2984
        %2986 = vadd.xlane.f32.xlu0 %v2731
        %v2987 = vpop.xlane.xlu0 %2986
        %2988 = vadd.xlane.f32.xlu0 %v2733
        %v2989 = vpop.xlane.xlu0 %2988
        %2990 = vadd.xlane.f32.xlu0 %v2735
        %v2991 = vpop.xlane.xlu0 %2990
        %2992 = vadd.xlane.f32.xlu0 %v2737
        %v2993 = vpop.xlane.xlu0 %2992
        %2994 = vadd.xlane.f32.xlu0 %v2739
        %v2995 = vpop.xlane.xlu0 %2994
        %2996 = vadd.xlane.f32.xlu0 %v2741
        %v2997 = vpop.xlane.xlu0 %2996
        %2998 = vadd.xlane.f32.xlu0 %v2743
        %v2999 = vpop.xlane.xlu0 %2998
        %3000 = vadd.xlane.f32.xlu0 %v2745
        %v3001 = vpop.xlane.xlu0 %3000
        %3002 = vadd.xlane.f32.xlu0 %v2747
        %v3003 = vpop.xlane.xlu0 %3002
        %3004 = vadd.xlane.f32.xlu0 %v2749
        %v3005 = vpop.xlane.xlu0 %3004
        %3006 = vadd.xlane.f32.xlu0 %v2751
        %v3007 = vpop.xlane.xlu0 %3006
        %3008 = vadd.xlane.f32.xlu0 %v2753
        %v3009 = vpop.xlane.xlu0 %3008
        %3010 = vadd.xlane.f32.xlu0 %v2755
        %v3011 = vpop.xlane.xlu0 %3010
        %3012 = vadd.xlane.f32.xlu0 %v2757
        %v3013 = vpop.xlane.xlu0 %3012
        %3014 = vadd.xlane.f32.xlu0 %v2759
        %v3015 = vpop.xlane.xlu0 %3014
        %3016 = vadd.xlane.f32.xlu0 %v2761
        %v3017 = vpop.xlane.xlu0 %3016
        %3018 = vadd.xlane.f32.xlu0 %v2763
        %v3019 = vpop.xlane.xlu0 %3018
        %3020 = vadd.xlane.f32.xlu0 %v2765
        %v3021 = vpop.xlane.xlu0 %3020
        %3022 = vadd.xlane.f32.xlu0 %v2767
        %v3023 = vpop.xlane.xlu0 %3022
        %3024 = vadd.xlane.f32.xlu0 %v2769
        %v3025 = vpop.xlane.xlu0 %3024
        %3026 = vadd.xlane.f32.xlu0 %v2771
        %v3027 = vpop.xlane.xlu0 %3026
        %3028 = vadd.xlane.f32.xlu0 %v2773
        %v3029 = vpop.xlane.xlu0 %3028
        %3030 = vadd.xlane.f32.xlu0 %v2775
        %v3031 = vpop.xlane.xlu0 %3030
        %3032 = vadd.xlane.f32.xlu0 %v2777
        %v3033 = vpop.xlane.xlu0 %3032
        %3034 = vadd.xlane.f32.xlu0 %v2779
        %v3035 = vpop.xlane.xlu0 %3034
        %3036 = vadd.xlane.f32.xlu0 %v2781
        %v3037 = vpop.xlane.xlu0 %3036
        %3038 = vadd.xlane.f32.xlu0 %v2783
        %v3039 = vpop.xlane.xlu0 %3038
        %3040 = vadd.xlane.f32.xlu0 %v2785
        %v3041 = vpop.xlane.xlu0 %3040
        %3042 = vadd.xlane.f32.xlu0 %v2787
        %v3043 = vpop.xlane.xlu0 %3042
        %3044 = vadd.xlane.f32.xlu0 %v2789
        %v3045 = vpop.xlane.xlu0 %3044
        %3046 = vadd.xlane.f32.xlu0 %v2791
        %v3047 = vpop.xlane.xlu0 %3046
        %3048 = vadd.xlane.f32.xlu0 %v2793
        %v3049 = vpop.xlane.xlu0 %3048
        %3050 = vadd.xlane.f32.xlu0 %v2795
        %v3051 = vpop.xlane.xlu0 %3050
        %3052 = vadd.xlane.f32.xlu0 %v2797
        %v3053 = vpop.xlane.xlu0 %3052
        %3054 = vadd.xlane.f32.xlu0 %v2799
        %v3055 = vpop.xlane.xlu0 %3054
        %3056 = vadd.xlane.f32.xlu0 %v2801
        %v3057 = vpop.xlane.xlu0 %3056
        %3058 = vadd.xlane.f32.xlu0 %v2803
        %v3059 = vpop.xlane.xlu0 %3058
        %3060 = vadd.xlane.f32.xlu0 %v2805
        %v3061 = vpop.xlane.xlu0 %3060
        %3062 = vadd.xlane.f32.xlu0 %v2807
        %v3063 = vpop.xlane.xlu0 %3062
        %3064 = vadd.xlane.f32.xlu0 %v2809
        %v3065 = vpop.xlane.xlu0 %3064
        %3066 = vadd.xlane.f32.xlu0 %v2811
        %v3067 = vpop.xlane.xlu0 %3066
        %3068 = vadd.xlane.f32.xlu0 %v2813
        %v3069 = vpop.xlane.xlu0 %3068
        %3070 = vadd.xlane.f32.xlu0 %v2815
        %v3071 = vpop.xlane.xlu0 %3070
        %3072 = vadd.xlane.f32.xlu0 %v2817
        %v3073 = vpop.xlane.xlu0 %3072
        %3074 = vadd.xlane.f32.xlu0 %v2819
        %v3075 = vpop.xlane.xlu0 %3074
        %3076 = vadd.xlane.f32.xlu0 %v2821
        %v3077 = vpop.xlane.xlu0 %3076
        %3078 = vadd.xlane.f32.xlu0 %v2823
        %v3079 = vpop.xlane.xlu0 %3078
        %3080 = vadd.xlane.f32.xlu0 %v2825
        %v3081 = vpop.xlane.xlu0 %3080
        %3082 = vadd.xlane.f32.xlu0 %v2827
        %v3083 = vpop.xlane.xlu0 %3082
        %3084 = vadd.xlane.f32.xlu0 %v2829
        %v3085 = vpop.xlane.xlu0 %3084
        %3086 = vadd.xlane.f32.xlu0 %v2831
        %v3087 = vpop.xlane.xlu0 %3086
        %3088 = vadd.xlane.f32.xlu0 %v2833
        %v3089 = vpop.xlane.xlu0 %3088
        %3090 = vadd.xlane.f32.xlu0 %v2835
        %v3091 = vpop.xlane.xlu0 %3090
        %3092 = vadd.xlane.f32.xlu0 %v2837
        %v3093 = vpop.xlane.xlu0 %3092
        %3094 = vadd.xlane.f32.xlu0 %v2839
        %v3095 = vpop.xlane.xlu0 %3094
        %3096 = vadd.xlane.f32.xlu0 %v2841
        %v3097 = vpop.xlane.xlu0 %3096
        %3098 = vadd.xlane.f32.xlu0 %v2843
        %v3099 = vpop.xlane.xlu0 %3098
        %3100 = vadd.xlane.f32.xlu0 %v2845
        %v3101 = vpop.xlane.xlu0 %3100
        %3102 = vadd.xlane.f32.xlu0 %v2847
        %v3103 = vpop.xlane.xlu0 %3102
        %3104 = vadd.xlane.f32.xlu0 %v2849
        %v3105 = vpop.xlane.xlu0 %3104
        %3106 = vadd.xlane.f32.xlu0 %v2851
        %v3107 = vpop.xlane.xlu0 %3106
        %3108 = vadd.xlane.f32.xlu0 %v2853
        %v3109 = vpop.xlane.xlu0 %3108
        %3110 = vadd.xlane.f32.xlu0 %v2855
        %v3111 = vpop.xlane.xlu0 %3110
        %3112 = vadd.xlane.f32.xlu0 %v2857
        %v3113 = vpop.xlane.xlu0 %3112
        %3114 = vadd.xlane.f32.xlu0 %v2859
        %v3115 = vpop.xlane.xlu0 %3114
        %3116 = vadd.xlane.f32.xlu0 %v2861
        %v3117 = vpop.xlane.xlu0 %3116
        %3118 = vadd.xlane.f32.xlu0 %v2863
        %v3119 = vpop.xlane.xlu0 %3118
        %3120 = vadd.xlane.f32.xlu0 %v2865
        %v3121 = vpop.xlane.xlu0 %3120
        %3122 = vadd.xlane.f32.xlu0 %v2867
        %v3123 = vpop.xlane.xlu0 %3122
        %3124 = vadd.xlane.f32.xlu0 %v2869
        %v3125 = vpop.xlane.xlu0 %3124
        %3126 = vadd.xlane.f32.xlu0 %v2871
        %v3127 = vpop.xlane.xlu0 %3126
        %3128 = vadd.xlane.f32.xlu0 %v2873
        %v3129 = vpop.xlane.xlu0 %3128
        %3130 = vadd.xlane.f32.xlu0 %v2875
        %v3131 = vpop.xlane.xlu0 %3130
        %3132 = vadd.xlane.f32.xlu0 %v2877
        %v3133 = vpop.xlane.xlu0 %3132
        %3134 = vadd.xlane.f32.xlu0 %v2879
        %v3135 = vpop.xlane.xlu0 %3134
        %3136 = vadd.xlane.f32.xlu0 %v2881
        %v3137 = vpop.xlane.xlu0 %3136
        %3138 = vadd.xlane.f32.xlu0 %v2883
        %v3139 = vpop.xlane.xlu0 %3138
        %3140 = vadd.xlane.f32.xlu0 %v2885
        %v3141 = vpop.xlane.xlu0 %3140
        %3142 = vadd.xlane.f32.xlu0 %v2887
        %v3143 = vpop.xlane.xlu0 %3142
        %3144 = vadd.xlane.f32.xlu0 %v2889
        %v3145 = vpop.xlane.xlu0 %3144
        %3146 = vadd.xlane.f32.xlu0 %v2891
        %v3147 = vpop.xlane.xlu0 %3146
        %3148 = vadd.xlane.f32.xlu0 %v2893
        %v3149 = vpop.xlane.xlu0 %3148
        %3150 = vadd.xlane.f32.xlu0 %v2895
        %v3151 = vpop.xlane.xlu0 %3150
        %3152 = vadd.xlane.f32.xlu0 %v2897
        %v3153 = vpop.xlane.xlu0 %3152
        %3154 = vadd.xlane.f32.xlu0 %v2899
        %v3155 = vpop.xlane.xlu0 %3154
        %3156 = vadd.xlane.f32.xlu0 %v2901
        %v3157 = vpop.xlane.xlu0 %3156
        %3158 = vadd.xlane.f32.xlu0 %v2903
        %v3159 = vpop.xlane.xlu0 %3158
        %3160 = vadd.xlane.f32.xlu0 %v2905
        %v3161 = vpop.xlane.xlu0 %3160
        %3162 = vadd.xlane.f32.xlu0 %v2907
        %v3163 = vpop.xlane.xlu0 %3162
        %3164 = vadd.xlane.f32.xlu0 %v2909
        %v3165 = vpop.xlane.xlu0 %3164
        %3166 = vadd.xlane.f32.xlu0 %v2911
        %v3167 = vpop.xlane.xlu0 %3166
        %3168 = vadd.xlane.f32.xlu0 %v2913
        %v3169 = vpop.xlane.xlu0 %3168
        %3170 = vadd.xlane.f32.xlu0 %v2915
        %v3171 = vpop.xlane.xlu0 %3170
        %3172 = vadd.xlane.f32.xlu0 %v2917
        %v3173 = vpop.xlane.xlu0 %3172
        %3174 = vadd.xlane.f32.xlu0 %v2919
        %v3175 = vpop.xlane.xlu0 %3174
        %3176 = vadd.xlane.f32.xlu0 %v2921
        %v3177 = vpop.xlane.xlu0 %3176
        %3178 = vadd.xlane.f32.xlu0 %v2923
        %v3179 = vpop.xlane.xlu0 %3178
        %3180 = vadd.xlane.f32.xlu0 %v2925
        %v3181 = vpop.xlane.xlu0 %3180
        %3182 = vadd.xlane.f32.xlu0 %v2927
        %v3183 = vpop.xlane.xlu0 %3182
        %3184 = vadd.xlane.f32.xlu0 %v2929
        %v3185 = vpop.xlane.xlu0 %3184
        %3186 = vadd.xlane.f32.xlu0 %v2931
        %v3187 = vpop.xlane.xlu0 %3186
        %3188 = vadd.xlane.f32.xlu0 %v2933
        %v3189 = vpop.xlane.xlu0 %3188
        %3190 = vadd.xlane.f32.xlu0 %v2935
        %v3191 = vpop.xlane.xlu0 %3190
        %3192 = vadd.xlane.f32.xlu0 %v2937
        %v3193 = vpop.xlane.xlu0 %3192
        %3194 = vadd.xlane.f32.xlu0 %v2939
        %v3195 = vpop.xlane.xlu0 %3194
        %v3196 = vrcp.pop %v2941
        %v3197 = vmul.f32 %v2685, %v3196
        %v3198 = vrcp.pop %v2943
        %v3199 = vmul.f32 %v2687, %v3198
        %v3200 = vrcp.pop %v2945
        %v3201 = vmul.f32 %v2689, %v3200
        %v3202 = vrcp.pop %v2947
        %v3203 = vmul.f32 %v2691, %v3202
        %v3204 = vrcp.pop %v2949
        %v3205 = vmul.f32 %v2693, %v3204
        %v3206 = vrcp.pop %v2951
        %v3207 = vmul.f32 %v2695, %v3206
        %v3208 = vrcp.pop %v2953
        %v3209 = vmul.f32 %v2697, %v3208
        %v3210 = vrcp.pop %v2955
        %v3211 = vmul.f32 %v2699, %v3210
        %v3212 = vrcp.pop %v2957
        %v3213 = vmul.f32 %v2701, %v3212
        %v3214 = vrcp.pop %v2959
        %v3215 = vmul.f32 %v2703, %v3214
        %v3216 = vrcp.pop %v2961
        %v3217 = vmul.f32 %v2705, %v3216
        %v3218 = vrcp.pop %v2963
        %v3219 = vmul.f32 %v2707, %v3218
        %v3220 = vrcp.pop %v2965
        %v3221 = vmul.f32 %v2709, %v3220
        %v3222 = vrcp.pop %v2967
        %v3223 = vmul.f32 %v2711, %v3222
        %v3224 = vrcp.pop %v2969
        %v3225 = vmul.f32 %v2713, %v3224
        %v3226 = vrcp.pop %v2971
        %v3227 = vmul.f32 %v2715, %v3226
        %v3228 = vrcp.pop %v2973
        %v3229 = vmul.f32 %v2717, %v3228
        %v3230 = vrcp.pop %v2975
        %v3231 = vmul.f32 %v2719, %v3230
        %v3232 = vrcp.pop %v2977
        %v3233 = vmul.f32 %v2721, %v3232
        %v3234 = vrcp.pop %v2979
        %v3235 = vmul.f32 %v2723, %v3234
        %v3236 = vrcp.pop %v2981
        %v3237 = vmul.f32 %v2725, %v3236
        %v3238 = vrcp.pop %v2983
        %v3239 = vmul.f32 %v2727, %v3238
        %v3240 = vrcp.pop %v2985
        %v3241 = vmul.f32 %v2729, %v3240
        %v3242 = vrcp.pop %v2987
        %v3243 = vmul.f32 %v2731, %v3242
        %v3244 = vrcp.pop %v2989
        %v3245 = vmul.f32 %v2733, %v3244
        %v3246 = vrcp.pop %v2991
        %v3247 = vmul.f32 %v2735, %v3246
        %v3248 = vrcp.pop %v2993
        %v3249 = vmul.f32 %v2737, %v3248
        %v3250 = vrcp.pop %v2995
        %v3251 = vmul.f32 %v2739, %v3250
        %v3252 = vrcp.pop %v2997
        %v3253 = vmul.f32 %v2741, %v3252
        %v3254 = vrcp.pop %v2999
        %v3255 = vmul.f32 %v2743, %v3254
        %v3256 = vrcp.pop %v3001
        %v3257 = vmul.f32 %v2745, %v3256
        %v3258 = vrcp.pop %v3003
        %v3259 = vmul.f32 %v2747, %v3258
        %v3260 = vrcp.pop %v3005
        %v3261 = vmul.f32 %v2749, %v3260
        %v3262 = vrcp.pop %v3007
        %v3263 = vmul.f32 %v2751, %v3262
        %v3264 = vrcp.pop %v3009
        %v3265 = vmul.f32 %v2753, %v3264
        %v3266 = vrcp.pop %v3011
        %v3267 = vmul.f32 %v2755, %v3266
        %v3268 = vrcp.pop %v3013
        %v3269 = vmul.f32 %v2757, %v3268
        %v3270 = vrcp.pop %v3015
        %v3271 = vmul.f32 %v2759, %v3270
        %v3272 = vrcp.pop %v3017
        %v3273 = vmul.f32 %v2761, %v3272
        %v3274 = vrcp.pop %v3019
        %v3275 = vmul.f32 %v2763, %v3274
        %v3276 = vrcp.pop %v3021
        %v3277 = vmul.f32 %v2765, %v3276
        %v3278 = vrcp.pop %v3023
        %v3279 = vmul.f32 %v2767, %v3278
        %v3280 = vrcp.pop %v3025
        %v3281 = vmul.f32 %v2769, %v3280
        %v3282 = vrcp.pop %v3027
        %v3283 = vmul.f32 %v2771, %v3282
        %v3284 = vrcp.pop %v3029
        %v3285 = vmul.f32 %v2773, %v3284
        %v3286 = vrcp.pop %v3031
        %v3287 = vmul.f32 %v2775, %v3286
        %v3288 = vrcp.pop %v3033
        %v3289 = vmul.f32 %v2777, %v3288
        %v3290 = vrcp.pop %v3035
        %v3291 = vmul.f32 %v2779, %v3290
        %v3292 = vrcp.pop %v3037
        %v3293 = vmul.f32 %v2781, %v3292
        %v3294 = vrcp.pop %v3039
        %v3295 = vmul.f32 %v2783, %v3294
        %v3296 = vrcp.pop %v3041
        %v3297 = vmul.f32 %v2785, %v3296
        %v3298 = vrcp.pop %v3043
        %v3299 = vmul.f32 %v2787, %v3298
        %v3300 = vrcp.pop %v3045
        %v3301 = vmul.f32 %v2789, %v3300
        %v3302 = vrcp.pop %v3047
        %v3303 = vmul.f32 %v2791, %v3302
        %v3304 = vrcp.pop %v3049
        %v3305 = vmul.f32 %v2793, %v3304
        %v3306 = vrcp.pop %v3051
        %v3307 = vmul.f32 %v2795, %v3306
        %v3308 = vrcp.pop %v3053
        %v3309 = vmul.f32 %v2797, %v3308
        %v3310 = vrcp.pop %v3055
        %v3311 = vmul.f32 %v2799, %v3310
        %v3312 = vrcp.pop %v3057
        %v3313 = vmul.f32 %v2801, %v3312
        %v3314 = vrcp.pop %v3059
        %v3315 = vmul.f32 %v2803, %v3314
        %v3316 = vrcp.pop %v3061
        %v3317 = vmul.f32 %v2805, %v3316
        %v3318 = vrcp.pop %v3063
        %v3319 = vmul.f32 %v2807, %v3318
        %v3320 = vrcp.pop %v3065
        %v3321 = vmul.f32 %v2809, %v3320
        %v3322 = vrcp.pop %v3067
        %v3323 = vmul.f32 %v2811, %v3322
        %v3324 = vrcp.pop %v3069
        %v3325 = vmul.f32 %v2813, %v3324
        %v3326 = vrcp.pop %v3071
        %v3327 = vmul.f32 %v2815, %v3326
        %v3328 = vrcp.pop %v3073
        %v3329 = vmul.f32 %v2817, %v3328
        %v3330 = vrcp.pop %v3075
        %v3331 = vmul.f32 %v2819, %v3330
        %v3332 = vrcp.pop %v3077
        %v3333 = vmul.f32 %v2821, %v3332
        %v3334 = vrcp.pop %v3079
        %v3335 = vmul.f32 %v2823, %v3334
        %v3336 = vrcp.pop %v3081
        %v3337 = vmul.f32 %v2825, %v3336
        %v3338 = vrcp.pop %v3083
        %v3339 = vmul.f32 %v2827, %v3338
        %v3340 = vrcp.pop %v3085
        %v3341 = vmul.f32 %v2829, %v3340
        %v3342 = vrcp.pop %v3087
        %v3343 = vmul.f32 %v2831, %v3342
        %v3344 = vrcp.pop %v3089
        %v3345 = vmul.f32 %v2833, %v3344
        %v3346 = vrcp.pop %v3091
        %v3347 = vmul.f32 %v2835, %v3346
        %v3348 = vrcp.pop %v3093
        %v3349 = vmul.f32 %v2837, %v3348
        %v3350 = vrcp.pop %v3095
        %v3351 = vmul.f32 %v2839, %v3350
        %v3352 = vrcp.pop %v3097
        %v3353 = vmul.f32 %v2841, %v3352
        %v3354 = vrcp.pop %v3099
        %v3355 = vmul.f32 %v2843, %v3354
        %v3356 = vrcp.pop %v3101
        %v3357 = vmul.f32 %v2845, %v3356
        %v3358 = vrcp.pop %v3103
        %v3359 = vmul.f32 %v2847, %v3358
        %v3360 = vrcp.pop %v3105
        %v3361 = vmul.f32 %v2849, %v3360
        %v3362 = vrcp.pop %v3107
        %v3363 = vmul.f32 %v2851, %v3362
        %v3364 = vrcp.pop %v3109
        %v3365 = vmul.f32 %v2853, %v3364
        %v3366 = vrcp.pop %v3111
        %v3367 = vmul.f32 %v2855, %v3366
        %v3368 = vrcp.pop %v3113
        %v3369 = vmul.f32 %v2857, %v3368
        %v3370 = vrcp.pop %v3115
        %v3371 = vmul.f32 %v2859, %v3370
        %v3372 = vrcp.pop %v3117
        %v3373 = vmul.f32 %v2861, %v3372
        %v3374 = vrcp.pop %v3119
        %v3375 = vmul.f32 %v2863, %v3374
        %v3376 = vrcp.pop %v3121
        %v3377 = vmul.f32 %v2865, %v3376
        %v3378 = vrcp.pop %v3123
        %v3379 = vmul.f32 %v2867, %v3378
        %v3380 = vrcp.pop %v3125
        %v3381 = vmul.f32 %v2869, %v3380
        %v3382 = vrcp.pop %v3127
        %v3383 = vmul.f32 %v2871, %v3382
        %v3384 = vrcp.pop %v3129
        %v3385 = vmul.f32 %v2873, %v3384
        %v3386 = vrcp.pop %v3131
        %v3387 = vmul.f32 %v2875, %v3386
        %v3388 = vrcp.pop %v3133
        %v3389 = vmul.f32 %v2877, %v3388
        %v3390 = vrcp.pop %v3135
        %v3391 = vmul.f32 %v2879, %v3390
        %v3392 = vrcp.pop %v3137
        %v3393 = vmul.f32 %v2881, %v3392
        %v3394 = vrcp.pop %v3139
        %v3395 = vmul.f32 %v2883, %v3394
        %v3396 = vrcp.pop %v3141
        %v3397 = vmul.f32 %v2885, %v3396
        %v3398 = vrcp.pop %v3143
        %v3399 = vmul.f32 %v2887, %v3398
        %v3400 = vrcp.pop %v3145
        %v3401 = vmul.f32 %v2889, %v3400
        %v3402 = vrcp.pop %v3147
        %v3403 = vmul.f32 %v2891, %v3402
        %v3404 = vrcp.pop %v3149
        %v3405 = vmul.f32 %v2893, %v3404
        %v3406 = vrcp.pop %v3151
        %v3407 = vmul.f32 %v2895, %v3406
        %v3408 = vrcp.pop %v3153
        %v3409 = vmul.f32 %v2897, %v3408
        %v3410 = vrcp.pop %v3155
        %v3411 = vmul.f32 %v2899, %v3410
        %v3412 = vrcp.pop %v3157
        %v3413 = vmul.f32 %v2901, %v3412
        %v3414 = vrcp.pop %v3159
        %v3415 = vmul.f32 %v2903, %v3414
        %v3416 = vrcp.pop %v3161
        %v3417 = vmul.f32 %v2905, %v3416
        %v3418 = vrcp.pop %v3163
        %v3419 = vmul.f32 %v2907, %v3418
        %v3420 = vrcp.pop %v3165
        %v3421 = vmul.f32 %v2909, %v3420
        %v3422 = vrcp.pop %v3167
        %v3423 = vmul.f32 %v2911, %v3422
        %v3424 = vrcp.pop %v3169
        %v3425 = vmul.f32 %v2913, %v3424
        %v3426 = vrcp.pop %v3171
        %v3427 = vmul.f32 %v2915, %v3426
        %v3428 = vrcp.pop %v3173
        %v3429 = vmul.f32 %v2917, %v3428
        %v3430 = vrcp.pop %v3175
        %v3431 = vmul.f32 %v2919, %v3430
        %v3432 = vrcp.pop %v3177
        %v3433 = vmul.f32 %v2921, %v3432
        %v3434 = vrcp.pop %v3179
        %v3435 = vmul.f32 %v2923, %v3434
        %v3436 = vrcp.pop %v3181
        %v3437 = vmul.f32 %v2925, %v3436
        %v3438 = vrcp.pop %v3183
        %v3439 = vmul.f32 %v2927, %v3438
        %v3440 = vrcp.pop %v3185
        %v3441 = vmul.f32 %v2929, %v3440
        %v3442 = vrcp.pop %v3187
        %v3443 = vmul.f32 %v2931, %v3442
        %v3444 = vrcp.pop %v3189
        %v3445 = vmul.f32 %v2933, %v3444
        %v3446 = vrcp.pop %v3191
        %v3447 = vmul.f32 %v2935, %v3446
        %v3448 = vrcp.pop %v3193
        %v3449 = vmul.f32 %v2937, %v3448
        %v3450 = vrcp.pop %v3195
        %v3451 = vmul.f32 %v2939, %v3450
        %v3452 = vsel %vm337, 1, 0
        %v3453 = vsel %vm338, 1, 0
        %v3454 = vsel %vm339, 1, 0
        %v3455 = vsel %vm340, 1, 0
        %v3456 = vsel %vm341, 1, 0
        %v3457 = vsel %vm342, 1, 0
        %v3458 = vsel %vm343, 1, 0
        %v3459 = vsel %vm344, 1, 0
        %v3460 = vsel %vm345, 1, 0
        %v3461 = vsel %vm346, 1, 0
        %v3462 = vsel %vm347, 1, 0
        %v3463 = vsel %vm348, 1, 0
        %v3464 = vsel %vm349, 1, 0
        %v3465 = vsel %vm350, 1, 0
        %v3466 = vsel %vm351, 1, 0
        %v3467 = vsel %vm352, 1, 0
        %vm3468 = vcmp.eq.s32.totalorder %v3452, 1
        %vm3469 = vcmp.eq.s32.totalorder %v3453, 1
        %vm3470 = vcmp.eq.s32.totalorder %v3454, 1
        %vm3471 = vcmp.eq.s32.totalorder %v3455, 1
        %vm3472 = vcmp.eq.s32.totalorder %v3456, 1
        %vm3473 = vcmp.eq.s32.totalorder %v3457, 1
        %vm3474 = vcmp.eq.s32.totalorder %v3458, 1
        %vm3475 = vcmp.eq.s32.totalorder %v3459, 1
        %vm3476 = vcmp.eq.s32.totalorder %v3460, 1
        %vm3477 = vcmp.eq.s32.totalorder %v3461, 1
        %vm3478 = vcmp.eq.s32.totalorder %v3462, 1
        %vm3479 = vcmp.eq.s32.totalorder %v3463, 1
        %vm3480 = vcmp.eq.s32.totalorder %v3464, 1
        %vm3481 = vcmp.eq.s32.totalorder %v3465, 1
        %vm3482 = vcmp.eq.s32.totalorder %v3466, 1
        %vm3483 = vcmp.eq.s32.totalorder %v3467, 1
        %v3484 = vsel %vm3468, %v3197, 0.0
        %v3485 = vsel %vm3469, %v3199, 0.0
        %v3486 = vsel %vm3470, %v3201, 0.0
        %v3487 = vsel %vm3471, %v3203, 0.0
        %v3488 = vsel %vm3472, %v3205, 0.0
        %v3489 = vsel %vm3473, %v3207, 0.0
        %v3490 = vsel %vm3474, %v3209, 0.0
        %v3491 = vsel %vm3475, %v3211, 0.0
        %v3492 = vsel %vm3476, %v3213, 0.0
        %v3493 = vsel %vm3477, %v3215, 0.0
        %v3494 = vsel %vm3478, %v3217, 0.0
        %v3495 = vsel %vm3479, %v3219, 0.0
        %v3496 = vsel %vm3480, %v3221, 0.0
        %v3497 = vsel %vm3481, %v3223, 0.0
        %v3498 = vsel %vm3482, %v3225, 0.0
        %v3499 = vsel %vm3483, %v3227, 0.0
        %v3500 = vsel %vm3468, %v3229, 0.0
        %v3501 = vsel %vm3469, %v3231, 0.0
        %v3502 = vsel %vm3470, %v3233, 0.0
        %v3503 = vsel %vm3471, %v3235, 0.0
        %v3504 = vsel %vm3472, %v3237, 0.0
        %v3505 = vsel %vm3473, %v3239, 0.0
        %v3506 = vsel %vm3474, %v3241, 0.0
        %v3507 = vsel %vm3475, %v3243, 0.0
        %v3508 = vsel %vm3476, %v3245, 0.0
        %v3509 = vsel %vm3477, %v3247, 0.0
        %v3510 = vsel %vm3478, %v3249, 0.0
        %v3511 = vsel %vm3479, %v3251, 0.0
        %v3512 = vsel %vm3480, %v3253, 0.0
        %v3513 = vsel %vm3481, %v3255, 0.0
        %v3514 = vsel %vm3482, %v3257, 0.0
        %v3515 = vsel %vm3483, %v3259, 0.0
        %v3516 = vsel %vm3468, %v3261, 0.0
        %v3517 = vsel %vm3469, %v3263, 0.0
        %v3518 = vsel %vm3470, %v3265, 0.0
        %v3519 = vsel %vm3471, %v3267, 0.0
        %v3520 = vsel %vm3472, %v3269, 0.0
        %v3521 = vsel %vm3473, %v3271, 0.0
        %v3522 = vsel %vm3474, %v3273, 0.0
        %v3523 = vsel %vm3475, %v3275, 0.0
        %v3524 = vsel %vm3476, %v3277, 0.0
        %v3525 = vsel %vm3477, %v3279, 0.0
        %v3526 = vsel %vm3478, %v3281, 0.0
        %v3527 = vsel %vm3479, %v3283, 0.0
        %v3528 = vsel %vm3480, %v3285, 0.0
        %v3529 = vsel %vm3481, %v3287, 0.0
        %v3530 = vsel %vm3482, %v3289, 0.0
        %v3531 = vsel %vm3483, %v3291, 0.0
        %v3532 = vsel %vm3468, %v3293, 0.0
        %v3533 = vsel %vm3469, %v3295, 0.0
        %v3534 = vsel %vm3470, %v3297, 0.0
        %v3535 = vsel %vm3471, %v3299, 0.0
        %v3536 = vsel %vm3472, %v3301, 0.0
        %v3537 = vsel %vm3473, %v3303, 0.0
        %v3538 = vsel %vm3474, %v3305, 0.0
        %v3539 = vsel %vm3475, %v3307, 0.0
        %v3540 = vsel %vm3476, %v3309, 0.0
        %v3541 = vsel %vm3477, %v3311, 0.0
        %v3542 = vsel %vm3478, %v3313, 0.0
        %v3543 = vsel %vm3479, %v3315, 0.0
        %v3544 = vsel %vm3480, %v3317, 0.0
        %v3545 = vsel %vm3481, %v3319, 0.0
        %v3546 = vsel %vm3482, %v3321, 0.0
        %v3547 = vsel %vm3483, %v3323, 0.0
        %v3548 = vsel %vm3468, %v3325, 0.0
        %v3549 = vsel %vm3469, %v3327, 0.0
        %v3550 = vsel %vm3470, %v3329, 0.0
        %v3551 = vsel %vm3471, %v3331, 0.0
        %v3552 = vsel %vm3472, %v3333, 0.0
        %v3553 = vsel %vm3473, %v3335, 0.0
        %v3554 = vsel %vm3474, %v3337, 0.0
        %v3555 = vsel %vm3475, %v3339, 0.0
        %v3556 = vsel %vm3476, %v3341, 0.0
        %v3557 = vsel %vm3477, %v3343, 0.0
        %v3558 = vsel %vm3478, %v3345, 0.0
        %v3559 = vsel %vm3479, %v3347, 0.0
        %v3560 = vsel %vm3480, %v3349, 0.0
        %v3561 = vsel %vm3481, %v3351, 0.0
        %v3562 = vsel %vm3482, %v3353, 0.0
        %v3563 = vsel %vm3483, %v3355, 0.0
        %v3564 = vsel %vm3468, %v3357, 0.0
        %v3565 = vsel %vm3469, %v3359, 0.0
        %v3566 = vsel %vm3470, %v3361, 0.0
        %v3567 = vsel %vm3471, %v3363, 0.0
        %v3568 = vsel %vm3472, %v3365, 0.0
        %v3569 = vsel %vm3473, %v3367, 0.0
        %v3570 = vsel %vm3474, %v3369, 0.0
        %v3571 = vsel %vm3475, %v3371, 0.0
        %v3572 = vsel %vm3476, %v3373, 0.0
        %v3573 = vsel %vm3477, %v3375, 0.0
        %v3574 = vsel %vm3478, %v3377, 0.0
        %v3575 = vsel %vm3479, %v3379, 0.0
        %v3576 = vsel %vm3480, %v3381, 0.0
        %v3577 = vsel %vm3481, %v3383, 0.0
        %v3578 = vsel %vm3482, %v3385, 0.0
        %v3579 = vsel %vm3483, %v3387, 0.0
        %v3580 = vsel %vm3468, %v3389, 0.0
        %v3581 = vsel %vm3469, %v3391, 0.0
        %v3582 = vsel %vm3470, %v3393, 0.0
        %v3583 = vsel %vm3471, %v3395, 0.0
        %v3584 = vsel %vm3472, %v3397, 0.0
        %v3585 = vsel %vm3473, %v3399, 0.0
        %v3586 = vsel %vm3474, %v3401, 0.0
        %v3587 = vsel %vm3475, %v3403, 0.0
        %v3588 = vsel %vm3476, %v3405, 0.0
        %v3589 = vsel %vm3477, %v3407, 0.0
        %v3590 = vsel %vm3478, %v3409, 0.0
        %v3591 = vsel %vm3479, %v3411, 0.0
        %v3592 = vsel %vm3480, %v3413, 0.0
        %v3593 = vsel %vm3481, %v3415, 0.0
        %v3594 = vsel %vm3482, %v3417, 0.0
        %v3595 = vsel %vm3483, %v3419, 0.0
        %v3596 = vsel %vm3468, %v3421, 0.0
        %v3597 = vsel %vm3469, %v3423, 0.0
        %v3598 = vsel %vm3470, %v3425, 0.0
        %v3599 = vsel %vm3471, %v3427, 0.0
        %v3600 = vsel %vm3472, %v3429, 0.0
        %v3601 = vsel %vm3473, %v3431, 0.0
        %v3602 = vsel %vm3474, %v3433, 0.0
        %v3603 = vsel %vm3475, %v3435, 0.0
        %v3604 = vsel %vm3476, %v3437, 0.0
        %v3605 = vsel %vm3477, %v3439, 0.0
        %v3606 = vsel %vm3478, %v3441, 0.0
        %v3607 = vsel %vm3479, %v3443, 0.0
        %v3608 = vsel %vm3480, %v3445, 0.0
        %v3609 = vsel %vm3481, %v3447, 0.0
        %v3610 = vsel %vm3482, %v3449, 0.0
        %v3611 = vsel %vm3483, %v3451, 0.0
        %v3612 = vld [vmem:[%s246] sm:$0xff]
        %v3613 = vld [vmem:[%s246 + $0x8] sm:$0xff]
        %v3614 = vld [vmem:[%s246 + $0x10] sm:$0xff]
        %v3615 = vld [vmem:[%s246 + $0x18] sm:$0xff]
        %v3616 = vld [vmem:[%s246 + $0x20] sm:$0xff]
        %v3617 = vld [vmem:[%s246 + $0x28] sm:$0xff]
        %v3618 = vld [vmem:[%s246 + $0x30] sm:$0xff]
        %v3619 = vld [vmem:[%s246 + $0x38] sm:$0xff]
        %3620 = vst [vmem:[%s296] sm:$0xff] %v3612
        %3621 = vst [vmem:[%s296 + $0x18] sm:$0xff] %v3613
        %3622 = vst [vmem:[%s296 + $0x30] sm:$0xff] %v3614
        %3623 = vst [vmem:[%s296 + $0x48] sm:$0xff] %v3615
        %3624 = vst [vmem:[%s296 + $0x60] sm:$0xff] %v3616
        %3625 = vst [vmem:[%s296 + $0x78] sm:$0xff] %v3617
        %3626 = vst [vmem:[%s296 + $0x90] sm:$0xff] %v3618
        %3627 = vst [vmem:[%s296 + $0xa8] sm:$0xff] %v3619
        %3628 = vmatprep.subr.mxu0 0.0
        %3629 = vmatpush1.msra.mxu0 %v3484
        %3630 = vmatprep.subr.mxu0 0.0
        %3631 = vmatpush1.msra.mxu0 %v3485
        %3632 = vmatprep.subr.mxu0 0.0
        %3633 = vmatpush1.msra.mxu0 %v3486
        %3634 = vmatprep.subr.mxu0 0.0
        %3635 = vmatpush1.msra.mxu0 %v3487
        %3636 = vmatprep.subr.mxu0 0.0
        %3637 = vmatpush1.msra.mxu0 %v3488
        %3638 = vmatprep.subr.mxu0 0.0
        %3639 = vmatpush1.msra.mxu0 %v3489
        %3640 = vmatprep.subr.mxu0 0.0
        %3641 = vmatpush1.msra.mxu0 %v3490
        %3642 = vmatprep.subr.mxu0 0.0
        %3643 = vmatpush1.msra.mxu0 %v3491
        %3644 = vmatprep.subr.mxu0 0.0
        %3645 = vmatpush1.msra.mxu0 %v3492
        %3646 = vmatprep.subr.mxu0 0.0
        %3647 = vmatpush1.msra.mxu0 %v3493
        %3648 = vmatprep.subr.mxu0 0.0
        %3649 = vmatpush1.msra.mxu0 %v3494
        %3650 = vmatprep.subr.mxu0 0.0
        %3651 = vmatpush1.msra.mxu0 %v3495
        %3652 = vmatprep.subr.mxu0 0.0
        %3653 = vmatpush1.msra.mxu0 %v3496
        %3654 = vmatprep.subr.mxu0 0.0
        %3655 = vmatpush1.msra.mxu0 %v3497
        %3656 = vmatprep.subr.mxu0 0.0
        %3657 = vmatpush1.msra.mxu0 %v3498
        %3658 = vmatprep.subr.mxu0 0.0
        %3659 = vmatpush1.msra.mxu0 %v3499
        %3660 = vmatprep.subr.mxu0 0.0
        %3661 = vmatpush1.msra.mxu0 0.0
        %3662 = vmatprep.subr.mxu0 0.0
        %3663 = vmatpush1.msra.mxu0 0.0
        %3664 = vmatprep.subr.mxu0 0.0
        %3665 = vmatpush1.msra.mxu0 0.0
        %3666 = vmatprep.subr.mxu0 0.0
        %3667 = vmatpush1.msra.mxu0 0.0
        %3668 = vmatprep.subr.mxu0 0.0
        %3669 = vmatpush1.msra.mxu0 0.0
        %3670 = vmatprep.subr.mxu0 0.0
        %3671 = vmatpush1.msra.mxu0 0.0
        %3672 = vmatprep.subr.mxu0 0.0
        %3673 = vmatpush1.msra.mxu0 0.0
        %3674 = vmatprep.subr.mxu0 0.0
        %3675 = vmatpush1.msra.mxu0 0.0
        %3676 = vmatprep.subr.mxu0 0.0
        %3677 = vmatpush1.msra.mxu0 0.0
        %3678 = vmatprep.subr.mxu0 0.0
        %3679 = vmatpush1.msra.mxu0 0.0
        %3680 = vmatprep.subr.mxu0 0.0
        %3681 = vmatpush1.msra.mxu0 0.0
        %3682 = vmatprep.subr.mxu0 0.0
        %3683 = vmatpush1.msra.mxu0 0.0
        %3684 = vmatprep.subr.mxu0 0.0
        %3685 = vmatpush1.msra.mxu0 0.0
        %3686 = vmatprep.subr.mxu0 0.0
        %3687 = vmatpush1.msra.mxu0 0.0
        %3688 = vmatprep.subr.mxu0 0.0
        %3689 = vmatpush1.msra.mxu0 0.0
        %3690 = vmatprep.subr.mxu0 0.0
        %3691 = vmatpush1.msra.mxu0 0.0
        %3692 = vmatprep.mubr.f32.mxu0 0.0
        %3693 = vmatmul.mubr.f32.gmra.mrb[0].mxu0 %v309
        %v3694 = vpop.f32.mrb[0].mxu0
        %v3695 = vadd.f32 0.0, %v3694
        %v3696 = vpop.f32.mrb[0].mxu0
        %3697 = vdwg.mxu0
        %3698 = vmatprep.subr.mxu0 0.0
        %3699 = vmatpush1.msra.mxu0 %v3500
        %3700 = vmatprep.subr.mxu0 0.0
        %3701 = vmatpush1.msra.mxu0 %v3501
        %3702 = vmatprep.subr.mxu0 0.0
        %3703 = vmatpush1.msra.mxu0 %v3502
        %3704 = vmatprep.subr.mxu0 0.0
        %3705 = vmatpush1.msra.mxu0 %v3503
        %3706 = vmatprep.subr.mxu0 0.0
        %3707 = vmatpush1.msra.mxu0 %v3504
        %3708 = vmatprep.subr.mxu0 0.0
        %3709 = vmatpush1.msra.mxu0 %v3505
        %3710 = vmatprep.subr.mxu0 0.0
        %3711 = vmatpush1.msra.mxu0 %v3506
        %3712 = vmatprep.subr.mxu0 0.0
        %3713 = vmatpush1.msra.mxu0 %v3507
        %3714 = vmatprep.subr.mxu0 0.0
        %3715 = vmatpush1.msra.mxu0 %v3508
        %3716 = vmatprep.subr.mxu0 0.0
        %3717 = vmatpush1.msra.mxu0 %v3509
        %3718 = vmatprep.subr.mxu0 0.0
        %3719 = vmatpush1.msra.mxu0 %v3510
        %3720 = vmatprep.subr.mxu0 0.0
        %3721 = vmatpush1.msra.mxu0 %v3511
        %3722 = vmatprep.subr.mxu0 0.0
        %3723 = vmatpush1.msra.mxu0 %v3512
        %3724 = vmatprep.subr.mxu0 0.0
        %3725 = vmatpush1.msra.mxu0 %v3513
        %3726 = vmatprep.subr.mxu0 0.0
        %3727 = vmatpush1.msra.mxu0 %v3514
        %3728 = vmatprep.subr.mxu0 0.0
        %3729 = vmatpush1.msra.mxu0 %v3515
        %3730 = vmatprep.subr.mxu0 0.0
        %3731 = vmatpush1.msra.mxu0 0.0
        %3732 = vmatprep.subr.mxu0 0.0
        %3733 = vmatpush1.msra.mxu0 0.0
        %3734 = vmatprep.subr.mxu0 0.0
        %3735 = vmatpush1.msra.mxu0 0.0
        %3736 = vmatprep.subr.mxu0 0.0
        %3737 = vmatpush1.msra.mxu0 0.0
        %3738 = vmatprep.subr.mxu0 0.0
        %3739 = vmatpush1.msra.mxu0 0.0
        %3740 = vmatprep.subr.mxu0 0.0
        %3741 = vmatpush1.msra.mxu0 0.0
        %3742 = vmatprep.subr.mxu0 0.0
        %3743 = vmatpush1.msra.mxu0 0.0
        %3744 = vmatprep.subr.mxu0 0.0
        %3745 = vmatpush1.msra.mxu0 0.0
        %3746 = vmatprep.subr.mxu0 0.0
        %3747 = vmatpush1.msra.mxu0 0.0
        %3748 = vmatprep.subr.mxu0 0.0
        %3749 = vmatpush1.msra.mxu0 0.0
        %3750 = vmatprep.subr.mxu0 0.0
        %3751 = vmatpush1.msra.mxu0 0.0
        %3752 = vmatprep.subr.mxu0 0.0
        %3753 = vmatpush1.msra.mxu0 0.0
        %3754 = vmatprep.subr.mxu0 0.0
        %3755 = vmatpush1.msra.mxu0 0.0
        %3756 = vmatprep.subr.mxu0 0.0
        %3757 = vmatpush1.msra.mxu0 0.0
        %3758 = vmatprep.subr.mxu0 0.0
        %3759 = vmatpush1.msra.mxu0 0.0
        %3760 = vmatprep.subr.mxu0 0.0
        %3761 = vmatpush1.msra.mxu0 0.0
        %3762 = vmatprep.mubr.f32.mxu0 0.0
        %3763 = vmatmul.mubr.f32.gmra.mrb[0].mxu0 %v310
        %v3764 = vpop.f32.mrb[0].mxu0
        %v3765 = vadd.f32 0.0, %v3764
        %v3766 = vpop.f32.mrb[0].mxu0
        %3767 = vdwg.mxu0
        %3768 = vmatprep.subr.mxu0 0.0
        %3769 = vmatpush1.msra.mxu0 %v3516
        %3770 = vmatprep.subr.mxu0 0.0
        %3771 = vmatpush1.msra.mxu0 %v3517
        %3772 = vmatprep.subr.mxu0 0.0
        %3773 = vmatpush1.msra.mxu0 %v3518
        %3774 = vmatprep.subr.mxu0 0.0
        %3775 = vmatpush1.msra.mxu0 %v3519
        %3776 = vmatprep.subr.mxu0 0.0
        %3777 = vmatpush1.msra.mxu0 %v3520
        %3778 = vmatprep.subr.mxu0 0.0
        %3779 = vmatpush1.msra.mxu0 %v3521
        %3780 = vmatprep.subr.mxu0 0.0
        %3781 = vmatpush1.msra.mxu0 %v3522
        %3782 = vmatprep.subr.mxu0 0.0
        %3783 = vmatpush1.msra.mxu0 %v3523
        %3784 = vmatprep.subr.mxu0 0.0
        %3785 = vmatpush1.msra.mxu0 %v3524
        %3786 = vmatprep.subr.mxu0 0.0
        %3787 = vmatpush1.msra.mxu0 %v3525
        %3788 = vmatprep.subr.mxu0 0.0
        %3789 = vmatpush1.msra.mxu0 %v3526
        %3790 = vmatprep.subr.mxu0 0.0
        %3791 = vmatpush1.msra.mxu0 %v3527
        %3792 = vmatprep.subr.mxu0 0.0
        %3793 = vmatpush1.msra.mxu0 %v3528
        %3794 = vmatprep.subr.mxu0 0.0
        %3795 = vmatpush1.msra.mxu0 %v3529
        %3796 = vmatprep.subr.mxu0 0.0
        %3797 = vmatpush1.msra.mxu0 %v3530
        %3798 = vmatprep.subr.mxu0 0.0
        %3799 = vmatpush1.msra.mxu0 %v3531
        %3800 = vmatprep.subr.mxu0 0.0
        %3801 = vmatpush1.msra.mxu0 0.0
        %3802 = vmatprep.subr.mxu0 0.0
        %3803 = vmatpush1.msra.mxu0 0.0
        %3804 = vmatprep.subr.mxu0 0.0
        %3805 = vmatpush1.msra.mxu0 0.0
        %3806 = vmatprep.subr.mxu0 0.0
        %3807 = vmatpush1.msra.mxu0 0.0
        %3808 = vmatprep.subr.mxu0 0.0
        %3809 = vmatpush1.msra.mxu0 0.0
        %3810 = vmatprep.subr.mxu0 0.0
        %3811 = vmatpush1.msra.mxu0 0.0
        %3812 = vmatprep.subr.mxu0 0.0
        %3813 = vmatpush1.msra.mxu0 0.0
        %3814 = vmatprep.subr.mxu0 0.0
        %3815 = vmatpush1.msra.mxu0 0.0
        %3816 = vmatprep.subr.mxu0 0.0
        %3817 = vmatpush1.msra.mxu0 0.0
        %3818 = vmatprep.subr.mxu0 0.0
        %3819 = vmatpush1.msra.mxu0 0.0
        %3820 = vmatprep.subr.mxu0 0.0
        %3821 = vmatpush1.msra.mxu0 0.0
        %3822 = vmatprep.subr.mxu0 0.0
        %3823 = vmatpush1.msra.mxu0 0.0
        %3824 = vmatprep.subr.mxu0 0.0
        %3825 = vmatpush1.msra.mxu0 0.0
        %3826 = vmatprep.subr.mxu0 0.0
        %3827 = vmatpush1.msra.mxu0 0.0
        %3828 = vmatprep.subr.mxu0 0.0
        %3829 = vmatpush1.msra.mxu0 0.0
        %3830 = vmatprep.subr.mxu0 0.0
        %3831 = vmatpush1.msra.mxu0 0.0
        %3832 = vmatprep.mubr.f32.mxu0 0.0
        %3833 = vmatmul.mubr.f32.gmra.mrb[0].mxu0 %v311
        %v3834 = vpop.f32.mrb[0].mxu0
        %v3835 = vadd.f32 0.0, %v3834
        %v3836 = vpop.f32.mrb[0].mxu0
        %3837 = vdwg.mxu0
        %3838 = vmatprep.subr.mxu0 0.0
        %3839 = vmatpush1.msra.mxu0 %v3532
        %3840 = vmatprep.subr.mxu0 0.0
        %3841 = vmatpush1.msra.mxu0 %v3533
        %3842 = vmatprep.subr.mxu0 0.0
        %3843 = vmatpush1.msra.mxu0 %v3534
        %3844 = vmatprep.subr.mxu0 0.0
        %3845 = vmatpush1.msra.mxu0 %v3535
        %3846 = vmatprep.subr.mxu0 0.0
        %3847 = vmatpush1.msra.mxu0 %v3536
        %3848 = vmatprep.subr.mxu0 0.0
        %3849 = vmatpush1.msra.mxu0 %v3537
        %3850 = vmatprep.subr.mxu0 0.0
        %3851 = vmatpush1.msra.mxu0 %v3538
        %3852 = vmatprep.subr.mxu0 0.0
        %3853 = vmatpush1.msra.mxu0 %v3539
        %3854 = vmatprep.subr.mxu0 0.0
        %3855 = vmatpush1.msra.mxu0 %v3540
        %3856 = vmatprep.subr.mxu0 0.0
        %3857 = vmatpush1.msra.mxu0 %v3541
        %3858 = vmatprep.subr.mxu0 0.0
        %3859 = vmatpush1.msra.mxu0 %v3542
        %3860 = vmatprep.subr.mxu0 0.0
        %3861 = vmatpush1.msra.mxu0 %v3543
        %3862 = vmatprep.subr.mxu0 0.0
        %3863 = vmatpush1.msra.mxu0 %v3544
        %3864 = vmatprep.subr.mxu0 0.0
        %3865 = vmatpush1.msra.mxu0 %v3545
        %3866 = vmatprep.subr.mxu0 0.0
        %3867 = vmatpush1.msra.mxu0 %v3546
        %3868 = vmatprep.subr.mxu0 0.0
        %3869 = vmatpush1.msra.mxu0 %v3547
        %3870 = vmatprep.subr.mxu0 0.0
        %3871 = vmatpush1.msra.mxu0 0.0
        %3872 = vmatprep.subr.mxu0 0.0
        %3873 = vmatpush1.msra.mxu0 0.0
        %3874 = vmatprep.subr.mxu0 0.0
        %3875 = vmatpush1.msra.mxu0 0.0
        %3876 = vmatprep.subr.mxu0 0.0
        %3877 = vmatpush1.msra.mxu0 0.0
        %3878 = vmatprep.subr.mxu0 0.0
        %3879 = vmatpush1.msra.mxu0 0.0
        %3880 = vmatprep.subr.mxu0 0.0
        %3881 = vmatpush1.msra.mxu0 0.0
        %3882 = vmatprep.subr.mxu0 0.0
        %3883 = vmatpush1.msra.mxu0 0.0
        %3884 = vmatprep.subr.mxu0 0.0
        %3885 = vmatpush1.msra.mxu0 0.0
        %3886 = vmatprep.subr.mxu0 0.0
        %3887 = vmatpush1.msra.mxu0 0.0
        %3888 = vmatprep.subr.mxu0 0.0
        %3889 = vmatpush1.msra.mxu0 0.0
        %3890 = vmatprep.subr.mxu0 0.0
        %3891 = vmatpush1.msra.mxu0 0.0
        %3892 = vmatprep.subr.mxu0 0.0
        %3893 = vmatpush1.msra.mxu0 0.0
        %3894 = vmatprep.subr.mxu0 0.0
        %3895 = vmatpush1.msra.mxu0 0.0
        %3896 = vmatprep.subr.mxu0 0.0
        %3897 = vmatpush1.msra.mxu0 0.0
        %3898 = vmatprep.subr.mxu0 0.0
        %3899 = vmatpush1.msra.mxu0 0.0
        %3900 = vmatprep.subr.mxu0 0.0
        %3901 = vmatpush1.msra.mxu0 0.0
        %3902 = vmatprep.mubr.f32.mxu0 0.0
        %3903 = vmatmul.mubr.f32.gmra.mrb[0].mxu0 %v312
        %v3904 = vpop.f32.mrb[0].mxu0
        %v3905 = vadd.f32 0.0, %v3904
        %v3906 = vpop.f32.mrb[0].mxu0
        %3907 = vdwg.mxu0
        %3908 = vmatprep.subr.mxu0 0.0
        %3909 = vmatpush1.msra.mxu0 %v3548
        %3910 = vmatprep.subr.mxu0 0.0
        %3911 = vmatpush1.msra.mxu0 %v3549
        %3912 = vmatprep.subr.mxu0 0.0
        %3913 = vmatpush1.msra.mxu0 %v3550
        %3914 = vmatprep.subr.mxu0 0.0
        %3915 = vmatpush1.msra.mxu0 %v3551
        %3916 = vmatprep.subr.mxu0 0.0
        %3917 = vmatpush1.msra.mxu0 %v3552
        %3918 = vmatprep.subr.mxu0 0.0
        %3919 = vmatpush1.msra.mxu0 %v3553
        %3920 = vmatprep.subr.mxu0 0.0
        %3921 = vmatpush1.msra.mxu0 %v3554
        %3922 = vmatprep.subr.mxu0 0.0
        %3923 = vmatpush1.msra.mxu0 %v3555
        %3924 = vmatprep.subr.mxu0 0.0
        %3925 = vmatpush1.msra.mxu0 %v3556
        %3926 = vmatprep.subr.mxu0 0.0
        %3927 = vmatpush1.msra.mxu0 %v3557
        %3928 = vmatprep.subr.mxu0 0.0
        %3929 = vmatpush1.msra.mxu0 %v3558
        %3930 = vmatprep.subr.mxu0 0.0
        %3931 = vmatpush1.msra.mxu0 %v3559
        %3932 = vmatprep.subr.mxu0 0.0
        %3933 = vmatpush1.msra.mxu0 %v3560
        %3934 = vmatprep.subr.mxu0 0.0
        %3935 = vmatpush1.msra.mxu0 %v3561
        %3936 = vmatprep.subr.mxu0 0.0
        %3937 = vmatpush1.msra.mxu0 %v3562
        %3938 = vmatprep.subr.mxu0 0.0
        %3939 = vmatpush1.msra.mxu0 %v3563
        %3940 = vmatprep.subr.mxu0 0.0
        %3941 = vmatpush1.msra.mxu0 0.0
        %3942 = vmatprep.subr.mxu0 0.0
        %3943 = vmatpush1.msra.mxu0 0.0
        %3944 = vmatprep.subr.mxu0 0.0
        %3945 = vmatpush1.msra.mxu0 0.0
        %3946 = vmatprep.subr.mxu0 0.0
        %3947 = vmatpush1.msra.mxu0 0.0
        %3948 = vmatprep.subr.mxu0 0.0
        %3949 = vmatpush1.msra.mxu0 0.0
        %3950 = vmatprep.subr.mxu0 0.0
        %3951 = vmatpush1.msra.mxu0 0.0
        %3952 = vmatprep.subr.mxu0 0.0
        %3953 = vmatpush1.msra.mxu0 0.0
        %3954 = vmatprep.subr.mxu0 0.0
        %3955 = vmatpush1.msra.mxu0 0.0
        %3956 = vmatprep.subr.mxu0 0.0
        %3957 = vmatpush1.msra.mxu0 0.0
        %3958 = vmatprep.subr.mxu0 0.0
        %3959 = vmatpush1.msra.mxu0 0.0
        %3960 = vmatprep.subr.mxu0 0.0
        %3961 = vmatpush1.msra.mxu0 0.0
        %3962 = vmatprep.subr.mxu0 0.0
        %3963 = vmatpush1.msra.mxu0 0.0
        %3964 = vmatprep.subr.mxu0 0.0
        %3965 = vmatpush1.msra.mxu0 0.0
        %3966 = vmatprep.subr.mxu0 0.0
        %3967 = vmatpush1.msra.mxu0 0.0
        %3968 = vmatprep.subr.mxu0 0.0
        %3969 = vmatpush1.msra.mxu0 0.0
        %3970 = vmatprep.subr.mxu0 0.0
        %3971 = vmatpush1.msra.mxu0 0.0
        %3972 = vmatprep.mubr.f32.mxu0 0.0
        %3973 = vmatmul.mubr.f32.gmra.mrb[0].mxu0 %v313
        %v3974 = vpop.f32.mrb[0].mxu0
        %v3975 = vadd.f32 0.0, %v3974
        %v3976 = vpop.f32.mrb[0].mxu0
        %3977 = vdwg.mxu0
        %3978 = vmatprep.subr.mxu0 0.0
        %3979 = vmatpush1.msra.mxu0 %v3564
        %3980 = vmatprep.subr.mxu0 0.0
        %3981 = vmatpush1.msra.mxu0 %v3565
        %3982 = vmatprep.subr.mxu0 0.0
        %3983 = vmatpush1.msra.mxu0 %v3566
        %3984 = vmatprep.subr.mxu0 0.0
        %3985 = vmatpush1.msra.mxu0 %v3567
        %3986 = vmatprep.subr.mxu0 0.0
        %3987 = vmatpush1.msra.mxu0 %v3568
        %3988 = vmatprep.subr.mxu0 0.0
        %3989 = vmatpush1.msra.mxu0 %v3569
        %3990 = vmatprep.subr.mxu0 0.0
        %3991 = vmatpush1.msra.mxu0 %v3570
        %3992 = vmatprep.subr.mxu0 0.0
        %3993 = vmatpush1.msra.mxu0 %v3571
        %3994 = vmatprep.subr.mxu0 0.0
        %3995 = vmatpush1.msra.mxu0 %v3572
        %3996 = vmatprep.subr.mxu0 0.0
        %3997 = vmatpush1.msra.mxu0 %v3573
        %3998 = vmatprep.subr.mxu0 0.0
        %3999 = vmatpush1.msra.mxu0 %v3574
        %4000 = vmatprep.subr.mxu0 0.0
        %4001 = vmatpush1.msra.mxu0 %v3575
        %4002 = vmatprep.subr.mxu0 0.0
        %4003 = vmatpush1.msra.mxu0 %v3576
        %4004 = vmatprep.subr.mxu0 0.0
        %4005 = vmatpush1.msra.mxu0 %v3577
        %4006 = vmatprep.subr.mxu0 0.0
        %4007 = vmatpush1.msra.mxu0 %v3578
        %4008 = vmatprep.subr.mxu0 0.0
        %4009 = vmatpush1.msra.mxu0 %v3579
        %4010 = vmatprep.subr.mxu0 0.0
        %4011 = vmatpush1.msra.mxu0 0.0
        %4012 = vmatprep.subr.mxu0 0.0
        %4013 = vmatpush1.msra.mxu0 0.0
        %4014 = vmatprep.subr.mxu0 0.0
        %4015 = vmatpush1.msra.mxu0 0.0
        %4016 = vmatprep.subr.mxu0 0.0
        %4017 = vmatpush1.msra.mxu0 0.0
        %4018 = vmatprep.subr.mxu0 0.0
        %4019 = vmatpush1.msra.mxu0 0.0
        %4020 = vmatprep.subr.mxu0 0.0
        %4021 = vmatpush1.msra.mxu0 0.0
        %4022 = vmatprep.subr.mxu0 0.0
        %4023 = vmatpush1.msra.mxu0 0.0
        %4024 = vmatprep.subr.mxu0 0.0
        %4025 = vmatpush1.msra.mxu0 0.0
        %4026 = vmatprep.subr.mxu0 0.0
        %4027 = vmatpush1.msra.mxu0 0.0
        %4028 = vmatprep.subr.mxu0 0.0
        %4029 = vmatpush1.msra.mxu0 0.0
        %4030 = vmatprep.subr.mxu0 0.0
        %4031 = vmatpush1.msra.mxu0 0.0
        %4032 = vmatprep.subr.mxu0 0.0
        %4033 = vmatpush1.msra.mxu0 0.0
        %4034 = vmatprep.subr.mxu0 0.0
        %4035 = vmatpush1.msra.mxu0 0.0
        %4036 = vmatprep.subr.mxu0 0.0
        %4037 = vmatpush1.msra.mxu0 0.0
        %4038 = vmatprep.subr.mxu0 0.0
        %4039 = vmatpush1.msra.mxu0 0.0
        %4040 = vmatprep.subr.mxu0 0.0
        %4041 = vmatpush1.msra.mxu0 0.0
        %4042 = vmatprep.mubr.f32.mxu0 0.0
        %4043 = vmatmul.mubr.f32.gmra.mrb[0].mxu0 %v314
        %v4044 = vpop.f32.mrb[0].mxu0
        %v4045 = vadd.f32 0.0, %v4044
        %v4046 = vpop.f32.mrb[0].mxu0
        %4047 = vdwg.mxu0
        %4048 = vmatprep.subr.mxu0 0.0
        %4049 = vmatpush1.msra.mxu0 %v3580
        %4050 = vmatprep.subr.mxu0 0.0
        %4051 = vmatpush1.msra.mxu0 %v3581
        %4052 = vmatprep.subr.mxu0 0.0
        %4053 = vmatpush1.msra.mxu0 %v3582
        %4054 = vmatprep.subr.mxu0 0.0
        %4055 = vmatpush1.msra.mxu0 %v3583
        %4056 = vmatprep.subr.mxu0 0.0
        %4057 = vmatpush1.msra.mxu0 %v3584
        %4058 = vmatprep.subr.mxu0 0.0
        %4059 = vmatpush1.msra.mxu0 %v3585
        %4060 = vmatprep.subr.mxu0 0.0
        %4061 = vmatpush1.msra.mxu0 %v3586
        %4062 = vmatprep.subr.mxu0 0.0
        %4063 = vmatpush1.msra.mxu0 %v3587
        %4064 = vmatprep.subr.mxu0 0.0
        %4065 = vmatpush1.msra.mxu0 %v3588
        %4066 = vmatprep.subr.mxu0 0.0
        %4067 = vmatpush1.msra.mxu0 %v3589
        %4068 = vmatprep.subr.mxu0 0.0
        %4069 = vmatpush1.msra.mxu0 %v3590
        %4070 = vmatprep.subr.mxu0 0.0
        %4071 = vmatpush1.msra.mxu0 %v3591
        %4072 = vmatprep.subr.mxu0 0.0
        %4073 = vmatpush1.msra.mxu0 %v3592
        %4074 = vmatprep.subr.mxu0 0.0
        %4075 = vmatpush1.msra.mxu0 %v3593
        %4076 = vmatprep.subr.mxu0 0.0
        %4077 = vmatpush1.msra.mxu0 %v3594
        %4078 = vmatprep.subr.mxu0 0.0
        %4079 = vmatpush1.msra.mxu0 %v3595
        %4080 = vmatprep.subr.mxu0 0.0
        %4081 = vmatpush1.msra.mxu0 0.0
        %4082 = vmatprep.subr.mxu0 0.0
        %4083 = vmatpush1.msra.mxu0 0.0
        %4084 = vmatprep.subr.mxu0 0.0
        %4085 = vmatpush1.msra.mxu0 0.0
        %4086 = vmatprep.subr.mxu0 0.0
        %4087 = vmatpush1.msra.mxu0 0.0
        %4088 = vmatprep.subr.mxu0 0.0
        %4089 = vmatpush1.msra.mxu0 0.0
        %4090 = vmatprep.subr.mxu0 0.0
        %4091 = vmatpush1.msra.mxu0 0.0
        %4092 = vmatprep.subr.mxu0 0.0
        %4093 = vmatpush1.msra.mxu0 0.0
        %4094 = vmatprep.subr.mxu0 0.0
        %4095 = vmatpush1.msra.mxu0 0.0
        %4096 = vmatprep.subr.mxu0 0.0
        %4097 = vmatpush1.msra.mxu0 0.0
        %4098 = vmatprep.subr.mxu0 0.0
        %4099 = vmatpush1.msra.mxu0 0.0
        %4100 = vmatprep.subr.mxu0 0.0
        %4101 = vmatpush1.msra.mxu0 0.0
        %4102 = vmatprep.subr.mxu0 0.0
        %4103 = vmatpush1.msra.mxu0 0.0
        %4104 = vmatprep.subr.mxu0 0.0
        %4105 = vmatpush1.msra.mxu0 0.0
        %4106 = vmatprep.subr.mxu0 0.0
        %4107 = vmatpush1.msra.mxu0 0.0
        %4108 = vmatprep.subr.mxu0 0.0
        %4109 = vmatpush1.msra.mxu0 0.0
        %4110 = vmatprep.subr.mxu0 0.0
        %4111 = vmatpush1.msra.mxu0 0.0
        %4112 = vmatprep.mubr.f32.mxu0 0.0
        %4113 = vmatmul.mubr.f32.gmra.mrb[0].mxu0 %v315
        %v4114 = vpop.f32.mrb[0].mxu0
        %v4115 = vadd.f32 0.0, %v4114
        %v4116 = vpop.f32.mrb[0].mxu0
        %4117 = vdwg.mxu0
        %4118 = vmatprep.subr.mxu0 0.0
        %4119 = vmatpush1.msra.mxu0 %v3596
        %4120 = vmatprep.subr.mxu0 0.0
        %4121 = vmatpush1.msra.mxu0 %v3597
        %4122 = vmatprep.subr.mxu0 0.0
        %4123 = vmatpush1.msra.mxu0 %v3598
        %4124 = vmatprep.subr.mxu0 0.0
        %4125 = vmatpush1.msra.mxu0 %v3599
        %4126 = vmatprep.subr.mxu0 0.0
        %4127 = vmatpush1.msra.mxu0 %v3600
        %4128 = vmatprep.subr.mxu0 0.0
        %4129 = vmatpush1.msra.mxu0 %v3601
        %4130 = vmatprep.subr.mxu0 0.0
        %4131 = vmatpush1.msra.mxu0 %v3602
        %4132 = vmatprep.subr.mxu0 0.0
        %4133 = vmatpush1.msra.mxu0 %v3603
        %4134 = vmatprep.subr.mxu0 0.0
        %4135 = vmatpush1.msra.mxu0 %v3604
        %4136 = vmatprep.subr.mxu0 0.0
        %4137 = vmatpush1.msra.mxu0 %v3605
        %4138 = vmatprep.subr.mxu0 0.0
        %4139 = vmatpush1.msra.mxu0 %v3606
        %4140 = vmatprep.subr.mxu0 0.0
        %4141 = vmatpush1.msra.mxu0 %v3607
        %4142 = vmatprep.subr.mxu0 0.0
        %4143 = vmatpush1.msra.mxu0 %v3608
        %4144 = vmatprep.subr.mxu0 0.0
        %4145 = vmatpush1.msra.mxu0 %v3609
        %4146 = vmatprep.subr.mxu0 0.0
        %4147 = vmatpush1.msra.mxu0 %v3610
        %4148 = vmatprep.subr.mxu0 0.0
        %4149 = vmatpush1.msra.mxu0 %v3611
        %4150 = vmatprep.subr.mxu0 0.0
        %4151 = vmatpush1.msra.mxu0 0.0
        %4152 = vmatprep.subr.mxu0 0.0
        %4153 = vmatpush1.msra.mxu0 0.0
        %4154 = vmatprep.subr.mxu0 0.0
        %4155 = vmatpush1.msra.mxu0 0.0
        %4156 = vmatprep.subr.mxu0 0.0
        %4157 = vmatpush1.msra.mxu0 0.0
        %4158 = vmatprep.subr.mxu0 0.0
        %4159 = vmatpush1.msra.mxu0 0.0
        %4160 = vmatprep.subr.mxu0 0.0
        %4161 = vmatpush1.msra.mxu0 0.0
        %4162 = vmatprep.subr.mxu0 0.0
        %4163 = vmatpush1.msra.mxu0 0.0
        %4164 = vmatprep.subr.mxu0 0.0
        %4165 = vmatpush1.msra.mxu0 0.0
        %4166 = vmatprep.subr.mxu0 0.0
        %4167 = vmatpush1.msra.mxu0 0.0
        %4168 = vmatprep.subr.mxu0 0.0
        %4169 = vmatpush1.msra.mxu0 0.0
        %4170 = vmatprep.subr.mxu0 0.0
        %4171 = vmatpush1.msra.mxu0 0.0
        %4172 = vmatprep.subr.mxu0 0.0
        %4173 = vmatpush1.msra.mxu0 0.0
        %4174 = vmatprep.subr.mxu0 0.0
        %4175 = vmatpush1.msra.mxu0 0.0
        %4176 = vmatprep.subr.mxu0 0.0
        %4177 = vmatpush1.msra.mxu0 0.0
        %4178 = vmatprep.subr.mxu0 0.0
        %4179 = vmatpush1.msra.mxu0 0.0
        %4180 = vmatprep.subr.mxu0 0.0
        %4181 = vmatpush1.msra.mxu0 0.0
        %4182 = vmatprep.mubr.f32.mxu0 0.0
        %4183 = vmatmul.mubr.f32.gmra.mrb[0].mxu0 %v316
        %v4184 = vpop.f32.mrb[0].mxu0
        %v4185 = vadd.f32 0.0, %v4184
        %v4186 = vpop.f32.mrb[0].mxu0
        %4187 = vdwg.mxu0
        %v4188 = vmul.f32 %v309, 0.05
        %v4189 = vmul.f32 %v310, 0.05
        %v4190 = vmul.f32 %v311, 0.05
        %v4191 = vmul.f32 %v312, 0.05
        %v4192 = vmul.f32 %v313, 0.05
        %v4193 = vmul.f32 %v314, 0.05
        %v4194 = vmul.f32 %v315, 0.05
        %v4195 = vmul.f32 %v316, 0.05
        %v4196 = vmul.f32 %v3695, 0.95
        %v4197 = vmul.f32 %v3765, 0.95
        %v4198 = vmul.f32 %v3835, 0.95
        %v4199 = vmul.f32 %v3905, 0.95
        %v4200 = vmul.f32 %v3975, 0.95
        %v4201 = vmul.f32 %v4045, 0.95
        %v4202 = vmul.f32 %v4115, 0.95
        %v4203 = vmul.f32 %v4185, 0.95
        %v4204 = vadd.f32 %v4188, %v4196
        %v4205 = vadd.f32 %v4189, %v4197
        %v4206 = vadd.f32 %v4190, %v4198
        %v4207 = vadd.f32 %v4191, %v4199
        %v4208 = vadd.f32 %v4192, %v4200
        %v4209 = vadd.f32 %v4193, %v4201
        %v4210 = vadd.f32 %v4194, %v4202
        %v4211 = vadd.f32 %v4195, %v4203
        %4212 = vst [vmem:[%s296 + $0x8] sm:$0xff] %v4204
        %4213 = vst [vmem:[%s296 + $0x20] sm:$0xff] %v4205
        %4214 = vst [vmem:[%s296 + $0x38] sm:$0xff] %v4206
        %4215 = vst [vmem:[%s296 + $0x50] sm:$0xff] %v4207
        %4216 = vst [vmem:[%s296 + $0x68] sm:$0xff] %v4208
        %4217 = vst [vmem:[%s296 + $0x80] sm:$0xff] %v4209
        %4218 = vst [vmem:[%s296 + $0x98] sm:$0xff] %v4210
        %4219 = vst [vmem:[%s296 + $0xb0] sm:$0xff] %v4211
        %4220 = vmatprep.subr.mxu0 0.0
        %4221 = vmatpush1.msra.mxu0 %v3484
        %4222 = vmatprep.subr.mxu0 0.0
        %4223 = vmatpush1.msra.mxu0 %v3485
        %4224 = vmatprep.subr.mxu0 0.0
        %4225 = vmatpush1.msra.mxu0 %v3486
        %4226 = vmatprep.subr.mxu0 0.0
        %4227 = vmatpush1.msra.mxu0 %v3487
        %4228 = vmatprep.subr.mxu0 0.0
        %4229 = vmatpush1.msra.mxu0 %v3488
        %4230 = vmatprep.subr.mxu0 0.0
        %4231 = vmatpush1.msra.mxu0 %v3489
        %4232 = vmatprep.subr.mxu0 0.0
        %4233 = vmatpush1.msra.mxu0 %v3490
        %4234 = vmatprep.subr.mxu0 0.0
        %4235 = vmatpush1.msra.mxu0 %v3491
        %4236 = vmatprep.subr.mxu0 0.0
        %4237 = vmatpush1.msra.mxu0 %v3492
        %4238 = vmatprep.subr.mxu0 0.0
        %4239 = vmatpush1.msra.mxu0 %v3493
        %4240 = vmatprep.subr.mxu0 0.0
        %4241 = vmatpush1.msra.mxu0 %v3494
        %4242 = vmatprep.subr.mxu0 0.0
        %4243 = vmatpush1.msra.mxu0 %v3495
        %4244 = vmatprep.subr.mxu0 0.0
        %4245 = vmatpush1.msra.mxu0 %v3496
        %4246 = vmatprep.subr.mxu0 0.0
        %4247 = vmatpush1.msra.mxu0 %v3497
        %4248 = vmatprep.subr.mxu0 0.0
        %4249 = vmatpush1.msra.mxu0 %v3498
        %4250 = vmatprep.subr.mxu0 0.0
        %4251 = vmatpush1.msra.mxu0 %v3499
        %4252 = vmatprep.subr.mxu0 0.0
        %4253 = vmatpush1.msra.mxu0 0.0
        %4254 = vmatprep.subr.mxu0 0.0
        %4255 = vmatpush1.msra.mxu0 0.0
        %4256 = vmatprep.subr.mxu0 0.0
        %4257 = vmatpush1.msra.mxu0 0.0
        %4258 = vmatprep.subr.mxu0 0.0
        %4259 = vmatpush1.msra.mxu0 0.0
        %4260 = vmatprep.subr.mxu0 0.0
        %4261 = vmatpush1.msra.mxu0 0.0
        %4262 = vmatprep.subr.mxu0 0.0
        %4263 = vmatpush1.msra.mxu0 0.0
        %4264 = vmatprep.subr.mxu0 0.0
        %4265 = vmatpush1.msra.mxu0 0.0
        %4266 = vmatprep.subr.mxu0 0.0
        %4267 = vmatpush1.msra.mxu0 0.0
        %4268 = vmatprep.subr.mxu0 0.0
        %4269 = vmatpush1.msra.mxu0 0.0
        %4270 = vmatprep.subr.mxu0 0.0
        %4271 = vmatpush1.msra.mxu0 0.0
        %4272 = vmatprep.subr.mxu0 0.0
        %4273 = vmatpush1.msra.mxu0 0.0
        %4274 = vmatprep.subr.mxu0 0.0
        %4275 = vmatpush1.msra.mxu0 0.0
        %4276 = vmatprep.subr.mxu0 0.0
        %4277 = vmatpush1.msra.mxu0 0.0
        %4278 = vmatprep.subr.mxu0 0.0
        %4279 = vmatpush1.msra.mxu0 0.0
        %4280 = vmatprep.subr.mxu0 0.0
        %4281 = vmatpush1.msra.mxu0 0.0
        %4282 = vmatprep.subr.mxu0 0.0
        %4283 = vmatpush1.msra.mxu0 0.0
        %4284 = vmatprep.mubr.f32.mxu0 0.0
        %4285 = vmatmul.mubr.f32.gmra.mrb[0].mxu0 %v4204
        %v4286 = vpop.f32.mrb[0].mxu0
        %v4287 = vadd.f32 0.0, %v4286
        %v4288 = vpop.f32.mrb[0].mxu0
        %4289 = vdwg.mxu0
        %4290 = vmatprep.subr.mxu0 0.0
        %4291 = vmatpush1.msra.mxu0 %v3500
        %4292 = vmatprep.subr.mxu0 0.0
        %4293 = vmatpush1.msra.mxu0 %v3501
        %4294 = vmatprep.subr.mxu0 0.0
        %4295 = vmatpush1.msra.mxu0 %v3502
        %4296 = vmatprep.subr.mxu0 0.0
        %4297 = vmatpush1.msra.mxu0 %v3503
        %4298 = vmatprep.subr.mxu0 0.0
        %4299 = vmatpush1.msra.mxu0 %v3504
        %4300 = vmatprep.subr.mxu0 0.0
        %4301 = vmatpush1.msra.mxu0 %v3505
        %4302 = vmatprep.subr.mxu0 0.0
        %4303 = vmatpush1.msra.mxu0 %v3506
        %4304 = vmatprep.subr.mxu0 0.0
        %4305 = vmatpush1.msra.mxu0 %v3507
        %4306 = vmatprep.subr.mxu0 0.0
        %4307 = vmatpush1.msra.mxu0 %v3508
        %4308 = vmatprep.subr.mxu0 0.0
        %4309 = vmatpush1.msra.mxu0 %v3509
        %4310 = vmatprep.subr.mxu0 0.0
        %4311 = vmatpush1.msra.mxu0 %v3510
        %4312 = vmatprep.subr.mxu0 0.0
        %4313 = vmatpush1.msra.mxu0 %v3511
        %4314 = vmatprep.subr.mxu0 0.0
        %4315 = vmatpush1.msra.mxu0 %v3512
        %4316 = vmatprep.subr.mxu0 0.0
        %4317 = vmatpush1.msra.mxu0 %v3513
        %4318 = vmatprep.subr.mxu0 0.0
        %4319 = vmatpush1.msra.mxu0 %v3514
        %4320 = vmatprep.subr.mxu0 0.0
        %4321 = vmatpush1.msra.mxu0 %v3515
        %4322 = vmatprep.subr.mxu0 0.0
        %4323 = vmatpush1.msra.mxu0 0.0
        %4324 = vmatprep.subr.mxu0 0.0
        %4325 = vmatpush1.msra.mxu0 0.0
        %4326 = vmatprep.subr.mxu0 0.0
        %4327 = vmatpush1.msra.mxu0 0.0
        %4328 = vmatprep.subr.mxu0 0.0
        %4329 = vmatpush1.msra.mxu0 0.0
        %4330 = vmatprep.subr.mxu0 0.0
        %4331 = vmatpush1.msra.mxu0 0.0
        %4332 = vmatprep.subr.mxu0 0.0
        %4333 = vmatpush1.msra.mxu0 0.0
        %4334 = vmatprep.subr.mxu0 0.0
        %4335 = vmatpush1.msra.mxu0 0.0
        %4336 = vmatprep.subr.mxu0 0.0
        %4337 = vmatpush1.msra.mxu0 0.0
        %4338 = vmatprep.subr.mxu0 0.0
        %4339 = vmatpush1.msra.mxu0 0.0
        %4340 = vmatprep.subr.mxu0 0.0
        %4341 = vmatpush1.msra.mxu0 0.0
        %4342 = vmatprep.subr.mxu0 0.0
        %4343 = vmatpush1.msra.mxu0 0.0
        %4344 = vmatprep.subr.mxu0 0.0
        %4345 = vmatpush1.msra.mxu0 0.0
        %4346 = vmatprep.subr.mxu0 0.0
        %4347 = vmatpush1.msra.mxu0 0.0
        %4348 = vmatprep.subr.mxu0 0.0
        %4349 = vmatpush1.msra.mxu0 0.0
        %4350 = vmatprep.subr.mxu0 0.0
        %4351 = vmatpush1.msra.mxu0 0.0
        %4352 = vmatprep.subr.mxu0 0.0
        %4353 = vmatpush1.msra.mxu0 0.0
        %4354 = vmatprep.mubr.f32.mxu0 0.0
        %4355 = vmatmul.mubr.f32.gmra.mrb[0].mxu0 %v4205
        %v4356 = vpop.f32.mrb[0].mxu0
        %v4357 = vadd.f32 0.0, %v4356
        %v4358 = vpop.f32.mrb[0].mxu0
        %4359 = vdwg.mxu0
        %4360 = vmatprep.subr.mxu0 0.0
        %4361 = vmatpush1.msra.mxu0 %v3516
        %4362 = vmatprep.subr.mxu0 0.0
        %4363 = vmatpush1.msra.mxu0 %v3517
        %4364 = vmatprep.subr.mxu0 0.0
        %4365 = vmatpush1.msra.mxu0 %v3518
        %4366 = vmatprep.subr.mxu0 0.0
        %4367 = vmatpush1.msra.mxu0 %v3519
        %4368 = vmatprep.subr.mxu0 0.0
        %4369 = vmatpush1.msra.mxu0 %v3520
        %4370 = vmatprep.subr.mxu0 0.0
        %4371 = vmatpush1.msra.mxu0 %v3521
        %4372 = vmatprep.subr.mxu0 0.0
        %4373 = vmatpush1.msra.mxu0 %v3522
        %4374 = vmatprep.subr.mxu0 0.0
        %4375 = vmatpush1.msra.mxu0 %v3523
        %4376 = vmatprep.subr.mxu0 0.0
        %4377 = vmatpush1.msra.mxu0 %v3524
        %4378 = vmatprep.subr.mxu0 0.0
        %4379 = vmatpush1.msra.mxu0 %v3525
        %4380 = vmatprep.subr.mxu0 0.0
        %4381 = vmatpush1.msra.mxu0 %v3526
        %4382 = vmatprep.subr.mxu0 0.0
        %4383 = vmatpush1.msra.mxu0 %v3527
        %4384 = vmatprep.subr.mxu0 0.0
        %4385 = vmatpush1.msra.mxu0 %v3528
        %4386 = vmatprep.subr.mxu0 0.0
        %4387 = vmatpush1.msra.mxu0 %v3529
        %4388 = vmatprep.subr.mxu0 0.0
        %4389 = vmatpush1.msra.mxu0 %v3530
        %4390 = vmatprep.subr.mxu0 0.0
        %4391 = vmatpush1.msra.mxu0 %v3531
        %4392 = vmatprep.subr.mxu0 0.0
        %4393 = vmatpush1.msra.mxu0 0.0
        %4394 = vmatprep.subr.mxu0 0.0
        %4395 = vmatpush1.msra.mxu0 0.0
        %4396 = vmatprep.subr.mxu0 0.0
        %4397 = vmatpush1.msra.mxu0 0.0
        %4398 = vmatprep.subr.mxu0 0.0
        %4399 = vmatpush1.msra.mxu0 0.0
        %4400 = vmatprep.subr.mxu0 0.0
        %4401 = vmatpush1.msra.mxu0 0.0
        %4402 = vmatprep.subr.mxu0 0.0
        %4403 = vmatpush1.msra.mxu0 0.0
        %4404 = vmatprep.subr.mxu0 0.0
        %4405 = vmatpush1.msra.mxu0 0.0
        %4406 = vmatprep.subr.mxu0 0.0
        %4407 = vmatpush1.msra.mxu0 0.0
        %4408 = vmatprep.subr.mxu0 0.0
        %4409 = vmatpush1.msra.mxu0 0.0
        %4410 = vmatprep.subr.mxu0 0.0
        %4411 = vmatpush1.msra.mxu0 0.0
        %4412 = vmatprep.subr.mxu0 0.0
        %4413 = vmatpush1.msra.mxu0 0.0
        %4414 = vmatprep.subr.mxu0 0.0
        %4415 = vmatpush1.msra.mxu0 0.0
        %4416 = vmatprep.subr.mxu0 0.0
        %4417 = vmatpush1.msra.mxu0 0.0
        %4418 = vmatprep.subr.mxu0 0.0
        %4419 = vmatpush1.msra.mxu0 0.0
        %4420 = vmatprep.subr.mxu0 0.0
        %4421 = vmatpush1.msra.mxu0 0.0
        %4422 = vmatprep.subr.mxu0 0.0
        %4423 = vmatpush1.msra.mxu0 0.0
        %4424 = vmatprep.mubr.f32.mxu0 0.0
        %4425 = vmatmul.mubr.f32.gmra.mrb[0].mxu0 %v4206
        %v4426 = vpop.f32.mrb[0].mxu0
        %v4427 = vadd.f32 0.0, %v4426
        %v4428 = vpop.f32.mrb[0].mxu0
        %4429 = vdwg.mxu0
        %4430 = vmatprep.subr.mxu0 0.0
        %4431 = vmatpush1.msra.mxu0 %v3532
        %4432 = vmatprep.subr.mxu0 0.0
        %4433 = vmatpush1.msra.mxu0 %v3533
        %4434 = vmatprep.subr.mxu0 0.0
        %4435 = vmatpush1.msra.mxu0 %v3534
        %4436 = vmatprep.subr.mxu0 0.0
        %4437 = vmatpush1.msra.mxu0 %v3535
        %4438 = vmatprep.subr.mxu0 0.0
        %4439 = vmatpush1.msra.mxu0 %v3536
        %4440 = vmatprep.subr.mxu0 0.0
        %4441 = vmatpush1.msra.mxu0 %v3537
        %4442 = vmatprep.subr.mxu0 0.0
        %4443 = vmatpush1.msra.mxu0 %v3538
        %4444 = vmatprep.subr.mxu0 0.0
        %4445 = vmatpush1.msra.mxu0 %v3539
        %4446 = vmatprep.subr.mxu0 0.0
        %4447 = vmatpush1.msra.mxu0 %v3540
        %4448 = vmatprep.subr.mxu0 0.0
        %4449 = vmatpush1.msra.mxu0 %v3541
        %4450 = vmatprep.subr.mxu0 0.0
        %4451 = vmatpush1.msra.mxu0 %v3542
        %4452 = vmatprep.subr.mxu0 0.0
        %4453 = vmatpush1.msra.mxu0 %v3543
        %4454 = vmatprep.subr.mxu0 0.0
        %4455 = vmatpush1.msra.mxu0 %v3544
        %4456 = vmatprep.subr.mxu0 0.0
        %4457 = vmatpush1.msra.mxu0 %v3545
        %4458 = vmatprep.subr.mxu0 0.0
        %4459 = vmatpush1.msra.mxu0 %v3546
        %4460 = vmatprep.subr.mxu0 0.0
        %4461 = vmatpush1.msra.mxu0 %v3547
        %4462 = vmatprep.subr.mxu0 0.0
        %4463 = vmatpush1.msra.mxu0 0.0
        %4464 = vmatprep.subr.mxu0 0.0
        %4465 = vmatpush1.msra.mxu0 0.0
        %4466 = vmatprep.subr.mxu0 0.0
        %4467 = vmatpush1.msra.mxu0 0.0
        %4468 = vmatprep.subr.mxu0 0.0
        %4469 = vmatpush1.msra.mxu0 0.0
        %4470 = vmatprep.subr.mxu0 0.0
        %4471 = vmatpush1.msra.mxu0 0.0
        %4472 = vmatprep.subr.mxu0 0.0
        %4473 = vmatpush1.msra.mxu0 0.0
        %4474 = vmatprep.subr.mxu0 0.0
        %4475 = vmatpush1.msra.mxu0 0.0
        %4476 = vmatprep.subr.mxu0 0.0
        %4477 = vmatpush1.msra.mxu0 0.0
        %4478 = vmatprep.subr.mxu0 0.0
        %4479 = vmatpush1.msra.mxu0 0.0
        %4480 = vmatprep.subr.mxu0 0.0
        %4481 = vmatpush1.msra.mxu0 0.0
        %4482 = vmatprep.subr.mxu0 0.0
        %4483 = vmatpush1.msra.mxu0 0.0
        %4484 = vmatprep.subr.mxu0 0.0
        %4485 = vmatpush1.msra.mxu0 0.0
        %4486 = vmatprep.subr.mxu0 0.0
        %4487 = vmatpush1.msra.mxu0 0.0
        %4488 = vmatprep.subr.mxu0 0.0
        %4489 = vmatpush1.msra.mxu0 0.0
        %4490 = vmatprep.subr.mxu0 0.0
        %4491 = vmatpush1.msra.mxu0 0.0
        %4492 = vmatprep.subr.mxu0 0.0
        %4493 = vmatpush1.msra.mxu0 0.0
        %4494 = vmatprep.mubr.f32.mxu0 0.0
        %4495 = vmatmul.mubr.f32.gmra.mrb[0].mxu0 %v4207
        %v4496 = vpop.f32.mrb[0].mxu0
        %v4497 = vadd.f32 0.0, %v4496
        %v4498 = vpop.f32.mrb[0].mxu0
        %4499 = vdwg.mxu0
        %4500 = vmatprep.subr.mxu0 0.0
        %4501 = vmatpush1.msra.mxu0 %v3548
        %4502 = vmatprep.subr.mxu0 0.0
        %4503 = vmatpush1.msra.mxu0 %v3549
        %4504 = vmatprep.subr.mxu0 0.0
        %4505 = vmatpush1.msra.mxu0 %v3550
        %4506 = vmatprep.subr.mxu0 0.0
        %4507 = vmatpush1.msra.mxu0 %v3551
        %4508 = vmatprep.subr.mxu0 0.0
        %4509 = vmatpush1.msra.mxu0 %v3552
        %4510 = vmatprep.subr.mxu0 0.0
        %4511 = vmatpush1.msra.mxu0 %v3553
        %4512 = vmatprep.subr.mxu0 0.0
        %4513 = vmatpush1.msra.mxu0 %v3554
        %4514 = vmatprep.subr.mxu0 0.0
        %4515 = vmatpush1.msra.mxu0 %v3555
        %4516 = vmatprep.subr.mxu0 0.0
        %4517 = vmatpush1.msra.mxu0 %v3556
        %4518 = vmatprep.subr.mxu0 0.0
        %4519 = vmatpush1.msra.mxu0 %v3557
        %4520 = vmatprep.subr.mxu0 0.0
        %4521 = vmatpush1.msra.mxu0 %v3558
        %4522 = vmatprep.subr.mxu0 0.0
        %4523 = vmatpush1.msra.mxu0 %v3559
        %4524 = vmatprep.subr.mxu0 0.0
        %4525 = vmatpush1.msra.mxu0 %v3560
        %4526 = vmatprep.subr.mxu0 0.0
        %4527 = vmatpush1.msra.mxu0 %v3561
        %4528 = vmatprep.subr.mxu0 0.0
        %4529 = vmatpush1.msra.mxu0 %v3562
        %4530 = vmatprep.subr.mxu0 0.0
        %4531 = vmatpush1.msra.mxu0 %v3563
        %4532 = vmatprep.subr.mxu0 0.0
        %4533 = vmatpush1.msra.mxu0 0.0
        %4534 = vmatprep.subr.mxu0 0.0
        %4535 = vmatpush1.msra.mxu0 0.0
        %4536 = vmatprep.subr.mxu0 0.0
        %4537 = vmatpush1.msra.mxu0 0.0
        %4538 = vmatprep.subr.mxu0 0.0
        %4539 = vmatpush1.msra.mxu0 0.0
        %4540 = vmatprep.subr.mxu0 0.0
        %4541 = vmatpush1.msra.mxu0 0.0
        %4542 = vmatprep.subr.mxu0 0.0
        %4543 = vmatpush1.msra.mxu0 0.0
        %4544 = vmatprep.subr.mxu0 0.0
        %4545 = vmatpush1.msra.mxu0 0.0
        %4546 = vmatprep.subr.mxu0 0.0
        %4547 = vmatpush1.msra.mxu0 0.0
        %4548 = vmatprep.subr.mxu0 0.0
        %4549 = vmatpush1.msra.mxu0 0.0
        %4550 = vmatprep.subr.mxu0 0.0
        %4551 = vmatpush1.msra.mxu0 0.0
        %4552 = vmatprep.subr.mxu0 0.0
        %4553 = vmatpush1.msra.mxu0 0.0
        %4554 = vmatprep.subr.mxu0 0.0
        %4555 = vmatpush1.msra.mxu0 0.0
        %4556 = vmatprep.subr.mxu0 0.0
        %4557 = vmatpush1.msra.mxu0 0.0
        %4558 = vmatprep.subr.mxu0 0.0
        %4559 = vmatpush1.msra.mxu0 0.0
        %4560 = vmatprep.subr.mxu0 0.0
        %4561 = vmatpush1.msra.mxu0 0.0
        %4562 = vmatprep.subr.mxu0 0.0
        %4563 = vmatpush1.msra.mxu0 0.0
        %4564 = vmatprep.mubr.f32.mxu0 0.0
        %4565 = vmatmul.mubr.f32.gmra.mrb[0].mxu0 %v4208
        %v4566 = vpop.f32.mrb[0].mxu0
        %v4567 = vadd.f32 0.0, %v4566
        %v4568 = vpop.f32.mrb[0].mxu0
        %4569 = vdwg.mxu0
        %4570 = vmatprep.subr.mxu0 0.0
        %4571 = vmatpush1.msra.mxu0 %v3564
        %4572 = vmatprep.subr.mxu0 0.0
        %4573 = vmatpush1.msra.mxu0 %v3565
        %4574 = vmatprep.subr.mxu0 0.0
        %4575 = vmatpush1.msra.mxu0 %v3566
        %4576 = vmatprep.subr.mxu0 0.0
        %4577 = vmatpush1.msra.mxu0 %v3567
        %4578 = vmatprep.subr.mxu0 0.0
        %4579 = vmatpush1.msra.mxu0 %v3568
        %4580 = vmatprep.subr.mxu0 0.0
        %4581 = vmatpush1.msra.mxu0 %v3569
        %4582 = vmatprep.subr.mxu0 0.0
        %4583 = vmatpush1.msra.mxu0 %v3570
        %4584 = vmatprep.subr.mxu0 0.0
        %4585 = vmatpush1.msra.mxu0 %v3571
        %4586 = vmatprep.subr.mxu0 0.0
        %4587 = vmatpush1.msra.mxu0 %v3572
        %4588 = vmatprep.subr.mxu0 0.0
        %4589 = vmatpush1.msra.mxu0 %v3573
        %4590 = vmatprep.subr.mxu0 0.0
        %4591 = vmatpush1.msra.mxu0 %v3574
        %4592 = vmatprep.subr.mxu0 0.0
        %4593 = vmatpush1.msra.mxu0 %v3575
        %4594 = vmatprep.subr.mxu0 0.0
        %4595 = vmatpush1.msra.mxu0 %v3576
        %4596 = vmatprep.subr.mxu0 0.0
        %4597 = vmatpush1.msra.mxu0 %v3577
        %4598 = vmatprep.subr.mxu0 0.0
        %4599 = vmatpush1.msra.mxu0 %v3578
        %4600 = vmatprep.subr.mxu0 0.0
        %4601 = vmatpush1.msra.mxu0 %v3579
        %4602 = vmatprep.subr.mxu0 0.0
        %4603 = vmatpush1.msra.mxu0 0.0
        %4604 = vmatprep.subr.mxu0 0.0
        %4605 = vmatpush1.msra.mxu0 0.0
        %4606 = vmatprep.subr.mxu0 0.0
        %4607 = vmatpush1.msra.mxu0 0.0
        %4608 = vmatprep.subr.mxu0 0.0
        %4609 = vmatpush1.msra.mxu0 0.0
        %4610 = vmatprep.subr.mxu0 0.0
        %4611 = vmatpush1.msra.mxu0 0.0
        %4612 = vmatprep.subr.mxu0 0.0
        %4613 = vmatpush1.msra.mxu0 0.0
        %4614 = vmatprep.subr.mxu0 0.0
        %4615 = vmatpush1.msra.mxu0 0.0
        %4616 = vmatprep.subr.mxu0 0.0
        %4617 = vmatpush1.msra.mxu0 0.0
        %4618 = vmatprep.subr.mxu0 0.0
        %4619 = vmatpush1.msra.mxu0 0.0
        %4620 = vmatprep.subr.mxu0 0.0
        %4621 = vmatpush1.msra.mxu0 0.0
        %4622 = vmatprep.subr.mxu0 0.0
        %4623 = vmatpush1.msra.mxu0 0.0
        %4624 = vmatprep.subr.mxu0 0.0
        %4625 = vmatpush1.msra.mxu0 0.0
        %4626 = vmatprep.subr.mxu0 0.0
        %4627 = vmatpush1.msra.mxu0 0.0
        %4628 = vmatprep.subr.mxu0 0.0
        %4629 = vmatpush1.msra.mxu0 0.0
        %4630 = vmatprep.subr.mxu0 0.0
        %4631 = vmatpush1.msra.mxu0 0.0
        %4632 = vmatprep.subr.mxu0 0.0
        %4633 = vmatpush1.msra.mxu0 0.0
        %4634 = vmatprep.mubr.f32.mxu0 0.0
        %4635 = vmatmul.mubr.f32.gmra.mrb[0].mxu0 %v4209
        %v4636 = vpop.f32.mrb[0].mxu0
        %v4637 = vadd.f32 0.0, %v4636
        %v4638 = vpop.f32.mrb[0].mxu0
        %4639 = vdwg.mxu0
        %4640 = vmatprep.subr.mxu0 0.0
        %4641 = vmatpush1.msra.mxu0 %v3580
        %4642 = vmatprep.subr.mxu0 0.0
        %4643 = vmatpush1.msra.mxu0 %v3581
        %4644 = vmatprep.subr.mxu0 0.0
        %4645 = vmatpush1.msra.mxu0 %v3582
        %4646 = vmatprep.subr.mxu0 0.0
        %4647 = vmatpush1.msra.mxu0 %v3583
        %4648 = vmatprep.subr.mxu0 0.0
        %4649 = vmatpush1.msra.mxu0 %v3584
        %4650 = vmatprep.subr.mxu0 0.0
        %4651 = vmatpush1.msra.mxu0 %v3585
        %4652 = vmatprep.subr.mxu0 0.0
        %4653 = vmatpush1.msra.mxu0 %v3586
        %4654 = vmatprep.subr.mxu0 0.0
        %4655 = vmatpush1.msra.mxu0 %v3587
        %4656 = vmatprep.subr.mxu0 0.0
        %4657 = vmatpush1.msra.mxu0 %v3588
        %4658 = vmatprep.subr.mxu0 0.0
        %4659 = vmatpush1.msra.mxu0 %v3589
        %4660 = vmatprep.subr.mxu0 0.0
        %4661 = vmatpush1.msra.mxu0 %v3590
        %4662 = vmatprep.subr.mxu0 0.0
        %4663 = vmatpush1.msra.mxu0 %v3591
        %4664 = vmatprep.subr.mxu0 0.0
        %4665 = vmatpush1.msra.mxu0 %v3592
        %4666 = vmatprep.subr.mxu0 0.0
        %4667 = vmatpush1.msra.mxu0 %v3593
        %4668 = vmatprep.subr.mxu0 0.0
        %4669 = vmatpush1.msra.mxu0 %v3594
        %4670 = vmatprep.subr.mxu0 0.0
        %4671 = vmatpush1.msra.mxu0 %v3595
        %4672 = vmatprep.subr.mxu0 0.0
        %4673 = vmatpush1.msra.mxu0 0.0
        %4674 = vmatprep.subr.mxu0 0.0
        %4675 = vmatpush1.msra.mxu0 0.0
        %4676 = vmatprep.subr.mxu0 0.0
        %4677 = vmatpush1.msra.mxu0 0.0
        %4678 = vmatprep.subr.mxu0 0.0
        %4679 = vmatpush1.msra.mxu0 0.0
        %4680 = vmatprep.subr.mxu0 0.0
        %4681 = vmatpush1.msra.mxu0 0.0
        %4682 = vmatprep.subr.mxu0 0.0
        %4683 = vmatpush1.msra.mxu0 0.0
        %4684 = vmatprep.subr.mxu0 0.0
        %4685 = vmatpush1.msra.mxu0 0.0
        %4686 = vmatprep.subr.mxu0 0.0
        %4687 = vmatpush1.msra.mxu0 0.0
        %4688 = vmatprep.subr.mxu0 0.0
        %4689 = vmatpush1.msra.mxu0 0.0
        %4690 = vmatprep.subr.mxu0 0.0
        %4691 = vmatpush1.msra.mxu0 0.0
        %4692 = vmatprep.subr.mxu0 0.0
        %4693 = vmatpush1.msra.mxu0 0.0
        %4694 = vmatprep.subr.mxu0 0.0
        %4695 = vmatpush1.msra.mxu0 0.0
        %4696 = vmatprep.subr.mxu0 0.0
        %4697 = vmatpush1.msra.mxu0 0.0
        %4698 = vmatprep.subr.mxu0 0.0
        %4699 = vmatpush1.msra.mxu0 0.0
        %4700 = vmatprep.subr.mxu0 0.0
        %4701 = vmatpush1.msra.mxu0 0.0
        %4702 = vmatprep.subr.mxu0 0.0
        %4703 = vmatpush1.msra.mxu0 0.0
        %4704 = vmatprep.mubr.f32.mxu0 0.0
        %4705 = vmatmul.mubr.f32.gmra.mrb[0].mxu0 %v4210
        %v4706 = vpop.f32.mrb[0].mxu0
        %v4707 = vadd.f32 0.0, %v4706
        %v4708 = vpop.f32.mrb[0].mxu0
        %4709 = vdwg.mxu0
        %4710 = vmatprep.subr.mxu0 0.0
        %4711 = vmatpush1.msra.mxu0 %v3596
        %4712 = vmatprep.subr.mxu0 0.0
        %4713 = vmatpush1.msra.mxu0 %v3597
        %4714 = vmatprep.subr.mxu0 0.0
        %4715 = vmatpush1.msra.mxu0 %v3598
        %4716 = vmatprep.subr.mxu0 0.0
        %4717 = vmatpush1.msra.mxu0 %v3599
        %4718 = vmatprep.subr.mxu0 0.0
        %4719 = vmatpush1.msra.mxu0 %v3600
        %4720 = vmatprep.subr.mxu0 0.0
        %4721 = vmatpush1.msra.mxu0 %v3601
        %4722 = vmatprep.subr.mxu0 0.0
        %4723 = vmatpush1.msra.mxu0 %v3602
        %4724 = vmatprep.subr.mxu0 0.0
        %4725 = vmatpush1.msra.mxu0 %v3603
        %4726 = vmatprep.subr.mxu0 0.0
        %4727 = vmatpush1.msra.mxu0 %v3604
        %4728 = vmatprep.subr.mxu0 0.0
        %4729 = vmatpush1.msra.mxu0 %v3605
        %4730 = vmatprep.subr.mxu0 0.0
        %4731 = vmatpush1.msra.mxu0 %v3606
        %4732 = vmatprep.subr.mxu0 0.0
        %4733 = vmatpush1.msra.mxu0 %v3607
        %4734 = vmatprep.subr.mxu0 0.0
        %4735 = vmatpush1.msra.mxu0 %v3608
        %4736 = vmatprep.subr.mxu0 0.0
        %4737 = vmatpush1.msra.mxu0 %v3609
        %4738 = vmatprep.subr.mxu0 0.0
        %4739 = vmatpush1.msra.mxu0 %v3610
        %4740 = vmatprep.subr.mxu0 0.0
        %4741 = vmatpush1.msra.mxu0 %v3611
        %4742 = vmatprep.subr.mxu0 0.0
        %4743 = vmatpush1.msra.mxu0 0.0
        %4744 = vmatprep.subr.mxu0 0.0
        %4745 = vmatpush1.msra.mxu0 0.0
        %4746 = vmatprep.subr.mxu0 0.0
        %4747 = vmatpush1.msra.mxu0 0.0
        %4748 = vmatprep.subr.mxu0 0.0
        %4749 = vmatpush1.msra.mxu0 0.0
        %4750 = vmatprep.subr.mxu0 0.0
        %4751 = vmatpush1.msra.mxu0 0.0
        %4752 = vmatprep.subr.mxu0 0.0
        %4753 = vmatpush1.msra.mxu0 0.0
        %4754 = vmatprep.subr.mxu0 0.0
        %4755 = vmatpush1.msra.mxu0 0.0
        %4756 = vmatprep.subr.mxu0 0.0
        %4757 = vmatpush1.msra.mxu0 0.0
        %4758 = vmatprep.subr.mxu0 0.0
        %4759 = vmatpush1.msra.mxu0 0.0
        %4760 = vmatprep.subr.mxu0 0.0
        %4761 = vmatpush1.msra.mxu0 0.0
        %4762 = vmatprep.subr.mxu0 0.0
        %4763 = vmatpush1.msra.mxu0 0.0
        %4764 = vmatprep.subr.mxu0 0.0
        %4765 = vmatpush1.msra.mxu0 0.0
        %4766 = vmatprep.subr.mxu0 0.0
        %4767 = vmatpush1.msra.mxu0 0.0
        %4768 = vmatprep.subr.mxu0 0.0
        %4769 = vmatpush1.msra.mxu0 0.0
        %4770 = vmatprep.subr.mxu0 0.0
        %4771 = vmatpush1.msra.mxu0 0.0
        %4772 = vmatprep.subr.mxu0 0.0
        %4773 = vmatpush1.msra.mxu0 0.0
        %4774 = vmatprep.mubr.f32.mxu0 0.0
        %4775 = vmatmul.mubr.f32.gmra.mrb[0].mxu0 %v4211
        %v4776 = vpop.f32.mrb[0].mxu0
        %v4777 = vadd.f32 0.0, %v4776
        %v4778 = vpop.f32.mrb[0].mxu0
        %4779 = vdwg.mxu0
        %v4780 = vmul.f32 %v4287, 0.95
        %v4781 = vmul.f32 %v4357, 0.95
        %v4782 = vmul.f32 %v4427, 0.95
        %v4783 = vmul.f32 %v4497, 0.95
        %v4784 = vmul.f32 %v4567, 0.95
        %v4785 = vmul.f32 %v4637, 0.95
        %v4786 = vmul.f32 %v4707, 0.95
        %v4787 = vmul.f32 %v4777, 0.95
        %v4788 = vadd.f32 %v4188, %v4780
        %v4789 = vadd.f32 %v4189, %v4781
        %v4790 = vadd.f32 %v4190, %v4782
        %v4791 = vadd.f32 %v4191, %v4783
        %v4792 = vadd.f32 %v4192, %v4784
        %v4793 = vadd.f32 %v4193, %v4785
        %v4794 = vadd.f32 %v4194, %v4786
        %v4795 = vadd.f32 %v4195, %v4787
        %4796 = vst [vmem:[%s296 + $0x10] sm:$0xff] %v4788
        %4797 = vst [vmem:[%s296 + $0x28] sm:$0xff] %v4789
        %4798 = vst [vmem:[%s296 + $0x40] sm:$0xff] %v4790
        %4799 = vst [vmem:[%s296 + $0x58] sm:$0xff] %v4791
        %4800 = vst [vmem:[%s296 + $0x70] sm:$0xff] %v4792
        %4801 = vst [vmem:[%s296 + $0x88] sm:$0xff] %v4793
        %4802 = vst [vmem:[%s296 + $0xa0] sm:$0xff] %v4794
        %4803 = vst [vmem:[%s296 + $0xb8] sm:$0xff] %v4795
        %v4804 = vld [vmem:[%s264] sm:$0xff]
        %v4805 = vld [vmem:[%s264 + $0x8] sm:$0xff]
        %v4806 = vld [vmem:[%s264 + $0x10] sm:$0xff]
        %v4807 = vld [vmem:[%s264 + $0x18] sm:$0xff]
        %v4808 = vld [vmem:[%s264 + $0x20] sm:$0xff]
        %v4809 = vld [vmem:[%s264 + $0x28] sm:$0xff]
        %v4810 = vld [vmem:[%s264 + $0x30] sm:$0xff]
        %v4811 = vld [vmem:[%s264 + $0x38] sm:$0xff]
        %4812 = vxpose.xlu0.b32.start [1/16] %v4804, 128
        %4813 = vxpose.xlu0.b32.cont [2/16] 0.0, 128
        %4814 = vxpose.xlu0.b32.cont [3/16] 0.0, 128
        %4815 = vxpose.xlu0.b32.cont [4/16] 0.0, 128
        %4816 = vxpose.xlu0.b32.cont [5/16] 0.0, 128
        %4817 = vxpose.xlu0.b32.cont [6/16] 0.0, 128
        %4818 = vxpose.xlu0.b32.cont [7/16] 0.0, 128
        %4819 = vxpose.xlu0.b32.cont [8/16] 0.0, 128
        %4820 = vxpose.xlu0.b32.cont [9/16] 0.0, 128
        %4821 = vxpose.xlu0.b32.cont [10/16] 0.0, 128
        %4822 = vxpose.xlu0.b32.cont [11/16] 0.0, 128
        %4823 = vxpose.xlu0.b32.cont [12/16] 0.0, 128
        %4824 = vxpose.xlu0.b32.cont [13/16] 0.0, 128
        %4825 = vxpose.xlu0.b32.cont [14/16] 0.0, 128
        %4826 = vxpose.xlu0.b32.cont [15/16] 0.0, 128
        %4827 = vxpose.xlu0.b32.end [16/16] 0.0, 128
        %v4828 = vpop.trf.xlu0
        %v4829 = vpop.trf.xlu0
        %v4830 = vpop.trf.xlu0
        %v4831 = vpop.trf.xlu0
        %v4832 = vpop.trf.xlu0
        %v4833 = vpop.trf.xlu0
        %v4834 = vpop.trf.xlu0
        %v4835 = vpop.trf.xlu0
        %v4836 = vpop.trf.xlu0
        %v4837 = vpop.trf.xlu0
        %v4838 = vpop.trf.xlu0
        %v4839 = vpop.trf.xlu0
        %v4840 = vpop.trf.xlu0
        %v4841 = vpop.trf.xlu0
        %v4842 = vpop.trf.xlu0
        %v4843 = vpop.trf.xlu0
        %4844 = vxpose.xlu0.b32.start [1/16] %v4805, 128
        %4845 = vxpose.xlu0.b32.cont [2/16] 0.0, 128
        %4846 = vxpose.xlu0.b32.cont [3/16] 0.0, 128
        %4847 = vxpose.xlu0.b32.cont [4/16] 0.0, 128
        %4848 = vxpose.xlu0.b32.cont [5/16] 0.0, 128
        %4849 = vxpose.xlu0.b32.cont [6/16] 0.0, 128
        %4850 = vxpose.xlu0.b32.cont [7/16] 0.0, 128
        %4851 = vxpose.xlu0.b32.cont [8/16] 0.0, 128
        %4852 = vxpose.xlu0.b32.cont [9/16] 0.0, 128
        %4853 = vxpose.xlu0.b32.cont [10/16] 0.0, 128
        %4854 = vxpose.xlu0.b32.cont [11/16] 0.0, 128
        %4855 = vxpose.xlu0.b32.cont [12/16] 0.0, 128
        %4856 = vxpose.xlu0.b32.cont [13/16] 0.0, 128
        %4857 = vxpose.xlu0.b32.cont [14/16] 0.0, 128
        %4858 = vxpose.xlu0.b32.cont [15/16] 0.0, 128
        %4859 = vxpose.xlu0.b32.end [16/16] 0.0, 128
        %v4860 = vpop.trf.xlu0
        %v4861 = vpop.trf.xlu0
        %v4862 = vpop.trf.xlu0
        %v4863 = vpop.trf.xlu0
        %v4864 = vpop.trf.xlu0
        %v4865 = vpop.trf.xlu0
        %v4866 = vpop.trf.xlu0
        %v4867 = vpop.trf.xlu0
        %v4868 = vpop.trf.xlu0
        %v4869 = vpop.trf.xlu0
        %v4870 = vpop.trf.xlu0
        %v4871 = vpop.trf.xlu0
        %v4872 = vpop.trf.xlu0
        %v4873 = vpop.trf.xlu0
        %v4874 = vpop.trf.xlu0
        %v4875 = vpop.trf.xlu0
        %4876 = vxpose.xlu0.b32.start [1/16] %v4806, 128
        %4877 = vxpose.xlu0.b32.cont [2/16] 0.0, 128
        %4878 = vxpose.xlu0.b32.cont [3/16] 0.0, 128
        %4879 = vxpose.xlu0.b32.cont [4/16] 0.0, 128
        %4880 = vxpose.xlu0.b32.cont [5/16] 0.0, 128
        %4881 = vxpose.xlu0.b32.cont [6/16] 0.0, 128
        %4882 = vxpose.xlu0.b32.cont [7/16] 0.0, 128
        %4883 = vxpose.xlu0.b32.cont [8/16] 0.0, 128
        %4884 = vxpose.xlu0.b32.cont [9/16] 0.0, 128
        %4885 = vxpose.xlu0.b32.cont [10/16] 0.0, 128
        %4886 = vxpose.xlu0.b32.cont [11/16] 0.0, 128
        %4887 = vxpose.xlu0.b32.cont [12/16] 0.0, 128
        %4888 = vxpose.xlu0.b32.cont [13/16] 0.0, 128
        %4889 = vxpose.xlu0.b32.cont [14/16] 0.0, 128
        %4890 = vxpose.xlu0.b32.cont [15/16] 0.0, 128
        %4891 = vxpose.xlu0.b32.end [16/16] 0.0, 128
        %v4892 = vpop.trf.xlu0
        %v4893 = vpop.trf.xlu0
        %v4894 = vpop.trf.xlu0
        %v4895 = vpop.trf.xlu0
        %v4896 = vpop.trf.xlu0
        %v4897 = vpop.trf.xlu0
        %v4898 = vpop.trf.xlu0
        %v4899 = vpop.trf.xlu0
        %v4900 = vpop.trf.xlu0
        %v4901 = vpop.trf.xlu0
        %v4902 = vpop.trf.xlu0
        %v4903 = vpop.trf.xlu0
        %v4904 = vpop.trf.xlu0
        %v4905 = vpop.trf.xlu0
        %v4906 = vpop.trf.xlu0
        %v4907 = vpop.trf.xlu0
        %4908 = vxpose.xlu0.b32.start [1/16] %v4807, 128
        %4909 = vxpose.xlu0.b32.cont [2/16] 0.0, 128
        %4910 = vxpose.xlu0.b32.cont [3/16] 0.0, 128
        %4911 = vxpose.xlu0.b32.cont [4/16] 0.0, 128
        %4912 = vxpose.xlu0.b32.cont [5/16] 0.0, 128
        %4913 = vxpose.xlu0.b32.cont [6/16] 0.0, 128
        %4914 = vxpose.xlu0.b32.cont [7/16] 0.0, 128
        %4915 = vxpose.xlu0.b32.cont [8/16] 0.0, 128
        %4916 = vxpose.xlu0.b32.cont [9/16] 0.0, 128
        %4917 = vxpose.xlu0.b32.cont [10/16] 0.0, 128
        %4918 = vxpose.xlu0.b32.cont [11/16] 0.0, 128
        %4919 = vxpose.xlu0.b32.cont [12/16] 0.0, 128
        %4920 = vxpose.xlu0.b32.cont [13/16] 0.0, 128
        %4921 = vxpose.xlu0.b32.cont [14/16] 0.0, 128
        %4922 = vxpose.xlu0.b32.cont [15/16] 0.0, 128
        %4923 = vxpose.xlu0.b32.end [16/16] 0.0, 128
        %v4924 = vpop.trf.xlu0
        %v4925 = vpop.trf.xlu0
        %v4926 = vpop.trf.xlu0
        %v4927 = vpop.trf.xlu0
        %v4928 = vpop.trf.xlu0
        %v4929 = vpop.trf.xlu0
        %v4930 = vpop.trf.xlu0
        %v4931 = vpop.trf.xlu0
        %v4932 = vpop.trf.xlu0
        %v4933 = vpop.trf.xlu0
        %v4934 = vpop.trf.xlu0
        %v4935 = vpop.trf.xlu0
        %v4936 = vpop.trf.xlu0
        %v4937 = vpop.trf.xlu0
        %v4938 = vpop.trf.xlu0
        %v4939 = vpop.trf.xlu0
        %4940 = vxpose.xlu0.b32.start [1/16] %v4808, 128
        %4941 = vxpose.xlu0.b32.cont [2/16] 0.0, 128
        %4942 = vxpose.xlu0.b32.cont [3/16] 0.0, 128
        %4943 = vxpose.xlu0.b32.cont [4/16] 0.0, 128
        %4944 = vxpose.xlu0.b32.cont [5/16] 0.0, 128
        %4945 = vxpose.xlu0.b32.cont [6/16] 0.0, 128
        %4946 = vxpose.xlu0.b32.cont [7/16] 0.0, 128
        %4947 = vxpose.xlu0.b32.cont [8/16] 0.0, 128
        %4948 = vxpose.xlu0.b32.cont [9/16] 0.0, 128
        %4949 = vxpose.xlu0.b32.cont [10/16] 0.0, 128
        %4950 = vxpose.xlu0.b32.cont [11/16] 0.0, 128
        %4951 = vxpose.xlu0.b32.cont [12/16] 0.0, 128
        %4952 = vxpose.xlu0.b32.cont [13/16] 0.0, 128
        %4953 = vxpose.xlu0.b32.cont [14/16] 0.0, 128
        %4954 = vxpose.xlu0.b32.cont [15/16] 0.0, 128
        %4955 = vxpose.xlu0.b32.end [16/16] 0.0, 128
        %v4956 = vpop.trf.xlu0
        %v4957 = vpop.trf.xlu0
        %v4958 = vpop.trf.xlu0
        %v4959 = vpop.trf.xlu0
        %v4960 = vpop.trf.xlu0
        %v4961 = vpop.trf.xlu0
        %v4962 = vpop.trf.xlu0
        %v4963 = vpop.trf.xlu0
        %v4964 = vpop.trf.xlu0
        %v4965 = vpop.trf.xlu0
        %v4966 = vpop.trf.xlu0
        %v4967 = vpop.trf.xlu0
        %v4968 = vpop.trf.xlu0
        %v4969 = vpop.trf.xlu0
        %v4970 = vpop.trf.xlu0
        %v4971 = vpop.trf.xlu0
        %4972 = vxpose.xlu0.b32.start [1/16] %v4809, 128
        %4973 = vxpose.xlu0.b32.cont [2/16] 0.0, 128
        %4974 = vxpose.xlu0.b32.cont [3/16] 0.0, 128
        %4975 = vxpose.xlu0.b32.cont [4/16] 0.0, 128
        %4976 = vxpose.xlu0.b32.cont [5/16] 0.0, 128
        %4977 = vxpose.xlu0.b32.cont [6/16] 0.0, 128
        %4978 = vxpose.xlu0.b32.cont [7/16] 0.0, 128
        %4979 = vxpose.xlu0.b32.cont [8/16] 0.0, 128
        %4980 = vxpose.xlu0.b32.cont [9/16] 0.0, 128
        %4981 = vxpose.xlu0.b32.cont [10/16] 0.0, 128
        %4982 = vxpose.xlu0.b32.cont [11/16] 0.0, 128
        %4983 = vxpose.xlu0.b32.cont [12/16] 0.0, 128
        %4984 = vxpose.xlu0.b32.cont [13/16] 0.0, 128
        %4985 = vxpose.xlu0.b32.cont [14/16] 0.0, 128
        %4986 = vxpose.xlu0.b32.cont [15/16] 0.0, 128
        %4987 = vxpose.xlu0.b32.end [16/16] 0.0, 128
        %v4988 = vpop.trf.xlu0
        %v4989 = vpop.trf.xlu0
        %v4990 = vpop.trf.xlu0
        %v4991 = vpop.trf.xlu0
        %v4992 = vpop.trf.xlu0
        %v4993 = vpop.trf.xlu0
        %v4994 = vpop.trf.xlu0
        %v4995 = vpop.trf.xlu0
        %v4996 = vpop.trf.xlu0
        %v4997 = vpop.trf.xlu0
        %v4998 = vpop.trf.xlu0
        %v4999 = vpop.trf.xlu0
        %v5000 = vpop.trf.xlu0
        %v5001 = vpop.trf.xlu0
        %v5002 = vpop.trf.xlu0
        %v5003 = vpop.trf.xlu0
        %5004 = vxpose.xlu0.b32.start [1/16] %v4810, 128
        %5005 = vxpose.xlu0.b32.cont [2/16] 0.0, 128
        %5006 = vxpose.xlu0.b32.cont [3/16] 0.0, 128
        %5007 = vxpose.xlu0.b32.cont [4/16] 0.0, 128
        %5008 = vxpose.xlu0.b32.cont [5/16] 0.0, 128
        %5009 = vxpose.xlu0.b32.cont [6/16] 0.0, 128
        %5010 = vxpose.xlu0.b32.cont [7/16] 0.0, 128
        %5011 = vxpose.xlu0.b32.cont [8/16] 0.0, 128
        %5012 = vxpose.xlu0.b32.cont [9/16] 0.0, 128
        %5013 = vxpose.xlu0.b32.cont [10/16] 0.0, 128
        %5014 = vxpose.xlu0.b32.cont [11/16] 0.0, 128
        %5015 = vxpose.xlu0.b32.cont [12/16] 0.0, 128
        %5016 = vxpose.xlu0.b32.cont [13/16] 0.0, 128
        %5017 = vxpose.xlu0.b32.cont [14/16] 0.0, 128
        %5018 = vxpose.xlu0.b32.cont [15/16] 0.0, 128
        %5019 = vxpose.xlu0.b32.end [16/16] 0.0, 128
        %v5020 = vpop.trf.xlu0
        %v5021 = vpop.trf.xlu0
        %v5022 = vpop.trf.xlu0
        %v5023 = vpop.trf.xlu0
        %v5024 = vpop.trf.xlu0
        %v5025 = vpop.trf.xlu0
        %v5026 = vpop.trf.xlu0
        %v5027 = vpop.trf.xlu0
        %v5028 = vpop.trf.xlu0
        %v5029 = vpop.trf.xlu0
        %v5030 = vpop.trf.xlu0
        %v5031 = vpop.trf.xlu0
        %v5032 = vpop.trf.xlu0
        %v5033 = vpop.trf.xlu0
        %v5034 = vpop.trf.xlu0
        %v5035 = vpop.trf.xlu0
        %5036 = vxpose.xlu0.b32.start [1/16] %v4811, 128
        %5037 = vxpose.xlu0.b32.cont [2/16] 0.0, 128
        %5038 = vxpose.xlu0.b32.cont [3/16] 0.0, 128
        %5039 = vxpose.xlu0.b32.cont [4/16] 0.0, 128
        %5040 = vxpose.xlu0.b32.cont [5/16] 0.0, 128
        %5041 = vxpose.xlu0.b32.cont [6/16] 0.0, 128
        %5042 = vxpose.xlu0.b32.cont [7/16] 0.0, 128
        %5043 = vxpose.xlu0.b32.cont [8/16] 0.0, 128
        %5044 = vxpose.xlu0.b32.cont [9/16] 0.0, 128
        %5045 = vxpose.xlu0.b32.cont [10/16] 0.0, 128
        %5046 = vxpose.xlu0.b32.cont [11/16] 0.0, 128
        %5047 = vxpose.xlu0.b32.cont [12/16] 0.0, 128
        %5048 = vxpose.xlu0.b32.cont [13/16] 0.0, 128
        %5049 = vxpose.xlu0.b32.cont [14/16] 0.0, 128
        %5050 = vxpose.xlu0.b32.cont [15/16] 0.0, 128
        %5051 = vxpose.xlu0.b32.end [16/16] 0.0, 128
        %v5052 = vpop.trf.xlu0
        %v5053 = vpop.trf.xlu0
        %v5054 = vpop.trf.xlu0
        %v5055 = vpop.trf.xlu0
        %v5056 = vpop.trf.xlu0
        %v5057 = vpop.trf.xlu0
        %v5058 = vpop.trf.xlu0
        %v5059 = vpop.trf.xlu0
        %v5060 = vpop.trf.xlu0
        %v5061 = vpop.trf.xlu0
        %v5062 = vpop.trf.xlu0
        %v5063 = vpop.trf.xlu0
        %v5064 = vpop.trf.xlu0
        %v5065 = vpop.trf.xlu0
        %v5066 = vpop.trf.xlu0
        %v5067 = vpop.trf.xlu0
        %v5068 = vld [vmem:[%s255] sm:$0xff]
        %v5069 = vld [vmem:[%s255 + $0x8] sm:$0xff]
        %v5070 = vld [vmem:[%s255 + $0x10] sm:$0xff]
        %v5071 = vld [vmem:[%s255 + $0x18] sm:$0xff]
        %v5072 = vld [vmem:[%s255 + $0x20] sm:$0xff]
        %v5073 = vld [vmem:[%s255 + $0x28] sm:$0xff]
        %v5074 = vld [vmem:[%s255 + $0x30] sm:$0xff]
        %v5075 = vld [vmem:[%s255 + $0x38] sm:$0xff]
        %v5077 = vsel %vm625, %v4828, 0
        %v5080 = vsel %vm625, %v4829, 0
        %v5083 = vsel %vm625, %v4830, 0
        %v5086 = vsel %vm625, %v4831, 0
        %v5089 = vsel %vm625, %v4832, 0
        %v5092 = vsel %vm625, %v4833, 0
        %v5095 = vsel %vm625, %v4834, 0
        %v5098 = vsel %vm625, %v4835, 0
        %v5101 = vsel %vm625, %v4836, 0
        %v5104 = vsel %vm625, %v4837, 0
        %v5107 = vsel %vm625, %v4838, 0
        %v5110 = vsel %vm625, %v4839, 0
        %v5113 = vsel %vm625, %v4840, 0
        %v5116 = vsel %vm625, %v4841, 0
        %v5119 = vsel %vm625, %v4842, 0
        %v5122 = vsel %vm625, %v4843, 0
        %5124 = vmatprep.subr.mxu0 0.0
        %5125 = vmatpush1.msra.mxu0 %v5068
        %5126 = vmatprep.subr.mxu0 0.0
        %5127 = vmatpush1.msra.mxu0 0.0
        %5128 = vmatprep.subr.mxu0 0.0
        %5129 = vmatpush1.msra.mxu0 0.0
        %5130 = vmatprep.subr.mxu0 0.0
        %5131 = vmatpush1.msra.mxu0 0.0
        %5132 = vmatprep.subr.mxu0 0.0
        %5133 = vmatpush1.msra.mxu0 0.0
        %5134 = vmatprep.subr.mxu0 0.0
        %5135 = vmatpush1.msra.mxu0 0.0
        %5136 = vmatprep.subr.mxu0 0.0
        %5137 = vmatpush1.msra.mxu0 0.0
        %5138 = vmatprep.subr.mxu0 0.0
        %5139 = vmatpush1.msra.mxu0 0.0
        %5140 = vmatprep.subr.mxu0 0.0
        %5141 = vmatpush1.msra.mxu0 0.0
        %5142 = vmatprep.subr.mxu0 0.0
        %5143 = vmatpush1.msra.mxu0 0.0
        %5144 = vmatprep.subr.mxu0 0.0
        %5145 = vmatpush1.msra.mxu0 0.0
        %5146 = vmatprep.subr.mxu0 0.0
        %5147 = vmatpush1.msra.mxu0 0.0
        %5148 = vmatprep.subr.mxu0 0.0
        %5149 = vmatpush1.msra.mxu0 0.0
        %5150 = vmatprep.subr.mxu0 0.0
        %5151 = vmatpush1.msra.mxu0 0.0
        %5152 = vmatprep.subr.mxu0 0.0
        %5153 = vmatpush1.msra.mxu0 0.0
        %5154 = vmatprep.subr.mxu0 0.0
        %5155 = vmatpush1.msra.mxu0 0.0
        %5156 = vmatprep.subr.mxu0 0.0
        %5157 = vmatpush1.msra.mxu0 0.0
        %5158 = vmatprep.subr.mxu0 0.0
        %5159 = vmatpush1.msra.mxu0 0.0
        %5160 = vmatprep.subr.mxu0 0.0
        %5161 = vmatpush1.msra.mxu0 0.0
        %5162 = vmatprep.subr.mxu0 0.0
        %5163 = vmatpush1.msra.mxu0 0.0
        %5164 = vmatprep.subr.mxu0 0.0
        %5165 = vmatpush1.msra.mxu0 0.0
        %5166 = vmatprep.subr.mxu0 0.0
        %5167 = vmatpush1.msra.mxu0 0.0
        %5168 = vmatprep.subr.mxu0 0.0
        %5169 = vmatpush1.msra.mxu0 0.0
        %5170 = vmatprep.subr.mxu0 0.0
        %5171 = vmatpush1.msra.mxu0 0.0
        %5172 = vmatprep.subr.mxu0 0.0
        %5173 = vmatpush1.msra.mxu0 0.0
        %5174 = vmatprep.subr.mxu0 0.0
        %5175 = vmatpush1.msra.mxu0 0.0
        %5176 = vmatprep.subr.mxu0 0.0
        %5177 = vmatpush1.msra.mxu0 0.0
        %5178 = vmatprep.subr.mxu0 0.0
        %5179 = vmatpush1.msra.mxu0 0.0
        %5180 = vmatprep.subr.mxu0 0.0
        %5181 = vmatpush1.msra.mxu0 0.0
        %5182 = vmatprep.subr.mxu0 0.0
        %5183 = vmatpush1.msra.mxu0 0.0
        %5184 = vmatprep.subr.mxu0 0.0
        %5185 = vmatpush1.msra.mxu0 0.0
        %5186 = vmatprep.subr.mxu0 0.0
        %5187 = vmatpush1.msra.mxu0 0.0
        %5188 = vmatprep.mubr.f32.mxu0 0.0
        %5189 = vmatmul.mubr.f32.gmra.mrb[0].mxu0 %v5077
        %v5190 = vpop.f32.mrb[0].mxu0
        %v5191 = vadd.f32 0.0, %v5190
        %v5192 = vpop.f32.mrb[0].mxu0
        %5193 = vmatprep.mubr.f32.mxu0 0.0
        %5194 = vmatmul.mubr.f32.gmra.mrb[0].mxu0 %v5080
        %v5195 = vpop.f32.mrb[0].mxu0
        %v5196 = vadd.f32 0.0, %v5195
        %v5197 = vpop.f32.mrb[0].mxu0
        %5198 = vmatprep.mubr.f32.mxu0 0.0
        %5199 = vmatmul.mubr.f32.gmra.mrb[0].mxu0 %v5083
        %v5200 = vpop.f32.mrb[0].mxu0
        %v5201 = vadd.f32 0.0, %v5200
        %v5202 = vpop.f32.mrb[0].mxu0
        %5203 = vmatprep.mubr.f32.mxu0 0.0
        %5204 = vmatmul.mubr.f32.gmra.mrb[0].mxu0 %v5086
        %v5205 = vpop.f32.mrb[0].mxu0
        %v5206 = vadd.f32 0.0, %v5205
        %v5207 = vpop.f32.mrb[0].mxu0
        %5208 = vmatprep.mubr.f32.mxu0 0.0
        %5209 = vmatmul.mubr.f32.gmra.mrb[0].mxu0 %v5089
        %v5210 = vpop.f32.mrb[0].mxu0
        %v5211 = vadd.f32 0.0, %v5210
        %v5212 = vpop.f32.mrb[0].mxu0
        %5213 = vmatprep.mubr.f32.mxu0 0.0
        %5214 = vmatmul.mubr.f32.gmra.mrb[0].mxu0 %v5092
        %v5215 = vpop.f32.mrb[0].mxu0
        %v5216 = vadd.f32 0.0, %v5215
        %v5217 = vpop.f32.mrb[0].mxu0
        %5218 = vmatprep.mubr.f32.mxu0 0.0
        %5219 = vmatmul.mubr.f32.gmra.mrb[0].mxu0 %v5095
        %v5220 = vpop.f32.mrb[0].mxu0
        %v5221 = vadd.f32 0.0, %v5220
        %v5222 = vpop.f32.mrb[0].mxu0
        %5223 = vmatprep.mubr.f32.mxu0 0.0
        %5224 = vmatmul.mubr.f32.gmra.mrb[0].mxu0 %v5098
        %v5225 = vpop.f32.mrb[0].mxu0
        %v5226 = vadd.f32 0.0, %v5225
        %v5227 = vpop.f32.mrb[0].mxu0
        %5228 = vmatprep.mubr.f32.mxu0 0.0
        %5229 = vmatmul.mubr.f32.gmra.mrb[0].mxu0 %v5101
        %v5230 = vpop.f32.mrb[0].mxu0
        %v5231 = vadd.f32 0.0, %v5230
        %v5232 = vpop.f32.mrb[0].mxu0
        %5233 = vmatprep.mubr.f32.mxu0 0.0
        %5234 = vmatmul.mubr.f32.gmra.mrb[0].mxu0 %v5104
        %v5235 = vpop.f32.mrb[0].mxu0
        %v5236 = vadd.f32 0.0, %v5235
        %v5237 = vpop.f32.mrb[0].mxu0
        %5238 = vmatprep.mubr.f32.mxu0 0.0
        %5239 = vmatmul.mubr.f32.gmra.mrb[0].mxu0 %v5107
        %v5240 = vpop.f32.mrb[0].mxu0
        %v5241 = vadd.f32 0.0, %v5240
        %v5242 = vpop.f32.mrb[0].mxu0
        %5243 = vmatprep.mubr.f32.mxu0 0.0
        %5244 = vmatmul.mubr.f32.gmra.mrb[0].mxu0 %v5110
        %v5245 = vpop.f32.mrb[0].mxu0
        %v5246 = vadd.f32 0.0, %v5245
        %v5247 = vpop.f32.mrb[0].mxu0
        %5248 = vmatprep.mubr.f32.mxu0 0.0
        %5249 = vmatmul.mubr.f32.gmra.mrb[0].mxu0 %v5113
        %v5250 = vpop.f32.mrb[0].mxu0
        %v5251 = vadd.f32 0.0, %v5250
        %v5252 = vpop.f32.mrb[0].mxu0
        %5253 = vmatprep.mubr.f32.mxu0 0.0
        %5254 = vmatmul.mubr.f32.gmra.mrb[0].mxu0 %v5116
        %v5255 = vpop.f32.mrb[0].mxu0
        %v5256 = vadd.f32 0.0, %v5255
        %v5257 = vpop.f32.mrb[0].mxu0
        %5258 = vmatprep.mubr.f32.mxu0 0.0
        %5259 = vmatmul.mubr.f32.gmra.mrb[0].mxu0 %v5119
        %v5260 = vpop.f32.mrb[0].mxu0
        %v5261 = vadd.f32 0.0, %v5260
        %v5262 = vpop.f32.mrb[0].mxu0
        %5263 = vmatprep.mubr.f32.mxu0 0.0
        %5264 = vmatmul.mubr.f32.gmra.mrb[0].mxu0 %v5122
        %v5265 = vpop.f32.mrb[0].mxu0
        %v5266 = vadd.f32 0.0, %v5265
        %v5267 = vpop.f32.mrb[0].mxu0
        %5268 = vdwg.mxu0
        %v5270 = vsel %vm625, %v4860, 0
        %v5273 = vsel %vm625, %v4861, 0
        %v5276 = vsel %vm625, %v4862, 0
        %v5279 = vsel %vm625, %v4863, 0
        %v5282 = vsel %vm625, %v4864, 0
        %v5285 = vsel %vm625, %v4865, 0
        %v5288 = vsel %vm625, %v4866, 0
        %v5291 = vsel %vm625, %v4867, 0
        %v5294 = vsel %vm625, %v4868, 0
        %v5297 = vsel %vm625, %v4869, 0
        %v5300 = vsel %vm625, %v4870, 0
        %v5303 = vsel %vm625, %v4871, 0
        %v5306 = vsel %vm625, %v4872, 0
        %v5309 = vsel %vm625, %v4873, 0
        %v5312 = vsel %vm625, %v4874, 0
        %v5315 = vsel %vm625, %v4875, 0
        %5317 = vmatprep.subr.mxu0 0.0
        %5318 = vmatpush1.msra.mxu0 %v5069
        %5319 = vmatprep.subr.mxu0 0.0
        %5320 = vmatpush1.msra.mxu0 0.0
        %5321 = vmatprep.subr.mxu0 0.0
        %5322 = vmatpush1.msra.mxu0 0.0
        %5323 = vmatprep.subr.mxu0 0.0
        %5324 = vmatpush1.msra.mxu0 0.0
        %5325 = vmatprep.subr.mxu0 0.0
        %5326 = vmatpush1.msra.mxu0 0.0
        %5327 = vmatprep.subr.mxu0 0.0
        %5328 = vmatpush1.msra.mxu0 0.0
        %5329 = vmatprep.subr.mxu0 0.0
        %5330 = vmatpush1.msra.mxu0 0.0
        %5331 = vmatprep.subr.mxu0 0.0
        %5332 = vmatpush1.msra.mxu0 0.0
        %5333 = vmatprep.subr.mxu0 0.0
        %5334 = vmatpush1.msra.mxu0 0.0
        %5335 = vmatprep.subr.mxu0 0.0
        %5336 = vmatpush1.msra.mxu0 0.0
        %5337 = vmatprep.subr.mxu0 0.0
        %5338 = vmatpush1.msra.mxu0 0.0
        %5339 = vmatprep.subr.mxu0 0.0
        %5340 = vmatpush1.msra.mxu0 0.0
        %5341 = vmatprep.subr.mxu0 0.0
        %5342 = vmatpush1.msra.mxu0 0.0
        %5343 = vmatprep.subr.mxu0 0.0
        %5344 = vmatpush1.msra.mxu0 0.0
        %5345 = vmatprep.subr.mxu0 0.0
        %5346 = vmatpush1.msra.mxu0 0.0
        %5347 = vmatprep.subr.mxu0 0.0
        %5348 = vmatpush1.msra.mxu0 0.0
        %5349 = vmatprep.subr.mxu0 0.0
        %5350 = vmatpush1.msra.mxu0 0.0
        %5351 = vmatprep.subr.mxu0 0.0
        %5352 = vmatpush1.msra.mxu0 0.0
        %5353 = vmatprep.subr.mxu0 0.0
        %5354 = vmatpush1.msra.mxu0 0.0
        %5355 = vmatprep.subr.mxu0 0.0
        %5356 = vmatpush1.msra.mxu0 0.0
        %5357 = vmatprep.subr.mxu0 0.0
        %5358 = vmatpush1.msra.mxu0 0.0
        %5359 = vmatprep.subr.mxu0 0.0
        %5360 = vmatpush1.msra.mxu0 0.0
        %5361 = vmatprep.subr.mxu0 0.0
        %5362 = vmatpush1.msra.mxu0 0.0
        %5363 = vmatprep.subr.mxu0 0.0
        %5364 = vmatpush1.msra.mxu0 0.0
        %5365 = vmatprep.subr.mxu0 0.0
        %5366 = vmatpush1.msra.mxu0 0.0
        %5367 = vmatprep.subr.mxu0 0.0
        %5368 = vmatpush1.msra.mxu0 0.0
        %5369 = vmatprep.subr.mxu0 0.0
        %5370 = vmatpush1.msra.mxu0 0.0
        %5371 = vmatprep.subr.mxu0 0.0
        %5372 = vmatpush1.msra.mxu0 0.0
        %5373 = vmatprep.subr.mxu0 0.0
        %5374 = vmatpush1.msra.mxu0 0.0
        %5375 = vmatprep.subr.mxu0 0.0
        %5376 = vmatpush1.msra.mxu0 0.0
        %5377 = vmatprep.subr.mxu0 0.0
        %5378 = vmatpush1.msra.mxu0 0.0
        %5379 = vmatprep.subr.mxu0 0.0
        %5380 = vmatpush1.msra.mxu0 0.0
        %5381 = vmatprep.mubr.f32.mxu0 0.0
        %5382 = vmatmul.mubr.f32.gmra.mrb[0].mxu0 %v5270
        %v5383 = vpop.f32.mrb[0].mxu0
        %v5384 = vadd.f32 0.0, %v5383
        %v5385 = vpop.f32.mrb[0].mxu0
        %5386 = vmatprep.mubr.f32.mxu0 0.0
        %5387 = vmatmul.mubr.f32.gmra.mrb[0].mxu0 %v5273
        %v5388 = vpop.f32.mrb[0].mxu0
        %v5389 = vadd.f32 0.0, %v5388
        %v5390 = vpop.f32.mrb[0].mxu0
        %5391 = vmatprep.mubr.f32.mxu0 0.0
        %5392 = vmatmul.mubr.f32.gmra.mrb[0].mxu0 %v5276
        %v5393 = vpop.f32.mrb[0].mxu0
        %v5394 = vadd.f32 0.0, %v5393
        %v5395 = vpop.f32.mrb[0].mxu0
        %5396 = vmatprep.mubr.f32.mxu0 0.0
        %5397 = vmatmul.mubr.f32.gmra.mrb[0].mxu0 %v5279
        %v5398 = vpop.f32.mrb[0].mxu0
        %v5399 = vadd.f32 0.0, %v5398
        %v5400 = vpop.f32.mrb[0].mxu0
        %5401 = vmatprep.mubr.f32.mxu0 0.0
        %5402 = vmatmul.mubr.f32.gmra.mrb[0].mxu0 %v5282
        %v5403 = vpop.f32.mrb[0].mxu0
        %v5404 = vadd.f32 0.0, %v5403
        %v5405 = vpop.f32.mrb[0].mxu0
        %5406 = vmatprep.mubr.f32.mxu0 0.0
        %5407 = vmatmul.mubr.f32.gmra.mrb[0].mxu0 %v5285
        %v5408 = vpop.f32.mrb[0].mxu0
        %v5409 = vadd.f32 0.0, %v5408
        %v5410 = vpop.f32.mrb[0].mxu0
        %5411 = vmatprep.mubr.f32.mxu0 0.0
        %5412 = vmatmul.mubr.f32.gmra.mrb[0].mxu0 %v5288
        %v5413 = vpop.f32.mrb[0].mxu0
        %v5414 = vadd.f32 0.0, %v5413
        %v5415 = vpop.f32.mrb[0].mxu0
        %5416 = vmatprep.mubr.f32.mxu0 0.0
        %5417 = vmatmul.mubr.f32.gmra.mrb[0].mxu0 %v5291
        %v5418 = vpop.f32.mrb[0].mxu0
        %v5419 = vadd.f32 0.0, %v5418
        %v5420 = vpop.f32.mrb[0].mxu0
        %5421 = vmatprep.mubr.f32.mxu0 0.0
        %5422 = vmatmul.mubr.f32.gmra.mrb[0].mxu0 %v5294
        %v5423 = vpop.f32.mrb[0].mxu0
        %v5424 = vadd.f32 0.0, %v5423
        %v5425 = vpop.f32.mrb[0].mxu0
        %5426 = vmatprep.mubr.f32.mxu0 0.0
        %5427 = vmatmul.mubr.f32.gmra.mrb[0].mxu0 %v5297
        %v5428 = vpop.f32.mrb[0].mxu0
        %v5429 = vadd.f32 0.0, %v5428
        %v5430 = vpop.f32.mrb[0].mxu0
        %5431 = vmatprep.mubr.f32.mxu0 0.0
        %5432 = vmatmul.mubr.f32.gmra.mrb[0].mxu0 %v5300
        %v5433 = vpop.f32.mrb[0].mxu0
        %v5434 = vadd.f32 0.0, %v5433
        %v5435 = vpop.f32.mrb[0].mxu0
        %5436 = vmatprep.mubr.f32.mxu0 0.0
        %5437 = vmatmul.mubr.f32.gmra.mrb[0].mxu0 %v5303
        %v5438 = vpop.f32.mrb[0].mxu0
        %v5439 = vadd.f32 0.0, %v5438
        %v5440 = vpop.f32.mrb[0].mxu0
        %5441 = vmatprep.mubr.f32.mxu0 0.0
        %5442 = vmatmul.mubr.f32.gmra.mrb[0].mxu0 %v5306
        %v5443 = vpop.f32.mrb[0].mxu0
        %v5444 = vadd.f32 0.0, %v5443
        %v5445 = vpop.f32.mrb[0].mxu0
        %5446 = vmatprep.mubr.f32.mxu0 0.0
        %5447 = vmatmul.mubr.f32.gmra.mrb[0].mxu0 %v5309
        %v5448 = vpop.f32.mrb[0].mxu0
        %v5449 = vadd.f32 0.0, %v5448
        %v5450 = vpop.f32.mrb[0].mxu0
        %5451 = vmatprep.mubr.f32.mxu0 0.0
        %5452 = vmatmul.mubr.f32.gmra.mrb[0].mxu0 %v5312
        %v5453 = vpop.f32.mrb[0].mxu0
        %v5454 = vadd.f32 0.0, %v5453
        %v5455 = vpop.f32.mrb[0].mxu0
        %5456 = vmatprep.mubr.f32.mxu0 0.0
        %5457 = vmatmul.mubr.f32.gmra.mrb[0].mxu0 %v5315
        %v5458 = vpop.f32.mrb[0].mxu0
        %v5459 = vadd.f32 0.0, %v5458
        %v5460 = vpop.f32.mrb[0].mxu0
        %5461 = vdwg.mxu0
        %v5463 = vsel %vm625, %v4892, 0
        %v5466 = vsel %vm625, %v4893, 0
        %v5469 = vsel %vm625, %v4894, 0
        %v5472 = vsel %vm625, %v4895, 0
        %v5475 = vsel %vm625, %v4896, 0
        %v5478 = vsel %vm625, %v4897, 0
        %v5481 = vsel %vm625, %v4898, 0
        %v5484 = vsel %vm625, %v4899, 0
        %v5487 = vsel %vm625, %v4900, 0
        %v5490 = vsel %vm625, %v4901, 0
        %v5493 = vsel %vm625, %v4902, 0
        %v5496 = vsel %vm625, %v4903, 0
        %v5499 = vsel %vm625, %v4904, 0
        %v5502 = vsel %vm625, %v4905, 0
        %v5505 = vsel %vm625, %v4906, 0
        %v5508 = vsel %vm625, %v4907, 0
        %5510 = vmatprep.subr.mxu0 0.0
        %5511 = vmatpush1.msra.mxu0 %v5070
        %5512 = vmatprep.subr.mxu0 0.0
        %5513 = vmatpush1.msra.mxu0 0.0
        %5514 = vmatprep.subr.mxu0 0.0
        %5515 = vmatpush1.msra.mxu0 0.0
        %5516 = vmatprep.subr.mxu0 0.0
        %5517 = vmatpush1.msra.mxu0 0.0
        %5518 = vmatprep.subr.mxu0 0.0
        %5519 = vmatpush1.msra.mxu0 0.0
        %5520 = vmatprep.subr.mxu0 0.0
        %5521 = vmatpush1.msra.mxu0 0.0
        %5522 = vmatprep.subr.mxu0 0.0
        %5523 = vmatpush1.msra.mxu0 0.0
        %5524 = vmatprep.subr.mxu0 0.0
        %5525 = vmatpush1.msra.mxu0 0.0
        %5526 = vmatprep.subr.mxu0 0.0
        %5527 = vmatpush1.msra.mxu0 0.0
        %5528 = vmatprep.subr.mxu0 0.0
        %5529 = vmatpush1.msra.mxu0 0.0
        %5530 = vmatprep.subr.mxu0 0.0
        %5531 = vmatpush1.msra.mxu0 0.0
        %5532 = vmatprep.subr.mxu0 0.0
        %5533 = vmatpush1.msra.mxu0 0.0
        %5534 = vmatprep.subr.mxu0 0.0
        %5535 = vmatpush1.msra.mxu0 0.0
        %5536 = vmatprep.subr.mxu0 0.0
        %5537 = vmatpush1.msra.mxu0 0.0
        %5538 = vmatprep.subr.mxu0 0.0
        %5539 = vmatpush1.msra.mxu0 0.0
        %5540 = vmatprep.subr.mxu0 0.0
        %5541 = vmatpush1.msra.mxu0 0.0
        %5542 = vmatprep.subr.mxu0 0.0
        %5543 = vmatpush1.msra.mxu0 0.0
        %5544 = vmatprep.subr.mxu0 0.0
        %5545 = vmatpush1.msra.mxu0 0.0
        %5546 = vmatprep.subr.mxu0 0.0
        %5547 = vmatpush1.msra.mxu0 0.0
        %5548 = vmatprep.subr.mxu0 0.0
        %5549 = vmatpush1.msra.mxu0 0.0
        %5550 = vmatprep.subr.mxu0 0.0
        %5551 = vmatpush1.msra.mxu0 0.0
        %5552 = vmatprep.subr.mxu0 0.0
        %5553 = vmatpush1.msra.mxu0 0.0
        %5554 = vmatprep.subr.mxu0 0.0
        %5555 = vmatpush1.msra.mxu0 0.0
        %5556 = vmatprep.subr.mxu0 0.0
        %5557 = vmatpush1.msra.mxu0 0.0
        %5558 = vmatprep.subr.mxu0 0.0
        %5559 = vmatpush1.msra.mxu0 0.0
        %5560 = vmatprep.subr.mxu0 0.0
        %5561 = vmatpush1.msra.mxu0 0.0
        %5562 = vmatprep.subr.mxu0 0.0
        %5563 = vmatpush1.msra.mxu0 0.0
        %5564 = vmatprep.subr.mxu0 0.0
        %5565 = vmatpush1.msra.mxu0 0.0
        %5566 = vmatprep.subr.mxu0 0.0
        %5567 = vmatpush1.msra.mxu0 0.0
        %5568 = vmatprep.subr.mxu0 0.0
        %5569 = vmatpush1.msra.mxu0 0.0
        %5570 = vmatprep.subr.mxu0 0.0
        %5571 = vmatpush1.msra.mxu0 0.0
        %5572 = vmatprep.subr.mxu0 0.0
        %5573 = vmatpush1.msra.mxu0 0.0
        %5574 = vmatprep.mubr.f32.mxu0 0.0
        %5575 = vmatmul.mubr.f32.gmra.mrb[0].mxu0 %v5463
        %v5576 = vpop.f32.mrb[0].mxu0
        %v5577 = vadd.f32 0.0, %v5576
        %v5578 = vpop.f32.mrb[0].mxu0
        %5579 = vmatprep.mubr.f32.mxu0 0.0
        %5580 = vmatmul.mubr.f32.gmra.mrb[0].mxu0 %v5466
        %v5581 = vpop.f32.mrb[0].mxu0
        %v5582 = vadd.f32 0.0, %v5581
        %v5583 = vpop.f32.mrb[0].mxu0
        %5584 = vmatprep.mubr.f32.mxu0 0.0
        %5585 = vmatmul.mubr.f32.gmra.mrb[0].mxu0 %v5469
        %v5586 = vpop.f32.mrb[0].mxu0
        %v5587 = vadd.f32 0.0, %v5586
        %v5588 = vpop.f32.mrb[0].mxu0
        %5589 = vmatprep.mubr.f32.mxu0 0.0
        %5590 = vmatmul.mubr.f32.gmra.mrb[0].mxu0 %v5472
        %v5591 = vpop.f32.mrb[0].mxu0
        %v5592 = vadd.f32 0.0, %v5591
        %v5593 = vpop.f32.mrb[0].mxu0
        %5594 = vmatprep.mubr.f32.mxu0 0.0
        %5595 = vmatmul.mubr.f32.gmra.mrb[0].mxu0 %v5475
        %v5596 = vpop.f32.mrb[0].mxu0
        %v5597 = vadd.f32 0.0, %v5596
        %v5598 = vpop.f32.mrb[0].mxu0
        %5599 = vmatprep.mubr.f32.mxu0 0.0
        %5600 = vmatmul.mubr.f32.gmra.mrb[0].mxu0 %v5478
        %v5601 = vpop.f32.mrb[0].mxu0
        %v5602 = vadd.f32 0.0, %v5601
        %v5603 = vpop.f32.mrb[0].mxu0
        %5604 = vmatprep.mubr.f32.mxu0 0.0
        %5605 = vmatmul.mubr.f32.gmra.mrb[0].mxu0 %v5481
        %v5606 = vpop.f32.mrb[0].mxu0
        %v5607 = vadd.f32 0.0, %v5606
        %v5608 = vpop.f32.mrb[0].mxu0
        %5609 = vmatprep.mubr.f32.mxu0 0.0
        %5610 = vmatmul.mubr.f32.gmra.mrb[0].mxu0 %v5484
        %v5611 = vpop.f32.mrb[0].mxu0
        %v5612 = vadd.f32 0.0, %v5611
        %v5613 = vpop.f32.mrb[0].mxu0
        %5614 = vmatprep.mubr.f32.mxu0 0.0
        %5615 = vmatmul.mubr.f32.gmra.mrb[0].mxu0 %v5487
        %v5616 = vpop.f32.mrb[0].mxu0
        %v5617 = vadd.f32 0.0, %v5616
        %v5618 = vpop.f32.mrb[0].mxu0
        %5619 = vmatprep.mubr.f32.mxu0 0.0
        %5620 = vmatmul.mubr.f32.gmra.mrb[0].mxu0 %v5490
        %v5621 = vpop.f32.mrb[0].mxu0
        %v5622 = vadd.f32 0.0, %v5621
        %v5623 = vpop.f32.mrb[0].mxu0
        %5624 = vmatprep.mubr.f32.mxu0 0.0
        %5625 = vmatmul.mubr.f32.gmra.mrb[0].mxu0 %v5493
        %v5626 = vpop.f32.mrb[0].mxu0
        %v5627 = vadd.f32 0.0, %v5626
        %v5628 = vpop.f32.mrb[0].mxu0
        %5629 = vmatprep.mubr.f32.mxu0 0.0
        %5630 = vmatmul.mubr.f32.gmra.mrb[0].mxu0 %v5496
        %v5631 = vpop.f32.mrb[0].mxu0
        %v5632 = vadd.f32 0.0, %v5631
        %v5633 = vpop.f32.mrb[0].mxu0
        %5634 = vmatprep.mubr.f32.mxu0 0.0
        %5635 = vmatmul.mubr.f32.gmra.mrb[0].mxu0 %v5499
        %v5636 = vpop.f32.mrb[0].mxu0
        %v5637 = vadd.f32 0.0, %v5636
        %v5638 = vpop.f32.mrb[0].mxu0
        %5639 = vmatprep.mubr.f32.mxu0 0.0
        %5640 = vmatmul.mubr.f32.gmra.mrb[0].mxu0 %v5502
        %v5641 = vpop.f32.mrb[0].mxu0
        %v5642 = vadd.f32 0.0, %v5641
        %v5643 = vpop.f32.mrb[0].mxu0
        %5644 = vmatprep.mubr.f32.mxu0 0.0
        %5645 = vmatmul.mubr.f32.gmra.mrb[0].mxu0 %v5505
        %v5646 = vpop.f32.mrb[0].mxu0
        %v5647 = vadd.f32 0.0, %v5646
        %v5648 = vpop.f32.mrb[0].mxu0
        %5649 = vmatprep.mubr.f32.mxu0 0.0
        %5650 = vmatmul.mubr.f32.gmra.mrb[0].mxu0 %v5508
        %v5651 = vpop.f32.mrb[0].mxu0
        %v5652 = vadd.f32 0.0, %v5651
        %v5653 = vpop.f32.mrb[0].mxu0
        %5654 = vdwg.mxu0
        %v5656 = vsel %vm625, %v4924, 0
        %v5659 = vsel %vm625, %v4925, 0
        %v5662 = vsel %vm625, %v4926, 0
        %v5665 = vsel %vm625, %v4927, 0
        %v5668 = vsel %vm625, %v4928, 0
        %v5671 = vsel %vm625, %v4929, 0
        %v5674 = vsel %vm625, %v4930, 0
        %v5677 = vsel %vm625, %v4931, 0
        %v5680 = vsel %vm625, %v4932, 0
        %v5683 = vsel %vm625, %v4933, 0
        %v5686 = vsel %vm625, %v4934, 0
        %v5689 = vsel %vm625, %v4935, 0
        %v5692 = vsel %vm625, %v4936, 0
        %v5695 = vsel %vm625, %v4937, 0
        %v5698 = vsel %vm625, %v4938, 0
        %v5701 = vsel %vm625, %v4939, 0
        %5703 = vmatprep.subr.mxu0 0.0
        %5704 = vmatpush1.msra.mxu0 %v5071
        %5705 = vmatprep.subr.mxu0 0.0
        %5706 = vmatpush1.msra.mxu0 0.0
        %5707 = vmatprep.subr.mxu0 0.0
        %5708 = vmatpush1.msra.mxu0 0.0
        %5709 = vmatprep.subr.mxu0 0.0
        %5710 = vmatpush1.msra.mxu0 0.0
        %5711 = vmatprep.subr.mxu0 0.0
        %5712 = vmatpush1.msra.mxu0 0.0
        %5713 = vmatprep.subr.mxu0 0.0
        %5714 = vmatpush1.msra.mxu0 0.0
        %5715 = vmatprep.subr.mxu0 0.0
        %5716 = vmatpush1.msra.mxu0 0.0
        %5717 = vmatprep.subr.mxu0 0.0
        %5718 = vmatpush1.msra.mxu0 0.0
        %5719 = vmatprep.subr.mxu0 0.0
        %5720 = vmatpush1.msra.mxu0 0.0
        %5721 = vmatprep.subr.mxu0 0.0
        %5722 = vmatpush1.msra.mxu0 0.0
        %5723 = vmatprep.subr.mxu0 0.0
        %5724 = vmatpush1.msra.mxu0 0.0
        %5725 = vmatprep.subr.mxu0 0.0
        %5726 = vmatpush1.msra.mxu0 0.0
        %5727 = vmatprep.subr.mxu0 0.0
        %5728 = vmatpush1.msra.mxu0 0.0
        %5729 = vmatprep.subr.mxu0 0.0
        %5730 = vmatpush1.msra.mxu0 0.0
        %5731 = vmatprep.subr.mxu0 0.0
        %5732 = vmatpush1.msra.mxu0 0.0
        %5733 = vmatprep.subr.mxu0 0.0
        %5734 = vmatpush1.msra.mxu0 0.0
        %5735 = vmatprep.subr.mxu0 0.0
        %5736 = vmatpush1.msra.mxu0 0.0
        %5737 = vmatprep.subr.mxu0 0.0
        %5738 = vmatpush1.msra.mxu0 0.0
        %5739 = vmatprep.subr.mxu0 0.0
        %5740 = vmatpush1.msra.mxu0 0.0
        %5741 = vmatprep.subr.mxu0 0.0
        %5742 = vmatpush1.msra.mxu0 0.0
        %5743 = vmatprep.subr.mxu0 0.0
        %5744 = vmatpush1.msra.mxu0 0.0
        %5745 = vmatprep.subr.mxu0 0.0
        %5746 = vmatpush1.msra.mxu0 0.0
        %5747 = vmatprep.subr.mxu0 0.0
        %5748 = vmatpush1.msra.mxu0 0.0
        %5749 = vmatprep.subr.mxu0 0.0
        %5750 = vmatpush1.msra.mxu0 0.0
        %5751 = vmatprep.subr.mxu0 0.0
        %5752 = vmatpush1.msra.mxu0 0.0
        %5753 = vmatprep.subr.mxu0 0.0
        %5754 = vmatpush1.msra.mxu0 0.0
        %5755 = vmatprep.subr.mxu0 0.0
        %5756 = vmatpush1.msra.mxu0 0.0
        %5757 = vmatprep.subr.mxu0 0.0
        %5758 = vmatpush1.msra.mxu0 0.0
        %5759 = vmatprep.subr.mxu0 0.0
        %5760 = vmatpush1.msra.mxu0 0.0
        %5761 = vmatprep.subr.mxu0 0.0
        %5762 = vmatpush1.msra.mxu0 0.0
        %5763 = vmatprep.subr.mxu0 0.0
        %5764 = vmatpush1.msra.mxu0 0.0
        %5765 = vmatprep.subr.mxu0 0.0
        %5766 = vmatpush1.msra.mxu0 0.0
        %5767 = vmatprep.mubr.f32.mxu0 0.0
        %5768 = vmatmul.mubr.f32.gmra.mrb[0].mxu0 %v5656
        %v5769 = vpop.f32.mrb[0].mxu0
        %v5770 = vadd.f32 0.0, %v5769
        %v5771 = vpop.f32.mrb[0].mxu0
        %5772 = vmatprep.mubr.f32.mxu0 0.0
        %5773 = vmatmul.mubr.f32.gmra.mrb[0].mxu0 %v5659
        %v5774 = vpop.f32.mrb[0].mxu0
        %v5775 = vadd.f32 0.0, %v5774
        %v5776 = vpop.f32.mrb[0].mxu0
        %5777 = vmatprep.mubr.f32.mxu0 0.0
        %5778 = vmatmul.mubr.f32.gmra.mrb[0].mxu0 %v5662
        %v5779 = vpop.f32.mrb[0].mxu0
        %v5780 = vadd.f32 0.0, %v5779
        %v5781 = vpop.f32.mrb[0].mxu0
        %5782 = vmatprep.mubr.f32.mxu0 0.0
        %5783 = vmatmul.mubr.f32.gmra.mrb[0].mxu0 %v5665
        %v5784 = vpop.f32.mrb[0].mxu0
        %v5785 = vadd.f32 0.0, %v5784
        %v5786 = vpop.f32.mrb[0].mxu0
        %5787 = vmatprep.mubr.f32.mxu0 0.0
        %5788 = vmatmul.mubr.f32.gmra.mrb[0].mxu0 %v5668
        %v5789 = vpop.f32.mrb[0].mxu0
        %v5790 = vadd.f32 0.0, %v5789
        %v5791 = vpop.f32.mrb[0].mxu0
        %5792 = vmatprep.mubr.f32.mxu0 0.0
        %5793 = vmatmul.mubr.f32.gmra.mrb[0].mxu0 %v5671
        %v5794 = vpop.f32.mrb[0].mxu0
        %v5795 = vadd.f32 0.0, %v5794
        %v5796 = vpop.f32.mrb[0].mxu0
        %5797 = vmatprep.mubr.f32.mxu0 0.0
        %5798 = vmatmul.mubr.f32.gmra.mrb[0].mxu0 %v5674
        %v5799 = vpop.f32.mrb[0].mxu0
        %v5800 = vadd.f32 0.0, %v5799
        %v5801 = vpop.f32.mrb[0].mxu0
        %5802 = vmatprep.mubr.f32.mxu0 0.0
        %5803 = vmatmul.mubr.f32.gmra.mrb[0].mxu0 %v5677
        %v5804 = vpop.f32.mrb[0].mxu0
        %v5805 = vadd.f32 0.0, %v5804
        %v5806 = vpop.f32.mrb[0].mxu0
        %5807 = vmatprep.mubr.f32.mxu0 0.0
        %5808 = vmatmul.mubr.f32.gmra.mrb[0].mxu0 %v5680
        %v5809 = vpop.f32.mrb[0].mxu0
        %v5810 = vadd.f32 0.0, %v5809
        %v5811 = vpop.f32.mrb[0].mxu0
        %5812 = vmatprep.mubr.f32.mxu0 0.0
        %5813 = vmatmul.mubr.f32.gmra.mrb[0].mxu0 %v5683
        %v5814 = vpop.f32.mrb[0].mxu0
        %v5815 = vadd.f32 0.0, %v5814
        %v5816 = vpop.f32.mrb[0].mxu0
        %5817 = vmatprep.mubr.f32.mxu0 0.0
        %5818 = vmatmul.mubr.f32.gmra.mrb[0].mxu0 %v5686
        %v5819 = vpop.f32.mrb[0].mxu0
        %v5820 = vadd.f32 0.0, %v5819
        %v5821 = vpop.f32.mrb[0].mxu0
        %5822 = vmatprep.mubr.f32.mxu0 0.0
        %5823 = vmatmul.mubr.f32.gmra.mrb[0].mxu0 %v5689
        %v5824 = vpop.f32.mrb[0].mxu0
        %v5825 = vadd.f32 0.0, %v5824
        %v5826 = vpop.f32.mrb[0].mxu0
        %5827 = vmatprep.mubr.f32.mxu0 0.0
        %5828 = vmatmul.mubr.f32.gmra.mrb[0].mxu0 %v5692
        %v5829 = vpop.f32.mrb[0].mxu0
        %v5830 = vadd.f32 0.0, %v5829
        %v5831 = vpop.f32.mrb[0].mxu0
        %5832 = vmatprep.mubr.f32.mxu0 0.0
        %5833 = vmatmul.mubr.f32.gmra.mrb[0].mxu0 %v5695
        %v5834 = vpop.f32.mrb[0].mxu0
        %v5835 = vadd.f32 0.0, %v5834
        %v5836 = vpop.f32.mrb[0].mxu0
        %5837 = vmatprep.mubr.f32.mxu0 0.0
        %5838 = vmatmul.mubr.f32.gmra.mrb[0].mxu0 %v5698
        %v5839 = vpop.f32.mrb[0].mxu0
        %v5840 = vadd.f32 0.0, %v5839
        %v5841 = vpop.f32.mrb[0].mxu0
        %5842 = vmatprep.mubr.f32.mxu0 0.0
        %5843 = vmatmul.mubr.f32.gmra.mrb[0].mxu0 %v5701
        %v5844 = vpop.f32.mrb[0].mxu0
        %v5845 = vadd.f32 0.0, %v5844
        %v5846 = vpop.f32.mrb[0].mxu0
        %5847 = vdwg.mxu0
        %v5849 = vsel %vm625, %v4956, 0
        %v5852 = vsel %vm625, %v4957, 0
        %v5855 = vsel %vm625, %v4958, 0
        %v5858 = vsel %vm625, %v4959, 0
        %v5861 = vsel %vm625, %v4960, 0
        %v5864 = vsel %vm625, %v4961, 0
        %v5867 = vsel %vm625, %v4962, 0
        %v5870 = vsel %vm625, %v4963, 0
        %v5873 = vsel %vm625, %v4964, 0
        %v5876 = vsel %vm625, %v4965, 0
        %v5879 = vsel %vm625, %v4966, 0
        %v5882 = vsel %vm625, %v4967, 0
        %v5885 = vsel %vm625, %v4968, 0
        %v5888 = vsel %vm625, %v4969, 0
        %v5891 = vsel %vm625, %v4970, 0
        %v5894 = vsel %vm625, %v4971, 0
        %5896 = vmatprep.subr.mxu0 0.0
        %5897 = vmatpush1.msra.mxu0 %v5072
        %5898 = vmatprep.subr.mxu0 0.0
        %5899 = vmatpush1.msra.mxu0 0.0
        %5900 = vmatprep.subr.mxu0 0.0
        %5901 = vmatpush1.msra.mxu0 0.0
        %5902 = vmatprep.subr.mxu0 0.0
        %5903 = vmatpush1.msra.mxu0 0.0
        %5904 = vmatprep.subr.mxu0 0.0
        %5905 = vmatpush1.msra.mxu0 0.0
        %5906 = vmatprep.subr.mxu0 0.0
        %5907 = vmatpush1.msra.mxu0 0.0
        %5908 = vmatprep.subr.mxu0 0.0
        %5909 = vmatpush1.msra.mxu0 0.0
        %5910 = vmatprep.subr.mxu0 0.0
        %5911 = vmatpush1.msra.mxu0 0.0
        %5912 = vmatprep.subr.mxu0 0.0
        %5913 = vmatpush1.msra.mxu0 0.0
        %5914 = vmatprep.subr.mxu0 0.0
        %5915 = vmatpush1.msra.mxu0 0.0
        %5916 = vmatprep.subr.mxu0 0.0
        %5917 = vmatpush1.msra.mxu0 0.0
        %5918 = vmatprep.subr.mxu0 0.0
        %5919 = vmatpush1.msra.mxu0 0.0
        %5920 = vmatprep.subr.mxu0 0.0
        %5921 = vmatpush1.msra.mxu0 0.0
        %5922 = vmatprep.subr.mxu0 0.0
        %5923 = vmatpush1.msra.mxu0 0.0
        %5924 = vmatprep.subr.mxu0 0.0
        %5925 = vmatpush1.msra.mxu0 0.0
        %5926 = vmatprep.subr.mxu0 0.0
        %5927 = vmatpush1.msra.mxu0 0.0
        %5928 = vmatprep.subr.mxu0 0.0
        %5929 = vmatpush1.msra.mxu0 0.0
        %5930 = vmatprep.subr.mxu0 0.0
        %5931 = vmatpush1.msra.mxu0 0.0
        %5932 = vmatprep.subr.mxu0 0.0
        %5933 = vmatpush1.msra.mxu0 0.0
        %5934 = vmatprep.subr.mxu0 0.0
        %5935 = vmatpush1.msra.mxu0 0.0
        %5936 = vmatprep.subr.mxu0 0.0
        %5937 = vmatpush1.msra.mxu0 0.0
        %5938 = vmatprep.subr.mxu0 0.0
        %5939 = vmatpush1.msra.mxu0 0.0
        %5940 = vmatprep.subr.mxu0 0.0
        %5941 = vmatpush1.msra.mxu0 0.0
        %5942 = vmatprep.subr.mxu0 0.0
        %5943 = vmatpush1.msra.mxu0 0.0
        %5944 = vmatprep.subr.mxu0 0.0
        %5945 = vmatpush1.msra.mxu0 0.0
        %5946 = vmatprep.subr.mxu0 0.0
        %5947 = vmatpush1.msra.mxu0 0.0
        %5948 = vmatprep.subr.mxu0 0.0
        %5949 = vmatpush1.msra.mxu0 0.0
        %5950 = vmatprep.subr.mxu0 0.0
        %5951 = vmatpush1.msra.mxu0 0.0
        %5952 = vmatprep.subr.mxu0 0.0
        %5953 = vmatpush1.msra.mxu0 0.0
        %5954 = vmatprep.subr.mxu0 0.0
        %5955 = vmatpush1.msra.mxu0 0.0
        %5956 = vmatprep.subr.mxu0 0.0
        %5957 = vmatpush1.msra.mxu0 0.0
        %5958 = vmatprep.subr.mxu0 0.0
        %5959 = vmatpush1.msra.mxu0 0.0
        %5960 = vmatprep.mubr.f32.mxu0 0.0
        %5961 = vmatmul.mubr.f32.gmra.mrb[0].mxu0 %v5849
        %v5962 = vpop.f32.mrb[0].mxu0
        %v5963 = vadd.f32 0.0, %v5962
        %v5964 = vpop.f32.mrb[0].mxu0
        %5965 = vmatprep.mubr.f32.mxu0 0.0
        %5966 = vmatmul.mubr.f32.gmra.mrb[0].mxu0 %v5852
        %v5967 = vpop.f32.mrb[0].mxu0
        %v5968 = vadd.f32 0.0, %v5967
        %v5969 = vpop.f32.mrb[0].mxu0
        %5970 = vmatprep.mubr.f32.mxu0 0.0
        %5971 = vmatmul.mubr.f32.gmra.mrb[0].mxu0 %v5855
        %v5972 = vpop.f32.mrb[0].mxu0
        %v5973 = vadd.f32 0.0, %v5972
        %v5974 = vpop.f32.mrb[0].mxu0
        %5975 = vmatprep.mubr.f32.mxu0 0.0
        %5976 = vmatmul.mubr.f32.gmra.mrb[0].mxu0 %v5858
        %v5977 = vpop.f32.mrb[0].mxu0
        %v5978 = vadd.f32 0.0, %v5977
        %v5979 = vpop.f32.mrb[0].mxu0
        %5980 = vmatprep.mubr.f32.mxu0 0.0
        %5981 = vmatmul.mubr.f32.gmra.mrb[0].mxu0 %v5861
        %v5982 = vpop.f32.mrb[0].mxu0
        %v5983 = vadd.f32 0.0, %v5982
        %v5984 = vpop.f32.mrb[0].mxu0
        %5985 = vmatprep.mubr.f32.mxu0 0.0
        %5986 = vmatmul.mubr.f32.gmra.mrb[0].mxu0 %v5864
        %v5987 = vpop.f32.mrb[0].mxu0
        %v5988 = vadd.f32 0.0, %v5987
        %v5989 = vpop.f32.mrb[0].mxu0
        %5990 = vmatprep.mubr.f32.mxu0 0.0
        %5991 = vmatmul.mubr.f32.gmra.mrb[0].mxu0 %v5867
        %v5992 = vpop.f32.mrb[0].mxu0
        %v5993 = vadd.f32 0.0, %v5992
        %v5994 = vpop.f32.mrb[0].mxu0
        %5995 = vmatprep.mubr.f32.mxu0 0.0
        %5996 = vmatmul.mubr.f32.gmra.mrb[0].mxu0 %v5870
        %v5997 = vpop.f32.mrb[0].mxu0
        %v5998 = vadd.f32 0.0, %v5997
        %v5999 = vpop.f32.mrb[0].mxu0
        %6000 = vmatprep.mubr.f32.mxu0 0.0
        %6001 = vmatmul.mubr.f32.gmra.mrb[0].mxu0 %v5873
        %v6002 = vpop.f32.mrb[0].mxu0
        %v6003 = vadd.f32 0.0, %v6002
        %v6004 = vpop.f32.mrb[0].mxu0
        %6005 = vmatprep.mubr.f32.mxu0 0.0
        %6006 = vmatmul.mubr.f32.gmra.mrb[0].mxu0 %v5876
        %v6007 = vpop.f32.mrb[0].mxu0
        %v6008 = vadd.f32 0.0, %v6007
        %v6009 = vpop.f32.mrb[0].mxu0
        %6010 = vmatprep.mubr.f32.mxu0 0.0
        %6011 = vmatmul.mubr.f32.gmra.mrb[0].mxu0 %v5879
        %v6012 = vpop.f32.mrb[0].mxu0
        %v6013 = vadd.f32 0.0, %v6012
        %v6014 = vpop.f32.mrb[0].mxu0
        %6015 = vmatprep.mubr.f32.mxu0 0.0
        %6016 = vmatmul.mubr.f32.gmra.mrb[0].mxu0 %v5882
        %v6017 = vpop.f32.mrb[0].mxu0
        %v6018 = vadd.f32 0.0, %v6017
        %v6019 = vpop.f32.mrb[0].mxu0
        %6020 = vmatprep.mubr.f32.mxu0 0.0
        %6021 = vmatmul.mubr.f32.gmra.mrb[0].mxu0 %v5885
        %v6022 = vpop.f32.mrb[0].mxu0
        %v6023 = vadd.f32 0.0, %v6022
        %v6024 = vpop.f32.mrb[0].mxu0
        %6025 = vmatprep.mubr.f32.mxu0 0.0
        %6026 = vmatmul.mubr.f32.gmra.mrb[0].mxu0 %v5888
        %v6027 = vpop.f32.mrb[0].mxu0
        %v6028 = vadd.f32 0.0, %v6027
        %v6029 = vpop.f32.mrb[0].mxu0
        %6030 = vmatprep.mubr.f32.mxu0 0.0
        %6031 = vmatmul.mubr.f32.gmra.mrb[0].mxu0 %v5891
        %v6032 = vpop.f32.mrb[0].mxu0
        %v6033 = vadd.f32 0.0, %v6032
        %v6034 = vpop.f32.mrb[0].mxu0
        %6035 = vmatprep.mubr.f32.mxu0 0.0
        %6036 = vmatmul.mubr.f32.gmra.mrb[0].mxu0 %v5894
        %v6037 = vpop.f32.mrb[0].mxu0
        %v6038 = vadd.f32 0.0, %v6037
        %v6039 = vpop.f32.mrb[0].mxu0
        %6040 = vdwg.mxu0
        %v6042 = vsel %vm625, %v4988, 0
        %v6045 = vsel %vm625, %v4989, 0
        %v6048 = vsel %vm625, %v4990, 0
        %v6051 = vsel %vm625, %v4991, 0
        %v6054 = vsel %vm625, %v4992, 0
        %v6057 = vsel %vm625, %v4993, 0
        %v6060 = vsel %vm625, %v4994, 0
        %v6063 = vsel %vm625, %v4995, 0
        %v6066 = vsel %vm625, %v4996, 0
        %v6069 = vsel %vm625, %v4997, 0
        %v6072 = vsel %vm625, %v4998, 0
        %v6075 = vsel %vm625, %v4999, 0
        %v6078 = vsel %vm625, %v5000, 0
        %v6081 = vsel %vm625, %v5001, 0
        %v6084 = vsel %vm625, %v5002, 0
        %v6087 = vsel %vm625, %v5003, 0
        %6089 = vmatprep.subr.mxu0 0.0
        %6090 = vmatpush1.msra.mxu0 %v5073
        %6091 = vmatprep.subr.mxu0 0.0
        %6092 = vmatpush1.msra.mxu0 0.0
        %6093 = vmatprep.subr.mxu0 0.0
        %6094 = vmatpush1.msra.mxu0 0.0
        %6095 = vmatprep.subr.mxu0 0.0
        %6096 = vmatpush1.msra.mxu0 0.0
        %6097 = vmatprep.subr.mxu0 0.0
        %6098 = vmatpush1.msra.mxu0 0.0
        %6099 = vmatprep.subr.mxu0 0.0
        %6100 = vmatpush1.msra.mxu0 0.0
        %6101 = vmatprep.subr.mxu0 0.0
        %6102 = vmatpush1.msra.mxu0 0.0
        %6103 = vmatprep.subr.mxu0 0.0
        %6104 = vmatpush1.msra.mxu0 0.0
        %6105 = vmatprep.subr.mxu0 0.0
        %6106 = vmatpush1.msra.mxu0 0.0
        %6107 = vmatprep.subr.mxu0 0.0
        %6108 = vmatpush1.msra.mxu0 0.0
        %6109 = vmatprep.subr.mxu0 0.0
        %6110 = vmatpush1.msra.mxu0 0.0
        %6111 = vmatprep.subr.mxu0 0.0
        %6112 = vmatpush1.msra.mxu0 0.0
        %6113 = vmatprep.subr.mxu0 0.0
        %6114 = vmatpush1.msra.mxu0 0.0
        %6115 = vmatprep.subr.mxu0 0.0
        %6116 = vmatpush1.msra.mxu0 0.0
        %6117 = vmatprep.subr.mxu0 0.0
        %6118 = vmatpush1.msra.mxu0 0.0
        %6119 = vmatprep.subr.mxu0 0.0
        %6120 = vmatpush1.msra.mxu0 0.0
        %6121 = vmatprep.subr.mxu0 0.0
        %6122 = vmatpush1.msra.mxu0 0.0
        %6123 = vmatprep.subr.mxu0 0.0
        %6124 = vmatpush1.msra.mxu0 0.0
        %6125 = vmatprep.subr.mxu0 0.0
        %6126 = vmatpush1.msra.mxu0 0.0
        %6127 = vmatprep.subr.mxu0 0.0
        %6128 = vmatpush1.msra.mxu0 0.0
        %6129 = vmatprep.subr.mxu0 0.0
        %6130 = vmatpush1.msra.mxu0 0.0
        %6131 = vmatprep.subr.mxu0 0.0
        %6132 = vmatpush1.msra.mxu0 0.0
        %6133 = vmatprep.subr.mxu0 0.0
        %6134 = vmatpush1.msra.mxu0 0.0
        %6135 = vmatprep.subr.mxu0 0.0
        %6136 = vmatpush1.msra.mxu0 0.0
        %6137 = vmatprep.subr.mxu0 0.0
        %6138 = vmatpush1.msra.mxu0 0.0
        %6139 = vmatprep.subr.mxu0 0.0
        %6140 = vmatpush1.msra.mxu0 0.0
        %6141 = vmatprep.subr.mxu0 0.0
        %6142 = vmatpush1.msra.mxu0 0.0
        %6143 = vmatprep.subr.mxu0 0.0
        %6144 = vmatpush1.msra.mxu0 0.0
        %6145 = vmatprep.subr.mxu0 0.0
        %6146 = vmatpush1.msra.mxu0 0.0
        %6147 = vmatprep.subr.mxu0 0.0
        %6148 = vmatpush1.msra.mxu0 0.0
        %6149 = vmatprep.subr.mxu0 0.0
        %6150 = vmatpush1.msra.mxu0 0.0
        %6151 = vmatprep.subr.mxu0 0.0
        %6152 = vmatpush1.msra.mxu0 0.0
        %6153 = vmatprep.mubr.f32.mxu0 0.0
        %6154 = vmatmul.mubr.f32.gmra.mrb[0].mxu0 %v6042
        %v6155 = vpop.f32.mrb[0].mxu0
        %v6156 = vadd.f32 0.0, %v6155
        %v6157 = vpop.f32.mrb[0].mxu0
        %6158 = vmatprep.mubr.f32.mxu0 0.0
        %6159 = vmatmul.mubr.f32.gmra.mrb[0].mxu0 %v6045
        %v6160 = vpop.f32.mrb[0].mxu0
        %v6161 = vadd.f32 0.0, %v6160
        %v6162 = vpop.f32.mrb[0].mxu0
        %6163 = vmatprep.mubr.f32.mxu0 0.0
        %6164 = vmatmul.mubr.f32.gmra.mrb[0].mxu0 %v6048
        %v6165 = vpop.f32.mrb[0].mxu0
        %v6166 = vadd.f32 0.0, %v6165
        %v6167 = vpop.f32.mrb[0].mxu0
        %6168 = vmatprep.mubr.f32.mxu0 0.0
        %6169 = vmatmul.mubr.f32.gmra.mrb[0].mxu0 %v6051
        %v6170 = vpop.f32.mrb[0].mxu0
        %v6171 = vadd.f32 0.0, %v6170
        %v6172 = vpop.f32.mrb[0].mxu0
        %6173 = vmatprep.mubr.f32.mxu0 0.0
        %6174 = vmatmul.mubr.f32.gmra.mrb[0].mxu0 %v6054
        %v6175 = vpop.f32.mrb[0].mxu0
        %v6176 = vadd.f32 0.0, %v6175
        %v6177 = vpop.f32.mrb[0].mxu0
        %6178 = vmatprep.mubr.f32.mxu0 0.0
        %6179 = vmatmul.mubr.f32.gmra.mrb[0].mxu0 %v6057
        %v6180 = vpop.f32.mrb[0].mxu0
        %v6181 = vadd.f32 0.0, %v6180
        %v6182 = vpop.f32.mrb[0].mxu0
        %6183 = vmatprep.mubr.f32.mxu0 0.0
        %6184 = vmatmul.mubr.f32.gmra.mrb[0].mxu0 %v6060
        %v6185 = vpop.f32.mrb[0].mxu0
        %v6186 = vadd.f32 0.0, %v6185
        %v6187 = vpop.f32.mrb[0].mxu0
        %6188 = vmatprep.mubr.f32.mxu0 0.0
        %6189 = vmatmul.mubr.f32.gmra.mrb[0].mxu0 %v6063
        %v6190 = vpop.f32.mrb[0].mxu0
        %v6191 = vadd.f32 0.0, %v6190
        %v6192 = vpop.f32.mrb[0].mxu0
        %6193 = vmatprep.mubr.f32.mxu0 0.0
        %6194 = vmatmul.mubr.f32.gmra.mrb[0].mxu0 %v6066
        %v6195 = vpop.f32.mrb[0].mxu0
        %v6196 = vadd.f32 0.0, %v6195
        %v6197 = vpop.f32.mrb[0].mxu0
        %6198 = vmatprep.mubr.f32.mxu0 0.0
        %6199 = vmatmul.mubr.f32.gmra.mrb[0].mxu0 %v6069
        %v6200 = vpop.f32.mrb[0].mxu0
        %v6201 = vadd.f32 0.0, %v6200
        %v6202 = vpop.f32.mrb[0].mxu0
        %6203 = vmatprep.mubr.f32.mxu0 0.0
        %6204 = vmatmul.mubr.f32.gmra.mrb[0].mxu0 %v6072
        %v6205 = vpop.f32.mrb[0].mxu0
        %v6206 = vadd.f32 0.0, %v6205
        %v6207 = vpop.f32.mrb[0].mxu0
        %6208 = vmatprep.mubr.f32.mxu0 0.0
        %6209 = vmatmul.mubr.f32.gmra.mrb[0].mxu0 %v6075
        %v6210 = vpop.f32.mrb[0].mxu0
        %v6211 = vadd.f32 0.0, %v6210
        %v6212 = vpop.f32.mrb[0].mxu0
        %6213 = vmatprep.mubr.f32.mxu0 0.0
        %6214 = vmatmul.mubr.f32.gmra.mrb[0].mxu0 %v6078
        %v6215 = vpop.f32.mrb[0].mxu0
        %v6216 = vadd.f32 0.0, %v6215
        %v6217 = vpop.f32.mrb[0].mxu0
        %6218 = vmatprep.mubr.f32.mxu0 0.0
        %6219 = vmatmul.mubr.f32.gmra.mrb[0].mxu0 %v6081
        %v6220 = vpop.f32.mrb[0].mxu0
        %v6221 = vadd.f32 0.0, %v6220
        %v6222 = vpop.f32.mrb[0].mxu0
        %6223 = vmatprep.mubr.f32.mxu0 0.0
        %6224 = vmatmul.mubr.f32.gmra.mrb[0].mxu0 %v6084
        %v6225 = vpop.f32.mrb[0].mxu0
        %v6226 = vadd.f32 0.0, %v6225
        %v6227 = vpop.f32.mrb[0].mxu0
        %6228 = vmatprep.mubr.f32.mxu0 0.0
        %6229 = vmatmul.mubr.f32.gmra.mrb[0].mxu0 %v6087
        %v6230 = vpop.f32.mrb[0].mxu0
        %v6231 = vadd.f32 0.0, %v6230
        %v6232 = vpop.f32.mrb[0].mxu0
        %6233 = vdwg.mxu0
        %v6235 = vsel %vm625, %v5020, 0
        %v6238 = vsel %vm625, %v5021, 0
        %v6241 = vsel %vm625, %v5022, 0
        %v6244 = vsel %vm625, %v5023, 0
        %v6247 = vsel %vm625, %v5024, 0
        %v6250 = vsel %vm625, %v5025, 0
        %v6253 = vsel %vm625, %v5026, 0
        %v6256 = vsel %vm625, %v5027, 0
        %v6259 = vsel %vm625, %v5028, 0
        %v6262 = vsel %vm625, %v5029, 0
        %v6265 = vsel %vm625, %v5030, 0
        %v6268 = vsel %vm625, %v5031, 0
        %v6271 = vsel %vm625, %v5032, 0
        %v6274 = vsel %vm625, %v5033, 0
        %v6277 = vsel %vm625, %v5034, 0
        %v6280 = vsel %vm625, %v5035, 0
        %6282 = vmatprep.subr.mxu0 0.0
        %6283 = vmatpush1.msra.mxu0 %v5074
        %6284 = vmatprep.subr.mxu0 0.0
        %6285 = vmatpush1.msra.mxu0 0.0
        %6286 = vmatprep.subr.mxu0 0.0
        %6287 = vmatpush1.msra.mxu0 0.0
        %6288 = vmatprep.subr.mxu0 0.0
        %6289 = vmatpush1.msra.mxu0 0.0
        %6290 = vmatprep.subr.mxu0 0.0
        %6291 = vmatpush1.msra.mxu0 0.0
        %6292 = vmatprep.subr.mxu0 0.0
        %6293 = vmatpush1.msra.mxu0 0.0
        %6294 = vmatprep.subr.mxu0 0.0
        %6295 = vmatpush1.msra.mxu0 0.0
        %6296 = vmatprep.subr.mxu0 0.0
        %6297 = vmatpush1.msra.mxu0 0.0
        %6298 = vmatprep.subr.mxu0 0.0
        %6299 = vmatpush1.msra.mxu0 0.0
        %6300 = vmatprep.subr.mxu0 0.0
        %6301 = vmatpush1.msra.mxu0 0.0
        %6302 = vmatprep.subr.mxu0 0.0
        %6303 = vmatpush1.msra.mxu0 0.0
        %6304 = vmatprep.subr.mxu0 0.0
        %6305 = vmatpush1.msra.mxu0 0.0
        %6306 = vmatprep.subr.mxu0 0.0
        %6307 = vmatpush1.msra.mxu0 0.0
        %6308 = vmatprep.subr.mxu0 0.0
        %6309 = vmatpush1.msra.mxu0 0.0
        %6310 = vmatprep.subr.mxu0 0.0
        %6311 = vmatpush1.msra.mxu0 0.0
        %6312 = vmatprep.subr.mxu0 0.0
        %6313 = vmatpush1.msra.mxu0 0.0
        %6314 = vmatprep.subr.mxu0 0.0
        %6315 = vmatpush1.msra.mxu0 0.0
        %6316 = vmatprep.subr.mxu0 0.0
        %6317 = vmatpush1.msra.mxu0 0.0
        %6318 = vmatprep.subr.mxu0 0.0
        %6319 = vmatpush1.msra.mxu0 0.0
        %6320 = vmatprep.subr.mxu0 0.0
        %6321 = vmatpush1.msra.mxu0 0.0
        %6322 = vmatprep.subr.mxu0 0.0
        %6323 = vmatpush1.msra.mxu0 0.0
        %6324 = vmatprep.subr.mxu0 0.0
        %6325 = vmatpush1.msra.mxu0 0.0
        %6326 = vmatprep.subr.mxu0 0.0
        %6327 = vmatpush1.msra.mxu0 0.0
        %6328 = vmatprep.subr.mxu0 0.0
        %6329 = vmatpush1.msra.mxu0 0.0
        %6330 = vmatprep.subr.mxu0 0.0
        %6331 = vmatpush1.msra.mxu0 0.0
        %6332 = vmatprep.subr.mxu0 0.0
        %6333 = vmatpush1.msra.mxu0 0.0
        %6334 = vmatprep.subr.mxu0 0.0
        %6335 = vmatpush1.msra.mxu0 0.0
        %6336 = vmatprep.subr.mxu0 0.0
        %6337 = vmatpush1.msra.mxu0 0.0
        %6338 = vmatprep.subr.mxu0 0.0
        %6339 = vmatpush1.msra.mxu0 0.0
        %6340 = vmatprep.subr.mxu0 0.0
        %6341 = vmatpush1.msra.mxu0 0.0
        %6342 = vmatprep.subr.mxu0 0.0
        %6343 = vmatpush1.msra.mxu0 0.0
        %6344 = vmatprep.subr.mxu0 0.0
        %6345 = vmatpush1.msra.mxu0 0.0
        %6346 = vmatprep.mubr.f32.mxu0 0.0
        %6347 = vmatmul.mubr.f32.gmra.mrb[0].mxu0 %v6235
        %v6348 = vpop.f32.mrb[0].mxu0
        %v6349 = vadd.f32 0.0, %v6348
        %v6350 = vpop.f32.mrb[0].mxu0
        %6351 = vmatprep.mubr.f32.mxu0 0.0
        %6352 = vmatmul.mubr.f32.gmra.mrb[0].mxu0 %v6238
        %v6353 = vpop.f32.mrb[0].mxu0
        %v6354 = vadd.f32 0.0, %v6353
        %v6355 = vpop.f32.mrb[0].mxu0
        %6356 = vmatprep.mubr.f32.mxu0 0.0
        %6357 = vmatmul.mubr.f32.gmra.mrb[0].mxu0 %v6241
        %v6358 = vpop.f32.mrb[0].mxu0
        %v6359 = vadd.f32 0.0, %v6358
        %v6360 = vpop.f32.mrb[0].mxu0
        %6361 = vmatprep.mubr.f32.mxu0 0.0
        %6362 = vmatmul.mubr.f32.gmra.mrb[0].mxu0 %v6244
        %v6363 = vpop.f32.mrb[0].mxu0
        %v6364 = vadd.f32 0.0, %v6363
        %v6365 = vpop.f32.mrb[0].mxu0
        %6366 = vmatprep.mubr.f32.mxu0 0.0
        %6367 = vmatmul.mubr.f32.gmra.mrb[0].mxu0 %v6247
        %v6368 = vpop.f32.mrb[0].mxu0
        %v6369 = vadd.f32 0.0, %v6368
        %v6370 = vpop.f32.mrb[0].mxu0
        %6371 = vmatprep.mubr.f32.mxu0 0.0
        %6372 = vmatmul.mubr.f32.gmra.mrb[0].mxu0 %v6250
        %v6373 = vpop.f32.mrb[0].mxu0
        %v6374 = vadd.f32 0.0, %v6373
        %v6375 = vpop.f32.mrb[0].mxu0
        %6376 = vmatprep.mubr.f32.mxu0 0.0
        %6377 = vmatmul.mubr.f32.gmra.mrb[0].mxu0 %v6253
        %v6378 = vpop.f32.mrb[0].mxu0
        %v6379 = vadd.f32 0.0, %v6378
        %v6380 = vpop.f32.mrb[0].mxu0
        %6381 = vmatprep.mubr.f32.mxu0 0.0
        %6382 = vmatmul.mubr.f32.gmra.mrb[0].mxu0 %v6256
        %v6383 = vpop.f32.mrb[0].mxu0
        %v6384 = vadd.f32 0.0, %v6383
        %v6385 = vpop.f32.mrb[0].mxu0
        %6386 = vmatprep.mubr.f32.mxu0 0.0
        %6387 = vmatmul.mubr.f32.gmra.mrb[0].mxu0 %v6259
        %v6388 = vpop.f32.mrb[0].mxu0
        %v6389 = vadd.f32 0.0, %v6388
        %v6390 = vpop.f32.mrb[0].mxu0
        %6391 = vmatprep.mubr.f32.mxu0 0.0
        %6392 = vmatmul.mubr.f32.gmra.mrb[0].mxu0 %v6262
        %v6393 = vpop.f32.mrb[0].mxu0
        %v6394 = vadd.f32 0.0, %v6393
        %v6395 = vpop.f32.mrb[0].mxu0
        %6396 = vmatprep.mubr.f32.mxu0 0.0
        %6397 = vmatmul.mubr.f32.gmra.mrb[0].mxu0 %v6265
        %v6398 = vpop.f32.mrb[0].mxu0
        %v6399 = vadd.f32 0.0, %v6398
        %v6400 = vpop.f32.mrb[0].mxu0
        %6401 = vmatprep.mubr.f32.mxu0 0.0
        %6402 = vmatmul.mubr.f32.gmra.mrb[0].mxu0 %v6268
        %v6403 = vpop.f32.mrb[0].mxu0
        %v6404 = vadd.f32 0.0, %v6403
        %v6405 = vpop.f32.mrb[0].mxu0
        %6406 = vmatprep.mubr.f32.mxu0 0.0
        %6407 = vmatmul.mubr.f32.gmra.mrb[0].mxu0 %v6271
        %v6408 = vpop.f32.mrb[0].mxu0
        %v6409 = vadd.f32 0.0, %v6408
        %v6410 = vpop.f32.mrb[0].mxu0
        %6411 = vmatprep.mubr.f32.mxu0 0.0
        %6412 = vmatmul.mubr.f32.gmra.mrb[0].mxu0 %v6274
        %v6413 = vpop.f32.mrb[0].mxu0
        %v6414 = vadd.f32 0.0, %v6413
        %v6415 = vpop.f32.mrb[0].mxu0
        %6416 = vmatprep.mubr.f32.mxu0 0.0
        %6417 = vmatmul.mubr.f32.gmra.mrb[0].mxu0 %v6277
        %v6418 = vpop.f32.mrb[0].mxu0
        %v6419 = vadd.f32 0.0, %v6418
        %v6420 = vpop.f32.mrb[0].mxu0
        %6421 = vmatprep.mubr.f32.mxu0 0.0
        %6422 = vmatmul.mubr.f32.gmra.mrb[0].mxu0 %v6280
        %v6423 = vpop.f32.mrb[0].mxu0
        %v6424 = vadd.f32 0.0, %v6423
        %v6425 = vpop.f32.mrb[0].mxu0
        %6426 = vdwg.mxu0
        %v6428 = vsel %vm625, %v5052, 0
        %v6431 = vsel %vm625, %v5053, 0
        %v6434 = vsel %vm625, %v5054, 0
        %v6437 = vsel %vm625, %v5055, 0
        %v6440 = vsel %vm625, %v5056, 0
        %v6443 = vsel %vm625, %v5057, 0
        %v6446 = vsel %vm625, %v5058, 0
        %v6449 = vsel %vm625, %v5059, 0
        %v6452 = vsel %vm625, %v5060, 0
        %v6455 = vsel %vm625, %v5061, 0
        %v6458 = vsel %vm625, %v5062, 0
        %v6461 = vsel %vm625, %v5063, 0
        %v6464 = vsel %vm625, %v5064, 0
        %v6467 = vsel %vm625, %v5065, 0
        %v6470 = vsel %vm625, %v5066, 0
        %v6473 = vsel %vm625, %v5067, 0
        %6475 = vmatprep.subr.mxu0 0.0
        %6476 = vmatpush1.msra.mxu0 %v5075
        %6477 = vmatprep.subr.mxu0 0.0
        %6478 = vmatpush1.msra.mxu0 0.0
        %6479 = vmatprep.subr.mxu0 0.0
        %6480 = vmatpush1.msra.mxu0 0.0
        %6481 = vmatprep.subr.mxu0 0.0
        %6482 = vmatpush1.msra.mxu0 0.0
        %6483 = vmatprep.subr.mxu0 0.0
        %6484 = vmatpush1.msra.mxu0 0.0
        %6485 = vmatprep.subr.mxu0 0.0
        %6486 = vmatpush1.msra.mxu0 0.0
        %6487 = vmatprep.subr.mxu0 0.0
        %6488 = vmatpush1.msra.mxu0 0.0
        %6489 = vmatprep.subr.mxu0 0.0
        %6490 = vmatpush1.msra.mxu0 0.0
        %6491 = vmatprep.subr.mxu0 0.0
        %6492 = vmatpush1.msra.mxu0 0.0
        %6493 = vmatprep.subr.mxu0 0.0
        %6494 = vmatpush1.msra.mxu0 0.0
        %6495 = vmatprep.subr.mxu0 0.0
        %6496 = vmatpush1.msra.mxu0 0.0
        %6497 = vmatprep.subr.mxu0 0.0
        %6498 = vmatpush1.msra.mxu0 0.0
        %6499 = vmatprep.subr.mxu0 0.0
        %6500 = vmatpush1.msra.mxu0 0.0
        %6501 = vmatprep.subr.mxu0 0.0
        %6502 = vmatpush1.msra.mxu0 0.0
        %6503 = vmatprep.subr.mxu0 0.0
        %6504 = vmatpush1.msra.mxu0 0.0
        %6505 = vmatprep.subr.mxu0 0.0
        %6506 = vmatpush1.msra.mxu0 0.0
        %6507 = vmatprep.subr.mxu0 0.0
        %6508 = vmatpush1.msra.mxu0 0.0
        %6509 = vmatprep.subr.mxu0 0.0
        %6510 = vmatpush1.msra.mxu0 0.0
        %6511 = vmatprep.subr.mxu0 0.0
        %6512 = vmatpush1.msra.mxu0 0.0
        %6513 = vmatprep.subr.mxu0 0.0
        %6514 = vmatpush1.msra.mxu0 0.0
        %6515 = vmatprep.subr.mxu0 0.0
        %6516 = vmatpush1.msra.mxu0 0.0
        %6517 = vmatprep.subr.mxu0 0.0
        %6518 = vmatpush1.msra.mxu0 0.0
        %6519 = vmatprep.subr.mxu0 0.0
        %6520 = vmatpush1.msra.mxu0 0.0
        %6521 = vmatprep.subr.mxu0 0.0
        %6522 = vmatpush1.msra.mxu0 0.0
        %6523 = vmatprep.subr.mxu0 0.0
        %6524 = vmatpush1.msra.mxu0 0.0
        %6525 = vmatprep.subr.mxu0 0.0
        %6526 = vmatpush1.msra.mxu0 0.0
        %6527 = vmatprep.subr.mxu0 0.0
        %6528 = vmatpush1.msra.mxu0 0.0
        %6529 = vmatprep.subr.mxu0 0.0
        %6530 = vmatpush1.msra.mxu0 0.0
        %6531 = vmatprep.subr.mxu0 0.0
        %6532 = vmatpush1.msra.mxu0 0.0
        %6533 = vmatprep.subr.mxu0 0.0
        %6534 = vmatpush1.msra.mxu0 0.0
        %6535 = vmatprep.subr.mxu0 0.0
        %6536 = vmatpush1.msra.mxu0 0.0
        %6537 = vmatprep.subr.mxu0 0.0
        %6538 = vmatpush1.msra.mxu0 0.0
        %6539 = vmatprep.mubr.f32.mxu0 0.0
        %6540 = vmatmul.mubr.f32.gmra.mrb[0].mxu0 %v6428
        %v6541 = vpop.f32.mrb[0].mxu0
        %v6542 = vadd.f32 0.0, %v6541
        %v6543 = vpop.f32.mrb[0].mxu0
        %6544 = vmatprep.mubr.f32.mxu0 0.0
        %6545 = vmatmul.mubr.f32.gmra.mrb[0].mxu0 %v6431
        %v6546 = vpop.f32.mrb[0].mxu0
        %v6547 = vadd.f32 0.0, %v6546
        %v6548 = vpop.f32.mrb[0].mxu0
        %6549 = vmatprep.mubr.f32.mxu0 0.0
        %6550 = vmatmul.mubr.f32.gmra.mrb[0].mxu0 %v6434
        %v6551 = vpop.f32.mrb[0].mxu0
        %v6552 = vadd.f32 0.0, %v6551
        %v6553 = vpop.f32.mrb[0].mxu0
        %6554 = vmatprep.mubr.f32.mxu0 0.0
        %6555 = vmatmul.mubr.f32.gmra.mrb[0].mxu0 %v6437
        %v6556 = vpop.f32.mrb[0].mxu0
        %v6557 = vadd.f32 0.0, %v6556
        %v6558 = vpop.f32.mrb[0].mxu0
        %6559 = vmatprep.mubr.f32.mxu0 0.0
        %6560 = vmatmul.mubr.f32.gmra.mrb[0].mxu0 %v6440
        %v6561 = vpop.f32.mrb[0].mxu0
        %v6562 = vadd.f32 0.0, %v6561
        %v6563 = vpop.f32.mrb[0].mxu0
        %6564 = vmatprep.mubr.f32.mxu0 0.0
        %6565 = vmatmul.mubr.f32.gmra.mrb[0].mxu0 %v6443
        %v6566 = vpop.f32.mrb[0].mxu0
        %v6567 = vadd.f32 0.0, %v6566
        %v6568 = vpop.f32.mrb[0].mxu0
        %6569 = vmatprep.mubr.f32.mxu0 0.0
        %6570 = vmatmul.mubr.f32.gmra.mrb[0].mxu0 %v6446
        %v6571 = vpop.f32.mrb[0].mxu0
        %v6572 = vadd.f32 0.0, %v6571
        %v6573 = vpop.f32.mrb[0].mxu0
        %6574 = vmatprep.mubr.f32.mxu0 0.0
        %6575 = vmatmul.mubr.f32.gmra.mrb[0].mxu0 %v6449
        %v6576 = vpop.f32.mrb[0].mxu0
        %v6577 = vadd.f32 0.0, %v6576
        %v6578 = vpop.f32.mrb[0].mxu0
        %6579 = vmatprep.mubr.f32.mxu0 0.0
        %6580 = vmatmul.mubr.f32.gmra.mrb[0].mxu0 %v6452
        %v6581 = vpop.f32.mrb[0].mxu0
        %v6582 = vadd.f32 0.0, %v6581
        %v6583 = vpop.f32.mrb[0].mxu0
        %6584 = vmatprep.mubr.f32.mxu0 0.0
        %6585 = vmatmul.mubr.f32.gmra.mrb[0].mxu0 %v6455
        %v6586 = vpop.f32.mrb[0].mxu0
        %v6587 = vadd.f32 0.0, %v6586
        %v6588 = vpop.f32.mrb[0].mxu0
        %6589 = vmatprep.mubr.f32.mxu0 0.0
        %6590 = vmatmul.mubr.f32.gmra.mrb[0].mxu0 %v6458
        %v6591 = vpop.f32.mrb[0].mxu0
        %v6592 = vadd.f32 0.0, %v6591
        %v6593 = vpop.f32.mrb[0].mxu0
        %6594 = vmatprep.mubr.f32.mxu0 0.0
        %6595 = vmatmul.mubr.f32.gmra.mrb[0].mxu0 %v6461
        %v6596 = vpop.f32.mrb[0].mxu0
        %v6597 = vadd.f32 0.0, %v6596
        %v6598 = vpop.f32.mrb[0].mxu0
        %6599 = vmatprep.mubr.f32.mxu0 0.0
        %6600 = vmatmul.mubr.f32.gmra.mrb[0].mxu0 %v6464
        %v6601 = vpop.f32.mrb[0].mxu0
        %v6602 = vadd.f32 0.0, %v6601
        %v6603 = vpop.f32.mrb[0].mxu0
        %6604 = vmatprep.mubr.f32.mxu0 0.0
        %6605 = vmatmul.mubr.f32.gmra.mrb[0].mxu0 %v6467
        %v6606 = vpop.f32.mrb[0].mxu0
        %v6607 = vadd.f32 0.0, %v6606
        %v6608 = vpop.f32.mrb[0].mxu0
        %6609 = vmatprep.mubr.f32.mxu0 0.0
        %6610 = vmatmul.mubr.f32.gmra.mrb[0].mxu0 %v6470
        %v6611 = vpop.f32.mrb[0].mxu0
        %v6612 = vadd.f32 0.0, %v6611
        %v6613 = vpop.f32.mrb[0].mxu0
        %6614 = vmatprep.mubr.f32.mxu0 0.0
        %6615 = vmatmul.mubr.f32.gmra.mrb[0].mxu0 %v6473
        %v6616 = vpop.f32.mrb[0].mxu0
        %v6617 = vadd.f32 0.0, %v6616
        %v6618 = vpop.f32.mrb[0].mxu0
        %6619 = vdwg.mxu0
        %v6620 = vsel %vm2171, %v5191, -inf
        %v6621 = vsel %vm2171, %v5196, -inf
        %v6622 = vsel %vm2171, %v5201, -inf
        %v6623 = vsel %vm2171, %v5206, -inf
        %v6624 = vsel %vm2171, %v5211, -inf
        %v6625 = vsel %vm2171, %v5216, -inf
        %v6626 = vsel %vm2171, %v5221, -inf
        %v6627 = vsel %vm2171, %v5226, -inf
        %v6628 = vsel %vm2171, %v5231, -inf
        %v6629 = vsel %vm2171, %v5236, -inf
        %v6630 = vsel %vm2171, %v5241, -inf
        %v6631 = vsel %vm2171, %v5246, -inf
        %v6632 = vsel %vm2171, %v5251, -inf
        %v6633 = vsel %vm2171, %v5256, -inf
        %v6634 = vsel %vm2171, %v5261, -inf
        %v6635 = vsel %vm2171, %v5266, -inf
        %v6636 = vsel %vm2171, %v5384, -inf
        %v6637 = vsel %vm2171, %v5389, -inf
        %v6638 = vsel %vm2171, %v5394, -inf
        %v6639 = vsel %vm2171, %v5399, -inf
        %v6640 = vsel %vm2171, %v5404, -inf
        %v6641 = vsel %vm2171, %v5409, -inf
        %v6642 = vsel %vm2171, %v5414, -inf
        %v6643 = vsel %vm2171, %v5419, -inf
        %v6644 = vsel %vm2171, %v5424, -inf
        %v6645 = vsel %vm2171, %v5429, -inf
        %v6646 = vsel %vm2171, %v5434, -inf
        %v6647 = vsel %vm2171, %v5439, -inf
        %v6648 = vsel %vm2171, %v5444, -inf
        %v6649 = vsel %vm2171, %v5449, -inf
        %v6650 = vsel %vm2171, %v5454, -inf
        %v6651 = vsel %vm2171, %v5459, -inf
        %v6652 = vsel %vm2171, %v5577, -inf
        %v6653 = vsel %vm2171, %v5582, -inf
        %v6654 = vsel %vm2171, %v5587, -inf
        %v6655 = vsel %vm2171, %v5592, -inf
        %v6656 = vsel %vm2171, %v5597, -inf
        %v6657 = vsel %vm2171, %v5602, -inf
        %v6658 = vsel %vm2171, %v5607, -inf
        %v6659 = vsel %vm2171, %v5612, -inf
        %v6660 = vsel %vm2171, %v5617, -inf
        %v6661 = vsel %vm2171, %v5622, -inf
        %v6662 = vsel %vm2171, %v5627, -inf
        %v6663 = vsel %vm2171, %v5632, -inf
        %v6664 = vsel %vm2171, %v5637, -inf
        %v6665 = vsel %vm2171, %v5642, -inf
        %v6666 = vsel %vm2171, %v5647, -inf
        %v6667 = vsel %vm2171, %v5652, -inf
        %v6668 = vsel %vm2171, %v5770, -inf
        %v6669 = vsel %vm2171, %v5775, -inf
        %v6670 = vsel %vm2171, %v5780, -inf
        %v6671 = vsel %vm2171, %v5785, -inf
        %v6672 = vsel %vm2171, %v5790, -inf
        %v6673 = vsel %vm2171, %v5795, -inf
        %v6674 = vsel %vm2171, %v5800, -inf
        %v6675 = vsel %vm2171, %v5805, -inf
        %v6676 = vsel %vm2171, %v5810, -inf
        %v6677 = vsel %vm2171, %v5815, -inf
        %v6678 = vsel %vm2171, %v5820, -inf
        %v6679 = vsel %vm2171, %v5825, -inf
        %v6680 = vsel %vm2171, %v5830, -inf
        %v6681 = vsel %vm2171, %v5835, -inf
        %v6682 = vsel %vm2171, %v5840, -inf
        %v6683 = vsel %vm2171, %v5845, -inf
        %v6684 = vsel %vm2171, %v5963, -inf
        %v6685 = vsel %vm2171, %v5968, -inf
        %v6686 = vsel %vm2171, %v5973, -inf
        %v6687 = vsel %vm2171, %v5978, -inf
        %v6688 = vsel %vm2171, %v5983, -inf
        %v6689 = vsel %vm2171, %v5988, -inf
        %v6690 = vsel %vm2171, %v5993, -inf
        %v6691 = vsel %vm2171, %v5998, -inf
        %v6692 = vsel %vm2171, %v6003, -inf
        %v6693 = vsel %vm2171, %v6008, -inf
        %v6694 = vsel %vm2171, %v6013, -inf
        %v6695 = vsel %vm2171, %v6018, -inf
        %v6696 = vsel %vm2171, %v6023, -inf
        %v6697 = vsel %vm2171, %v6028, -inf
        %v6698 = vsel %vm2171, %v6033, -inf
        %v6699 = vsel %vm2171, %v6038, -inf
        %v6700 = vsel %vm2171, %v6156, -inf
        %v6701 = vsel %vm2171, %v6161, -inf
        %v6702 = vsel %vm2171, %v6166, -inf
        %v6703 = vsel %vm2171, %v6171, -inf
        %v6704 = vsel %vm2171, %v6176, -inf
        %v6705 = vsel %vm2171, %v6181, -inf
        %v6706 = vsel %vm2171, %v6186, -inf
        %v6707 = vsel %vm2171, %v6191, -inf
        %v6708 = vsel %vm2171, %v6196, -inf
        %v6709 = vsel %vm2171, %v6201, -inf
        %v6710 = vsel %vm2171, %v6206, -inf
        %v6711 = vsel %vm2171, %v6211, -inf
        %v6712 = vsel %vm2171, %v6216, -inf
        %v6713 = vsel %vm2171, %v6221, -inf
        %v6714 = vsel %vm2171, %v6226, -inf
        %v6715 = vsel %vm2171, %v6231, -inf
        %v6716 = vsel %vm2171, %v6349, -inf
        %v6717 = vsel %vm2171, %v6354, -inf
        %v6718 = vsel %vm2171, %v6359, -inf
        %v6719 = vsel %vm2171, %v6364, -inf
        %v6720 = vsel %vm2171, %v6369, -inf
        %v6721 = vsel %vm2171, %v6374, -inf
        %v6722 = vsel %vm2171, %v6379, -inf
        %v6723 = vsel %vm2171, %v6384, -inf
        %v6724 = vsel %vm2171, %v6389, -inf
        %v6725 = vsel %vm2171, %v6394, -inf
        %v6726 = vsel %vm2171, %v6399, -inf
        %v6727 = vsel %vm2171, %v6404, -inf
        %v6728 = vsel %vm2171, %v6409, -inf
        %v6729 = vsel %vm2171, %v6414, -inf
        %v6730 = vsel %vm2171, %v6419, -inf
        %v6731 = vsel %vm2171, %v6424, -inf
        %v6732 = vsel %vm2171, %v6542, -inf
        %v6733 = vsel %vm2171, %v6547, -inf
        %v6734 = vsel %vm2171, %v6552, -inf
        %v6735 = vsel %vm2171, %v6557, -inf
        %v6736 = vsel %vm2171, %v6562, -inf
        %v6737 = vsel %vm2171, %v6567, -inf
        %v6738 = vsel %vm2171, %v6572, -inf
        %v6739 = vsel %vm2171, %v6577, -inf
        %v6740 = vsel %vm2171, %v6582, -inf
        %v6741 = vsel %vm2171, %v6587, -inf
        %v6742 = vsel %vm2171, %v6592, -inf
        %v6743 = vsel %vm2171, %v6597, -inf
        %v6744 = vsel %vm2171, %v6602, -inf
        %v6745 = vsel %vm2171, %v6607, -inf
        %v6746 = vsel %vm2171, %v6612, -inf
        %v6747 = vsel %vm2171, %v6617, -inf
        %6748 = vmax.xlane.f32.xlu0 %v6620
        %v6749 = vpop.xlane.xlu0 %6748
        %6750 = vmax.xlane.f32.xlu0 %v6621
        %v6751 = vpop.xlane.xlu0 %6750
        %6752 = vmax.xlane.f32.xlu0 %v6622
        %v6753 = vpop.xlane.xlu0 %6752
        %6754 = vmax.xlane.f32.xlu0 %v6623
        %v6755 = vpop.xlane.xlu0 %6754
        %6756 = vmax.xlane.f32.xlu0 %v6624
        %v6757 = vpop.xlane.xlu0 %6756
        %6758 = vmax.xlane.f32.xlu0 %v6625
        %v6759 = vpop.xlane.xlu0 %6758
        %6760 = vmax.xlane.f32.xlu0 %v6626
        %v6761 = vpop.xlane.xlu0 %6760
        %6762 = vmax.xlane.f32.xlu0 %v6627
        %v6763 = vpop.xlane.xlu0 %6762
        %6764 = vmax.xlane.f32.xlu0 %v6628
        %v6765 = vpop.xlane.xlu0 %6764
        %6766 = vmax.xlane.f32.xlu0 %v6629
        %v6767 = vpop.xlane.xlu0 %6766
        %6768 = vmax.xlane.f32.xlu0 %v6630
        %v6769 = vpop.xlane.xlu0 %6768
        %6770 = vmax.xlane.f32.xlu0 %v6631
        %v6771 = vpop.xlane.xlu0 %6770
        %6772 = vmax.xlane.f32.xlu0 %v6632
        %v6773 = vpop.xlane.xlu0 %6772
        %6774 = vmax.xlane.f32.xlu0 %v6633
        %v6775 = vpop.xlane.xlu0 %6774
        %6776 = vmax.xlane.f32.xlu0 %v6634
        %v6777 = vpop.xlane.xlu0 %6776
        %6778 = vmax.xlane.f32.xlu0 %v6635
        %v6779 = vpop.xlane.xlu0 %6778
        %6780 = vmax.xlane.f32.xlu0 %v6636
        %v6781 = vpop.xlane.xlu0 %6780
        %6782 = vmax.xlane.f32.xlu0 %v6637
        %v6783 = vpop.xlane.xlu0 %6782
        %6784 = vmax.xlane.f32.xlu0 %v6638
        %v6785 = vpop.xlane.xlu0 %6784
        %6786 = vmax.xlane.f32.xlu0 %v6639
        %v6787 = vpop.xlane.xlu0 %6786
        %6788 = vmax.xlane.f32.xlu0 %v6640
        %v6789 = vpop.xlane.xlu0 %6788
        %6790 = vmax.xlane.f32.xlu0 %v6641
        %v6791 = vpop.xlane.xlu0 %6790
        %6792 = vmax.xlane.f32.xlu0 %v6642
        %v6793 = vpop.xlane.xlu0 %6792
        %6794 = vmax.xlane.f32.xlu0 %v6643
        %v6795 = vpop.xlane.xlu0 %6794
        %6796 = vmax.xlane.f32.xlu0 %v6644
        %v6797 = vpop.xlane.xlu0 %6796
        %6798 = vmax.xlane.f32.xlu0 %v6645
        %v6799 = vpop.xlane.xlu0 %6798
        %6800 = vmax.xlane.f32.xlu0 %v6646
        %v6801 = vpop.xlane.xlu0 %6800
        %6802 = vmax.xlane.f32.xlu0 %v6647
        %v6803 = vpop.xlane.xlu0 %6802
        %6804 = vmax.xlane.f32.xlu0 %v6648
        %v6805 = vpop.xlane.xlu0 %6804
        %6806 = vmax.xlane.f32.xlu0 %v6649
        %v6807 = vpop.xlane.xlu0 %6806
        %6808 = vmax.xlane.f32.xlu0 %v6650
        %v6809 = vpop.xlane.xlu0 %6808
        %6810 = vmax.xlane.f32.xlu0 %v6651
        %v6811 = vpop.xlane.xlu0 %6810
        %6812 = vmax.xlane.f32.xlu0 %v6652
        %v6813 = vpop.xlane.xlu0 %6812
        %6814 = vmax.xlane.f32.xlu0 %v6653
        %v6815 = vpop.xlane.xlu0 %6814
        %6816 = vmax.xlane.f32.xlu0 %v6654
        %v6817 = vpop.xlane.xlu0 %6816
        %6818 = vmax.xlane.f32.xlu0 %v6655
        %v6819 = vpop.xlane.xlu0 %6818
        %6820 = vmax.xlane.f32.xlu0 %v6656
        %v6821 = vpop.xlane.xlu0 %6820
        %6822 = vmax.xlane.f32.xlu0 %v6657
        %v6823 = vpop.xlane.xlu0 %6822
        %6824 = vmax.xlane.f32.xlu0 %v6658
        %v6825 = vpop.xlane.xlu0 %6824
        %6826 = vmax.xlane.f32.xlu0 %v6659
        %v6827 = vpop.xlane.xlu0 %6826
        %6828 = vmax.xlane.f32.xlu0 %v6660
        %v6829 = vpop.xlane.xlu0 %6828
        %6830 = vmax.xlane.f32.xlu0 %v6661
        %v6831 = vpop.xlane.xlu0 %6830
        %6832 = vmax.xlane.f32.xlu0 %v6662
        %v6833 = vpop.xlane.xlu0 %6832
        %6834 = vmax.xlane.f32.xlu0 %v6663
        %v6835 = vpop.xlane.xlu0 %6834
        %6836 = vmax.xlane.f32.xlu0 %v6664
        %v6837 = vpop.xlane.xlu0 %6836
        %6838 = vmax.xlane.f32.xlu0 %v6665
        %v6839 = vpop.xlane.xlu0 %6838
        %6840 = vmax.xlane.f32.xlu0 %v6666
        %v6841 = vpop.xlane.xlu0 %6840
        %6842 = vmax.xlane.f32.xlu0 %v6667
        %v6843 = vpop.xlane.xlu0 %6842
        %6844 = vmax.xlane.f32.xlu0 %v6668
        %v6845 = vpop.xlane.xlu0 %6844
        %6846 = vmax.xlane.f32.xlu0 %v6669
        %v6847 = vpop.xlane.xlu0 %6846
        %6848 = vmax.xlane.f32.xlu0 %v6670
        %v6849 = vpop.xlane.xlu0 %6848
        %6850 = vmax.xlane.f32.xlu0 %v6671
        %v6851 = vpop.xlane.xlu0 %6850
        %6852 = vmax.xlane.f32.xlu0 %v6672
        %v6853 = vpop.xlane.xlu0 %6852
        %6854 = vmax.xlane.f32.xlu0 %v6673
        %v6855 = vpop.xlane.xlu0 %6854
        %6856 = vmax.xlane.f32.xlu0 %v6674
        %v6857 = vpop.xlane.xlu0 %6856
        %6858 = vmax.xlane.f32.xlu0 %v6675
        %v6859 = vpop.xlane.xlu0 %6858
        %6860 = vmax.xlane.f32.xlu0 %v6676
        %v6861 = vpop.xlane.xlu0 %6860
        %6862 = vmax.xlane.f32.xlu0 %v6677
        %v6863 = vpop.xlane.xlu0 %6862
        %6864 = vmax.xlane.f32.xlu0 %v6678
        %v6865 = vpop.xlane.xlu0 %6864
        %6866 = vmax.xlane.f32.xlu0 %v6679
        %v6867 = vpop.xlane.xlu0 %6866
        %6868 = vmax.xlane.f32.xlu0 %v6680
        %v6869 = vpop.xlane.xlu0 %6868
        %6870 = vmax.xlane.f32.xlu0 %v6681
        %v6871 = vpop.xlane.xlu0 %6870
        %6872 = vmax.xlane.f32.xlu0 %v6682
        %v6873 = vpop.xlane.xlu0 %6872
        %6874 = vmax.xlane.f32.xlu0 %v6683
        %v6875 = vpop.xlane.xlu0 %6874
        %6876 = vmax.xlane.f32.xlu0 %v6684
        %v6877 = vpop.xlane.xlu0 %6876
        %6878 = vmax.xlane.f32.xlu0 %v6685
        %v6879 = vpop.xlane.xlu0 %6878
        %6880 = vmax.xlane.f32.xlu0 %v6686
        %v6881 = vpop.xlane.xlu0 %6880
        %6882 = vmax.xlane.f32.xlu0 %v6687
        %v6883 = vpop.xlane.xlu0 %6882
        %6884 = vmax.xlane.f32.xlu0 %v6688
        %v6885 = vpop.xlane.xlu0 %6884
        %6886 = vmax.xlane.f32.xlu0 %v6689
        %v6887 = vpop.xlane.xlu0 %6886
        %6888 = vmax.xlane.f32.xlu0 %v6690
        %v6889 = vpop.xlane.xlu0 %6888
        %6890 = vmax.xlane.f32.xlu0 %v6691
        %v6891 = vpop.xlane.xlu0 %6890
        %6892 = vmax.xlane.f32.xlu0 %v6692
        %v6893 = vpop.xlane.xlu0 %6892
        %6894 = vmax.xlane.f32.xlu0 %v6693
        %v6895 = vpop.xlane.xlu0 %6894
        %6896 = vmax.xlane.f32.xlu0 %v6694
        %v6897 = vpop.xlane.xlu0 %6896
        %6898 = vmax.xlane.f32.xlu0 %v6695
        %v6899 = vpop.xlane.xlu0 %6898
        %6900 = vmax.xlane.f32.xlu0 %v6696
        %v6901 = vpop.xlane.xlu0 %6900
        %6902 = vmax.xlane.f32.xlu0 %v6697
        %v6903 = vpop.xlane.xlu0 %6902
        %6904 = vmax.xlane.f32.xlu0 %v6698
        %v6905 = vpop.xlane.xlu0 %6904
        %6906 = vmax.xlane.f32.xlu0 %v6699
        %v6907 = vpop.xlane.xlu0 %6906
        %6908 = vmax.xlane.f32.xlu0 %v6700
        %v6909 = vpop.xlane.xlu0 %6908
        %6910 = vmax.xlane.f32.xlu0 %v6701
        %v6911 = vpop.xlane.xlu0 %6910
        %6912 = vmax.xlane.f32.xlu0 %v6702
        %v6913 = vpop.xlane.xlu0 %6912
        %6914 = vmax.xlane.f32.xlu0 %v6703
        %v6915 = vpop.xlane.xlu0 %6914
        %6916 = vmax.xlane.f32.xlu0 %v6704
        %v6917 = vpop.xlane.xlu0 %6916
        %6918 = vmax.xlane.f32.xlu0 %v6705
        %v6919 = vpop.xlane.xlu0 %6918
        %6920 = vmax.xlane.f32.xlu0 %v6706
        %v6921 = vpop.xlane.xlu0 %6920
        %6922 = vmax.xlane.f32.xlu0 %v6707
        %v6923 = vpop.xlane.xlu0 %6922
        %6924 = vmax.xlane.f32.xlu0 %v6708
        %v6925 = vpop.xlane.xlu0 %6924
        %6926 = vmax.xlane.f32.xlu0 %v6709
        %v6927 = vpop.xlane.xlu0 %6926
        %6928 = vmax.xlane.f32.xlu0 %v6710
        %v6929 = vpop.xlane.xlu0 %6928
        %6930 = vmax.xlane.f32.xlu0 %v6711
        %v6931 = vpop.xlane.xlu0 %6930
        %6932 = vmax.xlane.f32.xlu0 %v6712
        %v6933 = vpop.xlane.xlu0 %6932
        %6934 = vmax.xlane.f32.xlu0 %v6713
        %v6935 = vpop.xlane.xlu0 %6934
        %6936 = vmax.xlane.f32.xlu0 %v6714
        %v6937 = vpop.xlane.xlu0 %6936
        %6938 = vmax.xlane.f32.xlu0 %v6715
        %v6939 = vpop.xlane.xlu0 %6938
        %6940 = vmax.xlane.f32.xlu0 %v6716
        %v6941 = vpop.xlane.xlu0 %6940
        %6942 = vmax.xlane.f32.xlu0 %v6717
        %v6943 = vpop.xlane.xlu0 %6942
        %6944 = vmax.xlane.f32.xlu0 %v6718
        %v6945 = vpop.xlane.xlu0 %6944
        %6946 = vmax.xlane.f32.xlu0 %v6719
        %v6947 = vpop.xlane.xlu0 %6946
        %6948 = vmax.xlane.f32.xlu0 %v6720
        %v6949 = vpop.xlane.xlu0 %6948
        %6950 = vmax.xlane.f32.xlu0 %v6721
        %v6951 = vpop.xlane.xlu0 %6950
        %6952 = vmax.xlane.f32.xlu0 %v6722
        %v6953 = vpop.xlane.xlu0 %6952
        %6954 = vmax.xlane.f32.xlu0 %v6723
        %v6955 = vpop.xlane.xlu0 %6954
        %6956 = vmax.xlane.f32.xlu0 %v6724
        %v6957 = vpop.xlane.xlu0 %6956
        %6958 = vmax.xlane.f32.xlu0 %v6725
        %v6959 = vpop.xlane.xlu0 %6958
        %6960 = vmax.xlane.f32.xlu0 %v6726
        %v6961 = vpop.xlane.xlu0 %6960
        %6962 = vmax.xlane.f32.xlu0 %v6727
        %v6963 = vpop.xlane.xlu0 %6962
        %6964 = vmax.xlane.f32.xlu0 %v6728
        %v6965 = vpop.xlane.xlu0 %6964
        %6966 = vmax.xlane.f32.xlu0 %v6729
        %v6967 = vpop.xlane.xlu0 %6966
        %6968 = vmax.xlane.f32.xlu0 %v6730
        %v6969 = vpop.xlane.xlu0 %6968
        %6970 = vmax.xlane.f32.xlu0 %v6731
        %v6971 = vpop.xlane.xlu0 %6970
        %6972 = vmax.xlane.f32.xlu0 %v6732
        %v6973 = vpop.xlane.xlu0 %6972
        %6974 = vmax.xlane.f32.xlu0 %v6733
        %v6975 = vpop.xlane.xlu0 %6974
        %6976 = vmax.xlane.f32.xlu0 %v6734
        %v6977 = vpop.xlane.xlu0 %6976
        %6978 = vmax.xlane.f32.xlu0 %v6735
        %v6979 = vpop.xlane.xlu0 %6978
        %6980 = vmax.xlane.f32.xlu0 %v6736
        %v6981 = vpop.xlane.xlu0 %6980
        %6982 = vmax.xlane.f32.xlu0 %v6737
        %v6983 = vpop.xlane.xlu0 %6982
        %6984 = vmax.xlane.f32.xlu0 %v6738
        %v6985 = vpop.xlane.xlu0 %6984
        %6986 = vmax.xlane.f32.xlu0 %v6739
        %v6987 = vpop.xlane.xlu0 %6986
        %6988 = vmax.xlane.f32.xlu0 %v6740
        %v6989 = vpop.xlane.xlu0 %6988
        %6990 = vmax.xlane.f32.xlu0 %v6741
        %v6991 = vpop.xlane.xlu0 %6990
        %6992 = vmax.xlane.f32.xlu0 %v6742
        %v6993 = vpop.xlane.xlu0 %6992
        %6994 = vmax.xlane.f32.xlu0 %v6743
        %v6995 = vpop.xlane.xlu0 %6994
        %6996 = vmax.xlane.f32.xlu0 %v6744
        %v6997 = vpop.xlane.xlu0 %6996
        %6998 = vmax.xlane.f32.xlu0 %v6745
        %v6999 = vpop.xlane.xlu0 %6998
        %7000 = vmax.xlane.f32.xlu0 %v6746
        %v7001 = vpop.xlane.xlu0 %7000
        %7002 = vmax.xlane.f32.xlu0 %v6747
        %v7003 = vpop.xlane.xlu0 %7002
        %v7004 = vsub.f32 %v6620, %v6749
        %v7005 = vsub.f32 %v6621, %v6751
        %v7006 = vsub.f32 %v6622, %v6753
        %v7007 = vsub.f32 %v6623, %v6755
        %v7008 = vsub.f32 %v6624, %v6757
        %v7009 = vsub.f32 %v6625, %v6759
        %v7010 = vsub.f32 %v6626, %v6761
        %v7011 = vsub.f32 %v6627, %v6763
        %v7012 = vsub.f32 %v6628, %v6765
        %v7013 = vsub.f32 %v6629, %v6767
        %v7014 = vsub.f32 %v6630, %v6769
        %v7015 = vsub.f32 %v6631, %v6771
        %v7016 = vsub.f32 %v6632, %v6773
        %v7017 = vsub.f32 %v6633, %v6775
        %v7018 = vsub.f32 %v6634, %v6777
        %v7019 = vsub.f32 %v6635, %v6779
        %v7020 = vsub.f32 %v6636, %v6781
        %v7021 = vsub.f32 %v6637, %v6783
        %v7022 = vsub.f32 %v6638, %v6785
        %v7023 = vsub.f32 %v6639, %v6787
        %v7024 = vsub.f32 %v6640, %v6789
        %v7025 = vsub.f32 %v6641, %v6791
        %v7026 = vsub.f32 %v6642, %v6793
        %v7027 = vsub.f32 %v6643, %v6795
        %v7028 = vsub.f32 %v6644, %v6797
        %v7029 = vsub.f32 %v6645, %v6799
        %v7030 = vsub.f32 %v6646, %v6801
        %v7031 = vsub.f32 %v6647, %v6803
        %v7032 = vsub.f32 %v6648, %v6805
        %v7033 = vsub.f32 %v6649, %v6807
        %v7034 = vsub.f32 %v6650, %v6809
        %v7035 = vsub.f32 %v6651, %v6811
        %v7036 = vsub.f32 %v6652, %v6813
        %v7037 = vsub.f32 %v6653, %v6815
        %v7038 = vsub.f32 %v6654, %v6817
        %v7039 = vsub.f32 %v6655, %v6819
        %v7040 = vsub.f32 %v6656, %v6821
        %v7041 = vsub.f32 %v6657, %v6823
        %v7042 = vsub.f32 %v6658, %v6825
        %v7043 = vsub.f32 %v6659, %v6827
        %v7044 = vsub.f32 %v6660, %v6829
        %v7045 = vsub.f32 %v6661, %v6831
        %v7046 = vsub.f32 %v6662, %v6833
        %v7047 = vsub.f32 %v6663, %v6835
        %v7048 = vsub.f32 %v6664, %v6837
        %v7049 = vsub.f32 %v6665, %v6839
        %v7050 = vsub.f32 %v6666, %v6841
        %v7051 = vsub.f32 %v6667, %v6843
        %v7052 = vsub.f32 %v6668, %v6845
        %v7053 = vsub.f32 %v6669, %v6847
        %v7054 = vsub.f32 %v6670, %v6849
        %v7055 = vsub.f32 %v6671, %v6851
        %v7056 = vsub.f32 %v6672, %v6853
        %v7057 = vsub.f32 %v6673, %v6855
        %v7058 = vsub.f32 %v6674, %v6857
        %v7059 = vsub.f32 %v6675, %v6859
        %v7060 = vsub.f32 %v6676, %v6861
        %v7061 = vsub.f32 %v6677, %v6863
        %v7062 = vsub.f32 %v6678, %v6865
        %v7063 = vsub.f32 %v6679, %v6867
        %v7064 = vsub.f32 %v6680, %v6869
        %v7065 = vsub.f32 %v6681, %v6871
        %v7066 = vsub.f32 %v6682, %v6873
        %v7067 = vsub.f32 %v6683, %v6875
        %v7068 = vsub.f32 %v6684, %v6877
        %v7069 = vsub.f32 %v6685, %v6879
        %v7070 = vsub.f32 %v6686, %v6881
        %v7071 = vsub.f32 %v6687, %v6883
        %v7072 = vsub.f32 %v6688, %v6885
        %v7073 = vsub.f32 %v6689, %v6887
        %v7074 = vsub.f32 %v6690, %v6889
        %v7075 = vsub.f32 %v6691, %v6891
        %v7076 = vsub.f32 %v6692, %v6893
        %v7077 = vsub.f32 %v6693, %v6895
        %v7078 = vsub.f32 %v6694, %v6897
        %v7079 = vsub.f32 %v6695, %v6899
        %v7080 = vsub.f32 %v6696, %v6901
        %v7081 = vsub.f32 %v6697, %v6903
        %v7082 = vsub.f32 %v6698, %v6905
        %v7083 = vsub.f32 %v6699, %v6907
        %v7084 = vsub.f32 %v6700, %v6909
        %v7085 = vsub.f32 %v6701, %v6911
        %v7086 = vsub.f32 %v6702, %v6913
        %v7087 = vsub.f32 %v6703, %v6915
        %v7088 = vsub.f32 %v6704, %v6917
        %v7089 = vsub.f32 %v6705, %v6919
        %v7090 = vsub.f32 %v6706, %v6921
        %v7091 = vsub.f32 %v6707, %v6923
        %v7092 = vsub.f32 %v6708, %v6925
        %v7093 = vsub.f32 %v6709, %v6927
        %v7094 = vsub.f32 %v6710, %v6929
        %v7095 = vsub.f32 %v6711, %v6931
        %v7096 = vsub.f32 %v6712, %v6933
        %v7097 = vsub.f32 %v6713, %v6935
        %v7098 = vsub.f32 %v6714, %v6937
        %v7099 = vsub.f32 %v6715, %v6939
        %v7100 = vsub.f32 %v6716, %v6941
        %v7101 = vsub.f32 %v6717, %v6943
        %v7102 = vsub.f32 %v6718, %v6945
        %v7103 = vsub.f32 %v6719, %v6947
        %v7104 = vsub.f32 %v6720, %v6949
        %v7105 = vsub.f32 %v6721, %v6951
        %v7106 = vsub.f32 %v6722, %v6953
        %v7107 = vsub.f32 %v6723, %v6955
        %v7108 = vsub.f32 %v6724, %v6957
        %v7109 = vsub.f32 %v6725, %v6959
        %v7110 = vsub.f32 %v6726, %v6961
        %v7111 = vsub.f32 %v6727, %v6963
        %v7112 = vsub.f32 %v6728, %v6965
        %v7113 = vsub.f32 %v6729, %v6967
        %v7114 = vsub.f32 %v6730, %v6969
        %v7115 = vsub.f32 %v6731, %v6971
        %v7116 = vsub.f32 %v6732, %v6973
        %v7117 = vsub.f32 %v6733, %v6975
        %v7118 = vsub.f32 %v6734, %v6977
        %v7119 = vsub.f32 %v6735, %v6979
        %v7120 = vsub.f32 %v6736, %v6981
        %v7121 = vsub.f32 %v6737, %v6983
        %v7122 = vsub.f32 %v6738, %v6985
        %v7123 = vsub.f32 %v6739, %v6987
        %v7124 = vsub.f32 %v6740, %v6989
        %v7125 = vsub.f32 %v6741, %v6991
        %v7126 = vsub.f32 %v6742, %v6993
        %v7127 = vsub.f32 %v6743, %v6995
        %v7128 = vsub.f32 %v6744, %v6997
        %v7129 = vsub.f32 %v6745, %v6999
        %v7130 = vsub.f32 %v6746, %v7001
        %v7131 = vsub.f32 %v6747, %v7003
        %v7132 = vmul.f32 %v7004, 1.442695
        %v7133 = vpow.pop %v7132
        %v7134 = vmul.f32 %v7005, 1.442695
        %v7135 = vpow.pop %v7134
        %v7136 = vmul.f32 %v7006, 1.442695
        %v7137 = vpow.pop %v7136
        %v7138 = vmul.f32 %v7007, 1.442695
        %v7139 = vpow.pop %v7138
        %v7140 = vmul.f32 %v7008, 1.442695
        %v7141 = vpow.pop %v7140
        %v7142 = vmul.f32 %v7009, 1.442695
        %v7143 = vpow.pop %v7142
        %v7144 = vmul.f32 %v7010, 1.442695
        %v7145 = vpow.pop %v7144
        %v7146 = vmul.f32 %v7011, 1.442695
        %v7147 = vpow.pop %v7146
        %v7148 = vmul.f32 %v7012, 1.442695
        %v7149 = vpow.pop %v7148
        %v7150 = vmul.f32 %v7013, 1.442695
        %v7151 = vpow.pop %v7150
        %v7152 = vmul.f32 %v7014, 1.442695
        %v7153 = vpow.pop %v7152
        %v7154 = vmul.f32 %v7015, 1.442695
        %v7155 = vpow.pop %v7154
        %v7156 = vmul.f32 %v7016, 1.442695
        %v7157 = vpow.pop %v7156
        %v7158 = vmul.f32 %v7017, 1.442695
        %v7159 = vpow.pop %v7158
        %v7160 = vmul.f32 %v7018, 1.442695
        %v7161 = vpow.pop %v7160
        %v7162 = vmul.f32 %v7019, 1.442695
        %v7163 = vpow.pop %v7162
        %v7164 = vmul.f32 %v7020, 1.442695
        %v7165 = vpow.pop %v7164
        %v7166 = vmul.f32 %v7021, 1.442695
        %v7167 = vpow.pop %v7166
        %v7168 = vmul.f32 %v7022, 1.442695
        %v7169 = vpow.pop %v7168
        %v7170 = vmul.f32 %v7023, 1.442695
        %v7171 = vpow.pop %v7170
        %v7172 = vmul.f32 %v7024, 1.442695
        %v7173 = vpow.pop %v7172
        %v7174 = vmul.f32 %v7025, 1.442695
        %v7175 = vpow.pop %v7174
        %v7176 = vmul.f32 %v7026, 1.442695
        %v7177 = vpow.pop %v7176
        %v7178 = vmul.f32 %v7027, 1.442695
        %v7179 = vpow.pop %v7178
        %v7180 = vmul.f32 %v7028, 1.442695
        %v7181 = vpow.pop %v7180
        %v7182 = vmul.f32 %v7029, 1.442695
        %v7183 = vpow.pop %v7182
        %v7184 = vmul.f32 %v7030, 1.442695
        %v7185 = vpow.pop %v7184
        %v7186 = vmul.f32 %v7031, 1.442695
        %v7187 = vpow.pop %v7186
        %v7188 = vmul.f32 %v7032, 1.442695
        %v7189 = vpow.pop %v7188
        %v7190 = vmul.f32 %v7033, 1.442695
        %v7191 = vpow.pop %v7190
        %v7192 = vmul.f32 %v7034, 1.442695
        %v7193 = vpow.pop %v7192
        %v7194 = vmul.f32 %v7035, 1.442695
        %v7195 = vpow.pop %v7194
        %v7196 = vmul.f32 %v7036, 1.442695
        %v7197 = vpow.pop %v7196
        %v7198 = vmul.f32 %v7037, 1.442695
        %v7199 = vpow.pop %v7198
        %v7200 = vmul.f32 %v7038, 1.442695
        %v7201 = vpow.pop %v7200
        %v7202 = vmul.f32 %v7039, 1.442695
        %v7203 = vpow.pop %v7202
        %v7204 = vmul.f32 %v7040, 1.442695
        %v7205 = vpow.pop %v7204
        %v7206 = vmul.f32 %v7041, 1.442695
        %v7207 = vpow.pop %v7206
        %v7208 = vmul.f32 %v7042, 1.442695
        %v7209 = vpow.pop %v7208
        %v7210 = vmul.f32 %v7043, 1.442695
        %v7211 = vpow.pop %v7210
        %v7212 = vmul.f32 %v7044, 1.442695
        %v7213 = vpow.pop %v7212
        %v7214 = vmul.f32 %v7045, 1.442695
        %v7215 = vpow.pop %v7214
        %v7216 = vmul.f32 %v7046, 1.442695
        %v7217 = vpow.pop %v7216
        %v7218 = vmul.f32 %v7047, 1.442695
        %v7219 = vpow.pop %v7218
        %v7220 = vmul.f32 %v7048, 1.442695
        %v7221 = vpow.pop %v7220
        %v7222 = vmul.f32 %v7049, 1.442695
        %v7223 = vpow.pop %v7222
        %v7224 = vmul.f32 %v7050, 1.442695
        %v7225 = vpow.pop %v7224
        %v7226 = vmul.f32 %v7051, 1.442695
        %v7227 = vpow.pop %v7226
        %v7228 = vmul.f32 %v7052, 1.442695
        %v7229 = vpow.pop %v7228
        %v7230 = vmul.f32 %v7053, 1.442695
        %v7231 = vpow.pop %v7230
        %v7232 = vmul.f32 %v7054, 1.442695
        %v7233 = vpow.pop %v7232
        %v7234 = vmul.f32 %v7055, 1.442695
        %v7235 = vpow.pop %v7234
        %v7236 = vmul.f32 %v7056, 1.442695
        %v7237 = vpow.pop %v7236
        %v7238 = vmul.f32 %v7057, 1.442695
        %v7239 = vpow.pop %v7238
        %v7240 = vmul.f32 %v7058, 1.442695
        %v7241 = vpow.pop %v7240
        %v7242 = vmul.f32 %v7059, 1.442695
        %v7243 = vpow.pop %v7242
        %v7244 = vmul.f32 %v7060, 1.442695
        %v7245 = vpow.pop %v7244
        %v7246 = vmul.f32 %v7061, 1.442695
        %v7247 = vpow.pop %v7246
        %v7248 = vmul.f32 %v7062, 1.442695
        %v7249 = vpow.pop %v7248
        %v7250 = vmul.f32 %v7063, 1.442695
        %v7251 = vpow.pop %v7250
        %v7252 = vmul.f32 %v7064, 1.442695
        %v7253 = vpow.pop %v7252
        %v7254 = vmul.f32 %v7065, 1.442695
        %v7255 = vpow.pop %v7254
        %v7256 = vmul.f32 %v7066, 1.442695
        %v7257 = vpow.pop %v7256
        %v7258 = vmul.f32 %v7067, 1.442695
        %v7259 = vpow.pop %v7258
        %v7260 = vmul.f32 %v7068, 1.442695
        %v7261 = vpow.pop %v7260
        %v7262 = vmul.f32 %v7069, 1.442695
        %v7263 = vpow.pop %v7262
        %v7264 = vmul.f32 %v7070, 1.442695
        %v7265 = vpow.pop %v7264
        %v7266 = vmul.f32 %v7071, 1.442695
        %v7267 = vpow.pop %v7266
        %v7268 = vmul.f32 %v7072, 1.442695
        %v7269 = vpow.pop %v7268
        %v7270 = vmul.f32 %v7073, 1.442695
        %v7271 = vpow.pop %v7270
        %v7272 = vmul.f32 %v7074, 1.442695
        %v7273 = vpow.pop %v7272
        %v7274 = vmul.f32 %v7075, 1.442695
        %v7275 = vpow.pop %v7274
        %v7276 = vmul.f32 %v7076, 1.442695
        %v7277 = vpow.pop %v7276
        %v7278 = vmul.f32 %v7077, 1.442695
        %v7279 = vpow.pop %v7278
        %v7280 = vmul.f32 %v7078, 1.442695
        %v7281 = vpow.pop %v7280
        %v7282 = vmul.f32 %v7079, 1.442695
        %v7283 = vpow.pop %v7282
        %v7284 = vmul.f32 %v7080, 1.442695
        %v7285 = vpow.pop %v7284
        %v7286 = vmul.f32 %v7081, 1.442695
        %v7287 = vpow.pop %v7286
        %v7288 = vmul.f32 %v7082, 1.442695
        %v7289 = vpow.pop %v7288
        %v7290 = vmul.f32 %v7083, 1.442695
        %v7291 = vpow.pop %v7290
        %v7292 = vmul.f32 %v7084, 1.442695
        %v7293 = vpow.pop %v7292
        %v7294 = vmul.f32 %v7085, 1.442695
        %v7295 = vpow.pop %v7294
        %v7296 = vmul.f32 %v7086, 1.442695
        %v7297 = vpow.pop %v7296
        %v7298 = vmul.f32 %v7087, 1.442695
        %v7299 = vpow.pop %v7298
        %v7300 = vmul.f32 %v7088, 1.442695
        %v7301 = vpow.pop %v7300
        %v7302 = vmul.f32 %v7089, 1.442695
        %v7303 = vpow.pop %v7302
        %v7304 = vmul.f32 %v7090, 1.442695
        %v7305 = vpow.pop %v7304
        %v7306 = vmul.f32 %v7091, 1.442695
        %v7307 = vpow.pop %v7306
        %v7308 = vmul.f32 %v7092, 1.442695
        %v7309 = vpow.pop %v7308
        %v7310 = vmul.f32 %v7093, 1.442695
        %v7311 = vpow.pop %v7310
        %v7312 = vmul.f32 %v7094, 1.442695
        %v7313 = vpow.pop %v7312
        %v7314 = vmul.f32 %v7095, 1.442695
        %v7315 = vpow.pop %v7314
        %v7316 = vmul.f32 %v7096, 1.442695
        %v7317 = vpow.pop %v7316
        %v7318 = vmul.f32 %v7097, 1.442695
        %v7319 = vpow.pop %v7318
        %v7320 = vmul.f32 %v7098, 1.442695
        %v7321 = vpow.pop %v7320
        %v7322 = vmul.f32 %v7099, 1.442695
        %v7323 = vpow.pop %v7322
        %v7324 = vmul.f32 %v7100, 1.442695
        %v7325 = vpow.pop %v7324
        %v7326 = vmul.f32 %v7101, 1.442695
        %v7327 = vpow.pop %v7326
        %v7328 = vmul.f32 %v7102, 1.442695
        %v7329 = vpow.pop %v7328
        %v7330 = vmul.f32 %v7103, 1.442695
        %v7331 = vpow.pop %v7330
        %v7332 = vmul.f32 %v7104, 1.442695
        %v7333 = vpow.pop %v7332
        %v7334 = vmul.f32 %v7105, 1.442695
        %v7335 = vpow.pop %v7334
        %v7336 = vmul.f32 %v7106, 1.442695
        %v7337 = vpow.pop %v7336
        %v7338 = vmul.f32 %v7107, 1.442695
        %v7339 = vpow.pop %v7338
        %v7340 = vmul.f32 %v7108, 1.442695
        %v7341 = vpow.pop %v7340
        %v7342 = vmul.f32 %v7109, 1.442695
        %v7343 = vpow.pop %v7342
        %v7344 = vmul.f32 %v7110, 1.442695
        %v7345 = vpow.pop %v7344
        %v7346 = vmul.f32 %v7111, 1.442695
        %v7347 = vpow.pop %v7346
        %v7348 = vmul.f32 %v7112, 1.442695
        %v7349 = vpow.pop %v7348
        %v7350 = vmul.f32 %v7113, 1.442695
        %v7351 = vpow.pop %v7350
        %v7352 = vmul.f32 %v7114, 1.442695
        %v7353 = vpow.pop %v7352
        %v7354 = vmul.f32 %v7115, 1.442695
        %v7355 = vpow.pop %v7354
        %v7356 = vmul.f32 %v7116, 1.442695
        %v7357 = vpow.pop %v7356
        %v7358 = vmul.f32 %v7117, 1.442695
        %v7359 = vpow.pop %v7358
        %v7360 = vmul.f32 %v7118, 1.442695
        %v7361 = vpow.pop %v7360
        %v7362 = vmul.f32 %v7119, 1.442695
        %v7363 = vpow.pop %v7362
        %v7364 = vmul.f32 %v7120, 1.442695
        %v7365 = vpow.pop %v7364
        %v7366 = vmul.f32 %v7121, 1.442695
        %v7367 = vpow.pop %v7366
        %v7368 = vmul.f32 %v7122, 1.442695
        %v7369 = vpow.pop %v7368
        %v7370 = vmul.f32 %v7123, 1.442695
        %v7371 = vpow.pop %v7370
        %v7372 = vmul.f32 %v7124, 1.442695
        %v7373 = vpow.pop %v7372
        %v7374 = vmul.f32 %v7125, 1.442695
        %v7375 = vpow.pop %v7374
        %v7376 = vmul.f32 %v7126, 1.442695
        %v7377 = vpow.pop %v7376
        %v7378 = vmul.f32 %v7127, 1.442695
        %v7379 = vpow.pop %v7378
        %v7380 = vmul.f32 %v7128, 1.442695
        %v7381 = vpow.pop %v7380
        %v7382 = vmul.f32 %v7129, 1.442695
        %v7383 = vpow.pop %v7382
        %v7384 = vmul.f32 %v7130, 1.442695
        %v7385 = vpow.pop %v7384
        %v7386 = vmul.f32 %v7131, 1.442695
        %v7387 = vpow.pop %v7386
        %7388 = vadd.xlane.f32.xlu0 %v7133
        %v7389 = vpop.xlane.xlu0 %7388
        %7390 = vadd.xlane.f32.xlu0 %v7135
        %v7391 = vpop.xlane.xlu0 %7390
        %7392 = vadd.xlane.f32.xlu0 %v7137
        %v7393 = vpop.xlane.xlu0 %7392
        %7394 = vadd.xlane.f32.xlu0 %v7139
        %v7395 = vpop.xlane.xlu0 %7394
        %7396 = vadd.xlane.f32.xlu0 %v7141
        %v7397 = vpop.xlane.xlu0 %7396
        %7398 = vadd.xlane.f32.xlu0 %v7143
        %v7399 = vpop.xlane.xlu0 %7398
        %7400 = vadd.xlane.f32.xlu0 %v7145
        %v7401 = vpop.xlane.xlu0 %7400
        %7402 = vadd.xlane.f32.xlu0 %v7147
        %v7403 = vpop.xlane.xlu0 %7402
        %7404 = vadd.xlane.f32.xlu0 %v7149
        %v7405 = vpop.xlane.xlu0 %7404
        %7406 = vadd.xlane.f32.xlu0 %v7151
        %v7407 = vpop.xlane.xlu0 %7406
        %7408 = vadd.xlane.f32.xlu0 %v7153
        %v7409 = vpop.xlane.xlu0 %7408
        %7410 = vadd.xlane.f32.xlu0 %v7155
        %v7411 = vpop.xlane.xlu0 %7410
        %7412 = vadd.xlane.f32.xlu0 %v7157
        %v7413 = vpop.xlane.xlu0 %7412
        %7414 = vadd.xlane.f32.xlu0 %v7159
        %v7415 = vpop.xlane.xlu0 %7414
        %7416 = vadd.xlane.f32.xlu0 %v7161
        %v7417 = vpop.xlane.xlu0 %7416
        %7418 = vadd.xlane.f32.xlu0 %v7163
        %v7419 = vpop.xlane.xlu0 %7418
        %7420 = vadd.xlane.f32.xlu0 %v7165
        %v7421 = vpop.xlane.xlu0 %7420
        %7422 = vadd.xlane.f32.xlu0 %v7167
        %v7423 = vpop.xlane.xlu0 %7422
        %7424 = vadd.xlane.f32.xlu0 %v7169
        %v7425 = vpop.xlane.xlu0 %7424
        %7426 = vadd.xlane.f32.xlu0 %v7171
        %v7427 = vpop.xlane.xlu0 %7426
        %7428 = vadd.xlane.f32.xlu0 %v7173
        %v7429 = vpop.xlane.xlu0 %7428
        %7430 = vadd.xlane.f32.xlu0 %v7175
        %v7431 = vpop.xlane.xlu0 %7430
        %7432 = vadd.xlane.f32.xlu0 %v7177
        %v7433 = vpop.xlane.xlu0 %7432
        %7434 = vadd.xlane.f32.xlu0 %v7179
        %v7435 = vpop.xlane.xlu0 %7434
        %7436 = vadd.xlane.f32.xlu0 %v7181
        %v7437 = vpop.xlane.xlu0 %7436
        %7438 = vadd.xlane.f32.xlu0 %v7183
        %v7439 = vpop.xlane.xlu0 %7438
        %7440 = vadd.xlane.f32.xlu0 %v7185
        %v7441 = vpop.xlane.xlu0 %7440
        %7442 = vadd.xlane.f32.xlu0 %v7187
        %v7443 = vpop.xlane.xlu0 %7442
        %7444 = vadd.xlane.f32.xlu0 %v7189
        %v7445 = vpop.xlane.xlu0 %7444
        %7446 = vadd.xlane.f32.xlu0 %v7191
        %v7447 = vpop.xlane.xlu0 %7446
        %7448 = vadd.xlane.f32.xlu0 %v7193
        %v7449 = vpop.xlane.xlu0 %7448
        %7450 = vadd.xlane.f32.xlu0 %v7195
        %v7451 = vpop.xlane.xlu0 %7450
        %7452 = vadd.xlane.f32.xlu0 %v7197
        %v7453 = vpop.xlane.xlu0 %7452
        %7454 = vadd.xlane.f32.xlu0 %v7199
        %v7455 = vpop.xlane.xlu0 %7454
        %7456 = vadd.xlane.f32.xlu0 %v7201
        %v7457 = vpop.xlane.xlu0 %7456
        %7458 = vadd.xlane.f32.xlu0 %v7203
        %v7459 = vpop.xlane.xlu0 %7458
        %7460 = vadd.xlane.f32.xlu0 %v7205
        %v7461 = vpop.xlane.xlu0 %7460
        %7462 = vadd.xlane.f32.xlu0 %v7207
        %v7463 = vpop.xlane.xlu0 %7462
        %7464 = vadd.xlane.f32.xlu0 %v7209
        %v7465 = vpop.xlane.xlu0 %7464
        %7466 = vadd.xlane.f32.xlu0 %v7211
        %v7467 = vpop.xlane.xlu0 %7466
        %7468 = vadd.xlane.f32.xlu0 %v7213
        %v7469 = vpop.xlane.xlu0 %7468
        %7470 = vadd.xlane.f32.xlu0 %v7215
        %v7471 = vpop.xlane.xlu0 %7470
        %7472 = vadd.xlane.f32.xlu0 %v7217
        %v7473 = vpop.xlane.xlu0 %7472
        %7474 = vadd.xlane.f32.xlu0 %v7219
        %v7475 = vpop.xlane.xlu0 %7474
        %7476 = vadd.xlane.f32.xlu0 %v7221
        %v7477 = vpop.xlane.xlu0 %7476
        %7478 = vadd.xlane.f32.xlu0 %v7223
        %v7479 = vpop.xlane.xlu0 %7478
        %7480 = vadd.xlane.f32.xlu0 %v7225
        %v7481 = vpop.xlane.xlu0 %7480
        %7482 = vadd.xlane.f32.xlu0 %v7227
        %v7483 = vpop.xlane.xlu0 %7482
        %7484 = vadd.xlane.f32.xlu0 %v7229
        %v7485 = vpop.xlane.xlu0 %7484
        %7486 = vadd.xlane.f32.xlu0 %v7231
        %v7487 = vpop.xlane.xlu0 %7486
        %7488 = vadd.xlane.f32.xlu0 %v7233
        %v7489 = vpop.xlane.xlu0 %7488
        %7490 = vadd.xlane.f32.xlu0 %v7235
        %v7491 = vpop.xlane.xlu0 %7490
        %7492 = vadd.xlane.f32.xlu0 %v7237
        %v7493 = vpop.xlane.xlu0 %7492
        %7494 = vadd.xlane.f32.xlu0 %v7239
        %v7495 = vpop.xlane.xlu0 %7494
        %7496 = vadd.xlane.f32.xlu0 %v7241
        %v7497 = vpop.xlane.xlu0 %7496
        %7498 = vadd.xlane.f32.xlu0 %v7243
        %v7499 = vpop.xlane.xlu0 %7498
        %7500 = vadd.xlane.f32.xlu0 %v7245
        %v7501 = vpop.xlane.xlu0 %7500
        %7502 = vadd.xlane.f32.xlu0 %v7247
        %v7503 = vpop.xlane.xlu0 %7502
        %7504 = vadd.xlane.f32.xlu0 %v7249
        %v7505 = vpop.xlane.xlu0 %7504
        %7506 = vadd.xlane.f32.xlu0 %v7251
        %v7507 = vpop.xlane.xlu0 %7506
        %7508 = vadd.xlane.f32.xlu0 %v7253
        %v7509 = vpop.xlane.xlu0 %7508
        %7510 = vadd.xlane.f32.xlu0 %v7255
        %v7511 = vpop.xlane.xlu0 %7510
        %7512 = vadd.xlane.f32.xlu0 %v7257
        %v7513 = vpop.xlane.xlu0 %7512
        %7514 = vadd.xlane.f32.xlu0 %v7259
        %v7515 = vpop.xlane.xlu0 %7514
        %7516 = vadd.xlane.f32.xlu0 %v7261
        %v7517 = vpop.xlane.xlu0 %7516
        %7518 = vadd.xlane.f32.xlu0 %v7263
        %v7519 = vpop.xlane.xlu0 %7518
        %7520 = vadd.xlane.f32.xlu0 %v7265
        %v7521 = vpop.xlane.xlu0 %7520
        %7522 = vadd.xlane.f32.xlu0 %v7267
        %v7523 = vpop.xlane.xlu0 %7522
        %7524 = vadd.xlane.f32.xlu0 %v7269
        %v7525 = vpop.xlane.xlu0 %7524
        %7526 = vadd.xlane.f32.xlu0 %v7271
        %v7527 = vpop.xlane.xlu0 %7526
        %7528 = vadd.xlane.f32.xlu0 %v7273
        %v7529 = vpop.xlane.xlu0 %7528
        %7530 = vadd.xlane.f32.xlu0 %v7275
        %v7531 = vpop.xlane.xlu0 %7530
        %7532 = vadd.xlane.f32.xlu0 %v7277
        %v7533 = vpop.xlane.xlu0 %7532
        %7534 = vadd.xlane.f32.xlu0 %v7279
        %v7535 = vpop.xlane.xlu0 %7534
        %7536 = vadd.xlane.f32.xlu0 %v7281
        %v7537 = vpop.xlane.xlu0 %7536
        %7538 = vadd.xlane.f32.xlu0 %v7283
        %v7539 = vpop.xlane.xlu0 %7538
        %7540 = vadd.xlane.f32.xlu0 %v7285
        %v7541 = vpop.xlane.xlu0 %7540
        %7542 = vadd.xlane.f32.xlu0 %v7287
        %v7543 = vpop.xlane.xlu0 %7542
        %7544 = vadd.xlane.f32.xlu0 %v7289
        %v7545 = vpop.xlane.xlu0 %7544
        %7546 = vadd.xlane.f32.xlu0 %v7291
        %v7547 = vpop.xlane.xlu0 %7546
        %7548 = vadd.xlane.f32.xlu0 %v7293
        %v7549 = vpop.xlane.xlu0 %7548
        %7550 = vadd.xlane.f32.xlu0 %v7295
        %v7551 = vpop.xlane.xlu0 %7550
        %7552 = vadd.xlane.f32.xlu0 %v7297
        %v7553 = vpop.xlane.xlu0 %7552
        %7554 = vadd.xlane.f32.xlu0 %v7299
        %v7555 = vpop.xlane.xlu0 %7554
        %7556 = vadd.xlane.f32.xlu0 %v7301
        %v7557 = vpop.xlane.xlu0 %7556
        %7558 = vadd.xlane.f32.xlu0 %v7303
        %v7559 = vpop.xlane.xlu0 %7558
        %7560 = vadd.xlane.f32.xlu0 %v7305
        %v7561 = vpop.xlane.xlu0 %7560
        %7562 = vadd.xlane.f32.xlu0 %v7307
        %v7563 = vpop.xlane.xlu0 %7562
        %7564 = vadd.xlane.f32.xlu0 %v7309
        %v7565 = vpop.xlane.xlu0 %7564
        %7566 = vadd.xlane.f32.xlu0 %v7311
        %v7567 = vpop.xlane.xlu0 %7566
        %7568 = vadd.xlane.f32.xlu0 %v7313
        %v7569 = vpop.xlane.xlu0 %7568
        %7570 = vadd.xlane.f32.xlu0 %v7315
        %v7571 = vpop.xlane.xlu0 %7570
        %7572 = vadd.xlane.f32.xlu0 %v7317
        %v7573 = vpop.xlane.xlu0 %7572
        %7574 = vadd.xlane.f32.xlu0 %v7319
        %v7575 = vpop.xlane.xlu0 %7574
        %7576 = vadd.xlane.f32.xlu0 %v7321
        %v7577 = vpop.xlane.xlu0 %7576
        %7578 = vadd.xlane.f32.xlu0 %v7323
        %v7579 = vpop.xlane.xlu0 %7578
        %7580 = vadd.xlane.f32.xlu0 %v7325
        %v7581 = vpop.xlane.xlu0 %7580
        %7582 = vadd.xlane.f32.xlu0 %v7327
        %v7583 = vpop.xlane.xlu0 %7582
        %7584 = vadd.xlane.f32.xlu0 %v7329
        %v7585 = vpop.xlane.xlu0 %7584
        %7586 = vadd.xlane.f32.xlu0 %v7331
        %v7587 = vpop.xlane.xlu0 %7586
        %7588 = vadd.xlane.f32.xlu0 %v7333
        %v7589 = vpop.xlane.xlu0 %7588
        %7590 = vadd.xlane.f32.xlu0 %v7335
        %v7591 = vpop.xlane.xlu0 %7590
        %7592 = vadd.xlane.f32.xlu0 %v7337
        %v7593 = vpop.xlane.xlu0 %7592
        %7594 = vadd.xlane.f32.xlu0 %v7339
        %v7595 = vpop.xlane.xlu0 %7594
        %7596 = vadd.xlane.f32.xlu0 %v7341
        %v7597 = vpop.xlane.xlu0 %7596
        %7598 = vadd.xlane.f32.xlu0 %v7343
        %v7599 = vpop.xlane.xlu0 %7598
        %7600 = vadd.xlane.f32.xlu0 %v7345
        %v7601 = vpop.xlane.xlu0 %7600
        %7602 = vadd.xlane.f32.xlu0 %v7347
        %v7603 = vpop.xlane.xlu0 %7602
        %7604 = vadd.xlane.f32.xlu0 %v7349
        %v7605 = vpop.xlane.xlu0 %7604
        %7606 = vadd.xlane.f32.xlu0 %v7351
        %v7607 = vpop.xlane.xlu0 %7606
        %7608 = vadd.xlane.f32.xlu0 %v7353
        %v7609 = vpop.xlane.xlu0 %7608
        %7610 = vadd.xlane.f32.xlu0 %v7355
        %v7611 = vpop.xlane.xlu0 %7610
        %7612 = vadd.xlane.f32.xlu0 %v7357
        %v7613 = vpop.xlane.xlu0 %7612
        %7614 = vadd.xlane.f32.xlu0 %v7359
        %v7615 = vpop.xlane.xlu0 %7614
        %7616 = vadd.xlane.f32.xlu0 %v7361
        %v7617 = vpop.xlane.xlu0 %7616
        %7618 = vadd.xlane.f32.xlu0 %v7363
        %v7619 = vpop.xlane.xlu0 %7618
        %7620 = vadd.xlane.f32.xlu0 %v7365
        %v7621 = vpop.xlane.xlu0 %7620
        %7622 = vadd.xlane.f32.xlu0 %v7367
        %v7623 = vpop.xlane.xlu0 %7622
        %7624 = vadd.xlane.f32.xlu0 %v7369
        %v7625 = vpop.xlane.xlu0 %7624
        %7626 = vadd.xlane.f32.xlu0 %v7371
        %v7627 = vpop.xlane.xlu0 %7626
        %7628 = vadd.xlane.f32.xlu0 %v7373
        %v7629 = vpop.xlane.xlu0 %7628
        %7630 = vadd.xlane.f32.xlu0 %v7375
        %v7631 = vpop.xlane.xlu0 %7630
        %7632 = vadd.xlane.f32.xlu0 %v7377
        %v7633 = vpop.xlane.xlu0 %7632
        %7634 = vadd.xlane.f32.xlu0 %v7379
        %v7635 = vpop.xlane.xlu0 %7634
        %7636 = vadd.xlane.f32.xlu0 %v7381
        %v7637 = vpop.xlane.xlu0 %7636
        %7638 = vadd.xlane.f32.xlu0 %v7383
        %v7639 = vpop.xlane.xlu0 %7638
        %7640 = vadd.xlane.f32.xlu0 %v7385
        %v7641 = vpop.xlane.xlu0 %7640
        %7642 = vadd.xlane.f32.xlu0 %v7387
        %v7643 = vpop.xlane.xlu0 %7642
        %v7644 = vrcp.pop %v7389
        %v7645 = vmul.f32 %v7133, %v7644
        %v7646 = vrcp.pop %v7391
        %v7647 = vmul.f32 %v7135, %v7646
        %v7648 = vrcp.pop %v7393
        %v7649 = vmul.f32 %v7137, %v7648
        %v7650 = vrcp.pop %v7395
        %v7651 = vmul.f32 %v7139, %v7650
        %v7652 = vrcp.pop %v7397
        %v7653 = vmul.f32 %v7141, %v7652
        %v7654 = vrcp.pop %v7399
        %v7655 = vmul.f32 %v7143, %v7654
        %v7656 = vrcp.pop %v7401
        %v7657 = vmul.f32 %v7145, %v7656
        %v7658 = vrcp.pop %v7403
        %v7659 = vmul.f32 %v7147, %v7658
        %v7660 = vrcp.pop %v7405
        %v7661 = vmul.f32 %v7149, %v7660
        %v7662 = vrcp.pop %v7407
        %v7663 = vmul.f32 %v7151, %v7662
        %v7664 = vrcp.pop %v7409
        %v7665 = vmul.f32 %v7153, %v7664
        %v7666 = vrcp.pop %v7411
        %v7667 = vmul.f32 %v7155, %v7666
        %v7668 = vrcp.pop %v7413
        %v7669 = vmul.f32 %v7157, %v7668
        %v7670 = vrcp.pop %v7415
        %v7671 = vmul.f32 %v7159, %v7670
        %v7672 = vrcp.pop %v7417
        %v7673 = vmul.f32 %v7161, %v7672
        %v7674 = vrcp.pop %v7419
        %v7675 = vmul.f32 %v7163, %v7674
        %v7676 = vrcp.pop %v7421
        %v7677 = vmul.f32 %v7165, %v7676
        %v7678 = vrcp.pop %v7423
        %v7679 = vmul.f32 %v7167, %v7678
        %v7680 = vrcp.pop %v7425
        %v7681 = vmul.f32 %v7169, %v7680
        %v7682 = vrcp.pop %v7427
        %v7683 = vmul.f32 %v7171, %v7682
        %v7684 = vrcp.pop %v7429
        %v7685 = vmul.f32 %v7173, %v7684
        %v7686 = vrcp.pop %v7431
        %v7687 = vmul.f32 %v7175, %v7686
        %v7688 = vrcp.pop %v7433
        %v7689 = vmul.f32 %v7177, %v7688
        %v7690 = vrcp.pop %v7435
        %v7691 = vmul.f32 %v7179, %v7690
        %v7692 = vrcp.pop %v7437
        %v7693 = vmul.f32 %v7181, %v7692
        %v7694 = vrcp.pop %v7439
        %v7695 = vmul.f32 %v7183, %v7694
        %v7696 = vrcp.pop %v7441
        %v7697 = vmul.f32 %v7185, %v7696
        %v7698 = vrcp.pop %v7443
        %v7699 = vmul.f32 %v7187, %v7698
        %v7700 = vrcp.pop %v7445
        %v7701 = vmul.f32 %v7189, %v7700
        %v7702 = vrcp.pop %v7447
        %v7703 = vmul.f32 %v7191, %v7702
        %v7704 = vrcp.pop %v7449
        %v7705 = vmul.f32 %v7193, %v7704
        %v7706 = vrcp.pop %v7451
        %v7707 = vmul.f32 %v7195, %v7706
        %v7708 = vrcp.pop %v7453
        %v7709 = vmul.f32 %v7197, %v7708
        %v7710 = vrcp.pop %v7455
        %v7711 = vmul.f32 %v7199, %v7710
        %v7712 = vrcp.pop %v7457
        %v7713 = vmul.f32 %v7201, %v7712
        %v7714 = vrcp.pop %v7459
        %v7715 = vmul.f32 %v7203, %v7714
        %v7716 = vrcp.pop %v7461
        %v7717 = vmul.f32 %v7205, %v7716
        %v7718 = vrcp.pop %v7463
        %v7719 = vmul.f32 %v7207, %v7718
        %v7720 = vrcp.pop %v7465
        %v7721 = vmul.f32 %v7209, %v7720
        %v7722 = vrcp.pop %v7467
        %v7723 = vmul.f32 %v7211, %v7722
        %v7724 = vrcp.pop %v7469
        %v7725 = vmul.f32 %v7213, %v7724
        %v7726 = vrcp.pop %v7471
        %v7727 = vmul.f32 %v7215, %v7726
        %v7728 = vrcp.pop %v7473
        %v7729 = vmul.f32 %v7217, %v7728
        %v7730 = vrcp.pop %v7475
        %v7731 = vmul.f32 %v7219, %v7730
        %v7732 = vrcp.pop %v7477
        %v7733 = vmul.f32 %v7221, %v7732
        %v7734 = vrcp.pop %v7479
        %v7735 = vmul.f32 %v7223, %v7734
        %v7736 = vrcp.pop %v7481
        %v7737 = vmul.f32 %v7225, %v7736
        %v7738 = vrcp.pop %v7483
        %v7739 = vmul.f32 %v7227, %v7738
        %v7740 = vrcp.pop %v7485
        %v7741 = vmul.f32 %v7229, %v7740
        %v7742 = vrcp.pop %v7487
        %v7743 = vmul.f32 %v7231, %v7742
        %v7744 = vrcp.pop %v7489
        %v7745 = vmul.f32 %v7233, %v7744
        %v7746 = vrcp.pop %v7491
        %v7747 = vmul.f32 %v7235, %v7746
        %v7748 = vrcp.pop %v7493
        %v7749 = vmul.f32 %v7237, %v7748
        %v7750 = vrcp.pop %v7495
        %v7751 = vmul.f32 %v7239, %v7750
        %v7752 = vrcp.pop %v7497
        %v7753 = vmul.f32 %v7241, %v7752
        %v7754 = vrcp.pop %v7499
        %v7755 = vmul.f32 %v7243, %v7754
        %v7756 = vrcp.pop %v7501
        %v7757 = vmul.f32 %v7245, %v7756
        %v7758 = vrcp.pop %v7503
        %v7759 = vmul.f32 %v7247, %v7758
        %v7760 = vrcp.pop %v7505
        %v7761 = vmul.f32 %v7249, %v7760
        %v7762 = vrcp.pop %v7507
        %v7763 = vmul.f32 %v7251, %v7762
        %v7764 = vrcp.pop %v7509
        %v7765 = vmul.f32 %v7253, %v7764
        %v7766 = vrcp.pop %v7511
        %v7767 = vmul.f32 %v7255, %v7766
        %v7768 = vrcp.pop %v7513
        %v7769 = vmul.f32 %v7257, %v7768
        %v7770 = vrcp.pop %v7515
        %v7771 = vmul.f32 %v7259, %v7770
        %v7772 = vrcp.pop %v7517
        %v7773 = vmul.f32 %v7261, %v7772
        %v7774 = vrcp.pop %v7519
        %v7775 = vmul.f32 %v7263, %v7774
        %v7776 = vrcp.pop %v7521
        %v7777 = vmul.f32 %v7265, %v7776
        %v7778 = vrcp.pop %v7523
        %v7779 = vmul.f32 %v7267, %v7778
        %v7780 = vrcp.pop %v7525
        %v7781 = vmul.f32 %v7269, %v7780
        %v7782 = vrcp.pop %v7527
        %v7783 = vmul.f32 %v7271, %v7782
        %v7784 = vrcp.pop %v7529
        %v7785 = vmul.f32 %v7273, %v7784
        %v7786 = vrcp.pop %v7531
        %v7787 = vmul.f32 %v7275, %v7786
        %v7788 = vrcp.pop %v7533
        %v7789 = vmul.f32 %v7277, %v7788
        %v7790 = vrcp.pop %v7535
        %v7791 = vmul.f32 %v7279, %v7790
        %v7792 = vrcp.pop %v7537
        %v7793 = vmul.f32 %v7281, %v7792
        %v7794 = vrcp.pop %v7539
        %v7795 = vmul.f32 %v7283, %v7794
        %v7796 = vrcp.pop %v7541
        %v7797 = vmul.f32 %v7285, %v7796
        %v7798 = vrcp.pop %v7543
        %v7799 = vmul.f32 %v7287, %v7798
        %v7800 = vrcp.pop %v7545
        %v7801 = vmul.f32 %v7289, %v7800
        %v7802 = vrcp.pop %v7547
        %v7803 = vmul.f32 %v7291, %v7802
        %v7804 = vrcp.pop %v7549
        %v7805 = vmul.f32 %v7293, %v7804
        %v7806 = vrcp.pop %v7551
        %v7807 = vmul.f32 %v7295, %v7806
        %v7808 = vrcp.pop %v7553
        %v7809 = vmul.f32 %v7297, %v7808
        %v7810 = vrcp.pop %v7555
        %v7811 = vmul.f32 %v7299, %v7810
        %v7812 = vrcp.pop %v7557
        %v7813 = vmul.f32 %v7301, %v7812
        %v7814 = vrcp.pop %v7559
        %v7815 = vmul.f32 %v7303, %v7814
        %v7816 = vrcp.pop %v7561
        %v7817 = vmul.f32 %v7305, %v7816
        %v7818 = vrcp.pop %v7563
        %v7819 = vmul.f32 %v7307, %v7818
        %v7820 = vrcp.pop %v7565
        %v7821 = vmul.f32 %v7309, %v7820
        %v7822 = vrcp.pop %v7567
        %v7823 = vmul.f32 %v7311, %v7822
        %v7824 = vrcp.pop %v7569
        %v7825 = vmul.f32 %v7313, %v7824
        %v7826 = vrcp.pop %v7571
        %v7827 = vmul.f32 %v7315, %v7826
        %v7828 = vrcp.pop %v7573
        %v7829 = vmul.f32 %v7317, %v7828
        %v7830 = vrcp.pop %v7575
        %v7831 = vmul.f32 %v7319, %v7830
        %v7832 = vrcp.pop %v7577
        %v7833 = vmul.f32 %v7321, %v7832
        %v7834 = vrcp.pop %v7579
        %v7835 = vmul.f32 %v7323, %v7834
        %v7836 = vrcp.pop %v7581
        %v7837 = vmul.f32 %v7325, %v7836
        %v7838 = vrcp.pop %v7583
        %v7839 = vmul.f32 %v7327, %v7838
        %v7840 = vrcp.pop %v7585
        %v7841 = vmul.f32 %v7329, %v7840
        %v7842 = vrcp.pop %v7587
        %v7843 = vmul.f32 %v7331, %v7842
        %v7844 = vrcp.pop %v7589
        %v7845 = vmul.f32 %v7333, %v7844
        %v7846 = vrcp.pop %v7591
        %v7847 = vmul.f32 %v7335, %v7846
        %v7848 = vrcp.pop %v7593
        %v7849 = vmul.f32 %v7337, %v7848
        %v7850 = vrcp.pop %v7595
        %v7851 = vmul.f32 %v7339, %v7850
        %v7852 = vrcp.pop %v7597
        %v7853 = vmul.f32 %v7341, %v7852
        %v7854 = vrcp.pop %v7599
        %v7855 = vmul.f32 %v7343, %v7854
        %v7856 = vrcp.pop %v7601
        %v7857 = vmul.f32 %v7345, %v7856
        %v7858 = vrcp.pop %v7603
        %v7859 = vmul.f32 %v7347, %v7858
        %v7860 = vrcp.pop %v7605
        %v7861 = vmul.f32 %v7349, %v7860
        %v7862 = vrcp.pop %v7607
        %v7863 = vmul.f32 %v7351, %v7862
        %v7864 = vrcp.pop %v7609
        %v7865 = vmul.f32 %v7353, %v7864
        %v7866 = vrcp.pop %v7611
        %v7867 = vmul.f32 %v7355, %v7866
        %v7868 = vrcp.pop %v7613
        %v7869 = vmul.f32 %v7357, %v7868
        %v7870 = vrcp.pop %v7615
        %v7871 = vmul.f32 %v7359, %v7870
        %v7872 = vrcp.pop %v7617
        %v7873 = vmul.f32 %v7361, %v7872
        %v7874 = vrcp.pop %v7619
        %v7875 = vmul.f32 %v7363, %v7874
        %v7876 = vrcp.pop %v7621
        %v7877 = vmul.f32 %v7365, %v7876
        %v7878 = vrcp.pop %v7623
        %v7879 = vmul.f32 %v7367, %v7878
        %v7880 = vrcp.pop %v7625
        %v7881 = vmul.f32 %v7369, %v7880
        %v7882 = vrcp.pop %v7627
        %v7883 = vmul.f32 %v7371, %v7882
        %v7884 = vrcp.pop %v7629
        %v7885 = vmul.f32 %v7373, %v7884
        %v7886 = vrcp.pop %v7631
        %v7887 = vmul.f32 %v7375, %v7886
        %v7888 = vrcp.pop %v7633
        %v7889 = vmul.f32 %v7377, %v7888
        %v7890 = vrcp.pop %v7635
        %v7891 = vmul.f32 %v7379, %v7890
        %v7892 = vrcp.pop %v7637
        %v7893 = vmul.f32 %v7381, %v7892
        %v7894 = vrcp.pop %v7639
        %v7895 = vmul.f32 %v7383, %v7894
        %v7896 = vrcp.pop %v7641
        %v7897 = vmul.f32 %v7385, %v7896
        %v7898 = vrcp.pop %v7643
        %v7899 = vmul.f32 %v7387, %v7898
        %v7900 = vsel %vm3468, %v7645, 0.0
        %v7901 = vsel %vm3469, %v7647, 0.0
        %v7902 = vsel %vm3470, %v7649, 0.0
        %v7903 = vsel %vm3471, %v7651, 0.0
        %v7904 = vsel %vm3472, %v7653, 0.0
        %v7905 = vsel %vm3473, %v7655, 0.0
        %v7906 = vsel %vm3474, %v7657, 0.0
        %v7907 = vsel %vm3475, %v7659, 0.0
        %v7908 = vsel %vm3476, %v7661, 0.0
        %v7909 = vsel %vm3477, %v7663, 0.0
        %v7910 = vsel %vm3478, %v7665, 0.0
        %v7911 = vsel %vm3479, %v7667, 0.0
        %v7912 = vsel %vm3480, %v7669, 0.0
        %v7913 = vsel %vm3481, %v7671, 0.0
        %v7914 = vsel %vm3482, %v7673, 0.0
        %v7915 = vsel %vm3483, %v7675, 0.0
        %v7916 = vsel %vm3468, %v7677, 0.0
        %v7917 = vsel %vm3469, %v7679, 0.0
        %v7918 = vsel %vm3470, %v7681, 0.0
        %v7919 = vsel %vm3471, %v7683, 0.0
        %v7920 = vsel %vm3472, %v7685, 0.0
        %v7921 = vsel %vm3473, %v7687, 0.0
        %v7922 = vsel %vm3474, %v7689, 0.0
        %v7923 = vsel %vm3475, %v7691, 0.0
        %v7924 = vsel %vm3476, %v7693, 0.0
        %v7925 = vsel %vm3477, %v7695, 0.0
        %v7926 = vsel %vm3478, %v7697, 0.0
        %v7927 = vsel %vm3479, %v7699, 0.0
        %v7928 = vsel %vm3480, %v7701, 0.0
        %v7929 = vsel %vm3481, %v7703, 0.0
        %v7930 = vsel %vm3482, %v7705, 0.0
        %v7931 = vsel %vm3483, %v7707, 0.0
        %v7932 = vsel %vm3468, %v7709, 0.0
        %v7933 = vsel %vm3469, %v7711, 0.0
        %v7934 = vsel %vm3470, %v7713, 0.0
        %v7935 = vsel %vm3471, %v7715, 0.0
        %v7936 = vsel %vm3472, %v7717, 0.0
        %v7937 = vsel %vm3473, %v7719, 0.0
        %v7938 = vsel %vm3474, %v7721, 0.0
        %v7939 = vsel %vm3475, %v7723, 0.0
        %v7940 = vsel %vm3476, %v7725, 0.0
        %v7941 = vsel %vm3477, %v7727, 0.0
        %v7942 = vsel %vm3478, %v7729, 0.0
        %v7943 = vsel %vm3479, %v7731, 0.0
        %v7944 = vsel %vm3480, %v7733, 0.0
        %v7945 = vsel %vm3481, %v7735, 0.0
        %v7946 = vsel %vm3482, %v7737, 0.0
        %v7947 = vsel %vm3483, %v7739, 0.0
        %v7948 = vsel %vm3468, %v7741, 0.0
        %v7949 = vsel %vm3469, %v7743, 0.0
        %v7950 = vsel %vm3470, %v7745, 0.0
        %v7951 = vsel %vm3471, %v7747, 0.0
        %v7952 = vsel %vm3472, %v7749, 0.0
        %v7953 = vsel %vm3473, %v7751, 0.0
        %v7954 = vsel %vm3474, %v7753, 0.0
        %v7955 = vsel %vm3475, %v7755, 0.0
        %v7956 = vsel %vm3476, %v7757, 0.0
        %v7957 = vsel %vm3477, %v7759, 0.0
        %v7958 = vsel %vm3478, %v7761, 0.0
        %v7959 = vsel %vm3479, %v7763, 0.0
        %v7960 = vsel %vm3480, %v7765, 0.0
        %v7961 = vsel %vm3481, %v7767, 0.0
        %v7962 = vsel %vm3482, %v7769, 0.0
        %v7963 = vsel %vm3483, %v7771, 0.0
        %v7964 = vsel %vm3468, %v7773, 0.0
        %v7965 = vsel %vm3469, %v7775, 0.0
        %v7966 = vsel %vm3470, %v7777, 0.0
        %v7967 = vsel %vm3471, %v7779, 0.0
        %v7968 = vsel %vm3472, %v7781, 0.0
        %v7969 = vsel %vm3473, %v7783, 0.0
        %v7970 = vsel %vm3474, %v7785, 0.0
        %v7971 = vsel %vm3475, %v7787, 0.0
        %v7972 = vsel %vm3476, %v7789, 0.0
        %v7973 = vsel %vm3477, %v7791, 0.0
        %v7974 = vsel %vm3478, %v7793, 0.0
        %v7975 = vsel %vm3479, %v7795, 0.0
        %v7976 = vsel %vm3480, %v7797, 0.0
        %v7977 = vsel %vm3481, %v7799, 0.0
        %v7978 = vsel %vm3482, %v7801, 0.0
        %v7979 = vsel %vm3483, %v7803, 0.0
        %v7980 = vsel %vm3468, %v7805, 0.0
        %v7981 = vsel %vm3469, %v7807, 0.0
        %v7982 = vsel %vm3470, %v7809, 0.0
        %v7983 = vsel %vm3471, %v7811, 0.0
        %v7984 = vsel %vm3472, %v7813, 0.0
        %v7985 = vsel %vm3473, %v7815, 0.0
        %v7986 = vsel %vm3474, %v7817, 0.0
        %v7987 = vsel %vm3475, %v7819, 0.0
        %v7988 = vsel %vm3476, %v7821, 0.0
        %v7989 = vsel %vm3477, %v7823, 0.0
        %v7990 = vsel %vm3478, %v7825, 0.0
        %v7991 = vsel %vm3479, %v7827, 0.0
        %v7992 = vsel %vm3480, %v7829, 0.0
        %v7993 = vsel %vm3481, %v7831, 0.0
        %v7994 = vsel %vm3482, %v7833, 0.0
        %v7995 = vsel %vm3483, %v7835, 0.0
        %v7996 = vsel %vm3468, %v7837, 0.0
        %v7997 = vsel %vm3469, %v7839, 0.0
        %v7998 = vsel %vm3470, %v7841, 0.0
        %v7999 = vsel %vm3471, %v7843, 0.0
        %v8000 = vsel %vm3472, %v7845, 0.0
        %v8001 = vsel %vm3473, %v7847, 0.0
        %v8002 = vsel %vm3474, %v7849, 0.0
        %v8003 = vsel %vm3475, %v7851, 0.0
        %v8004 = vsel %vm3476, %v7853, 0.0
        %v8005 = vsel %vm3477, %v7855, 0.0
        %v8006 = vsel %vm3478, %v7857, 0.0
        %v8007 = vsel %vm3479, %v7859, 0.0
        %v8008 = vsel %vm3480, %v7861, 0.0
        %v8009 = vsel %vm3481, %v7863, 0.0
        %v8010 = vsel %vm3482, %v7865, 0.0
        %v8011 = vsel %vm3483, %v7867, 0.0
        %v8012 = vsel %vm3468, %v7869, 0.0
        %v8013 = vsel %vm3469, %v7871, 0.0
        %v8014 = vsel %vm3470, %v7873, 0.0
        %v8015 = vsel %vm3471, %v7875, 0.0
        %v8016 = vsel %vm3472, %v7877, 0.0
        %v8017 = vsel %vm3473, %v7879, 0.0
        %v8018 = vsel %vm3474, %v7881, 0.0
        %v8019 = vsel %vm3475, %v7883, 0.0
        %v8020 = vsel %vm3476, %v7885, 0.0
        %v8021 = vsel %vm3477, %v7887, 0.0
        %v8022 = vsel %vm3478, %v7889, 0.0
        %v8023 = vsel %vm3479, %v7891, 0.0
        %v8024 = vsel %vm3480, %v7893, 0.0
        %v8025 = vsel %vm3481, %v7895, 0.0
        %v8026 = vsel %vm3482, %v7897, 0.0
        %v8027 = vsel %vm3483, %v7899, 0.0
        %v8028 = vld [vmem:[%s246] sm:$0xff]
        %v8029 = vld [vmem:[%s246 + $0x8] sm:$0xff]
        %v8030 = vld [vmem:[%s246 + $0x10] sm:$0xff]
        %v8031 = vld [vmem:[%s246 + $0x18] sm:$0xff]
        %v8032 = vld [vmem:[%s246 + $0x20] sm:$0xff]
        %v8033 = vld [vmem:[%s246 + $0x28] sm:$0xff]
        %v8034 = vld [vmem:[%s246 + $0x30] sm:$0xff]
        %v8035 = vld [vmem:[%s246 + $0x38] sm:$0xff]
        %8036 = vst [vmem:[%s303] sm:$0xff] %v8028
        %8037 = vst [vmem:[%s303 + $0x18] sm:$0xff] %v8029
        %8038 = vst [vmem:[%s303 + $0x30] sm:$0xff] %v8030
        %8039 = vst [vmem:[%s303 + $0x48] sm:$0xff] %v8031
        %8040 = vst [vmem:[%s303 + $0x60] sm:$0xff] %v8032
        %8041 = vst [vmem:[%s303 + $0x78] sm:$0xff] %v8033
        %8042 = vst [vmem:[%s303 + $0x90] sm:$0xff] %v8034
        %8043 = vst [vmem:[%s303 + $0xa8] sm:$0xff] %v8035
        %8044 = vmatprep.subr.mxu0 0.0
        %8045 = vmatpush1.msra.mxu0 %v7900
        %8046 = vmatprep.subr.mxu0 0.0
        %8047 = vmatpush1.msra.mxu0 %v7901
        %8048 = vmatprep.subr.mxu0 0.0
        %8049 = vmatpush1.msra.mxu0 %v7902
        %8050 = vmatprep.subr.mxu0 0.0
        %8051 = vmatpush1.msra.mxu0 %v7903
        %8052 = vmatprep.subr.mxu0 0.0
        %8053 = vmatpush1.msra.mxu0 %v7904
        %8054 = vmatprep.subr.mxu0 0.0
        %8055 = vmatpush1.msra.mxu0 %v7905
        %8056 = vmatprep.subr.mxu0 0.0
        %8057 = vmatpush1.msra.mxu0 %v7906
        %8058 = vmatprep.subr.mxu0 0.0
        %8059 = vmatpush1.msra.mxu0 %v7907
        %8060 = vmatprep.subr.mxu0 0.0
        %8061 = vmatpush1.msra.mxu0 %v7908
        %8062 = vmatprep.subr.mxu0 0.0
        %8063 = vmatpush1.msra.mxu0 %v7909
        %8064 = vmatprep.subr.mxu0 0.0
        %8065 = vmatpush1.msra.mxu0 %v7910
        %8066 = vmatprep.subr.mxu0 0.0
        %8067 = vmatpush1.msra.mxu0 %v7911
        %8068 = vmatprep.subr.mxu0 0.0
        %8069 = vmatpush1.msra.mxu0 %v7912
        %8070 = vmatprep.subr.mxu0 0.0
        %8071 = vmatpush1.msra.mxu0 %v7913
        %8072 = vmatprep.subr.mxu0 0.0
        %8073 = vmatpush1.msra.mxu0 %v7914
        %8074 = vmatprep.subr.mxu0 0.0
        %8075 = vmatpush1.msra.mxu0 %v7915
        %8076 = vmatprep.subr.mxu0 0.0
        %8077 = vmatpush1.msra.mxu0 0.0
        %8078 = vmatprep.subr.mxu0 0.0
        %8079 = vmatpush1.msra.mxu0 0.0
        %8080 = vmatprep.subr.mxu0 0.0
        %8081 = vmatpush1.msra.mxu0 0.0
        %8082 = vmatprep.subr.mxu0 0.0
        %8083 = vmatpush1.msra.mxu0 0.0
        %8084 = vmatprep.subr.mxu0 0.0
        %8085 = vmatpush1.msra.mxu0 0.0
        %8086 = vmatprep.subr.mxu0 0.0
        %8087 = vmatpush1.msra.mxu0 0.0
        %8088 = vmatprep.subr.mxu0 0.0
        %8089 = vmatpush1.msra.mxu0 0.0
        %8090 = vmatprep.subr.mxu0 0.0
        %8091 = vmatpush1.msra.mxu0 0.0
        %8092 = vmatprep.subr.mxu0 0.0
        %8093 = vmatpush1.msra.mxu0 0.0
        %8094 = vmatprep.subr.mxu0 0.0
        %8095 = vmatpush1.msra.mxu0 0.0
        %8096 = vmatprep.subr.mxu0 0.0
        %8097 = vmatpush1.msra.mxu0 0.0
        %8098 = vmatprep.subr.mxu0 0.0
        %8099 = vmatpush1.msra.mxu0 0.0
        %8100 = vmatprep.subr.mxu0 0.0
        %8101 = vmatpush1.msra.mxu0 0.0
        %8102 = vmatprep.subr.mxu0 0.0
        %8103 = vmatpush1.msra.mxu0 0.0
        %8104 = vmatprep.subr.mxu0 0.0
        %8105 = vmatpush1.msra.mxu0 0.0
        %8106 = vmatprep.subr.mxu0 0.0
        %8107 = vmatpush1.msra.mxu0 0.0
        %8108 = vmatprep.mubr.f32.mxu0 0.0
        %8109 = vmatmul.mubr.f32.gmra.mrb[0].mxu0 %v309
        %v8110 = vpop.f32.mrb[0].mxu0
        %v8111 = vadd.f32 0.0, %v8110
        %v8112 = vpop.f32.mrb[0].mxu0
        %8113 = vdwg.mxu0
        %8114 = vmatprep.subr.mxu0 0.0
        %8115 = vmatpush1.msra.mxu0 %v7916
        %8116 = vmatprep.subr.mxu0 0.0
        %8117 = vmatpush1.msra.mxu0 %v7917
        %8118 = vmatprep.subr.mxu0 0.0
        %8119 = vmatpush1.msra.mxu0 %v7918
        %8120 = vmatprep.subr.mxu0 0.0
        %8121 = vmatpush1.msra.mxu0 %v7919
        %8122 = vmatprep.subr.mxu0 0.0
        %8123 = vmatpush1.msra.mxu0 %v7920
        %8124 = vmatprep.subr.mxu0 0.0
        %8125 = vmatpush1.msra.mxu0 %v7921
        %8126 = vmatprep.subr.mxu0 0.0
        %8127 = vmatpush1.msra.mxu0 %v7922
        %8128 = vmatprep.subr.mxu0 0.0
        %8129 = vmatpush1.msra.mxu0 %v7923
        %8130 = vmatprep.subr.mxu0 0.0
        %8131 = vmatpush1.msra.mxu0 %v7924
        %8132 = vmatprep.subr.mxu0 0.0
        %8133 = vmatpush1.msra.mxu0 %v7925
        %8134 = vmatprep.subr.mxu0 0.0
        %8135 = vmatpush1.msra.mxu0 %v7926
        %8136 = vmatprep.subr.mxu0 0.0
        %8137 = vmatpush1.msra.mxu0 %v7927
        %8138 = vmatprep.subr.mxu0 0.0
        %8139 = vmatpush1.msra.mxu0 %v7928
        %8140 = vmatprep.subr.mxu0 0.0
        %8141 = vmatpush1.msra.mxu0 %v7929
        %8142 = vmatprep.subr.mxu0 0.0
        %8143 = vmatpush1.msra.mxu0 %v7930
        %8144 = vmatprep.subr.mxu0 0.0
        %8145 = vmatpush1.msra.mxu0 %v7931
        %8146 = vmatprep.subr.mxu0 0.0
        %8147 = vmatpush1.msra.mxu0 0.0
        %8148 = vmatprep.subr.mxu0 0.0
        %8149 = vmatpush1.msra.mxu0 0.0
        %8150 = vmatprep.subr.mxu0 0.0
        %8151 = vmatpush1.msra.mxu0 0.0
        %8152 = vmatprep.subr.mxu0 0.0
        %8153 = vmatpush1.msra.mxu0 0.0
        %8154 = vmatprep.subr.mxu0 0.0
        %8155 = vmatpush1.msra.mxu0 0.0
        %8156 = vmatprep.subr.mxu0 0.0
        %8157 = vmatpush1.msra.mxu0 0.0
        %8158 = vmatprep.subr.mxu0 0.0
        %8159 = vmatpush1.msra.mxu0 0.0
        %8160 = vmatprep.subr.mxu0 0.0
        %8161 = vmatpush1.msra.mxu0 0.0
        %8162 = vmatprep.subr.mxu0 0.0
        %8163 = vmatpush1.msra.mxu0 0.0
        %8164 = vmatprep.subr.mxu0 0.0
        %8165 = vmatpush1.msra.mxu0 0.0
        %8166 = vmatprep.subr.mxu0 0.0
        %8167 = vmatpush1.msra.mxu0 0.0
        %8168 = vmatprep.subr.mxu0 0.0
        %8169 = vmatpush1.msra.mxu0 0.0
        %8170 = vmatprep.subr.mxu0 0.0
        %8171 = vmatpush1.msra.mxu0 0.0
        %8172 = vmatprep.subr.mxu0 0.0
        %8173 = vmatpush1.msra.mxu0 0.0
        %8174 = vmatprep.subr.mxu0 0.0
        %8175 = vmatpush1.msra.mxu0 0.0
        %8176 = vmatprep.subr.mxu0 0.0
        %8177 = vmatpush1.msra.mxu0 0.0
        %8178 = vmatprep.mubr.f32.mxu0 0.0
        %8179 = vmatmul.mubr.f32.gmra.mrb[0].mxu0 %v310
        %v8180 = vpop.f32.mrb[0].mxu0
        %v8181 = vadd.f32 0.0, %v8180
        %v8182 = vpop.f32.mrb[0].mxu0
        %8183 = vdwg.mxu0
        %8184 = vmatprep.subr.mxu0 0.0
        %8185 = vmatpush1.msra.mxu0 %v7932
        %8186 = vmatprep.subr.mxu0 0.0
        %8187 = vmatpush1.msra.mxu0 %v7933
        %8188 = vmatprep.subr.mxu0 0.0
        %8189 = vmatpush1.msra.mxu0 %v7934
        %8190 = vmatprep.subr.mxu0 0.0
        %8191 = vmatpush1.msra.mxu0 %v7935
        %8192 = vmatprep.subr.mxu0 0.0
        %8193 = vmatpush1.msra.mxu0 %v7936
        %8194 = vmatprep.subr.mxu0 0.0
        %8195 = vmatpush1.msra.mxu0 %v7937
        %8196 = vmatprep.subr.mxu0 0.0
        %8197 = vmatpush1.msra.mxu0 %v7938
        %8198 = vmatprep.subr.mxu0 0.0
        %8199 = vmatpush1.msra.mxu0 %v7939
        %8200 = vmatprep.subr.mxu0 0.0
        %8201 = vmatpush1.msra.mxu0 %v7940
        %8202 = vmatprep.subr.mxu0 0.0
        %8203 = vmatpush1.msra.mxu0 %v7941
        %8204 = vmatprep.subr.mxu0 0.0
        %8205 = vmatpush1.msra.mxu0 %v7942
        %8206 = vmatprep.subr.mxu0 0.0
        %8207 = vmatpush1.msra.mxu0 %v7943
        %8208 = vmatprep.subr.mxu0 0.0
        %8209 = vmatpush1.msra.mxu0 %v7944
        %8210 = vmatprep.subr.mxu0 0.0
        %8211 = vmatpush1.msra.mxu0 %v7945
        %8212 = vmatprep.subr.mxu0 0.0
        %8213 = vmatpush1.msra.mxu0 %v7946
        %8214 = vmatprep.subr.mxu0 0.0
        %8215 = vmatpush1.msra.mxu0 %v7947
        %8216 = vmatprep.subr.mxu0 0.0
        %8217 = vmatpush1.msra.mxu0 0.0
        %8218 = vmatprep.subr.mxu0 0.0
        %8219 = vmatpush1.msra.mxu0 0.0
        %8220 = vmatprep.subr.mxu0 0.0
        %8221 = vmatpush1.msra.mxu0 0.0
        %8222 = vmatprep.subr.mxu0 0.0
        %8223 = vmatpush1.msra.mxu0 0.0
        %8224 = vmatprep.subr.mxu0 0.0
        %8225 = vmatpush1.msra.mxu0 0.0
        %8226 = vmatprep.subr.mxu0 0.0
        %8227 = vmatpush1.msra.mxu0 0.0
        %8228 = vmatprep.subr.mxu0 0.0
        %8229 = vmatpush1.msra.mxu0 0.0
        %8230 = vmatprep.subr.mxu0 0.0
        %8231 = vmatpush1.msra.mxu0 0.0
        %8232 = vmatprep.subr.mxu0 0.0
        %8233 = vmatpush1.msra.mxu0 0.0
        %8234 = vmatprep.subr.mxu0 0.0
        %8235 = vmatpush1.msra.mxu0 0.0
        %8236 = vmatprep.subr.mxu0 0.0
        %8237 = vmatpush1.msra.mxu0 0.0
        %8238 = vmatprep.subr.mxu0 0.0
        %8239 = vmatpush1.msra.mxu0 0.0
        %8240 = vmatprep.subr.mxu0 0.0
        %8241 = vmatpush1.msra.mxu0 0.0
        %8242 = vmatprep.subr.mxu0 0.0
        %8243 = vmatpush1.msra.mxu0 0.0
        %8244 = vmatprep.subr.mxu0 0.0
        %8245 = vmatpush1.msra.mxu0 0.0
        %8246 = vmatprep.subr.mxu0 0.0
        %8247 = vmatpush1.msra.mxu0 0.0
        %8248 = vmatprep.mubr.f32.mxu0 0.0
        %8249 = vmatmul.mubr.f32.gmra.mrb[0].mxu0 %v311
        %v8250 = vpop.f32.mrb[0].mxu0
        %v8251 = vadd.f32 0.0, %v8250
        %v8252 = vpop.f32.mrb[0].mxu0
        %8253 = vdwg.mxu0
        %8254 = vmatprep.subr.mxu0 0.0
        %8255 = vmatpush1.msra.mxu0 %v7948
        %8256 = vmatprep.subr.mxu0 0.0
        %8257 = vmatpush1.msra.mxu0 %v7949
        %8258 = vmatprep.subr.mxu0 0.0
        %8259 = vmatpush1.msra.mxu0 %v7950
        %8260 = vmatprep.subr.mxu0 0.0
        %8261 = vmatpush1.msra.mxu0 %v7951
        %8262 = vmatprep.subr.mxu0 0.0
        %8263 = vmatpush1.msra.mxu0 %v7952
        %8264 = vmatprep.subr.mxu0 0.0
        %8265 = vmatpush1.msra.mxu0 %v7953
        %8266 = vmatprep.subr.mxu0 0.0
        %8267 = vmatpush1.msra.mxu0 %v7954
        %8268 = vmatprep.subr.mxu0 0.0
        %8269 = vmatpush1.msra.mxu0 %v7955
        %8270 = vmatprep.subr.mxu0 0.0
        %8271 = vmatpush1.msra.mxu0 %v7956
        %8272 = vmatprep.subr.mxu0 0.0
        %8273 = vmatpush1.msra.mxu0 %v7957
        %8274 = vmatprep.subr.mxu0 0.0
        %8275 = vmatpush1.msra.mxu0 %v7958
        %8276 = vmatprep.subr.mxu0 0.0
        %8277 = vmatpush1.msra.mxu0 %v7959
        %8278 = vmatprep.subr.mxu0 0.0
        %8279 = vmatpush1.msra.mxu0 %v7960
        %8280 = vmatprep.subr.mxu0 0.0
        %8281 = vmatpush1.msra.mxu0 %v7961
        %8282 = vmatprep.subr.mxu0 0.0
        %8283 = vmatpush1.msra.mxu0 %v7962
        %8284 = vmatprep.subr.mxu0 0.0
        %8285 = vmatpush1.msra.mxu0 %v7963
        %8286 = vmatprep.subr.mxu0 0.0
        %8287 = vmatpush1.msra.mxu0 0.0
        %8288 = vmatprep.subr.mxu0 0.0
        %8289 = vmatpush1.msra.mxu0 0.0
        %8290 = vmatprep.subr.mxu0 0.0
        %8291 = vmatpush1.msra.mxu0 0.0
        %8292 = vmatprep.subr.mxu0 0.0
        %8293 = vmatpush1.msra.mxu0 0.0
        %8294 = vmatprep.subr.mxu0 0.0
        %8295 = vmatpush1.msra.mxu0 0.0
        %8296 = vmatprep.subr.mxu0 0.0
        %8297 = vmatpush1.msra.mxu0 0.0
        %8298 = vmatprep.subr.mxu0 0.0
        %8299 = vmatpush1.msra.mxu0 0.0
        %8300 = vmatprep.subr.mxu0 0.0
        %8301 = vmatpush1.msra.mxu0 0.0
        %8302 = vmatprep.subr.mxu0 0.0
        %8303 = vmatpush1.msra.mxu0 0.0
        %8304 = vmatprep.subr.mxu0 0.0
        %8305 = vmatpush1.msra.mxu0 0.0
        %8306 = vmatprep.subr.mxu0 0.0
        %8307 = vmatpush1.msra.mxu0 0.0
        %8308 = vmatprep.subr.mxu0 0.0
        %8309 = vmatpush1.msra.mxu0 0.0
        %8310 = vmatprep.subr.mxu0 0.0
        %8311 = vmatpush1.msra.mxu0 0.0
        %8312 = vmatprep.subr.mxu0 0.0
        %8313 = vmatpush1.msra.mxu0 0.0
        %8314 = vmatprep.subr.mxu0 0.0
        %8315 = vmatpush1.msra.mxu0 0.0
        %8316 = vmatprep.subr.mxu0 0.0
        %8317 = vmatpush1.msra.mxu0 0.0
        %8318 = vmatprep.mubr.f32.mxu0 0.0
        %8319 = vmatmul.mubr.f32.gmra.mrb[0].mxu0 %v312
        %v8320 = vpop.f32.mrb[0].mxu0
        %v8321 = vadd.f32 0.0, %v8320
        %v8322 = vpop.f32.mrb[0].mxu0
        %8323 = vdwg.mxu0
        %8324 = vmatprep.subr.mxu0 0.0
        %8325 = vmatpush1.msra.mxu0 %v7964
        %8326 = vmatprep.subr.mxu0 0.0
        %8327 = vmatpush1.msra.mxu0 %v7965
        %8328 = vmatprep.subr.mxu0 0.0
        %8329 = vmatpush1.msra.mxu0 %v7966
        %8330 = vmatprep.subr.mxu0 0.0
        %8331 = vmatpush1.msra.mxu0 %v7967
        %8332 = vmatprep.subr.mxu0 0.0
        %8333 = vmatpush1.msra.mxu0 %v7968
        %8334 = vmatprep.subr.mxu0 0.0
        %8335 = vmatpush1.msra.mxu0 %v7969
        %8336 = vmatprep.subr.mxu0 0.0
        %8337 = vmatpush1.msra.mxu0 %v7970
        %8338 = vmatprep.subr.mxu0 0.0
        %8339 = vmatpush1.msra.mxu0 %v7971
        %8340 = vmatprep.subr.mxu0 0.0
        %8341 = vmatpush1.msra.mxu0 %v7972
        %8342 = vmatprep.subr.mxu0 0.0
        %8343 = vmatpush1.msra.mxu0 %v7973
        %8344 = vmatprep.subr.mxu0 0.0
        %8345 = vmatpush1.msra.mxu0 %v7974
        %8346 = vmatprep.subr.mxu0 0.0
        %8347 = vmatpush1.msra.mxu0 %v7975
        %8348 = vmatprep.subr.mxu0 0.0
        %8349 = vmatpush1.msra.mxu0 %v7976
        %8350 = vmatprep.subr.mxu0 0.0
        %8351 = vmatpush1.msra.mxu0 %v7977
        %8352 = vmatprep.subr.mxu0 0.0
        %8353 = vmatpush1.msra.mxu0 %v7978
        %8354 = vmatprep.subr.mxu0 0.0
        %8355 = vmatpush1.msra.mxu0 %v7979
        %8356 = vmatprep.subr.mxu0 0.0
        %8357 = vmatpush1.msra.mxu0 0.0
        %8358 = vmatprep.subr.mxu0 0.0
        %8359 = vmatpush1.msra.mxu0 0.0
        %8360 = vmatprep.subr.mxu0 0.0
        %8361 = vmatpush1.msra.mxu0 0.0
        %8362 = vmatprep.subr.mxu0 0.0
        %8363 = vmatpush1.msra.mxu0 0.0
        %8364 = vmatprep.subr.mxu0 0.0
        %8365 = vmatpush1.msra.mxu0 0.0
        %8366 = vmatprep.subr.mxu0 0.0
        %8367 = vmatpush1.msra.mxu0 0.0
        %8368 = vmatprep.subr.mxu0 0.0
        %8369 = vmatpush1.msra.mxu0 0.0
        %8370 = vmatprep.subr.mxu0 0.0
        %8371 = vmatpush1.msra.mxu0 0.0
        %8372 = vmatprep.subr.mxu0 0.0
        %8373 = vmatpush1.msra.mxu0 0.0
        %8374 = vmatprep.subr.mxu0 0.0
        %8375 = vmatpush1.msra.mxu0 0.0
        %8376 = vmatprep.subr.mxu0 0.0
        %8377 = vmatpush1.msra.mxu0 0.0
        %8378 = vmatprep.subr.mxu0 0.0
        %8379 = vmatpush1.msra.mxu0 0.0
        %8380 = vmatprep.subr.mxu0 0.0
        %8381 = vmatpush1.msra.mxu0 0.0
        %8382 = vmatprep.subr.mxu0 0.0
        %8383 = vmatpush1.msra.mxu0 0.0
        %8384 = vmatprep.subr.mxu0 0.0
        %8385 = vmatpush1.msra.mxu0 0.0
        %8386 = vmatprep.subr.mxu0 0.0
        %8387 = vmatpush1.msra.mxu0 0.0
        %8388 = vmatprep.mubr.f32.mxu0 0.0
        %8389 = vmatmul.mubr.f32.gmra.mrb[0].mxu0 %v313
        %v8390 = vpop.f32.mrb[0].mxu0
        %v8391 = vadd.f32 0.0, %v8390
        %v8392 = vpop.f32.mrb[0].mxu0
        %8393 = vdwg.mxu0
        %8394 = vmatprep.subr.mxu0 0.0
        %8395 = vmatpush1.msra.mxu0 %v7980
        %8396 = vmatprep.subr.mxu0 0.0
        %8397 = vmatpush1.msra.mxu0 %v7981
        %8398 = vmatprep.subr.mxu0 0.0
        %8399 = vmatpush1.msra.mxu0 %v7982
        %8400 = vmatprep.subr.mxu0 0.0
        %8401 = vmatpush1.msra.mxu0 %v7983
        %8402 = vmatprep.subr.mxu0 0.0
        %8403 = vmatpush1.msra.mxu0 %v7984
        %8404 = vmatprep.subr.mxu0 0.0
        %8405 = vmatpush1.msra.mxu0 %v7985
        %8406 = vmatprep.subr.mxu0 0.0
        %8407 = vmatpush1.msra.mxu0 %v7986
        %8408 = vmatprep.subr.mxu0 0.0
        %8409 = vmatpush1.msra.mxu0 %v7987
        %8410 = vmatprep.subr.mxu0 0.0
        %8411 = vmatpush1.msra.mxu0 %v7988
        %8412 = vmatprep.subr.mxu0 0.0
        %8413 = vmatpush1.msra.mxu0 %v7989
        %8414 = vmatprep.subr.mxu0 0.0
        %8415 = vmatpush1.msra.mxu0 %v7990
        %8416 = vmatprep.subr.mxu0 0.0
        %8417 = vmatpush1.msra.mxu0 %v7991
        %8418 = vmatprep.subr.mxu0 0.0
        %8419 = vmatpush1.msra.mxu0 %v7992
        %8420 = vmatprep.subr.mxu0 0.0
        %8421 = vmatpush1.msra.mxu0 %v7993
        %8422 = vmatprep.subr.mxu0 0.0
        %8423 = vmatpush1.msra.mxu0 %v7994
        %8424 = vmatprep.subr.mxu0 0.0
        %8425 = vmatpush1.msra.mxu0 %v7995
        %8426 = vmatprep.subr.mxu0 0.0
        %8427 = vmatpush1.msra.mxu0 0.0
        %8428 = vmatprep.subr.mxu0 0.0
        %8429 = vmatpush1.msra.mxu0 0.0
        %8430 = vmatprep.subr.mxu0 0.0
        %8431 = vmatpush1.msra.mxu0 0.0
        %8432 = vmatprep.subr.mxu0 0.0
        %8433 = vmatpush1.msra.mxu0 0.0
        %8434 = vmatprep.subr.mxu0 0.0
        %8435 = vmatpush1.msra.mxu0 0.0
        %8436 = vmatprep.subr.mxu0 0.0
        %8437 = vmatpush1.msra.mxu0 0.0
        %8438 = vmatprep.subr.mxu0 0.0
        %8439 = vmatpush1.msra.mxu0 0.0
        %8440 = vmatprep.subr.mxu0 0.0
        %8441 = vmatpush1.msra.mxu0 0.0
        %8442 = vmatprep.subr.mxu0 0.0
        %8443 = vmatpush1.msra.mxu0 0.0
        %8444 = vmatprep.subr.mxu0 0.0
        %8445 = vmatpush1.msra.mxu0 0.0
        %8446 = vmatprep.subr.mxu0 0.0
        %8447 = vmatpush1.msra.mxu0 0.0
        %8448 = vmatprep.subr.mxu0 0.0
        %8449 = vmatpush1.msra.mxu0 0.0
        %8450 = vmatprep.subr.mxu0 0.0
        %8451 = vmatpush1.msra.mxu0 0.0
        %8452 = vmatprep.subr.mxu0 0.0
        %8453 = vmatpush1.msra.mxu0 0.0
        %8454 = vmatprep.subr.mxu0 0.0
        %8455 = vmatpush1.msra.mxu0 0.0
        %8456 = vmatprep.subr.mxu0 0.0
        %8457 = vmatpush1.msra.mxu0 0.0
        %8458 = vmatprep.mubr.f32.mxu0 0.0
        %8459 = vmatmul.mubr.f32.gmra.mrb[0].mxu0 %v314
        %v8460 = vpop.f32.mrb[0].mxu0
        %v8461 = vadd.f32 0.0, %v8460
        %v8462 = vpop.f32.mrb[0].mxu0
        %8463 = vdwg.mxu0
        %8464 = vmatprep.subr.mxu0 0.0
        %8465 = vmatpush1.msra.mxu0 %v7996
        %8466 = vmatprep.subr.mxu0 0.0
        %8467 = vmatpush1.msra.mxu0 %v7997
        %8468 = vmatprep.subr.mxu0 0.0
        %8469 = vmatpush1.msra.mxu0 %v7998
        %8470 = vmatprep.subr.mxu0 0.0
        %8471 = vmatpush1.msra.mxu0 %v7999
        %8472 = vmatprep.subr.mxu0 0.0
        %8473 = vmatpush1.msra.mxu0 %v8000
        %8474 = vmatprep.subr.mxu0 0.0
        %8475 = vmatpush1.msra.mxu0 %v8001
        %8476 = vmatprep.subr.mxu0 0.0
        %8477 = vmatpush1.msra.mxu0 %v8002
        %8478 = vmatprep.subr.mxu0 0.0
        %8479 = vmatpush1.msra.mxu0 %v8003
        %8480 = vmatprep.subr.mxu0 0.0
        %8481 = vmatpush1.msra.mxu0 %v8004
        %8482 = vmatprep.subr.mxu0 0.0
        %8483 = vmatpush1.msra.mxu0 %v8005
        %8484 = vmatprep.subr.mxu0 0.0
        %8485 = vmatpush1.msra.mxu0 %v8006
        %8486 = vmatprep.subr.mxu0 0.0
        %8487 = vmatpush1.msra.mxu0 %v8007
        %8488 = vmatprep.subr.mxu0 0.0
        %8489 = vmatpush1.msra.mxu0 %v8008
        %8490 = vmatprep.subr.mxu0 0.0
        %8491 = vmatpush1.msra.mxu0 %v8009
        %8492 = vmatprep.subr.mxu0 0.0
        %8493 = vmatpush1.msra.mxu0 %v8010
        %8494 = vmatprep.subr.mxu0 0.0
        %8495 = vmatpush1.msra.mxu0 %v8011
        %8496 = vmatprep.subr.mxu0 0.0
        %8497 = vmatpush1.msra.mxu0 0.0
        %8498 = vmatprep.subr.mxu0 0.0
        %8499 = vmatpush1.msra.mxu0 0.0
        %8500 = vmatprep.subr.mxu0 0.0
        %8501 = vmatpush1.msra.mxu0 0.0
        %8502 = vmatprep.subr.mxu0 0.0
        %8503 = vmatpush1.msra.mxu0 0.0
        %8504 = vmatprep.subr.mxu0 0.0
        %8505 = vmatpush1.msra.mxu0 0.0
        %8506 = vmatprep.subr.mxu0 0.0
        %8507 = vmatpush1.msra.mxu0 0.0
        %8508 = vmatprep.subr.mxu0 0.0
        %8509 = vmatpush1.msra.mxu0 0.0
        %8510 = vmatprep.subr.mxu0 0.0
        %8511 = vmatpush1.msra.mxu0 0.0
        %8512 = vmatprep.subr.mxu0 0.0
        %8513 = vmatpush1.msra.mxu0 0.0
        %8514 = vmatprep.subr.mxu0 0.0
        %8515 = vmatpush1.msra.mxu0 0.0
        %8516 = vmatprep.subr.mxu0 0.0
        %8517 = vmatpush1.msra.mxu0 0.0
        %8518 = vmatprep.subr.mxu0 0.0
        %8519 = vmatpush1.msra.mxu0 0.0
        %8520 = vmatprep.subr.mxu0 0.0
        %8521 = vmatpush1.msra.mxu0 0.0
        %8522 = vmatprep.subr.mxu0 0.0
        %8523 = vmatpush1.msra.mxu0 0.0
        %8524 = vmatprep.subr.mxu0 0.0
        %8525 = vmatpush1.msra.mxu0 0.0
        %8526 = vmatprep.subr.mxu0 0.0
        %8527 = vmatpush1.msra.mxu0 0.0
        %8528 = vmatprep.mubr.f32.mxu0 0.0
        %8529 = vmatmul.mubr.f32.gmra.mrb[0].mxu0 %v315
        %v8530 = vpop.f32.mrb[0].mxu0
        %v8531 = vadd.f32 0.0, %v8530
        %v8532 = vpop.f32.mrb[0].mxu0
        %8533 = vdwg.mxu0
        %8534 = vmatprep.subr.mxu0 0.0
        %8535 = vmatpush1.msra.mxu0 %v8012
        %8536 = vmatprep.subr.mxu0 0.0
        %8537 = vmatpush1.msra.mxu0 %v8013
        %8538 = vmatprep.subr.mxu0 0.0
        %8539 = vmatpush1.msra.mxu0 %v8014
        %8540 = vmatprep.subr.mxu0 0.0
        %8541 = vmatpush1.msra.mxu0 %v8015
        %8542 = vmatprep.subr.mxu0 0.0
        %8543 = vmatpush1.msra.mxu0 %v8016
        %8544 = vmatprep.subr.mxu0 0.0
        %8545 = vmatpush1.msra.mxu0 %v8017
        %8546 = vmatprep.subr.mxu0 0.0
        %8547 = vmatpush1.msra.mxu0 %v8018
        %8548 = vmatprep.subr.mxu0 0.0
        %8549 = vmatpush1.msra.mxu0 %v8019
        %8550 = vmatprep.subr.mxu0 0.0
        %8551 = vmatpush1.msra.mxu0 %v8020
        %8552 = vmatprep.subr.mxu0 0.0
        %8553 = vmatpush1.msra.mxu0 %v8021
        %8554 = vmatprep.subr.mxu0 0.0
        %8555 = vmatpush1.msra.mxu0 %v8022
        %8556 = vmatprep.subr.mxu0 0.0
        %8557 = vmatpush1.msra.mxu0 %v8023
        %8558 = vmatprep.subr.mxu0 0.0
        %8559 = vmatpush1.msra.mxu0 %v8024
        %8560 = vmatprep.subr.mxu0 0.0
        %8561 = vmatpush1.msra.mxu0 %v8025
        %8562 = vmatprep.subr.mxu0 0.0
        %8563 = vmatpush1.msra.mxu0 %v8026
        %8564 = vmatprep.subr.mxu0 0.0
        %8565 = vmatpush1.msra.mxu0 %v8027
        %8566 = vmatprep.subr.mxu0 0.0
        %8567 = vmatpush1.msra.mxu0 0.0
        %8568 = vmatprep.subr.mxu0 0.0
        %8569 = vmatpush1.msra.mxu0 0.0
        %8570 = vmatprep.subr.mxu0 0.0
        %8571 = vmatpush1.msra.mxu0 0.0
        %8572 = vmatprep.subr.mxu0 0.0
        %8573 = vmatpush1.msra.mxu0 0.0
        %8574 = vmatprep.subr.mxu0 0.0
        %8575 = vmatpush1.msra.mxu0 0.0
        %8576 = vmatprep.subr.mxu0 0.0
        %8577 = vmatpush1.msra.mxu0 0.0
        %8578 = vmatprep.subr.mxu0 0.0
        %8579 = vmatpush1.msra.mxu0 0.0
        %8580 = vmatprep.subr.mxu0 0.0
        %8581 = vmatpush1.msra.mxu0 0.0
        %8582 = vmatprep.subr.mxu0 0.0
        %8583 = vmatpush1.msra.mxu0 0.0
        %8584 = vmatprep.subr.mxu0 0.0
        %8585 = vmatpush1.msra.mxu0 0.0
        %8586 = vmatprep.subr.mxu0 0.0
        %8587 = vmatpush1.msra.mxu0 0.0
        %8588 = vmatprep.subr.mxu0 0.0
        %8589 = vmatpush1.msra.mxu0 0.0
        %8590 = vmatprep.subr.mxu0 0.0
        %8591 = vmatpush1.msra.mxu0 0.0
        %8592 = vmatprep.subr.mxu0 0.0
        %8593 = vmatpush1.msra.mxu0 0.0
        %8594 = vmatprep.subr.mxu0 0.0
        %8595 = vmatpush1.msra.mxu0 0.0
        %8596 = vmatprep.subr.mxu0 0.0
        %8597 = vmatpush1.msra.mxu0 0.0
        %8598 = vmatprep.mubr.f32.mxu0 0.0
        %8599 = vmatmul.mubr.f32.gmra.mrb[0].mxu0 %v316
        %v8600 = vpop.f32.mrb[0].mxu0
        %v8601 = vadd.f32 0.0, %v8600
        %v8602 = vpop.f32.mrb[0].mxu0
        %8603 = vdwg.mxu0
        %v8604 = vmul.f32 %v8111, 0.95
        %v8605 = vmul.f32 %v8181, 0.95
        %v8606 = vmul.f32 %v8251, 0.95
        %v8607 = vmul.f32 %v8321, 0.95
        %v8608 = vmul.f32 %v8391, 0.95
        %v8609 = vmul.f32 %v8461, 0.95
        %v8610 = vmul.f32 %v8531, 0.95
        %v8611 = vmul.f32 %v8601, 0.95
        %v8612 = vadd.f32 %v4188, %v8604
        %v8613 = vadd.f32 %v4189, %v8605
        %v8614 = vadd.f32 %v4190, %v8606
        %v8615 = vadd.f32 %v4191, %v8607
        %v8616 = vadd.f32 %v4192, %v8608
        %v8617 = vadd.f32 %v4193, %v8609
        %v8618 = vadd.f32 %v4194, %v8610
        %v8619 = vadd.f32 %v4195, %v8611
        %8620 = vst [vmem:[%s303 + $0x8] sm:$0xff] %v8612
        %8621 = vst [vmem:[%s303 + $0x20] sm:$0xff] %v8613
        %8622 = vst [vmem:[%s303 + $0x38] sm:$0xff] %v8614
        %8623 = vst [vmem:[%s303 + $0x50] sm:$0xff] %v8615
        %8624 = vst [vmem:[%s303 + $0x68] sm:$0xff] %v8616
        %8625 = vst [vmem:[%s303 + $0x80] sm:$0xff] %v8617
        %8626 = vst [vmem:[%s303 + $0x98] sm:$0xff] %v8618
        %8627 = vst [vmem:[%s303 + $0xb0] sm:$0xff] %v8619
        %8628 = vmatprep.subr.mxu0 0.0
        %8629 = vmatpush1.msra.mxu0 %v7900
        %8630 = vmatprep.subr.mxu0 0.0
        %8631 = vmatpush1.msra.mxu0 %v7901
        %8632 = vmatprep.subr.mxu0 0.0
        %8633 = vmatpush1.msra.mxu0 %v7902
        %8634 = vmatprep.subr.mxu0 0.0
        %8635 = vmatpush1.msra.mxu0 %v7903
        %8636 = vmatprep.subr.mxu0 0.0
        %8637 = vmatpush1.msra.mxu0 %v7904
        %8638 = vmatprep.subr.mxu0 0.0
        %8639 = vmatpush1.msra.mxu0 %v7905
        %8640 = vmatprep.subr.mxu0 0.0
        %8641 = vmatpush1.msra.mxu0 %v7906
        %8642 = vmatprep.subr.mxu0 0.0
        %8643 = vmatpush1.msra.mxu0 %v7907
        %8644 = vmatprep.subr.mxu0 0.0
        %8645 = vmatpush1.msra.mxu0 %v7908
        %8646 = vmatprep.subr.mxu0 0.0
        %8647 = vmatpush1.msra.mxu0 %v7909
        %8648 = vmatprep.subr.mxu0 0.0
        %8649 = vmatpush1.msra.mxu0 %v7910
        %8650 = vmatprep.subr.mxu0 0.0
        %8651 = vmatpush1.msra.mxu0 %v7911
        %8652 = vmatprep.subr.mxu0 0.0
        %8653 = vmatpush1.msra.mxu0 %v7912
        %8654 = vmatprep.subr.mxu0 0.0
        %8655 = vmatpush1.msra.mxu0 %v7913
        %8656 = vmatprep.subr.mxu0 0.0
        %8657 = vmatpush1.msra.mxu0 %v7914
        %8658 = vmatprep.subr.mxu0 0.0
        %8659 = vmatpush1.msra.mxu0 %v7915
        %8660 = vmatprep.subr.mxu0 0.0
        %8661 = vmatpush1.msra.mxu0 0.0
        %8662 = vmatprep.subr.mxu0 0.0
        %8663 = vmatpush1.msra.mxu0 0.0
        %8664 = vmatprep.subr.mxu0 0.0
        %8665 = vmatpush1.msra.mxu0 0.0
        %8666 = vmatprep.subr.mxu0 0.0
        %8667 = vmatpush1.msra.mxu0 0.0
        %8668 = vmatprep.subr.mxu0 0.0
        %8669 = vmatpush1.msra.mxu0 0.0
        %8670 = vmatprep.subr.mxu0 0.0
        %8671 = vmatpush1.msra.mxu0 0.0
        %8672 = vmatprep.subr.mxu0 0.0
        %8673 = vmatpush1.msra.mxu0 0.0
        %8674 = vmatprep.subr.mxu0 0.0
        %8675 = vmatpush1.msra.mxu0 0.0
        %8676 = vmatprep.subr.mxu0 0.0
        %8677 = vmatpush1.msra.mxu0 0.0
        %8678 = vmatprep.subr.mxu0 0.0
        %8679 = vmatpush1.msra.mxu0 0.0
        %8680 = vmatprep.subr.mxu0 0.0
        %8681 = vmatpush1.msra.mxu0 0.0
        %8682 = vmatprep.subr.mxu0 0.0
        %8683 = vmatpush1.msra.mxu0 0.0
        %8684 = vmatprep.subr.mxu0 0.0
        %8685 = vmatpush1.msra.mxu0 0.0
        %8686 = vmatprep.subr.mxu0 0.0
        %8687 = vmatpush1.msra.mxu0 0.0
        %8688 = vmatprep.subr.mxu0 0.0
        %8689 = vmatpush1.msra.mxu0 0.0
        %8690 = vmatprep.subr.mxu0 0.0
        %8691 = vmatpush1.msra.mxu0 0.0
        %8692 = vmatprep.mubr.f32.mxu0 0.0
        %8693 = vmatmul.mubr.f32.gmra.mrb[0].mxu0 %v8612
        %v8694 = vpop.f32.mrb[0].mxu0
        %v8695 = vadd.f32 0.0, %v8694
        %v8696 = vpop.f32.mrb[0].mxu0
        %8697 = vdwg.mxu0
        %8698 = vmatprep.subr.mxu0 0.0
        %8699 = vmatpush1.msra.mxu0 %v7916
        %8700 = vmatprep.subr.mxu0 0.0
        %8701 = vmatpush1.msra.mxu0 %v7917
        %8702 = vmatprep.subr.mxu0 0.0
        %8703 = vmatpush1.msra.mxu0 %v7918
        %8704 = vmatprep.subr.mxu0 0.0
        %8705 = vmatpush1.msra.mxu0 %v7919
        %8706 = vmatprep.subr.mxu0 0.0
        %8707 = vmatpush1.msra.mxu0 %v7920
        %8708 = vmatprep.subr.mxu0 0.0
        %8709 = vmatpush1.msra.mxu0 %v7921
        %8710 = vmatprep.subr.mxu0 0.0
        %8711 = vmatpush1.msra.mxu0 %v7922
        %8712 = vmatprep.subr.mxu0 0.0
        %8713 = vmatpush1.msra.mxu0 %v7923
        %8714 = vmatprep.subr.mxu0 0.0
        %8715 = vmatpush1.msra.mxu0 %v7924
        %8716 = vmatprep.subr.mxu0 0.0
        %8717 = vmatpush1.msra.mxu0 %v7925
        %8718 = vmatprep.subr.mxu0 0.0
        %8719 = vmatpush1.msra.mxu0 %v7926
        %8720 = vmatprep.subr.mxu0 0.0
        %8721 = vmatpush1.msra.mxu0 %v7927
        %8722 = vmatprep.subr.mxu0 0.0
        %8723 = vmatpush1.msra.mxu0 %v7928
        %8724 = vmatprep.subr.mxu0 0.0
        %8725 = vmatpush1.msra.mxu0 %v7929
        %8726 = vmatprep.subr.mxu0 0.0
        %8727 = vmatpush1.msra.mxu0 %v7930
        %8728 = vmatprep.subr.mxu0 0.0
        %8729 = vmatpush1.msra.mxu0 %v7931
        %8730 = vmatprep.subr.mxu0 0.0
        %8731 = vmatpush1.msra.mxu0 0.0
        %8732 = vmatprep.subr.mxu0 0.0
        %8733 = vmatpush1.msra.mxu0 0.0
        %8734 = vmatprep.subr.mxu0 0.0
        %8735 = vmatpush1.msra.mxu0 0.0
        %8736 = vmatprep.subr.mxu0 0.0
        %8737 = vmatpush1.msra.mxu0 0.0
        %8738 = vmatprep.subr.mxu0 0.0
        %8739 = vmatpush1.msra.mxu0 0.0
        %8740 = vmatprep.subr.mxu0 0.0
        %8741 = vmatpush1.msra.mxu0 0.0
        %8742 = vmatprep.subr.mxu0 0.0
        %8743 = vmatpush1.msra.mxu0 0.0
        %8744 = vmatprep.subr.mxu0 0.0
        %8745 = vmatpush1.msra.mxu0 0.0
        %8746 = vmatprep.subr.mxu0 0.0
        %8747 = vmatpush1.msra.mxu0 0.0
        %8748 = vmatprep.subr.mxu0 0.0
        %8749 = vmatpush1.msra.mxu0 0.0
        %8750 = vmatprep.subr.mxu0 0.0
        %8751 = vmatpush1.msra.mxu0 0.0
        %8752 = vmatprep.subr.mxu0 0.0
        %8753 = vmatpush1.msra.mxu0 0.0
        %8754 = vmatprep.subr.mxu0 0.0
        %8755 = vmatpush1.msra.mxu0 0.0
        %8756 = vmatprep.subr.mxu0 0.0
        %8757 = vmatpush1.msra.mxu0 0.0
        %8758 = vmatprep.subr.mxu0 0.0
        %8759 = vmatpush1.msra.mxu0 0.0
        %8760 = vmatprep.subr.mxu0 0.0
        %8761 = vmatpush1.msra.mxu0 0.0
        %8762 = vmatprep.mubr.f32.mxu0 0.0
        %8763 = vmatmul.mubr.f32.gmra.mrb[0].mxu0 %v8613
        %v8764 = vpop.f32.mrb[0].mxu0
        %v8765 = vadd.f32 0.0, %v8764
        %v8766 = vpop.f32.mrb[0].mxu0
        %8767 = vdwg.mxu0
        %8768 = vmatprep.subr.mxu0 0.0
        %8769 = vmatpush1.msra.mxu0 %v7932
        %8770 = vmatprep.subr.mxu0 0.0
        %8771 = vmatpush1.msra.mxu0 %v7933
        %8772 = vmatprep.subr.mxu0 0.0
        %8773 = vmatpush1.msra.mxu0 %v7934
        %8774 = vmatprep.subr.mxu0 0.0
        %8775 = vmatpush1.msra.mxu0 %v7935
        %8776 = vmatprep.subr.mxu0 0.0
        %8777 = vmatpush1.msra.mxu0 %v7936
        %8778 = vmatprep.subr.mxu0 0.0
        %8779 = vmatpush1.msra.mxu0 %v7937
        %8780 = vmatprep.subr.mxu0 0.0
        %8781 = vmatpush1.msra.mxu0 %v7938
        %8782 = vmatprep.subr.mxu0 0.0
        %8783 = vmatpush1.msra.mxu0 %v7939
        %8784 = vmatprep.subr.mxu0 0.0
        %8785 = vmatpush1.msra.mxu0 %v7940
        %8786 = vmatprep.subr.mxu0 0.0
        %8787 = vmatpush1.msra.mxu0 %v7941
        %8788 = vmatprep.subr.mxu0 0.0
        %8789 = vmatpush1.msra.mxu0 %v7942
        %8790 = vmatprep.subr.mxu0 0.0
        %8791 = vmatpush1.msra.mxu0 %v7943
        %8792 = vmatprep.subr.mxu0 0.0
        %8793 = vmatpush1.msra.mxu0 %v7944
        %8794 = vmatprep.subr.mxu0 0.0
        %8795 = vmatpush1.msra.mxu0 %v7945
        %8796 = vmatprep.subr.mxu0 0.0
        %8797 = vmatpush1.msra.mxu0 %v7946
        %8798 = vmatprep.subr.mxu0 0.0
        %8799 = vmatpush1.msra.mxu0 %v7947
        %8800 = vmatprep.subr.mxu0 0.0
        %8801 = vmatpush1.msra.mxu0 0.0
        %8802 = vmatprep.subr.mxu0 0.0
        %8803 = vmatpush1.msra.mxu0 0.0
        %8804 = vmatprep.subr.mxu0 0.0
        %8805 = vmatpush1.msra.mxu0 0.0
        %8806 = vmatprep.subr.mxu0 0.0
        %8807 = vmatpush1.msra.mxu0 0.0
        %8808 = vmatprep.subr.mxu0 0.0
        %8809 = vmatpush1.msra.mxu0 0.0
        %8810 = vmatprep.subr.mxu0 0.0
        %8811 = vmatpush1.msra.mxu0 0.0
        %8812 = vmatprep.subr.mxu0 0.0
        %8813 = vmatpush1.msra.mxu0 0.0
        %8814 = vmatprep.subr.mxu0 0.0
        %8815 = vmatpush1.msra.mxu0 0.0
        %8816 = vmatprep.subr.mxu0 0.0
        %8817 = vmatpush1.msra.mxu0 0.0
        %8818 = vmatprep.subr.mxu0 0.0
        %8819 = vmatpush1.msra.mxu0 0.0
        %8820 = vmatprep.subr.mxu0 0.0
        %8821 = vmatpush1.msra.mxu0 0.0
        %8822 = vmatprep.subr.mxu0 0.0
        %8823 = vmatpush1.msra.mxu0 0.0
        %8824 = vmatprep.subr.mxu0 0.0
        %8825 = vmatpush1.msra.mxu0 0.0
        %8826 = vmatprep.subr.mxu0 0.0
        %8827 = vmatpush1.msra.mxu0 0.0
        %8828 = vmatprep.subr.mxu0 0.0
        %8829 = vmatpush1.msra.mxu0 0.0
        %8830 = vmatprep.subr.mxu0 0.0
        %8831 = vmatpush1.msra.mxu0 0.0
        %8832 = vmatprep.mubr.f32.mxu0 0.0
        %8833 = vmatmul.mubr.f32.gmra.mrb[0].mxu0 %v8614
        %v8834 = vpop.f32.mrb[0].mxu0
        %v8835 = vadd.f32 0.0, %v8834
        %v8836 = vpop.f32.mrb[0].mxu0
        %8837 = vdwg.mxu0
        %8838 = vmatprep.subr.mxu0 0.0
        %8839 = vmatpush1.msra.mxu0 %v7948
        %8840 = vmatprep.subr.mxu0 0.0
        %8841 = vmatpush1.msra.mxu0 %v7949
        %8842 = vmatprep.subr.mxu0 0.0
        %8843 = vmatpush1.msra.mxu0 %v7950
        %8844 = vmatprep.subr.mxu0 0.0
        %8845 = vmatpush1.msra.mxu0 %v7951
        %8846 = vmatprep.subr.mxu0 0.0
        %8847 = vmatpush1.msra.mxu0 %v7952
        %8848 = vmatprep.subr.mxu0 0.0
        %8849 = vmatpush1.msra.mxu0 %v7953
        %8850 = vmatprep.subr.mxu0 0.0
        %8851 = vmatpush1.msra.mxu0 %v7954
        %8852 = vmatprep.subr.mxu0 0.0
        %8853 = vmatpush1.msra.mxu0 %v7955
        %8854 = vmatprep.subr.mxu0 0.0
        %8855 = vmatpush1.msra.mxu0 %v7956
        %8856 = vmatprep.subr.mxu0 0.0
        %8857 = vmatpush1.msra.mxu0 %v7957
        %8858 = vmatprep.subr.mxu0 0.0
        %8859 = vmatpush1.msra.mxu0 %v7958
        %8860 = vmatprep.subr.mxu0 0.0
        %8861 = vmatpush1.msra.mxu0 %v7959
        %8862 = vmatprep.subr.mxu0 0.0
        %8863 = vmatpush1.msra.mxu0 %v7960
        %8864 = vmatprep.subr.mxu0 0.0
        %8865 = vmatpush1.msra.mxu0 %v7961
        %8866 = vmatprep.subr.mxu0 0.0
        %8867 = vmatpush1.msra.mxu0 %v7962
        %8868 = vmatprep.subr.mxu0 0.0
        %8869 = vmatpush1.msra.mxu0 %v7963
        %8870 = vmatprep.subr.mxu0 0.0
        %8871 = vmatpush1.msra.mxu0 0.0
        %8872 = vmatprep.subr.mxu0 0.0
        %8873 = vmatpush1.msra.mxu0 0.0
        %8874 = vmatprep.subr.mxu0 0.0
        %8875 = vmatpush1.msra.mxu0 0.0
        %8876 = vmatprep.subr.mxu0 0.0
        %8877 = vmatpush1.msra.mxu0 0.0
        %8878 = vmatprep.subr.mxu0 0.0
        %8879 = vmatpush1.msra.mxu0 0.0
        %8880 = vmatprep.subr.mxu0 0.0
        %8881 = vmatpush1.msra.mxu0 0.0
        %8882 = vmatprep.subr.mxu0 0.0
        %8883 = vmatpush1.msra.mxu0 0.0
        %8884 = vmatprep.subr.mxu0 0.0
        %8885 = vmatpush1.msra.mxu0 0.0
        %8886 = vmatprep.subr.mxu0 0.0
        %8887 = vmatpush1.msra.mxu0 0.0
        %8888 = vmatprep.subr.mxu0 0.0
        %8889 = vmatpush1.msra.mxu0 0.0
        %8890 = vmatprep.subr.mxu0 0.0
        %8891 = vmatpush1.msra.mxu0 0.0
        %8892 = vmatprep.subr.mxu0 0.0
        %8893 = vmatpush1.msra.mxu0 0.0
        %8894 = vmatprep.subr.mxu0 0.0
        %8895 = vmatpush1.msra.mxu0 0.0
        %8896 = vmatprep.subr.mxu0 0.0
        %8897 = vmatpush1.msra.mxu0 0.0
        %8898 = vmatprep.subr.mxu0 0.0
        %8899 = vmatpush1.msra.mxu0 0.0
        %8900 = vmatprep.subr.mxu0 0.0
        %8901 = vmatpush1.msra.mxu0 0.0
        %8902 = vmatprep.mubr.f32.mxu0 0.0
        %8903 = vmatmul.mubr.f32.gmra.mrb[0].mxu0 %v8615
        %v8904 = vpop.f32.mrb[0].mxu0
        %v8905 = vadd.f32 0.0, %v8904
        %v8906 = vpop.f32.mrb[0].mxu0
        %8907 = vdwg.mxu0
        %8908 = vmatprep.subr.mxu0 0.0
        %8909 = vmatpush1.msra.mxu0 %v7964
        %8910 = vmatprep.subr.mxu0 0.0
        %8911 = vmatpush1.msra.mxu0 %v7965
        %8912 = vmatprep.subr.mxu0 0.0
        %8913 = vmatpush1.msra.mxu0 %v7966
        %8914 = vmatprep.subr.mxu0 0.0
        %8915 = vmatpush1.msra.mxu0 %v7967
        %8916 = vmatprep.subr.mxu0 0.0
        %8917 = vmatpush1.msra.mxu0 %v7968
        %8918 = vmatprep.subr.mxu0 0.0
        %8919 = vmatpush1.msra.mxu0 %v7969
        %8920 = vmatprep.subr.mxu0 0.0
        %8921 = vmatpush1.msra.mxu0 %v7970
        %8922 = vmatprep.subr.mxu0 0.0
        %8923 = vmatpush1.msra.mxu0 %v7971
        %8924 = vmatprep.subr.mxu0 0.0
        %8925 = vmatpush1.msra.mxu0 %v7972
        %8926 = vmatprep.subr.mxu0 0.0
        %8927 = vmatpush1.msra.mxu0 %v7973
        %8928 = vmatprep.subr.mxu0 0.0
        %8929 = vmatpush1.msra.mxu0 %v7974
        %8930 = vmatprep.subr.mxu0 0.0
        %8931 = vmatpush1.msra.mxu0 %v7975
        %8932 = vmatprep.subr.mxu0 0.0
        %8933 = vmatpush1.msra.mxu0 %v7976
        %8934 = vmatprep.subr.mxu0 0.0
        %8935 = vmatpush1.msra.mxu0 %v7977
        %8936 = vmatprep.subr.mxu0 0.0
        %8937 = vmatpush1.msra.mxu0 %v7978
        %8938 = vmatprep.subr.mxu0 0.0
        %8939 = vmatpush1.msra.mxu0 %v7979
        %8940 = vmatprep.subr.mxu0 0.0
        %8941 = vmatpush1.msra.mxu0 0.0
        %8942 = vmatprep.subr.mxu0 0.0
        %8943 = vmatpush1.msra.mxu0 0.0
        %8944 = vmatprep.subr.mxu0 0.0
        %8945 = vmatpush1.msra.mxu0 0.0
        %8946 = vmatprep.subr.mxu0 0.0
        %8947 = vmatpush1.msra.mxu0 0.0
        %8948 = vmatprep.subr.mxu0 0.0
        %8949 = vmatpush1.msra.mxu0 0.0
        %8950 = vmatprep.subr.mxu0 0.0
        %8951 = vmatpush1.msra.mxu0 0.0
        %8952 = vmatprep.subr.mxu0 0.0
        %8953 = vmatpush1.msra.mxu0 0.0
        %8954 = vmatprep.subr.mxu0 0.0
        %8955 = vmatpush1.msra.mxu0 0.0
        %8956 = vmatprep.subr.mxu0 0.0
        %8957 = vmatpush1.msra.mxu0 0.0
        %8958 = vmatprep.subr.mxu0 0.0
        %8959 = vmatpush1.msra.mxu0 0.0
        %8960 = vmatprep.subr.mxu0 0.0
        %8961 = vmatpush1.msra.mxu0 0.0
        %8962 = vmatprep.subr.mxu0 0.0
        %8963 = vmatpush1.msra.mxu0 0.0
        %8964 = vmatprep.subr.mxu0 0.0
        %8965 = vmatpush1.msra.mxu0 0.0
        %8966 = vmatprep.subr.mxu0 0.0
        %8967 = vmatpush1.msra.mxu0 0.0
        %8968 = vmatprep.subr.mxu0 0.0
        %8969 = vmatpush1.msra.mxu0 0.0
        %8970 = vmatprep.subr.mxu0 0.0
        %8971 = vmatpush1.msra.mxu0 0.0
        %8972 = vmatprep.mubr.f32.mxu0 0.0
        %8973 = vmatmul.mubr.f32.gmra.mrb[0].mxu0 %v8616
        %v8974 = vpop.f32.mrb[0].mxu0
        %v8975 = vadd.f32 0.0, %v8974
        %v8976 = vpop.f32.mrb[0].mxu0
        %8977 = vdwg.mxu0
        %8978 = vmatprep.subr.mxu0 0.0
        %8979 = vmatpush1.msra.mxu0 %v7980
        %8980 = vmatprep.subr.mxu0 0.0
        %8981 = vmatpush1.msra.mxu0 %v7981
        %8982 = vmatprep.subr.mxu0 0.0
        %8983 = vmatpush1.msra.mxu0 %v7982
        %8984 = vmatprep.subr.mxu0 0.0
        %8985 = vmatpush1.msra.mxu0 %v7983
        %8986 = vmatprep.subr.mxu0 0.0
        %8987 = vmatpush1.msra.mxu0 %v7984
        %8988 = vmatprep.subr.mxu0 0.0
        %8989 = vmatpush1.msra.mxu0 %v7985
        %8990 = vmatprep.subr.mxu0 0.0
        %8991 = vmatpush1.msra.mxu0 %v7986
        %8992 = vmatprep.subr.mxu0 0.0
        %8993 = vmatpush1.msra.mxu0 %v7987
        %8994 = vmatprep.subr.mxu0 0.0
        %8995 = vmatpush1.msra.mxu0 %v7988
        %8996 = vmatprep.subr.mxu0 0.0
        %8997 = vmatpush1.msra.mxu0 %v7989
        %8998 = vmatprep.subr.mxu0 0.0
        %8999 = vmatpush1.msra.mxu0 %v7990
        %9000 = vmatprep.subr.mxu0 0.0
        %9001 = vmatpush1.msra.mxu0 %v7991
        %9002 = vmatprep.subr.mxu0 0.0
        %9003 = vmatpush1.msra.mxu0 %v7992
        %9004 = vmatprep.subr.mxu0 0.0
        %9005 = vmatpush1.msra.mxu0 %v7993
        %9006 = vmatprep.subr.mxu0 0.0
        %9007 = vmatpush1.msra.mxu0 %v7994
        %9008 = vmatprep.subr.mxu0 0.0
        %9009 = vmatpush1.msra.mxu0 %v7995
        %9010 = vmatprep.subr.mxu0 0.0
        %9011 = vmatpush1.msra.mxu0 0.0
        %9012 = vmatprep.subr.mxu0 0.0
        %9013 = vmatpush1.msra.mxu0 0.0
        %9014 = vmatprep.subr.mxu0 0.0
        %9015 = vmatpush1.msra.mxu0 0.0
        %9016 = vmatprep.subr.mxu0 0.0
        %9017 = vmatpush1.msra.mxu0 0.0
        %9018 = vmatprep.subr.mxu0 0.0
        %9019 = vmatpush1.msra.mxu0 0.0
        %9020 = vmatprep.subr.mxu0 0.0
        %9021 = vmatpush1.msra.mxu0 0.0
        %9022 = vmatprep.subr.mxu0 0.0
        %9023 = vmatpush1.msra.mxu0 0.0
        %9024 = vmatprep.subr.mxu0 0.0
        %9025 = vmatpush1.msra.mxu0 0.0
        %9026 = vmatprep.subr.mxu0 0.0
        %9027 = vmatpush1.msra.mxu0 0.0
        %9028 = vmatprep.subr.mxu0 0.0
        %9029 = vmatpush1.msra.mxu0 0.0
        %9030 = vmatprep.subr.mxu0 0.0
        %9031 = vmatpush1.msra.mxu0 0.0
        %9032 = vmatprep.subr.mxu0 0.0
        %9033 = vmatpush1.msra.mxu0 0.0
        %9034 = vmatprep.subr.mxu0 0.0
        %9035 = vmatpush1.msra.mxu0 0.0
        %9036 = vmatprep.subr.mxu0 0.0
        %9037 = vmatpush1.msra.mxu0 0.0
        %9038 = vmatprep.subr.mxu0 0.0
        %9039 = vmatpush1.msra.mxu0 0.0
        %9040 = vmatprep.subr.mxu0 0.0
        %9041 = vmatpush1.msra.mxu0 0.0
        %9042 = vmatprep.mubr.f32.mxu0 0.0
        %9043 = vmatmul.mubr.f32.gmra.mrb[0].mxu0 %v8617
        %v9044 = vpop.f32.mrb[0].mxu0
        %v9045 = vadd.f32 0.0, %v9044
        %v9046 = vpop.f32.mrb[0].mxu0
        %9047 = vdwg.mxu0
        %9048 = vmatprep.subr.mxu0 0.0
        %9049 = vmatpush1.msra.mxu0 %v7996
        %9050 = vmatprep.subr.mxu0 0.0
        %9051 = vmatpush1.msra.mxu0 %v7997
        %9052 = vmatprep.subr.mxu0 0.0
        %9053 = vmatpush1.msra.mxu0 %v7998
        %9054 = vmatprep.subr.mxu0 0.0
        %9055 = vmatpush1.msra.mxu0 %v7999
        %9056 = vmatprep.subr.mxu0 0.0
        %9057 = vmatpush1.msra.mxu0 %v8000
        %9058 = vmatprep.subr.mxu0 0.0
        %9059 = vmatpush1.msra.mxu0 %v8001
        %9060 = vmatprep.subr.mxu0 0.0
        %9061 = vmatpush1.msra.mxu0 %v8002
        %9062 = vmatprep.subr.mxu0 0.0
        %9063 = vmatpush1.msra.mxu0 %v8003
        %9064 = vmatprep.subr.mxu0 0.0
        %9065 = vmatpush1.msra.mxu0 %v8004
        %9066 = vmatprep.subr.mxu0 0.0
        %9067 = vmatpush1.msra.mxu0 %v8005
        %9068 = vmatprep.subr.mxu0 0.0
        %9069 = vmatpush1.msra.mxu0 %v8006
        %9070 = vmatprep.subr.mxu0 0.0
        %9071 = vmatpush1.msra.mxu0 %v8007
        %9072 = vmatprep.subr.mxu0 0.0
        %9073 = vmatpush1.msra.mxu0 %v8008
        %9074 = vmatprep.subr.mxu0 0.0
        %9075 = vmatpush1.msra.mxu0 %v8009
        %9076 = vmatprep.subr.mxu0 0.0
        %9077 = vmatpush1.msra.mxu0 %v8010
        %9078 = vmatprep.subr.mxu0 0.0
        %9079 = vmatpush1.msra.mxu0 %v8011
        %9080 = vmatprep.subr.mxu0 0.0
        %9081 = vmatpush1.msra.mxu0 0.0
        %9082 = vmatprep.subr.mxu0 0.0
        %9083 = vmatpush1.msra.mxu0 0.0
        %9084 = vmatprep.subr.mxu0 0.0
        %9085 = vmatpush1.msra.mxu0 0.0
        %9086 = vmatprep.subr.mxu0 0.0
        %9087 = vmatpush1.msra.mxu0 0.0
        %9088 = vmatprep.subr.mxu0 0.0
        %9089 = vmatpush1.msra.mxu0 0.0
        %9090 = vmatprep.subr.mxu0 0.0
        %9091 = vmatpush1.msra.mxu0 0.0
        %9092 = vmatprep.subr.mxu0 0.0
        %9093 = vmatpush1.msra.mxu0 0.0
        %9094 = vmatprep.subr.mxu0 0.0
        %9095 = vmatpush1.msra.mxu0 0.0
        %9096 = vmatprep.subr.mxu0 0.0
        %9097 = vmatpush1.msra.mxu0 0.0
        %9098 = vmatprep.subr.mxu0 0.0
        %9099 = vmatpush1.msra.mxu0 0.0
        %9100 = vmatprep.subr.mxu0 0.0
        %9101 = vmatpush1.msra.mxu0 0.0
        %9102 = vmatprep.subr.mxu0 0.0
        %9103 = vmatpush1.msra.mxu0 0.0
        %9104 = vmatprep.subr.mxu0 0.0
        %9105 = vmatpush1.msra.mxu0 0.0
        %9106 = vmatprep.subr.mxu0 0.0
        %9107 = vmatpush1.msra.mxu0 0.0
        %9108 = vmatprep.subr.mxu0 0.0
        %9109 = vmatpush1.msra.mxu0 0.0
        %9110 = vmatprep.subr.mxu0 0.0
        %9111 = vmatpush1.msra.mxu0 0.0
        %9112 = vmatprep.mubr.f32.mxu0 0.0
        %9113 = vmatmul.mubr.f32.gmra.mrb[0].mxu0 %v8618
        %v9114 = vpop.f32.mrb[0].mxu0
        %v9115 = vadd.f32 0.0, %v9114
        %v9116 = vpop.f32.mrb[0].mxu0
        %9117 = vdwg.mxu0
        %9118 = vmatprep.subr.mxu0 0.0
        %9119 = vmatpush1.msra.mxu0 %v8012
        %9120 = vmatprep.subr.mxu0 0.0
        %9121 = vmatpush1.msra.mxu0 %v8013
        %9122 = vmatprep.subr.mxu0 0.0
        %9123 = vmatpush1.msra.mxu0 %v8014
        %9124 = vmatprep.subr.mxu0 0.0
        %9125 = vmatpush1.msra.mxu0 %v8015
        %9126 = vmatprep.subr.mxu0 0.0
        %9127 = vmatpush1.msra.mxu0 %v8016
        %9128 = vmatprep.subr.mxu0 0.0
        %9129 = vmatpush1.msra.mxu0 %v8017
        %9130 = vmatprep.subr.mxu0 0.0
        %9131 = vmatpush1.msra.mxu0 %v8018
        %9132 = vmatprep.subr.mxu0 0.0
        %9133 = vmatpush1.msra.mxu0 %v8019
        %9134 = vmatprep.subr.mxu0 0.0
        %9135 = vmatpush1.msra.mxu0 %v8020
        %9136 = vmatprep.subr.mxu0 0.0
        %9137 = vmatpush1.msra.mxu0 %v8021
        %9138 = vmatprep.subr.mxu0 0.0
        %9139 = vmatpush1.msra.mxu0 %v8022
        %9140 = vmatprep.subr.mxu0 0.0
        %9141 = vmatpush1.msra.mxu0 %v8023
        %9142 = vmatprep.subr.mxu0 0.0
        %9143 = vmatpush1.msra.mxu0 %v8024
        %9144 = vmatprep.subr.mxu0 0.0
        %9145 = vmatpush1.msra.mxu0 %v8025
        %9146 = vmatprep.subr.mxu0 0.0
        %9147 = vmatpush1.msra.mxu0 %v8026
        %9148 = vmatprep.subr.mxu0 0.0
        %9149 = vmatpush1.msra.mxu0 %v8027
        %9150 = vmatprep.subr.mxu0 0.0
        %9151 = vmatpush1.msra.mxu0 0.0
        %9152 = vmatprep.subr.mxu0 0.0
        %9153 = vmatpush1.msra.mxu0 0.0
        %9154 = vmatprep.subr.mxu0 0.0
        %9155 = vmatpush1.msra.mxu0 0.0
        %9156 = vmatprep.subr.mxu0 0.0
        %9157 = vmatpush1.msra.mxu0 0.0
        %9158 = vmatprep.subr.mxu0 0.0
        %9159 = vmatpush1.msra.mxu0 0.0
        %9160 = vmatprep.subr.mxu0 0.0
        %9161 = vmatpush1.msra.mxu0 0.0
        %9162 = vmatprep.subr.mxu0 0.0
        %9163 = vmatpush1.msra.mxu0 0.0
        %9164 = vmatprep.subr.mxu0 0.0
        %9165 = vmatpush1.msra.mxu0 0.0
        %9166 = vmatprep.subr.mxu0 0.0
        %9167 = vmatpush1.msra.mxu0 0.0
        %9168 = vmatprep.subr.mxu0 0.0
        %9169 = vmatpush1.msra.mxu0 0.0
        %9170 = vmatprep.subr.mxu0 0.0
        %9171 = vmatpush1.msra.mxu0 0.0
        %9172 = vmatprep.subr.mxu0 0.0
        %9173 = vmatpush1.msra.mxu0 0.0
        %9174 = vmatprep.subr.mxu0 0.0
        %9175 = vmatpush1.msra.mxu0 0.0
        %9176 = vmatprep.subr.mxu0 0.0
        %9177 = vmatpush1.msra.mxu0 0.0
        %9178 = vmatprep.subr.mxu0 0.0
        %9179 = vmatpush1.msra.mxu0 0.0
        %9180 = vmatprep.subr.mxu0 0.0
        %9181 = vmatpush1.msra.mxu0 0.0
        %9182 = vmatprep.mubr.f32.mxu0 0.0
        %9183 = vmatmul.mubr.f32.gmra.mrb[0].mxu0 %v8619
        %v9184 = vpop.f32.mrb[0].mxu0
        %v9185 = vadd.f32 0.0, %v9184
        %v9186 = vpop.f32.mrb[0].mxu0
        %9187 = vdwg.mxu0
        %v9188 = vmul.f32 %v8695, 0.95
        %v9189 = vmul.f32 %v8765, 0.95
        %v9190 = vmul.f32 %v8835, 0.95
        %v9191 = vmul.f32 %v8905, 0.95
        %v9192 = vmul.f32 %v8975, 0.95
        %v9193 = vmul.f32 %v9045, 0.95
        %v9194 = vmul.f32 %v9115, 0.95
        %v9195 = vmul.f32 %v9185, 0.95
        %v9196 = vadd.f32 %v4188, %v9188
        %v9197 = vadd.f32 %v4189, %v9189
        %v9198 = vadd.f32 %v4190, %v9190
        %v9199 = vadd.f32 %v4191, %v9191
        %v9200 = vadd.f32 %v4192, %v9192
        %v9201 = vadd.f32 %v4193, %v9193
        %v9202 = vadd.f32 %v4194, %v9194
        %v9203 = vadd.f32 %v4195, %v9195
        %9204 = vst [vmem:[%s303 + $0x10] sm:$0xff] %v9196
        %9205 = vst [vmem:[%s303 + $0x28] sm:$0xff] %v9197
        %9206 = vst [vmem:[%s303 + $0x40] sm:$0xff] %v9198
        %9207 = vst [vmem:[%s303 + $0x58] sm:$0xff] %v9199
        %9208 = vst [vmem:[%s303 + $0x70] sm:$0xff] %v9200
        %9209 = vst [vmem:[%s303 + $0x88] sm:$0xff] %v9201
        %9210 = vst [vmem:[%s303 + $0xa0] sm:$0xff] %v9202
        %9211 = vst [vmem:[%s303 + $0xb8] sm:$0xff] %v9203
        %s9212 = sand.u32 %s114, 1
        %s9213 = scalar_lea.sflag [#allocation4], %s9212
        %s9214 = sand.u32 %s114, 1
        %s9215 = smul.addr %s9214, 192
        %s9216 = scalar_lea.vmem [#allocation8], %s9215
        %s9217 = sand.u32 %s140, 1
        %s9218 = scalar_lea.sflag [#allocation10], %s9217
        %s9219 = sand.u32 %s140, 1
        %s9220 = smul.addr %s9219, 192
        %s9221 = scalar_lea.vmem [#allocation9], %s9220
        // Predicated region
        $region45: #{dy_mixprop_forward.1} parent=31 // pred_check
          %p9222 = pneg %p124
        $region46: #{dy_mixprop_forward.1} parent=31 // pred_check_branch
          %9224 = sbr.rel (%p9222) target = $region48
        $region47: #{dy_mixprop_forward.1} parent=31 // pred_region
          %s9225 = smul.u32 8, %s28
          %s9227 = ssub.s32 3072, 3072
          %9228 = vsyncadd %s9213, %s9227
          %s9229 = smul.addr %s9225, 3
          %s9230 = smul.addr %s9229, 128
          %s9231 = scalar_lea.hbm %s3, %s9230
          %s9232 = sshll.u32 %s9216, 4
          %s9233 = int_to_ptr.vmem [resolvable:$true] %s9232
          %9238 = dma.vmem_to_hbm [thread:$0]  %s9233, 3072, %s9231, %s9213, 128, 128, 8
        $region48: #{dy_mixprop_forward.1} parent=31 // pred_fallthru
          _
        // Predicated region
        $region49: #{dy_mixprop_forward.1} parent=31 // pred_check
          %p9239 = pneg %p150
        $region50: #{dy_mixprop_forward.1} parent=31 // pred_check_branch
          %9241 = sbr.rel (%p9239) target = $region52
        $region51: #{dy_mixprop_forward.1} parent=31 // pred_region
          %s9242 = smul.u32 8, %s28
          %s9244 = ssub.s32 3072, 3072
          %9245 = vsyncadd %s9218, %s9244
          %s9246 = smul.addr %s9242, 3
          %s9247 = smul.addr %s9246, 128
          %s9248 = scalar_lea.hbm %s4, %s9247
          %s9249 = sshll.u32 %s9221, 4
          %s9250 = int_to_ptr.vmem [resolvable:$true] %s9249
          %9255 = dma.vmem_to_hbm [thread:$0]  %s9250, 3072, %s9248, %s9218, 128, 128, 8
        $region52: #{dy_mixprop_forward.1} parent=31 // pred_fallthru
          _
      $region32: #{dy_mixprop_forward.1} parent=5 // pred_fallthru
        _
      %p9256 = scmp.le.s32.totalorder 2, %s23
      // Predicated region
      $region53: #{dy_mixprop_forward.1} parent=5 // pred_check
        %p9257 = pneg %p9256
      $region54: #{dy_mixprop_forward.1} parent=5 // pred_check_branch
        %9259 = sbr.rel (%p9257) target = $region56
      $region55: #{dy_mixprop_forward.1} parent=5 // pred_region
        %s9260 = ssub.s32 %s23, 2
        // Predicated region
        $region57: #{dy_mixprop_forward.1} parent=55 // pred_check
          %p9261 = pneg %p130
        $region58: #{dy_mixprop_forward.1} parent=55 // pred_check_branch
          %9263 = sbr.rel (%p9261) target = $region60
        $region59: #{dy_mixprop_forward.1} parent=55 // pred_region
          %s9264 = sand.u32 %s115, 1
          %s9265 = scalar_lea.sflag [#allocation4], %s9264
          %s9266 = sand.u32 %s115, 1
          %s9267 = smul.addr %s9266, 192
          %s9268 = scalar_lea.vmem [#allocation8], %s9267
          %9269 = dma.done %s9265, 3072
        $region60: #{dy_mixprop_forward.1} parent=55 // pred_fallthru
          _
        // Predicated region
        $region61: #{dy_mixprop_forward.1} parent=55 // pred_check
          %p9270 = pneg %p156
        $region62: #{dy_mixprop_forward.1} parent=55 // pred_check_branch
          %9272 = sbr.rel (%p9270) target = $region64
        $region63: #{dy_mixprop_forward.1} parent=55 // pred_region
          %s9273 = sand.u32 %s141, 1
          %s9274 = scalar_lea.sflag [#allocation10], %s9273
          %s9275 = sand.u32 %s141, 1
          %s9276 = smul.addr %s9275, 192
          %s9277 = scalar_lea.vmem [#allocation9], %s9276
          %9278 = dma.done %s9274, 3072
        $region64: #{dy_mixprop_forward.1} parent=55 // pred_fallthru
          _
      $region56: #{dy_mixprop_forward.1} parent=5 // pred_fallthru
        _
    $region6: #{dy_mixprop_forward.1} parent=1 // loop_footer
      %s27 = sadd.s32 1, %s23
    $region7: #{dy_mixprop_forward.1} parent=1 // loop_footer_branch
      %22 = sbr.rel target = $region3
    $region8: #{dy_mixprop_forward.1} parent=1 // loop_exit
      _
    %9279 = vsyncpa [#allocation3], 1
    %s9280 = scalar_lea.sflag [#allocation3], 1
    %9281 = vsyncpa %s9280, 1
    %9282 = vsyncpa [#allocation6], 1
    %s9283 = scalar_lea.sflag [#allocation6], 1
    %9284 = vsyncpa %s9283, 1
    %9285 = vsyncpa [#allocation4], 1
    %s9286 = scalar_lea.sflag [#allocation4], 1
    %9287 = vsyncpa %s9286, 1
    %9288 = vsyncpa [#allocation10], 1
    %s9289 = scalar_lea.sflag [#allocation10], 1
    %9290 = vsyncpa %s9289, 1

</llo_original>
